<compile_context>
chip_gen: v6e
topology: v6e:2x2x1
jax: 0.10.0
libtpu: 0.0.40
codegen_flags: <defaults>
</compile_context>

<pallas_src>
import functools

import jax
import jax.numpy as jnp
import numpy as np
from jax.experimental import pallas as pl
from jax.experimental.pallas import tpu as pltpu

# Explicit scoped-VMEM limit: above v5e's 16 MiB default, within v6e/v7x limits.
_VMEM_LIMIT = 32 * 1024 * 1024


# --------------------------------------------------------------------------
# Kernel 1: depthwise 3x3 conv, groups = C, channel multiplier = 3
# --------------------------------------------------------------------------
def _dw_kernel(xp_ref, w_ref, o_ref, *, H, W, C):
    """One (batch, multiplier) tile of the depthwise conv.

    xp_ref: (1, H+2, C, W+2)  zero-padded input; H on the leading (slab) axis,
                              channels on sublanes, width on lanes.
    w_ref : (3, 3, 3, C, 1)   weights indexed [m, ky, kx, c, 0].
    o_ref : (1, 1, H, C, W)   output for multiplier m = program_id(1);
                              o[m, b, y, c, x] == PyTorch dw channel c*3+m.
    """
    m = pl.program_id(1)
    acc = jnp.zeros((H, C, W), jnp.float32)
    for ky in range(3):
        for kx in range(3):
            # ky slices a leading (non-tiled) axis -> free slab selection.
            # kx is a static lane offset folded into the load (no full-tile
            # re-tiled copy; pltpu.roll would be the explicit-XLU alternative).
            tap = xp_ref[0, ky:ky + H, :, kx:kx + W]          # (H, C, W)
            acc = acc + tap * w_ref[m, ky, kx]                # (C, 1) broadcast
    o_ref[0, 0] = acc.astype(o_ref.dtype)


def dw_conv(x_nchw, w_dw):
    """Depthwise 3x3 with channel multiplier 3.

    Returns (3, B, H, C, W): out[m, b, y, g, x] == PyTorch dw channel g*3+m.
    """
    B, C, H, W = x_nchw.shape
    # NHCW + zero padding of both spatial dims (one fused XLA pass).
    xp = jnp.pad(jnp.transpose(x_nchw, (0, 2, 1, 3)),
                 ((0, 0), (1, 1), (0, 0), (1, 1)))
    # weights -> [m, ky, kx, c, 1]
    w_k = jnp.transpose(w_dw[:, 0].reshape(C, 3, 3, 3), (1, 2, 3, 0))[..., None]
    kern = functools.partial(_dw_kernel, H=H, W=W, C=C)
    # TODO(synk): for production-sized H, tile the H axis in row strips with a
    # 2-row halo (pl.Element / manual DMA) so the per-step block fits v7x VMEM.
    return pl.pallas_call(
        kern,
        grid=(B, 3),
        in_specs=[
            pl.BlockSpec((1, H + 2, C, W + 2), lambda b, m: (b, 0, 0, 0)),
            pl.BlockSpec((3, 3, 3, C, 1), lambda b, m: (0, 0, 0, 0, 0)),
        ],
        out_specs=pl.BlockSpec((1, 1, H, C, W), lambda b, m: (m, b, 0, 0, 0)),
        out_shape=jax.ShapeDtypeStruct((3, B, H, C, W), x_nchw.dtype),
        compiler_params=pltpu.CompilerParams(
            # m innermost + "arbitrary": the input block index is unchanged
            # across m, so the padded input is not re-DMA'd per multiplier.
            dimension_semantics=("parallel", "arbitrary"),
            vmem_limit_bytes=_VMEM_LIMIT),
    )(xp, w_k)


# --------------------------------------------------------------------------
# Kernel 2: batched per-window self-attention: softmax(q q^T) @ v
# --------------------------------------------------------------------------
def _attn_kernel(q_ref, v_ref, o_ref):
    """Self-attention over a batch of WB windows.

    q_ref: (WB, N, ch);  v_ref, o_ref: (WB, ch, N)  (N on lanes -> dense store).
    """
    q = q_ref[...]
    v = v_ref[...]
    # scores[b, n, m] = sum_c q[b, n, c] * q[b, m, c]
    atn = jax.lax.dot_general(q, q, (((2,), (2,)), ((0,), (0,))),
                              preferred_element_type=jnp.float32)   # (WB, N, N)
    atn = atn - jnp.max(atn, axis=-1, keepdims=True)
    e = jnp.exp(atn)
    # Exact reciprocal: approx=True (EUP vrcp) is the faster option but its
    # relative error can exceed the 1e-4 validation tolerance used below.
    p = e * pl.reciprocal(jnp.sum(e, axis=-1, keepdims=True), approx=False)
    # y[b, c, n] = sum_m v[b, c, m] * p[b, n, m]
    y = jax.lax.dot_general(v, p, (((2,), (2,)), ((0,), (0,))),
                            preferred_element_type=jnp.float32)     # (WB, ch, N)
    o_ref[...] = y.astype(o_ref.dtype)


def _pick_window_batch(nw, N):
    """Windows per grid step: divides nw, fits VMEM, leaves >= 2 grid steps."""
    score_budget = 4 * 1024 * 1024                    # (WB, N, N) f32 scores
    cap = max(1, score_budget // (N * N * 4))
    cap = min(cap, 512)
    if nw >= 2:
        cap = min(cap, nw // 2)                       # >= 2 steps for 2 TCs
    wb = 1
    for d in range(1, min(cap, nw) + 1):
        if nw % d == 0:
            wb = d
    return wb


def window_attention(q_win, v_win):
    nw, N, ch = q_win.shape
    wb = _pick_window_batch(nw, N)
    return pl.pallas_call(
        _attn_kernel,
        grid=(nw // wb,),
        in_specs=[pl.BlockSpec((wb, N, ch), lambda i: (i, 0, 0)),
                  pl.BlockSpec((wb, ch, N), lambda i: (i, 0, 0))],
        out_specs=pl.BlockSpec((wb, ch, N), lambda i: (i, 0, 0)),
        out_shape=jax.ShapeDtypeStruct((nw, ch, N), q_win.dtype),
        compiler_params=pltpu.CompilerParams(
            dimension_semantics=("parallel",),
            vmem_limit_bytes=_VMEM_LIMIT),
    )(q_win, v_win)


# --------------------------------------------------------------------------
# Kernel 3: fused (concat over branches) + 1x1 conv, tiled over (B, spatial)
# --------------------------------------------------------------------------
def _out_conv_kernel(y0_ref, y1_ref, y2_ref, w_ref, o_ref):
    """y*_ref: (1, ch, TL) branch blocks; w_ref: (3, C, ch); o_ref: (1, C, TL)."""
    acc = jnp.dot(w_ref[0], y0_ref[0], preferred_element_type=jnp.float32)
    acc = acc + jnp.dot(w_ref[1], y1_ref[0], preferred_element_type=jnp.float32)
    acc = acc + jnp.dot(w_ref[2], y2_ref[0], preferred_element_type=jnp.float32)
    o_ref[0] = acc.astype(o_ref.dtype)


def _pick_spatial_tile(hw):
    if hw % 128 != 0:
        return hw                                     # tiny-shape fallback
    cap = min(hw, 2048)
    if hw >= 256:
        cap = min(cap, hw // 2)                       # >= 2 spatial tiles
    best, t = 128, 128
    while t <= cap:
        if hw % t == 0:
            best = t
        t += 128
    return best


def out_conv(y_branches, w_out, out_dtype):
    B, ch, H, W = y_branches[0].shape
    C = w_out.shape[0]
    hw = H * W
    tl = _pick_spatial_tile(hw)
    ys = [y.reshape(B, ch, hw) for y in y_branches]   # free (row-major) reshape
    w3 = jnp.transpose(w_out.reshape(C, 3, ch), (1, 0, 2))        # (3, C, ch)
    y_spec = pl.BlockSpec((1, ch, tl), lambda b, l: (b, 0, l))
    out = pl.pallas_call(
        _out_conv_kernel,
        grid=(B, hw // tl),
        in_specs=[y_spec, y_spec, y_spec,
                  pl.BlockSpec((3, C, ch), lambda b, l: (0, 0, 0))],
        out_specs=pl.BlockSpec((1, C, tl), lambda b, l: (b, 0, l)),
        out_shape=jax.ShapeDtypeStruct((B, C, hw), out_dtype),
        compiler_params=pltpu.CompilerParams(
            dimension_semantics=("parallel", "parallel"),
            vmem_limit_bytes=_VMEM_LIMIT),
    )(*ys, w3)
    return out.reshape(B, C, H, W)


# --------------------------------------------------------------------------
# MWSA forward (Pallas path), NCHW in / NCHW out like the PyTorch module
# --------------------------------------------------------------------------
def mwsa_forward(x_nchw, params, shifts=4, window_sizes=(4, 8, 16)):
    w_dw, w_out = params['dw'], params['out']     # (3C, 1, 3, 3), (C, 3C//2)
    B, C, H, W = x_nchw.shape
    if C % 2 != 0:
        raise ValueError("channels must be even (q/v split)")
    for ws in window_sizes:
        if H % ws != 0 or W % ws != 0:
            raise ValueError(f"H={H}, W={W} must be divisible by window {ws}")
    ch = C // 2

    y_dw = dw_conv(x_nchw, w_dw)                  # (3, B, H, C, W)

    ys = []
    for idx, ws in enumerate(window_sizes):
        # Gather this branch's C channels (dw channel k = idx*C+j lives at
        # multiplier k%3, input channel k//3).  This gather, the shift-roll and
        # the window partition below fuse into XLA copy passes per branch.
        # TODO(synk): fold the roll + window partition into the attention
        # kernel's BlockSpec/index_map to drop this glue entirely (wraparound of
        # the shifted windows makes a block-aligned index_map non-trivial).
        x_br = jnp.stack(
            [y_dw[(idx * C + j) % 3, :, :, (idx * C + j) // 3, :]
             for j in range(C)], axis=1)                          # (B, C, H, W)
        if shifts > 0:
            x_br = jnp.roll(x_br, shift=(-ws // 2, -ws // 2), axis=(2, 3))
        hb, wbk = H // ws, W // ws
        nw, N = B * hb * wbk, ws * ws
        t = x_br.reshape(B, C, hb, ws, wbk, ws)
        q = jnp.transpose(t[:, :ch], (0, 2, 4, 3, 5, 1)).reshape(nw, N, ch)
        v = jnp.transpose(t[:, ch:], (0, 2, 4, 1, 3, 5)).reshape(nw, ch, N)
        yw = window_attention(q, v)                               # (nw, ch, N)
        y_ = yw.reshape(B, hb, wbk, ch, ws, ws)
        y_ = jnp.transpose(y_, (0, 3, 1, 4, 2, 5)).reshape(B, ch, H, W)
        if shifts > 0:
            y_ = jnp.roll(y_, shift=(ws // 2, ws // 2), axis=(2, 3))
        ys.append(y_)

    return out_conv(ys, w_out, x_nchw.dtype)      # (B, C, H, W)


# --------------------------------------------------------------------------
# Pure-JAX reference (mirrors the PyTorch module) for validation
# --------------------------------------------------------------------------
def reference_forward(x_nchw, w_dw, w_out, shifts=4, window_sizes=(4, 8, 16)):
    hi = jax.lax.Precision.HIGHEST
    b, c, h, w = x_nchw.shape
    x = jax.lax.conv_general_dilated(
        x_nchw, w_dw, window_strides=(1, 1), padding=((1, 1), (1, 1)),
        feature_group_count=c,
        dimension_numbers=('NCHW', 'OIHW', 'NCHW'), precision=hi)
    cc = c // 2
    ys = []
    for idx, ws_ in enumerate(window_sizes):
        x_ = x[:, idx * c:(idx + 1) * c]
        if shifts > 0:
            x_ = jnp.roll(x_, shift=(-ws_ // 2, -ws_ // 2), axis=(2, 3))
        hb, wb = h // ws_, w // ws_
        t = x_.reshape(b, 2, cc, hb, ws_, wb, ws_)
        t = jnp.transpose(t, (1, 0, 3, 5, 4, 6, 2))
        t = t.reshape(2, b * hb * wb, ws_ * ws_, cc)
        q, v = t[0], t[1]
        atn = jnp.einsum('bnc,bmc->bnm', q, q, precision=hi)
        atn = jax.nn.softmax(atn, axis=-1)
        y_ = jnp.einsum('bnm,bmc->bnc', atn, v, precision=hi)
        y_ = y_.reshape(b, hb, wb, ws_, ws_, cc)
        y_ = jnp.transpose(y_, (0, 5, 1, 3, 2, 4)).reshape(b, cc, h, w)
        if shifts > 0:
            y_ = jnp.roll(y_, shift=(ws_ // 2, ws_ // 2), axis=(2, 3))
        ys.append(y_)
    y = jnp.concatenate(ys, axis=1)
    return jnp.einsum('bihw,oi->bohw', y, w_out, precision=hi)


if __name__ == "__main__":
    key = jax.random.PRNGKey(0)
    kx, kd, ko = jax.random.split(key, 3)

    B, C, H, W = 2, 4, 16, 16            # H, W divisible by all window sizes
    x = jax.random.normal(kx, (B, C, H, W), jnp.float32)

    # Deterministic synthetic parameters (shapes from MWSA.__init__, bias=False)
    w_dw = jax.random.normal(kd, (C * 3, 1, 3, 3), jnp.float32) * 0.2
    w_out = jax.random.normal(ko, (C, C * 3 // 2), jnp.float32) * 0.2
    params = {'dw': w_dw, 'out': w_out}

    fwd = jax.jit(mwsa_forward)
    y = jax.block_until_ready(fwd(x, params))
    y_ref = jax.block_until_ready(reference_forward(x, w_dw, w_out))
    np.testing.assert_allclose(np.asarray(y), np.asarray(y_ref),
                               atol=1e-4, rtol=1e-4)
    print("KERNEL_OK")
</pallas_src>

<mosaic_0001>
module attributes {stable_mosaic.version = 11 : i64} {
  func.func @_dw_kernel(%arg0: i32, %arg1: i32, %arg2: memref<1x18x4x18xf32, #tpu.memory_space<vmem>>, %arg3: memref<3x3x3x4x1xf32, #tpu.memory_space<vmem>>, %arg4: memref<1x1x16x4x16xf32, #tpu.memory_space<vmem>>) attributes {dimension_semantics = [#tpu.dimension_semantics<parallel>, #tpu.dimension_semantics<arbitrary>], iteration_bounds = array<i64: 2, 3>, scalar_prefetch = 0 : i64, scratch_operands = 0 : i64, tpu.core_type = #tpu.core_type<tc>, window_params = [{transform_indices = @transform_0, window_bounds = array<i64: 1, 18, 4, 18>}, {pipeline_mode = #tpu.pipeline_mode<synchronous>, transform_indices = @transform_1, window_bounds = array<i64: 3, 3, 3, 4, 1>}, {transform_indices = @transform_2, window_bounds = array<i64: 1, 1, 16, 4, 16>}]} {
    %cst = arith.constant 0.000000e+00 : f32
    %0 = vector.broadcast %cst : f32 to vector<16x4x16xf32>
    %c0 = arith.constant 0 : index
    %c0_0 = arith.constant 0 : index
    %c0_1 = arith.constant 0 : index
    %c0_2 = arith.constant 0 : index
    %1 = vector.load %arg2[%c0, %c0_0, %c0_1, %c0_2] : memref<1x18x4x18xf32, #tpu.memory_space<vmem>>, vector<1x16x4x16xf32>
    %2 = vector.shape_cast %1 : vector<1x16x4x16xf32> to vector<16x4x16xf32>
    %3 = arith.index_cast %arg1 : i32 to index
    %c0_3 = arith.constant 0 : index
    %c0_4 = arith.constant 0 : index
    %c0_5 = arith.constant 0 : index
    %c0_6 = arith.constant 0 : index
    %4 = vector.load %arg3[%3, %c0_3, %c0_4, %c0_5, %c0_6] : memref<3x3x3x4x1xf32, #tpu.memory_space<vmem>>, vector<1x1x1x4x1xf32>
    %5 = vector.shape_cast %4 : vector<1x1x1x4x1xf32> to vector<4x1xf32>
    %6 = vector.shape_cast %5 : vector<4x1xf32> to vector<1x4x1xf32>
    %7 = vector.broadcast %6 : vector<1x4x1xf32> to vector<16x4x16xf32>
    %8 = arith.mulf %2, %7 : vector<16x4x16xf32>
    %9 = arith.addf %0, %8 : vector<16x4x16xf32>
    %c0_7 = arith.constant 0 : index
    %c0_8 = arith.constant 0 : index
    %c0_9 = arith.constant 0 : index
    %c1 = arith.constant 1 : index
    %10 = vector.load %arg2[%c0_7, %c0_8, %c0_9, %c1] : memref<1x18x4x18xf32, #tpu.memory_space<vmem>>, vector<1x16x4x16xf32>
    %11 = vector.shape_cast %10 : vector<1x16x4x16xf32> to vector<16x4x16xf32>
    %12 = arith.index_cast %arg1 : i32 to index
    %c0_10 = arith.constant 0 : index
    %c1_11 = arith.constant 1 : index
    %c0_12 = arith.constant 0 : index
    %c0_13 = arith.constant 0 : index
    %13 = vector.load %arg3[%12, %c0_10, %c1_11, %c0_12, %c0_13] : memref<3x3x3x4x1xf32, #tpu.memory_space<vmem>>, vector<1x1x1x4x1xf32>
    %14 = vector.shape_cast %13 : vector<1x1x1x4x1xf32> to vector<4x1xf32>
    %15 = vector.shape_cast %14 : vector<4x1xf32> to vector<1x4x1xf32>
    %16 = vector.broadcast %15 : vector<1x4x1xf32> to vector<16x4x16xf32>
    %17 = arith.mulf %11, %16 : vector<16x4x16xf32>
    %18 = arith.addf %9, %17 : vector<16x4x16xf32>
    %c0_14 = arith.constant 0 : index
    %c0_15 = arith.constant 0 : index
    %c0_16 = arith.constant 0 : index
    %c2 = arith.constant 2 : index
    %19 = vector.load %arg2[%c0_14, %c0_15, %c0_16, %c2] : memref<1x18x4x18xf32, #tpu.memory_space<vmem>>, vector<1x16x4x16xf32>
    %20 = vector.shape_cast %19 : vector<1x16x4x16xf32> to vector<16x4x16xf32>
    %21 = arith.index_cast %arg1 : i32 to index
    %c0_17 = arith.constant 0 : index
    %c2_18 = arith.constant 2 : index
    %c0_19 = arith.constant 0 : index
    %c0_20 = arith.constant 0 : index
    %22 = vector.load %arg3[%21, %c0_17, %c2_18, %c0_19, %c0_20] : memref<3x3x3x4x1xf32, #tpu.memory_space<vmem>>, vector<1x1x1x4x1xf32>
    %23 = vector.shape_cast %22 : vector<1x1x1x4x1xf32> to vector<4x1xf32>
    %24 = vector.shape_cast %23 : vector<4x1xf32> to vector<1x4x1xf32>
    %25 = vector.broadcast %24 : vector<1x4x1xf32> to vector<16x4x16xf32>
    %26 = arith.mulf %20, %25 : vector<16x4x16xf32>
    %27 = arith.addf %18, %26 : vector<16x4x16xf32>
    %c0_21 = arith.constant 0 : index
    %c1_22 = arith.constant 1 : index
    %c0_23 = arith.constant 0 : index
    %c0_24 = arith.constant 0 : index
    %28 = vector.load %arg2[%c0_21, %c1_22, %c0_23, %c0_24] : memref<1x18x4x18xf32, #tpu.memory_space<vmem>>, vector<1x16x4x16xf32>
    %29 = vector.shape_cast %28 : vector<1x16x4x16xf32> to vector<16x4x16xf32>
    %30 = arith.index_cast %arg1 : i32 to index
    %c1_25 = arith.constant 1 : index
    %c0_26 = arith.constant 0 : index
    %c0_27 = arith.constant 0 : index
    %c0_28 = arith.constant 0 : index
    %31 = vector.load %arg3[%30, %c1_25, %c0_26, %c0_27, %c0_28] : memref<3x3x3x4x1xf32, #tpu.memory_space<vmem>>, vector<1x1x1x4x1xf32>
    %32 = vector.shape_cast %31 : vector<1x1x1x4x1xf32> to vector<4x1xf32>
    %33 = vector.shape_cast %32 : vector<4x1xf32> to vector<1x4x1xf32>
    %34 = vector.broadcast %33 : vector<1x4x1xf32> to vector<16x4x16xf32>
    %35 = arith.mulf %29, %34 : vector<16x4x16xf32>
    %36 = arith.addf %27, %35 : vector<16x4x16xf32>
    %c0_29 = arith.constant 0 : index
    %c1_30 = arith.constant 1 : index
    %c0_31 = arith.constant 0 : index
    %c1_32 = arith.constant 1 : index
    %37 = vector.load %arg2[%c0_29, %c1_30, %c0_31, %c1_32] : memref<1x18x4x18xf32, #tpu.memory_space<vmem>>, vector<1x16x4x16xf32>
    %38 = vector.shape_cast %37 : vector<1x16x4x16xf32> to vector<16x4x16xf32>
    %39 = arith.index_cast %arg1 : i32 to index
    %c1_33 = arith.constant 1 : index
    %c1_34 = arith.constant 1 : index
    %c0_35 = arith.constant 0 : index
    %c0_36 = arith.constant 0 : index
    %40 = vector.load %arg3[%39, %c1_33, %c1_34, %c0_35, %c0_36] : memref<3x3x3x4x1xf32, #tpu.memory_space<vmem>>, vector<1x1x1x4x1xf32>
    %41 = vector.shape_cast %40 : vector<1x1x1x4x1xf32> to vector<4x1xf32>
    %42 = vector.shape_cast %41 : vector<4x1xf32> to vector<1x4x1xf32>
    %43 = vector.broadcast %42 : vector<1x4x1xf32> to vector<16x4x16xf32>
    %44 = arith.mulf %38, %43 : vector<16x4x16xf32>
    %45 = arith.addf %36, %44 : vector<16x4x16xf32>
    %c0_37 = arith.constant 0 : index
    %c1_38 = arith.constant 1 : index
    %c0_39 = arith.constant 0 : index
    %c2_40 = arith.constant 2 : index
    %46 = vector.load %arg2[%c0_37, %c1_38, %c0_39, %c2_40] : memref<1x18x4x18xf32, #tpu.memory_space<vmem>>, vector<1x16x4x16xf32>
    %47 = vector.shape_cast %46 : vector<1x16x4x16xf32> to vector<16x4x16xf32>
    %48 = arith.index_cast %arg1 : i32 to index
    %c1_41 = arith.constant 1 : index
    %c2_42 = arith.constant 2 : index
    %c0_43 = arith.constant 0 : index
    %c0_44 = arith.constant 0 : index
    %49 = vector.load %arg3[%48, %c1_41, %c2_42, %c0_43, %c0_44] : memref<3x3x3x4x1xf32, #tpu.memory_space<vmem>>, vector<1x1x1x4x1xf32>
    %50 = vector.shape_cast %49 : vector<1x1x1x4x1xf32> to vector<4x1xf32>
    %51 = vector.shape_cast %50 : vector<4x1xf32> to vector<1x4x1xf32>
    %52 = vector.broadcast %51 : vector<1x4x1xf32> to vector<16x4x16xf32>
    %53 = arith.mulf %47, %52 : vector<16x4x16xf32>
    %54 = arith.addf %45, %53 : vector<16x4x16xf32>
    %c0_45 = arith.constant 0 : index
    %c2_46 = arith.constant 2 : index
    %c0_47 = arith.constant 0 : index
    %c0_48 = arith.constant 0 : index
    %55 = vector.load %arg2[%c0_45, %c2_46, %c0_47, %c0_48] : memref<1x18x4x18xf32, #tpu.memory_space<vmem>>, vector<1x16x4x16xf32>
    %56 = vector.shape_cast %55 : vector<1x16x4x16xf32> to vector<16x4x16xf32>
    %57 = arith.index_cast %arg1 : i32 to index
    %c2_49 = arith.constant 2 : index
    %c0_50 = arith.constant 0 : index
    %c0_51 = arith.constant 0 : index
    %c0_52 = arith.constant 0 : index
    %58 = vector.load %arg3[%57, %c2_49, %c0_50, %c0_51, %c0_52] : memref<3x3x3x4x1xf32, #tpu.memory_space<vmem>>, vector<1x1x1x4x1xf32>
    %59 = vector.shape_cast %58 : vector<1x1x1x4x1xf32> to vector<4x1xf32>
    %60 = vector.shape_cast %59 : vector<4x1xf32> to vector<1x4x1xf32>
    %61 = vector.broadcast %60 : vector<1x4x1xf32> to vector<16x4x16xf32>
    %62 = arith.mulf %56, %61 : vector<16x4x16xf32>
    %63 = arith.addf %54, %62 : vector<16x4x16xf32>
    %c0_53 = arith.constant 0 : index
    %c2_54 = arith.constant 2 : index
    %c0_55 = arith.constant 0 : index
    %c1_56 = arith.constant 1 : index
    %64 = vector.load %arg2[%c0_53, %c2_54, %c0_55, %c1_56] : memref<1x18x4x18xf32, #tpu.memory_space<vmem>>, vector<1x16x4x16xf32>
    %65 = vector.shape_cast %64 : vector<1x16x4x16xf32> to vector<16x4x16xf32>
    %66 = arith.index_cast %arg1 : i32 to index
    %c2_57 = arith.constant 2 : index
    %c1_58 = arith.constant 1 : index
    %c0_59 = arith.constant 0 : index
    %c0_60 = arith.constant 0 : index
    %67 = vector.load %arg3[%66, %c2_57, %c1_58, %c0_59, %c0_60] : memref<3x3x3x4x1xf32, #tpu.memory_space<vmem>>, vector<1x1x1x4x1xf32>
    %68 = vector.shape_cast %67 : vector<1x1x1x4x1xf32> to vector<4x1xf32>
    %69 = vector.shape_cast %68 : vector<4x1xf32> to vector<1x4x1xf32>
    %70 = vector.broadcast %69 : vector<1x4x1xf32> to vector<16x4x16xf32>
    %71 = arith.mulf %65, %70 : vector<16x4x16xf32>
    %72 = arith.addf %63, %71 : vector<16x4x16xf32>
    %c0_61 = arith.constant 0 : index
    %c2_62 = arith.constant 2 : index
    %c0_63 = arith.constant 0 : index
    %c2_64 = arith.constant 2 : index
    %73 = vector.load %arg2[%c0_61, %c2_62, %c0_63, %c2_64] : memref<1x18x4x18xf32, #tpu.memory_space<vmem>>, vector<1x16x4x16xf32>
    %74 = vector.shape_cast %73 : vector<1x16x4x16xf32> to vector<16x4x16xf32>
    %75 = arith.index_cast %arg1 : i32 to index
    %c2_65 = arith.constant 2 : index
    %c2_66 = arith.constant 2 : index
    %c0_67 = arith.constant 0 : index
    %c0_68 = arith.constant 0 : index
    %76 = vector.load %arg3[%75, %c2_65, %c2_66, %c0_67, %c0_68] : memref<3x3x3x4x1xf32, #tpu.memory_space<vmem>>, vector<1x1x1x4x1xf32>
    %77 = vector.shape_cast %76 : vector<1x1x1x4x1xf32> to vector<4x1xf32>
    %78 = vector.shape_cast %77 : vector<4x1xf32> to vector<1x4x1xf32>
    %79 = vector.broadcast %78 : vector<1x4x1xf32> to vector<16x4x16xf32>
    %80 = arith.mulf %74, %79 : vector<16x4x16xf32>
    %81 = arith.addf %72, %80 : vector<16x4x16xf32>
    %c0_69 = arith.constant 0 : index
    %c0_70 = arith.constant 0 : index
    %c0_71 = arith.constant 0 : index
    %c0_72 = arith.constant 0 : index
    %c0_73 = arith.constant 0 : index
    %82 = vector.load %arg4[%c0_69, %c0_70, %c0_71, %c0_72, %c0_73] : memref<1x1x16x4x16xf32, #tpu.memory_space<vmem>>, vector<1x1x16x4x16xf32>
    %83 = vector.shape_cast %82 : vector<1x1x16x4x16xf32> to vector<16x4x16xf32>
    %84 = vector.shape_cast %81 : vector<16x4x16xf32> to vector<1x1x16x4x16xf32>
    tpu.vector_store %arg4[%c0_69, %c0_70, %c0_71, %c0_72, %c0_73], %84 {strides = array<i32>} : memref<1x1x16x4x16xf32, #tpu.memory_space<vmem>>, vector<1x1x16x4x16xf32>,
    return
  }
  func.func @transform_0(%arg0: i32, %arg1: i32) -> (i32, i32, i32, i32) {
    %c0_i32 = arith.constant 0 : i32
    %c0_i32_0 = arith.constant 0 : i32
    %c0_i32_1 = arith.constant 0 : i32
    %c0_i32_2 = arith.constant 0 : i32
    return %arg0, %c0_i32, %c0_i32_0, %c0_i32_1 : i32, i32, i32, i32
  }
  func.func @transform_1(%arg0: i32, %arg1: i32) -> (i32, i32, i32, i32, i32) {
    %c0_i32 = arith.constant 0 : i32
    %c0_i32_0 = arith.constant 0 : i32
    %c0_i32_1 = arith.constant 0 : i32
    %c0_i32_2 = arith.constant 0 : i32
    %c0_i32_3 = arith.constant 0 : i32
    %c0_i32_4 = arith.constant 0 : i32
    return %c0_i32, %c0_i32_0, %c0_i32_1, %c0_i32_2, %c0_i32_3 : i32, i32, i32, i32, i32
  }
  func.func @transform_2(%arg0: i32, %arg1: i32) -> (i32, i32, i32, i32, i32) {
    %c0_i32 = arith.constant 0 : i32
    %c0_i32_0 = arith.constant 0 : i32
    %c0_i32_1 = arith.constant 0 : i32
    %c0_i32_2 = arith.constant 0 : i32
    return %arg1, %arg0, %c0_i32, %c0_i32_0, %c0_i32_1 : i32, i32, i32, i32, i32
  }
}

module attributes {stable_mosaic.version = 11 : i64} {
  func.func @_attn_kernel(%arg0: i32, %arg1: memref<1x256x2xf32, #tpu.memory_space<vmem>>, %arg2: memref<1x2x256xf32, #tpu.memory_space<vmem>>, %arg3: memref<1x2x256xf32, #tpu.memory_space<vmem>>) attributes {dimension_semantics = [#tpu.dimension_semantics<parallel>], iteration_bounds = array<i64: 2>, scalar_prefetch = 0 : i64, scratch_operands = 0 : i64, tpu.core_type = #tpu.core_type<tc>, window_params = [{transform_indices = @transform_0, window_bounds = array<i64: 1, 256, 2>}, {transform_indices = @transform_1, window_bounds = array<i64: 1, 2, 256>}, {transform_indices = @transform_2, window_bounds = array<i64: 1, 2, 256>}]} {
    %c0 = arith.constant 0 : index
    %c0_0 = arith.constant 0 : index
    %c0_1 = arith.constant 0 : index
    %0 = vector.load %arg1[%c0, %c0_0, %c0_1] : memref<1x256x2xf32, #tpu.memory_space<vmem>>, vector<1x256x2xf32>
    %c0_2 = arith.constant 0 : index
    %c0_3 = arith.constant 0 : index
    %c0_4 = arith.constant 0 : index
    %1 = vector.load %arg2[%c0_2, %c0_3, %c0_4] : memref<1x2x256xf32, #tpu.memory_space<vmem>>, vector<1x2x256xf32>
    %cst = arith.constant dense<0.000000e+00> : vector<1x256x256xf32>
    %2 = tpu.matmul %0, %0, %cst {dimension_numbers = #tpu.dot_dimension_numbers<[2], [2], [1], [1], [0, 0, 0, 1, 1, 1], [0], [0]>} : vector<1x256x2xf32>, vector<1x256x2xf32>, vector<1x256x256xf32> -> vector<1x256x256xf32>
    %cst_5 = arith.constant dense<0xFF800000> : vector<1x256xf32>
    %3 = vector.multi_reduction <maximumf>, %2, %cst_5 [2] : vector<1x256x256xf32> to vector<1x256xf32>
    %4 = vector.shape_cast %3 : vector<1x256xf32> to vector<1x256x1xf32>
    %5 = vector.broadcast %4 : vector<1x256x1xf32> to vector<1x256x256xf32>
    %6 = arith.subf %2, %5 : vector<1x256x256xf32>
    %7 = math.exp %6 : vector<1x256x256xf32>
    %cst_6 = arith.constant dense<0.000000e+00> : vector<1x256xf32>
    %8 = vector.multi_reduction <add>, %7, %cst_6 [2] : vector<1x256x256xf32> to vector<1x256xf32>
    %9 = vector.shape_cast %8 : vector<1x256xf32> to vector<1x256x1xf32>
    %10 = tpu.reciprocal %9 : vector<1x256x1xf32> -> vector<1x256x1xf32>
    %11 = vector.broadcast %10 : vector<1x256x1xf32> to vector<1x256x256xf32>
    %12 = arith.mulf %7, %11 : vector<1x256x256xf32>
    %cst_7 = arith.constant dense<0.000000e+00> : vector<1x2x256xf32>
    %13 = tpu.matmul %1, %12, %cst_7 {dimension_numbers = #tpu.dot_dimension_numbers<[2], [2], [1], [1], [0, 0, 0, 1, 1, 1], [0], [0]>} : vector<1x2x256xf32>, vector<1x256x256xf32>, vector<1x2x256xf32> -> vector<1x2x256xf32>
    %c0_8 = arith.constant 0 : index
    %c0_9 = arith.constant 0 : index
    %c0_10 = arith.constant 0 : index
    %14 = vector.load %arg3[%c0_8, %c0_9, %c0_10] : memref<1x2x256xf32, #tpu.memory_space<vmem>>, vector<1x2x256xf32>
    tpu.vector_store %arg3[%c0_8, %c0_9, %c0_10], %13 {strides = array<i32>} : memref<1x2x256xf32, #tpu.memory_space<vmem>>, vector<1x2x256xf32>,
    return
  }
  func.func @transform_0(%arg0: i32) -> (i32, i32, i32) {
    %c0_i32 = arith.constant 0 : i32
    %c0_i32_0 = arith.constant 0 : i32
    %c0_i32_1 = arith.constant 0 : i32
    return %arg0, %c0_i32, %c0_i32_0 : i32, i32, i32
  }
  func.func @transform_1(%arg0: i32) -> (i32, i32, i32) {
    %c0_i32 = arith.constant 0 : i32
    %c0_i32_0 = arith.constant 0 : i32
    %c0_i32_1 = arith.constant 0 : i32
    return %arg0, %c0_i32, %c0_i32_0 : i32, i32, i32
  }
  func.func @transform_2(%arg0: i32) -> (i32, i32, i32) {
    %c0_i32 = arith.constant 0 : i32
    %c0_i32_0 = arith.constant 0 : i32
    %c0_i32_1 = arith.constant 0 : i32
    return %arg0, %c0_i32, %c0_i32_0 : i32, i32, i32
  }
}

module attributes {stable_mosaic.version = 11 : i64} {
  func.func @_attn_kernel(%arg0: i32, %arg1: memref<4x64x2xf32, #tpu.memory_space<vmem>>, %arg2: memref<4x2x64xf32, #tpu.memory_space<vmem>>, %arg3: memref<4x2x64xf32, #tpu.memory_space<vmem>>) attributes {dimension_semantics = [#tpu.dimension_semantics<parallel>], iteration_bounds = array<i64: 2>, scalar_prefetch = 0 : i64, scratch_operands = 0 : i64, tpu.core_type = #tpu.core_type<tc>, window_params = [{transform_indices = @transform_0, window_bounds = array<i64: 4, 64, 2>}, {transform_indices = @transform_1, window_bounds = array<i64: 4, 2, 64>}, {transform_indices = @transform_2, window_bounds = array<i64: 4, 2, 64>}]} {
    %c0 = arith.constant 0 : index
    %c0_0 = arith.constant 0 : index
    %c0_1 = arith.constant 0 : index
    %0 = vector.load %arg1[%c0, %c0_0, %c0_1] : memref<4x64x2xf32, #tpu.memory_space<vmem>>, vector<4x64x2xf32>
    %c0_2 = arith.constant 0 : index
    %c0_3 = arith.constant 0 : index
    %c0_4 = arith.constant 0 : index
    %1 = vector.load %arg2[%c0_2, %c0_3, %c0_4] : memref<4x2x64xf32, #tpu.memory_space<vmem>>, vector<4x2x64xf32>
    %cst = arith.constant dense<0.000000e+00> : vector<4x64x64xf32>
    %2 = tpu.matmul %0, %0, %cst {dimension_numbers = #tpu.dot_dimension_numbers<[2], [2], [1], [1], [0, 0, 0, 1, 1, 1], [0], [0]>} : vector<4x64x2xf32>, vector<4x64x2xf32>, vector<4x64x64xf32> -> vector<4x64x64xf32>
    %cst_5 = arith.constant dense<0xFF800000> : vector<4x64xf32>
    %3 = vector.multi_reduction <maximumf>, %2, %cst_5 [2] : vector<4x64x64xf32> to vector<4x64xf32>
    %4 = vector.shape_cast %3 : vector<4x64xf32> to vector<4x64x1xf32>
    %5 = vector.broadcast %4 : vector<4x64x1xf32> to vector<4x64x64xf32>
    %6 = arith.subf %2, %5 : vector<4x64x64xf32>
    %7 = math.exp %6 : vector<4x64x64xf32>
    %cst_6 = arith.constant dense<0.000000e+00> : vector<4x64xf32>
    %8 = vector.multi_reduction <add>, %7, %cst_6 [2] : vector<4x64x64xf32> to vector<4x64xf32>
    %9 = vector.shape_cast %8 : vector<4x64xf32> to vector<4x64x1xf32>
    %10 = tpu.reciprocal %9 : vector<4x64x1xf32> -> vector<4x64x1xf32>
    %11 = vector.broadcast %10 : vector<4x64x1xf32> to vector<4x64x64xf32>
    %12 = arith.mulf %7, %11 : vector<4x64x64xf32>
    %cst_7 = arith.constant dense<0.000000e+00> : vector<4x2x64xf32>
    %13 = tpu.matmul %1, %12, %cst_7 {dimension_numbers = #tpu.dot_dimension_numbers<[2], [2], [1], [1], [0, 0, 0, 1, 1, 1], [0], [0]>} : vector<4x2x64xf32>, vector<4x64x64xf32>, vector<4x2x64xf32> -> vector<4x2x64xf32>
    %c0_8 = arith.constant 0 : index
    %c0_9 = arith.constant 0 : index
    %c0_10 = arith.constant 0 : index
    %14 = vector.load %arg3[%c0_8, %c0_9, %c0_10] : memref<4x2x64xf32, #tpu.memory_space<vmem>>, vector<4x2x64xf32>
    tpu.vector_store %arg3[%c0_8, %c0_9, %c0_10], %13 {strides = array<i32>} : memref<4x2x64xf32, #tpu.memory_space<vmem>>, vector<4x2x64xf32>,
    return
  }
  func.func @transform_0(%arg0: i32) -> (i32, i32, i32) {
    %c0_i32 = arith.constant 0 : i32
    %c0_i32_0 = arith.constant 0 : i32
    %c0_i32_1 = arith.constant 0 : i32
    return %arg0, %c0_i32, %c0_i32_0 : i32, i32, i32
  }
  func.func @transform_1(%arg0: i32) -> (i32, i32, i32) {
    %c0_i32 = arith.constant 0 : i32
    %c0_i32_0 = arith.constant 0 : i32
    %c0_i32_1 = arith.constant 0 : i32
    return %arg0, %c0_i32, %c0_i32_0 : i32, i32, i32
  }
  func.func @transform_2(%arg0: i32) -> (i32, i32, i32) {
    %c0_i32 = arith.constant 0 : i32
    %c0_i32_0 = arith.constant 0 : i32
    %c0_i32_1 = arith.constant 0 : i32
    return %arg0, %c0_i32, %c0_i32_0 : i32, i32, i32
  }
}

module attributes {stable_mosaic.version = 11 : i64} {
  func.func @_attn_kernel(%arg0: i32, %arg1: memref<16x16x2xf32, #tpu.memory_space<vmem>>, %arg2: memref<16x2x16xf32, #tpu.memory_space<vmem>>, %arg3: memref<16x2x16xf32, #tpu.memory_space<vmem>>) attributes {dimension_semantics = [#tpu.dimension_semantics<parallel>], iteration_bounds = array<i64: 2>, scalar_prefetch = 0 : i64, scratch_operands = 0 : i64, tpu.core_type = #tpu.core_type<tc>, window_params = [{transform_indices = @transform_0, window_bounds = array<i64: 16, 16, 2>}, {transform_indices = @transform_1, window_bounds = array<i64: 16, 2, 16>}, {transform_indices = @transform_2, window_bounds = array<i64: 16, 2, 16>}]} {
    %c0 = arith.constant 0 : index
    %c0_0 = arith.constant 0 : index
    %c0_1 = arith.constant 0 : index
    %0 = vector.load %arg1[%c0, %c0_0, %c0_1] : memref<16x16x2xf32, #tpu.memory_space<vmem>>, vector<16x16x2xf32>
    %c0_2 = arith.constant 0 : index
    %c0_3 = arith.constant 0 : index
    %c0_4 = arith.constant 0 : index
    %1 = vector.load %arg2[%c0_2, %c0_3, %c0_4] : memref<16x2x16xf32, #tpu.memory_space<vmem>>, vector<16x2x16xf32>
    %cst = arith.constant dense<0.000000e+00> : vector<16x16x16xf32>
    %2 = tpu.matmul %0, %0, %cst {dimension_numbers = #tpu.dot_dimension_numbers<[2], [2], [1], [1], [0, 0, 0, 1, 1, 1], [0], [0]>} : vector<16x16x2xf32>, vector<16x16x2xf32>, vector<16x16x16xf32> -> vector<16x16x16xf32>
    %cst_5 = arith.constant dense<0xFF800000> : vector<16x16xf32>
    %3 = vector.multi_reduction <maximumf>, %2, %cst_5 [2] : vector<16x16x16xf32> to vector<16x16xf32>
    %4 = vector.shape_cast %3 : vector<16x16xf32> to vector<16x16x1xf32>
    %5 = vector.broadcast %4 : vector<16x16x1xf32> to vector<16x16x16xf32>
    %6 = arith.subf %2, %5 : vector<16x16x16xf32>
    %7 = math.exp %6 : vector<16x16x16xf32>
    %cst_6 = arith.constant dense<0.000000e+00> : vector<16x16xf32>
    %8 = vector.multi_reduction <add>, %7, %cst_6 [2] : vector<16x16x16xf32> to vector<16x16xf32>
    %9 = vector.shape_cast %8 : vector<16x16xf32> to vector<16x16x1xf32>
    %10 = tpu.reciprocal %9 : vector<16x16x1xf32> -> vector<16x16x1xf32>
    %11 = vector.broadcast %10 : vector<16x16x1xf32> to vector<16x16x16xf32>
    %12 = arith.mulf %7, %11 : vector<16x16x16xf32>
    %cst_7 = arith.constant dense<0.000000e+00> : vector<16x2x16xf32>
    %13 = tpu.matmul %1, %12, %cst_7 {dimension_numbers = #tpu.dot_dimension_numbers<[2], [2], [1], [1], [0, 0, 0, 1, 1, 1], [0], [0]>} : vector<16x2x16xf32>, vector<16x16x16xf32>, vector<16x2x16xf32> -> vector<16x2x16xf32>
    %c0_8 = arith.constant 0 : index
    %c0_9 = arith.constant 0 : index
    %c0_10 = arith.constant 0 : index
    %14 = vector.load %arg3[%c0_8, %c0_9, %c0_10] : memref<16x2x16xf32, #tpu.memory_space<vmem>>, vector<16x2x16xf32>
    tpu.vector_store %arg3[%c0_8, %c0_9, %c0_10], %13 {strides = array<i32>} : memref<16x2x16xf32, #tpu.memory_space<vmem>>, vector<16x2x16xf32>,
    return
  }
  func.func @transform_0(%arg0: i32) -> (i32, i32, i32) {
    %c0_i32 = arith.constant 0 : i32
    %c0_i32_0 = arith.constant 0 : i32
    %c0_i32_1 = arith.constant 0 : i32
    return %arg0, %c0_i32, %c0_i32_0 : i32, i32, i32
  }
  func.func @transform_1(%arg0: i32) -> (i32, i32, i32) {
    %c0_i32 = arith.constant 0 : i32
    %c0_i32_0 = arith.constant 0 : i32
    %c0_i32_1 = arith.constant 0 : i32
    return %arg0, %c0_i32, %c0_i32_0 : i32, i32, i32
  }
  func.func @transform_2(%arg0: i32) -> (i32, i32, i32) {
    %c0_i32 = arith.constant 0 : i32
    %c0_i32_0 = arith.constant 0 : i32
    %c0_i32_1 = arith.constant 0 : i32
    return %arg0, %c0_i32, %c0_i32_0 : i32, i32, i32
  }
}

module attributes {stable_mosaic.version = 11 : i64} {
  func.func @_out_conv_kernel(%arg0: i32, %arg1: i32, %arg2: memref<1x2x128xf32, #tpu.memory_space<vmem>>, %arg3: memref<1x2x128xf32, #tpu.memory_space<vmem>>, %arg4: memref<1x2x128xf32, #tpu.memory_space<vmem>>, %arg5: memref<3x4x2xf32, #tpu.memory_space<vmem>>, %arg6: memref<1x4x128xf32, #tpu.memory_space<vmem>>) attributes {dimension_semantics = [#tpu.dimension_semantics<parallel>, #tpu.dimension_semantics<parallel>], iteration_bounds = array<i64: 2, 2>, scalar_prefetch = 0 : i64, scratch_operands = 0 : i64, tpu.core_type = #tpu.core_type<tc>, window_params = [{transform_indices = @transform_0, window_bounds = array<i64: 1, 2, 128>}, {transform_indices = @transform_1, window_bounds = array<i64: 1, 2, 128>}, {transform_indices = @transform_2, window_bounds = array<i64: 1, 2, 128>}, {pipeline_mode = #tpu.pipeline_mode<synchronous>, transform_indices = @transform_3, window_bounds = array<i64: 3, 4, 2>}, {transform_indices = @transform_4, window_bounds = array<i64: 1, 4, 128>}]} {
    %c0 = arith.constant 0 : index
    %c0_0 = arith.constant 0 : index
    %c0_1 = arith.constant 0 : index
    %0 = vector.load %arg5[%c0, %c0_0, %c0_1] : memref<3x4x2xf32, #tpu.memory_space<vmem>>, vector<1x4x2xf32>
    %1 = vector.shape_cast %0 : vector<1x4x2xf32> to vector<4x2xf32>
    %c0_2 = arith.constant 0 : index
    %c0_3 = arith.constant 0 : index
    %c0_4 = arith.constant 0 : index
    %2 = vector.load %arg2[%c0_2, %c0_3, %c0_4] : memref<1x2x128xf32, #tpu.memory_space<vmem>>, vector<1x2x128xf32>
    %3 = vector.shape_cast %2 : vector<1x2x128xf32> to vector<2x128xf32>
    %cst = arith.constant dense<0.000000e+00> : vector<4x128xf32>
    %4 = tpu.matmul %1, %3, %cst {dimension_numbers = #tpu.dot_dimension_numbers<[1], [0], [0], [1], [0, 0, 1, 1], [], []>} : vector<4x2xf32>, vector<2x128xf32>, vector<4x128xf32> -> vector<4x128xf32>
    %c1 = arith.constant 1 : index
    %c0_5 = arith.constant 0 : index
    %c0_6 = arith.constant 0 : index
    %5 = vector.load %arg5[%c1, %c0_5, %c0_6] : memref<3x4x2xf32, #tpu.memory_space<vmem>>, vector<1x4x2xf32>
    %6 = vector.shape_cast %5 : vector<1x4x2xf32> to vector<4x2xf32>
    %c0_7 = arith.constant 0 : index
    %c0_8 = arith.constant 0 : index
    %c0_9 = arith.constant 0 : index
    %7 = vector.load %arg3[%c0_7, %c0_8, %c0_9] : memref<1x2x128xf32, #tpu.memory_space<vmem>>, vector<1x2x128xf32>
    %8 = vector.shape_cast %7 : vector<1x2x128xf32> to vector<2x128xf32>
    %cst_10 = arith.constant dense<0.000000e+00> : vector<4x128xf32>
    %9 = tpu.matmul %6, %8, %cst_10 {dimension_numbers = #tpu.dot_dimension_numbers<[1], [0], [0], [1], [0, 0, 1, 1], [], []>} : vector<4x2xf32>, vector<2x128xf32>, vector<4x128xf32> -> vector<4x128xf32>
    %10 = arith.addf %4, %9 : vector<4x128xf32>
    %c2 = arith.constant 2 : index
    %c0_11 = arith.constant 0 : index
    %c0_12 = arith.constant 0 : index
    %11 = vector.load %arg5[%c2, %c0_11, %c0_12] : memref<3x4x2xf32, #tpu.memory_space<vmem>>, vector<1x4x2xf32>
    %12 = vector.shape_cast %11 : vector<1x4x2xf32> to vector<4x2xf32>
    %c0_13 = arith.constant 0 : index
    %c0_14 = arith.constant 0 : index
    %c0_15 = arith.constant 0 : index
    %13 = vector.load %arg4[%c0_13, %c0_14, %c0_15] : memref<1x2x128xf32, #tpu.memory_space<vmem>>, vector<1x2x128xf32>
    %14 = vector.shape_cast %13 : vector<1x2x128xf32> to vector<2x128xf32>
    %cst_16 = arith.constant dense<0.000000e+00> : vector<4x128xf32>
    %15 = tpu.matmul %12, %14, %cst_16 {dimension_numbers = #tpu.dot_dimension_numbers<[1], [0], [0], [1], [0, 0, 1, 1], [], []>} : vector<4x2xf32>, vector<2x128xf32>, vector<4x128xf32> -> vector<4x128xf32>
    %16 = arith.addf %10, %15 : vector<4x128xf32>
    %c0_17 = arith.constant 0 : index
    %c0_18 = arith.constant 0 : index
    %c0_19 = arith.constant 0 : index
    %17 = vector.load %arg6[%c0_17, %c0_18, %c0_19] : memref<1x4x128xf32, #tpu.memory_space<vmem>>, vector<1x4x128xf32>
    %18 = vector.shape_cast %17 : vector<1x4x128xf32> to vector<4x128xf32>
    %19 = vector.shape_cast %16 : vector<4x128xf32> to vector<1x4x128xf32>
    tpu.vector_store %arg6[%c0_17, %c0_18, %c0_19], %19 {strides = array<i32>} : memref<1x4x128xf32, #tpu.memory_space<vmem>>, vector<1x4x128xf32>,
    return
  }
  func.func @transform_0(%arg0: i32, %arg1: i32) -> (i32, i32, i32) {
    %c0_i32 = arith.constant 0 : i32
    %c0_i32_0 = arith.constant 0 : i32
    return %arg0, %c0_i32, %arg1 : i32, i32, i32
  }
  func.func @transform_1(%arg0: i32, %arg1: i32) -> (i32, i32, i32) {
    %c0_i32 = arith.constant 0 : i32
    %c0_i32_0 = arith.constant 0 : i32
    return %arg0, %c0_i32, %arg1 : i32, i32, i32
  }
  func.func @transform_2(%arg0: i32, %arg1: i32) -> (i32, i32, i32) {
    %c0_i32 = arith.constant 0 : i32
    %c0_i32_0 = arith.constant 0 : i32
    return %arg0, %c0_i32, %arg1 : i32, i32, i32
  }
  func.func @transform_3(%arg0: i32, %arg1: i32) -> (i32, i32, i32) {
    %c0_i32 = arith.constant 0 : i32
    %c0_i32_0 = arith.constant 0 : i32
    %c0_i32_1 = arith.constant 0 : i32
    %c0_i32_2 = arith.constant 0 : i32
    return %c0_i32, %c0_i32_0, %c0_i32_1 : i32, i32, i32
  }
  func.func @transform_4(%arg0: i32, %arg1: i32) -> (i32, i32, i32) {
    %c0_i32 = arith.constant 0 : i32
    %c0_i32_0 = arith.constant 0 : i32
    return %arg0, %c0_i32, %arg1 : i32, i32, i32
  }
}

</mosaic_0001>

<llo_original>
// kernel: squeeze.13
$region0: #{squeeze.13}
  %s0 = inlined_call_operand.vmem [shape: f32[12,3,3], index: 0, kind: input, shape index: {}]
  %s1 = inlined_call_operand.vmem [shape: f32[4,3,3,3], index: 1, kind: output, shape index: {}]
  $region1: #{squeeze.13} parent=0
    #allocation0 [shape = 'u8[36864]{0}', space=vmem, size = 0x9000, scoped, tag = 'scoped mem for output reshape']
    #allocation1 [shape = 'u8[12288]{0}', space=vmem, size = 0x3000, scoped, tag = 'scoped mem for input reshape']
    %s3 = sshll.u32 1, 4
    %s4 = ssub.s32 %s3, 1
    %s5 = smul.addr 4, 2
    %s6 = scalar_lea.vmem %s0, %s5
    %v7 = vld [vmem:[%s6] sm:%s4]
    %s8 = scalar_lea.vmem [#allocation1], 16
    %9 = vst [vmem:[%s8] sm:%s4] %v7
    %s10 = scalar_lea.vmem %s0, 4
    %v11 = vld [vmem:[%s10] sm:%s4]
    %s12 = scalar_lea.vmem [#allocation1], 8
    %13 = vst [vmem:[%s12] sm:%s4] %v11
    %v14 = vld [vmem:[%s0] sm:%s4]
    %15 = vst [vmem:[#allocation1] sm:%s4] %v14
    %v16 = vld [vmem:[#allocation1] sm:$0x7]
    %vm17 = vcmask 23552
    %18 = vst.msk [vmem:[#allocation0] ss:$8 sm:$0x7] %vm17, %v16
    %s19 = scalar_lea.vmem [#allocation1], 8
    %v20 = vld [vmem:[%s19] sm:$0x7]
    %vm21 = vcmask 23552
    %s22 = scalar_lea.vmem [#allocation0], 24
    %23 = vst.msk [vmem:[%s22] ss:$8 sm:$0x7] %vm21, %v20
    %s24 = scalar_lea.vmem [#allocation1], 16
    %v25 = vld [vmem:[%s24] sm:$0x7]
    %vm26 = vcmask 23552
    %s27 = scalar_lea.vmem [#allocation0], 48
    %28 = vst.msk [vmem:[%s27] ss:$8 sm:$0x7] %vm26, %v25
    %v29 = vld.sshfl [vmem:[#allocation1] sm:$0xff pattern:$0xaaa98210]
    %s30 = scalar_lea.vmem [#allocation1], 10
    %v31 = vld [vmem:[%s30] sm:$0xc0]
    %vm32 = vcmask 1047558
    %v33 = vsel %vm32, %v31, %v29
    %34 = vrot.lane.b32.xlu0 %v33, 125
    %v35 = vpop.permute.xlu0 %34
    %vm36 = vcmask 23552
    %s37 = scalar_lea.vmem [#allocation0], 1
    %38 = vst.msk [vmem:[%s37] ss:$8 sm:$0xf] %vm36, %v35
    %s39 = scalar_lea.vmem [#allocation0], 1
    %40 = vst.msk [vmem:[%s39] ss:$8 sm:$0xf0] %vm36, %v35
    %s41 = scalar_lea.vmem [#allocation1], 18
    %v42 = vld [vmem:[%s41] sm:$0x1]
    %43 = vrot.lane.b32.xlu0 %v42, 125
    %v44 = vpop.permute.xlu0 %43
    %vm45 = vcmask 23552
    %s46 = scalar_lea.vmem [#allocation0], 65
    %47 = vst.msk [vmem:[%s46] sm:$0x1] %vm45, %v44
    %v48 = vld.sshfl [vmem:[#allocation1] sm:$0xff pattern:$0xaaa98210]
    %s49 = scalar_lea.vmem [#allocation1], 10
    %v50 = vld [vmem:[%s49] sm:$0xc0]
    %vm51 = vcmask 1047558
    %v52 = vsel %vm51, %v50, %v48
    %53 = vrot.lane.b32.xlu0 %v52, 122
    %v54 = vpop.permute.xlu0 %53
    %vm55 = vcmask 23552
    %s56 = scalar_lea.vmem [#allocation0], 2
    %57 = vst.msk [vmem:[%s56] ss:$8 sm:$0xf] %vm55, %v54
    %s58 = scalar_lea.vmem [#allocation0], 2
    %59 = vst.msk [vmem:[%s58] ss:$8 sm:$0xf0] %vm55, %v54
    %s60 = scalar_lea.vmem [#allocation1], 18
    %v61 = vld [vmem:[%s60] sm:$0x1]
    %62 = vrot.lane.b32.xlu0 %v61, 122
    %v63 = vpop.permute.xlu0 %62
    %vm64 = vcmask 23552
    %s65 = scalar_lea.vmem [#allocation0], 66
    %66 = vst.msk [vmem:[%s65] sm:$0x1] %vm64, %v63
    %v67 = vld.sshfl [vmem:[#allocation1] sm:$0xff pattern:$0xaaa98210]
    %s68 = scalar_lea.vmem [#allocation1], 10
    %v69 = vld [vmem:[%s68] sm:$0xc0]
    %vm70 = vcmask 1047558
    %v71 = vsel %vm70, %v69, %v67
    %72 = vrot.lane.b32.xlu0 %v71, 119
    %v73 = vpop.permute.xlu0 %72
    %vm74 = vcmask 23552
    %s75 = scalar_lea.vmem [#allocation0], 3
    %76 = vst.msk [vmem:[%s75] ss:$8 sm:$0xf] %vm74, %v73
    %s77 = scalar_lea.vmem [#allocation0], 3
    %78 = vst.msk [vmem:[%s77] ss:$8 sm:$0xf0] %vm74, %v73
    %s79 = scalar_lea.vmem [#allocation1], 18
    %v80 = vld [vmem:[%s79] sm:$0x1]
    %81 = vrot.lane.b32.xlu0 %v80, 119
    %v82 = vpop.permute.xlu0 %81
    %vm83 = vcmask 23552
    %s84 = scalar_lea.vmem [#allocation0], 67
    %85 = vst.msk [vmem:[%s84] sm:$0x1] %vm83, %v82
    %s87 = sshll.u32 1, 4
    %s88 = ssub.s32 %s87, 1
    %v90 = vld [vmem:[#allocation0] sm:%s88]
    %s91 = sshll.u32 1, 4
    %s92 = ssub.s32 %s91, 1
    %93 = vst [vmem:[%s1] sm:%s92] %v90
    %s94 = scalar_lea.vmem [#allocation0], 8
    %v95 = vld [vmem:[%s94] sm:%s88]
    %s96 = sshll.u32 1, 4
    %s97 = ssub.s32 %s96, 1
    %s98 = scalar_lea.vmem %s1, 4
    %99 = vst [vmem:[%s98] sm:%s97] %v95
    %s100 = scalar_lea.vmem [#allocation0], 16
    %v101 = vld [vmem:[%s100] sm:%s88]
    %s102 = sshll.u32 1, 4
    %s103 = ssub.s32 %s102, 1
    %s104 = smul.addr 4, 2
    %s105 = scalar_lea.vmem %s1, %s104
    %106 = vst [vmem:[%s105] sm:%s103] %v101
    %s107 = scalar_lea.vmem [#allocation0], 24
    %v108 = vld [vmem:[%s107] sm:%s88]
    %s109 = sshll.u32 1, 4
    %s110 = ssub.s32 %s109, 1
    %s111 = smul.addr 4, 3
    %s112 = scalar_lea.vmem %s1, %s111
    %113 = vst [vmem:[%s112] sm:%s110] %v108
    %s114 = scalar_lea.vmem [#allocation0], 32
    %v115 = vld [vmem:[%s114] sm:%s88]
    %s116 = sshll.u32 1, 4
    %s117 = ssub.s32 %s116, 1
    %s118 = smul.addr 4, 4
    %s119 = scalar_lea.vmem %s1, %s118
    %120 = vst [vmem:[%s119] sm:%s117] %v115
    %s121 = scalar_lea.vmem [#allocation0], 40
    %v122 = vld [vmem:[%s121] sm:%s88]
    %s123 = sshll.u32 1, 4
    %s124 = ssub.s32 %s123, 1
    %s125 = smul.addr 4, 5
    %s126 = scalar_lea.vmem %s1, %s125
    %127 = vst [vmem:[%s126] sm:%s124] %v122
    %s128 = scalar_lea.vmem [#allocation0], 48
    %v129 = vld [vmem:[%s128] sm:%s88]
    %s130 = sshll.u32 1, 4
    %s131 = ssub.s32 %s130, 1
    %s132 = smul.addr 4, 6
    %s133 = scalar_lea.vmem %s1, %s132
    %134 = vst [vmem:[%s133] sm:%s131] %v129
    %s135 = scalar_lea.vmem [#allocation0], 56
    %v136 = vld [vmem:[%s135] sm:%s88]
    %s137 = sshll.u32 1, 4
    %s138 = ssub.s32 %s137, 1
    %s139 = smul.addr 4, 7
    %s140 = scalar_lea.vmem %s1, %s139
    %141 = vst [vmem:[%s140] sm:%s138] %v136
    %s142 = scalar_lea.vmem [#allocation0], 64
    %v143 = vld [vmem:[%s142] sm:%s88]
    %s144 = sshll.u32 1, 4
    %s145 = ssub.s32 %s144, 1
    %s146 = smul.addr 4, 8
    %s147 = scalar_lea.vmem %s1, %s146
    %148 = vst [vmem:[%s147] sm:%s145] %v143

// kernel: mwsa_forward.5
$region0: #{mwsa_forward.5}
  #allocation0 [shape = 'u32[]', space=smem, size = 0x4, offset = 0x4, fixed_abs, tag = 'smem constant byte address 0x4 - core index']
  #allocation1 [shape = 'u32[144,128]{1,0:T(1,128)}', space=vmem, size = 0x12000, scoped, tag = 'internal scratch']
  %s0 = inlined_call_operand.vmem [shape: f32[2,18,4,18], index: 0, kind: input, shape index: {}]
  %s1 = inlined_call_operand.vmem [shape: f32[3,3,3,4,1], index: 1, kind: input, shape index: {}]
  %s2 = inlined_call_operand.vmem [shape: f32[3,2,16,4,16], index: 2, kind: output, shape index: {}]
  %s3 = sld [smem:[#allocation0]]
  $region41: #{mwsa_forward.5} parent=0
    _
  %s5 = ssub.s32 1, %s3
  %s6 = scalar_select 0, %s5, %s3
  loop: start=0, step=1, limit=8
  $region2: #{mwsa_forward.5} parent=0 // loop_pre_header
    _
  $region3: #{mwsa_forward.5} parent=0 // loop_header
    %s8 = sphi 0, %s12
    %p9 = scmp.ge.s32.totalorder %s8, 8
    %s15 = sphi 0, %s27
    %s16 = sphi 0, %s23
    %s17 = sphi 0, %s15
    %s18 = sphi 0, %s16
    %s19 = sphi 0, %s17
    %s20 = sphi 0, %s18
    %s30 = sphi 0, %s32
    %s33 = sphi 0, %s30
    %s34 = sphi 0, %s33
    %s50 = sphi 0, %s34
    %s54 = sphi 0, %s54
    %s56 = sphi 0, %s54
    %s57 = sphi 0, %s56
    %s71 = sphi 0, %s57
    %s79 = sphi 0, %s81
    %s82 = sphi 0, %s79
    %s83 = sphi 0, %s82
    %s99 = sphi 0, %s83
  $region4: #{mwsa_forward.5} parent=0 // loop_header_branch
    %11 = sbr.rel (%p9) target = $region8
  $region5: #{mwsa_forward.5} parent=0 // loop_body
    %s13 = ssub.s32 %s8, 1
    %s14 = ssub.s32 %s8, 2
    %s21 = sadd.s32 1, %s16
    %p22 = scmp.ge.s32.totalorder %s21, 3
    %s23 = scalar_select %p22, 0, %s21
    %s24 = sadd.s32 1, %s15
    %s25 = scalar_select %p22, %s24, %s15
    %p26 = scmp.ge.s32.totalorder %s25, 2
    %s27 = scalar_select %p26, 0, %s25
    %s28 = ssub.s32 %s15, %s27
    %p29 = scmp.eq.s32.totalorder %s28, 0
    %s31 = sadd.s32 %s30, 1
    %s32 = scalar_select %p29, %s30, %s31
    %p35 = pneg %p29
    %p36 = scmp.eq.s32.totalorder %s8, 5
    %p37 = por %p35, %p36
    %p38 = scmp.ne.s32.totalorder %s30, %s33
    %p39 = scmp.eq.s32.totalorder %s8, 0
    %p40 = por %p38, %p39
    %p41 = scmp.ne.s32.totalorder %s30, %s33
    %p42 = scmp.eq.s32.totalorder %s13, 5
    %p43 = por %p41, %p42
    %p44 = scmp.ne.s32.totalorder %s33, %s34
    %p45 = scmp.eq.s32.totalorder %s13, 0
    %p46 = por %p44, %p45
    %p47 = scmp.ne.s32.totalorder %s33, %s34
    %p48 = scmp.eq.s32.totalorder %s14, 5
    %p49 = por %p47, %p48
    %p51 = scmp.ne.s32.totalorder %s34, %s50
    %p52 = scmp.eq.s32.totalorder %s14, 0
    %p53 = por %p51, %p52
    %s55 = sadd.s32 %s54, 1
    %p58 = scmp.eq.s32.totalorder %s8, 5
    %p59 = scmp.ne.s32.totalorder %s54, %s56
    %p60 = scmp.eq.s32.totalorder %s8, 0
    %p61 = por %p59, %p60
    %p62 = scmp.ne.s32.totalorder %s54, %s56
    %p63 = scmp.eq.s32.totalorder %s13, 5
    %p64 = por %p62, %p63
    %p65 = scmp.ne.s32.totalorder %s56, %s57
    %p66 = scmp.eq.s32.totalorder %s13, 0
    %p67 = por %p65, %p66
    %p68 = scmp.ne.s32.totalorder %s56, %s57
    %p69 = scmp.eq.s32.totalorder %s14, 5
    %p70 = por %p68, %p69
    %p72 = scmp.ne.s32.totalorder %s57, %s71
    %p73 = scmp.eq.s32.totalorder %s14, 0
    %p74 = por %p72, %p73
    %s75 = ssub.s32 %s16, %s23
    %s76 = ssub.s32 %s15, %s27
    %s77 = sor.u32 %s75, %s76
    %p78 = scmp.eq.s32.totalorder %s77, 0
    %s80 = sadd.s32 %s79, 1
    %s81 = scalar_select %p78, %s79, %s80
    %p84 = pneg %p78
    %p85 = scmp.eq.s32.totalorder %s8, 5
    %p86 = por %p84, %p85
    %p87 = scmp.ne.s32.totalorder %s79, %s82
    %p88 = scmp.eq.s32.totalorder %s8, 0
    %p89 = por %p87, %p88
    %p90 = scmp.ne.s32.totalorder %s79, %s82
    %p91 = scmp.eq.s32.totalorder %s13, 5
    %p92 = por %p90, %p91
    %p93 = scmp.ne.s32.totalorder %s82, %s83
    %p94 = scmp.eq.s32.totalorder %s13, 0
    %p95 = por %p93, %p94
    %p96 = scmp.ne.s32.totalorder %s82, %s83
    %p97 = scmp.eq.s32.totalorder %s14, 5
    %p98 = por %p96, %p97
    %p100 = scmp.ne.s32.totalorder %s83, %s99
    %p101 = scmp.eq.s32.totalorder %s14, 0
    %p102 = por %p100, %p101
    %p103 = scmp.le.s32.totalorder 1, %s8
    %p104 = scmp.lt.s32.totalorder %s8, 7
    %p105 = pnand %p103, %p104
    %p106 = pneg %p105
    // Predicated region
    $region9: #{mwsa_forward.5} parent=5 // pred_check
      _
    $region10: #{mwsa_forward.5} parent=5 // pred_check_branch
      %108 = sbr.rel (%p105) target = $region12
    $region11: #{mwsa_forward.5} parent=5 // pred_region
      %s109 = ssub.s32 %s8, 1
      // Predicated region
      $region13: #{mwsa_forward.5} parent=11 // pred_check
        %p110 = pneg %p67
      $region14: #{mwsa_forward.5} parent=11 // pred_check_branch
        %112 = sbr.rel (%p110) target = $region16
      $region15: #{mwsa_forward.5} parent=11 // pred_region
        _
      $region16: #{mwsa_forward.5} parent=11 // pred_fallthru
        _
    $region12: #{mwsa_forward.5} parent=5 // pred_fallthru
      _
    %p113 = scmp.lt.s32.totalorder %s8, 6
    // Predicated region
    $region17: #{mwsa_forward.5} parent=5 // pred_check
      %p114 = pneg %p113
    $region18: #{mwsa_forward.5} parent=5 // pred_check_branch
      %116 = sbr.rel (%p114) target = $region20
    $region19: #{mwsa_forward.5} parent=5 // pred_region
      // Predicated region
      $region21: #{mwsa_forward.5} parent=19 // pred_check
        %p117 = pneg %p40
      $region22: #{mwsa_forward.5} parent=19 // pred_check_branch
        %119 = sbr.rel (%p117) target = $region24
      $region23: #{mwsa_forward.5} parent=19 // pred_region
        %p120 = scmp.lt.s32.totalorder %s15, 1
        %s121 = scalar_select %p120, %s15, 1
        %s122 = smul.addr %s121, 18
        %s123 = smul.addr %s122, 4
        %s124 = scalar_lea.vmem %s0, %s123
      $region24: #{mwsa_forward.5} parent=19 // pred_fallthru
        _
    $region20: #{mwsa_forward.5} parent=5 // pred_fallthru
      _
    %p125 = scmp.le.s32.totalorder 1, %s8
    %p126 = scmp.lt.s32.totalorder %s8, 7
    %p127 = pnand %p125, %p126
    %p128 = pneg %p127
    // Predicated region
    $region25: #{mwsa_forward.5} parent=5 // pred_check
      _
    $region26: #{mwsa_forward.5} parent=5 // pred_check_branch
      %130 = sbr.rel (%p127) target = $region28
    $region27: #{mwsa_forward.5} parent=5 // pred_region
      %s131 = ssub.s32 %s8, 1
      %p132 = scmp.lt.s32.totalorder %s17, 1
      %s133 = scalar_select %p132, %s17, 1
      %s134 = smul.addr %s133, 18
      %s135 = smul.addr %s134, 4
      %s136 = scalar_lea.vmem %s0, %s135
      %p137 = pneg %p46
      %p138 = pneg %p43
      %p139 = pneg %p67
      %p140 = pneg %p64
      %p141 = pneg %p95
      %p142 = pneg %p92
      %p143 = scmp.lt.s32.totalorder %s18, 2
      %s144 = scalar_select %p143, %s18, 2
      %p145 = scmp.lt.s32.totalorder %s17, 1
      %s146 = scalar_select %p145, %s17, 1
      %s147 = smul.addr %s146, 16
      %s148 = smul.addr %s144, 32
      %s149 = sadd.s32 %s147, %s148
      %s150 = smul.addr %s149, 4
      %s151 = scalar_lea.vmem %s2, %s150
      %p152 = scmp.lt.s32.totalorder %s17, 1
      %s153 = scalar_select %p152, %s17, 1
      %s154 = smul.addr %s153, 18
      %s155 = smul.addr %s154, 4
      %s156 = scalar_lea.vmem %s0, %s155
      %p157 = scmp.lt.s32.totalorder %s18, 2
      %s158 = scalar_select %p157, %s18, 2
      %p159 = scmp.lt.s32.totalorder %s17, 1
      %s160 = scalar_select %p159, %s17, 1
      %s161 = smul.addr %s160, 16
      %s162 = smul.addr %s158, 32
      %s163 = sadd.s32 %s161, %s162
      %s164 = smul.addr %s163, 4
      %s165 = scalar_lea.vmem %s2, %s164
      %v166 = vld [vmem:[%s156] sm:$0xf]
      %v167 = vld [vmem:[%s156 + $0x4] sm:$0xf]
      %v168 = vld [vmem:[%s156 + $0x8] sm:$0xf]
      %v169 = vld [vmem:[%s156 + $0xc] sm:$0xf]
      %v170 = vld [vmem:[%s156 + $0x10] sm:$0xf]
      %v171 = vld [vmem:[%s156 + $0x14] sm:$0xf]
      %v172 = vld [vmem:[%s156 + $0x18] sm:$0xf]
      %v173 = vld [vmem:[%s156 + $0x1c] sm:$0xf]
      %v174 = vld [vmem:[%s156 + $0x20] sm:$0xf]
      %v175 = vld [vmem:[%s156 + $0x24] sm:$0xf]
      %v176 = vld [vmem:[%s156 + $0x28] sm:$0xf]
      %v177 = vld [vmem:[%s156 + $0x2c] sm:$0xf]
      %v178 = vld [vmem:[%s156 + $0x30] sm:$0xf]
      %v179 = vld [vmem:[%s156 + $0x34] sm:$0xf]
      %v180 = vld [vmem:[%s156 + $0x38] sm:$0xf]
      %v181 = vld [vmem:[%s156 + $0x3c] sm:$0xf]
      %s182 = smul.u32 %s18, 36
      %s183 = scalar_lea.vmem %s1, %s182
      %v184 = vld [vmem:[%s183] sm:$0xf]
      %186 = vset.pattern.permute.xlu0 0
      %187 = vperm.xlu0 %186, %v184
      %v188 = vpop.permute.xlu0 %187
      %v190 = vmul.f32 %v166, %v188
      %v191 = vmul.f32 %v167, %v188
      %v192 = vmul.f32 %v168, %v188
      %v193 = vmul.f32 %v169, %v188
      %v194 = vmul.f32 %v170, %v188
      %v195 = vmul.f32 %v171, %v188
      %v196 = vmul.f32 %v172, %v188
      %v197 = vmul.f32 %v173, %v188
      %v198 = vmul.f32 %v174, %v188
      %v199 = vmul.f32 %v175, %v188
      %v200 = vmul.f32 %v176, %v188
      %v201 = vmul.f32 %v177, %v188
      %v202 = vmul.f32 %v178, %v188
      %v203 = vmul.f32 %v179, %v188
      %v204 = vmul.f32 %v180, %v188
      %v205 = vmul.f32 %v181, %v188
      %v206 = vadd.f32 %v190, 0.0
      %v207 = vadd.f32 %v191, 0.0
      %v208 = vadd.f32 %v192, 0.0
      %v209 = vadd.f32 %v193, 0.0
      %v210 = vadd.f32 %v194, 0.0
      %v211 = vadd.f32 %v195, 0.0
      %v212 = vadd.f32 %v196, 0.0
      %v213 = vadd.f32 %v197, 0.0
      %v214 = vadd.f32 %v198, 0.0
      %v215 = vadd.f32 %v199, 0.0
      %v216 = vadd.f32 %v200, 0.0
      %v217 = vadd.f32 %v201, 0.0
      %v218 = vadd.f32 %v202, 0.0
      %v219 = vadd.f32 %v203, 0.0
      %v220 = vadd.f32 %v204, 0.0
      %v221 = vadd.f32 %v205, 0.0
      %s222 = sadd.s32 4, %s182
      %s223 = scalar_lea.vmem %s1, %s222
      %v224 = vld [vmem:[%s223] sm:$0xf]
      %226 = vset.pattern.permute.xlu0 0
      %227 = vperm.xlu0 %226, %v224
      %v228 = vpop.permute.xlu0 %227
      %v230 = vmul.f32 %v166, %v228
      %v231 = vmul.f32 %v167, %v228
      %v232 = vmul.f32 %v168, %v228
      %v233 = vmul.f32 %v169, %v228
      %v234 = vmul.f32 %v170, %v228
      %v235 = vmul.f32 %v171, %v228
      %v236 = vmul.f32 %v172, %v228
      %v237 = vmul.f32 %v173, %v228
      %v238 = vmul.f32 %v174, %v228
      %v239 = vmul.f32 %v175, %v228
      %v240 = vmul.f32 %v176, %v228
      %v241 = vmul.f32 %v177, %v228
      %v242 = vmul.f32 %v178, %v228
      %v243 = vmul.f32 %v179, %v228
      %v244 = vmul.f32 %v180, %v228
      %v245 = vmul.f32 %v181, %v228
      %262 = vrot.lane.b32.xlu0 %v230, 127
      %v263 = vpop.permute.xlu0 %262
      %264 = vrot.lane.b32.xlu0 %v231, 127
      %v265 = vpop.permute.xlu0 %264
      %266 = vrot.lane.b32.xlu0 %v232, 127
      %v267 = vpop.permute.xlu0 %266
      %268 = vrot.lane.b32.xlu0 %v233, 127
      %v269 = vpop.permute.xlu0 %268
      %270 = vrot.lane.b32.xlu0 %v234, 127
      %v271 = vpop.permute.xlu0 %270
      %272 = vrot.lane.b32.xlu0 %v235, 127
      %v273 = vpop.permute.xlu0 %272
      %274 = vrot.lane.b32.xlu0 %v236, 127
      %v275 = vpop.permute.xlu0 %274
      %276 = vrot.lane.b32.xlu0 %v237, 127
      %v277 = vpop.permute.xlu0 %276
      %278 = vrot.lane.b32.xlu0 %v238, 127
      %v279 = vpop.permute.xlu0 %278
      %280 = vrot.lane.b32.xlu0 %v239, 127
      %v281 = vpop.permute.xlu0 %280
      %282 = vrot.lane.b32.xlu0 %v240, 127
      %v283 = vpop.permute.xlu0 %282
      %284 = vrot.lane.b32.xlu0 %v241, 127
      %v285 = vpop.permute.xlu0 %284
      %286 = vrot.lane.b32.xlu0 %v242, 127
      %v287 = vpop.permute.xlu0 %286
      %288 = vrot.lane.b32.xlu0 %v243, 127
      %v289 = vpop.permute.xlu0 %288
      %290 = vrot.lane.b32.xlu0 %v244, 127
      %v291 = vpop.permute.xlu0 %290
      %292 = vrot.lane.b32.xlu0 %v245, 127
      %v293 = vpop.permute.xlu0 %292
      %v310 = vadd.f32 %v206, %v263
      %v311 = vadd.f32 %v207, %v265
      %v312 = vadd.f32 %v208, %v267
      %v313 = vadd.f32 %v209, %v269
      %v314 = vadd.f32 %v210, %v271
      %v315 = vadd.f32 %v211, %v273
      %v316 = vadd.f32 %v212, %v275
      %v317 = vadd.f32 %v213, %v277
      %v318 = vadd.f32 %v214, %v279
      %v319 = vadd.f32 %v215, %v281
      %v320 = vadd.f32 %v216, %v283
      %v321 = vadd.f32 %v217, %v285
      %v322 = vadd.f32 %v218, %v287
      %v323 = vadd.f32 %v219, %v289
      %v324 = vadd.f32 %v220, %v291
      %v325 = vadd.f32 %v221, %v293
      %s326 = sadd.s32 8, %s182
      %s327 = scalar_lea.vmem %s1, %s326
      %v328 = vld [vmem:[%s327] sm:$0xf]
      %330 = vset.pattern.permute.xlu0 0
      %331 = vperm.xlu0 %330, %v328
      %v332 = vpop.permute.xlu0 %331
      %v334 = vmul.f32 %v166, %v332
      %v335 = vmul.f32 %v167, %v332
      %v336 = vmul.f32 %v168, %v332
      %v337 = vmul.f32 %v169, %v332
      %v338 = vmul.f32 %v170, %v332
      %v339 = vmul.f32 %v171, %v332
      %v340 = vmul.f32 %v172, %v332
      %v341 = vmul.f32 %v173, %v332
      %v342 = vmul.f32 %v174, %v332
      %v343 = vmul.f32 %v175, %v332
      %v344 = vmul.f32 %v176, %v332
      %v345 = vmul.f32 %v177, %v332
      %v346 = vmul.f32 %v178, %v332
      %v347 = vmul.f32 %v179, %v332
      %v348 = vmul.f32 %v180, %v332
      %v349 = vmul.f32 %v181, %v332
      %366 = vrot.lane.b32.xlu0 %v334, 126
      %v367 = vpop.permute.xlu0 %366
      %368 = vrot.lane.b32.xlu0 %v335, 126
      %v369 = vpop.permute.xlu0 %368
      %370 = vrot.lane.b32.xlu0 %v336, 126
      %v371 = vpop.permute.xlu0 %370
      %372 = vrot.lane.b32.xlu0 %v337, 126
      %v373 = vpop.permute.xlu0 %372
      %374 = vrot.lane.b32.xlu0 %v338, 126
      %v375 = vpop.permute.xlu0 %374
      %376 = vrot.lane.b32.xlu0 %v339, 126
      %v377 = vpop.permute.xlu0 %376
      %378 = vrot.lane.b32.xlu0 %v340, 126
      %v379 = vpop.permute.xlu0 %378
      %380 = vrot.lane.b32.xlu0 %v341, 126
      %v381 = vpop.permute.xlu0 %380
      %382 = vrot.lane.b32.xlu0 %v342, 126
      %v383 = vpop.permute.xlu0 %382
      %384 = vrot.lane.b32.xlu0 %v343, 126
      %v385 = vpop.permute.xlu0 %384
      %386 = vrot.lane.b32.xlu0 %v344, 126
      %v387 = vpop.permute.xlu0 %386
      %388 = vrot.lane.b32.xlu0 %v345, 126
      %v389 = vpop.permute.xlu0 %388
      %390 = vrot.lane.b32.xlu0 %v346, 126
      %v391 = vpop.permute.xlu0 %390
      %392 = vrot.lane.b32.xlu0 %v347, 126
      %v393 = vpop.permute.xlu0 %392
      %394 = vrot.lane.b32.xlu0 %v348, 126
      %v395 = vpop.permute.xlu0 %394
      %396 = vrot.lane.b32.xlu0 %v349, 126
      %v397 = vpop.permute.xlu0 %396
      %v414 = vadd.f32 %v310, %v367
      %v415 = vadd.f32 %v311, %v369
      %v416 = vadd.f32 %v312, %v371
      %v417 = vadd.f32 %v313, %v373
      %v418 = vadd.f32 %v314, %v375
      %v419 = vadd.f32 %v315, %v377
      %v420 = vadd.f32 %v316, %v379
      %v421 = vadd.f32 %v317, %v381
      %v422 = vadd.f32 %v318, %v383
      %v423 = vadd.f32 %v319, %v385
      %v424 = vadd.f32 %v320, %v387
      %v425 = vadd.f32 %v321, %v389
      %v426 = vadd.f32 %v322, %v391
      %v427 = vadd.f32 %v323, %v393
      %v428 = vadd.f32 %v324, %v395
      %v429 = vadd.f32 %v325, %v397
      %s430 = scalar_lea.vmem %s156, 4
      %v431 = vld [vmem:[%s430] sm:$0xf]
      %v432 = vld [vmem:[%s430 + $0x4] sm:$0xf]
      %v433 = vld [vmem:[%s430 + $0x8] sm:$0xf]
      %v434 = vld [vmem:[%s430 + $0xc] sm:$0xf]
      %v435 = vld [vmem:[%s430 + $0x10] sm:$0xf]
      %v436 = vld [vmem:[%s430 + $0x14] sm:$0xf]
      %v437 = vld [vmem:[%s430 + $0x18] sm:$0xf]
      %v438 = vld [vmem:[%s430 + $0x1c] sm:$0xf]
      %v439 = vld [vmem:[%s430 + $0x20] sm:$0xf]
      %v440 = vld [vmem:[%s430 + $0x24] sm:$0xf]
      %v441 = vld [vmem:[%s430 + $0x28] sm:$0xf]
      %v442 = vld [vmem:[%s430 + $0x2c] sm:$0xf]
      %v443 = vld [vmem:[%s430 + $0x30] sm:$0xf]
      %v444 = vld [vmem:[%s430 + $0x34] sm:$0xf]
      %v445 = vld [vmem:[%s430 + $0x38] sm:$0xf]
      %v446 = vld [vmem:[%s430 + $0x3c] sm:$0xf]
      %s447 = sadd.s32 12, %s182
      %s448 = scalar_lea.vmem %s1, %s447
      %v449 = vld [vmem:[%s448] sm:$0xf]
      %451 = vset.pattern.permute.xlu0 0
      %452 = vperm.xlu0 %451, %v449
      %v453 = vpop.permute.xlu0 %452
      %v455 = vmul.f32 %v431, %v453
      %v456 = vmul.f32 %v432, %v453
      %v457 = vmul.f32 %v433, %v453
      %v458 = vmul.f32 %v434, %v453
      %v459 = vmul.f32 %v435, %v453
      %v460 = vmul.f32 %v436, %v453
      %v461 = vmul.f32 %v437, %v453
      %v462 = vmul.f32 %v438, %v453
      %v463 = vmul.f32 %v439, %v453
      %v464 = vmul.f32 %v440, %v453
      %v465 = vmul.f32 %v441, %v453
      %v466 = vmul.f32 %v442, %v453
      %v467 = vmul.f32 %v443, %v453
      %v468 = vmul.f32 %v444, %v453
      %v469 = vmul.f32 %v445, %v453
      %v470 = vmul.f32 %v446, %v453
      %v471 = vadd.f32 %v414, %v455
      %v472 = vadd.f32 %v415, %v456
      %v473 = vadd.f32 %v416, %v457
      %v474 = vadd.f32 %v417, %v458
      %v475 = vadd.f32 %v418, %v459
      %v476 = vadd.f32 %v419, %v460
      %v477 = vadd.f32 %v420, %v461
      %v478 = vadd.f32 %v421, %v462
      %v479 = vadd.f32 %v422, %v463
      %v480 = vadd.f32 %v423, %v464
      %v481 = vadd.f32 %v424, %v465
      %v482 = vadd.f32 %v425, %v466
      %v483 = vadd.f32 %v426, %v467
      %v484 = vadd.f32 %v427, %v468
      %v485 = vadd.f32 %v428, %v469
      %v486 = vadd.f32 %v429, %v470
      %s487 = sadd.s32 16, %s182
      %s488 = scalar_lea.vmem %s1, %s487
      %v489 = vld [vmem:[%s488] sm:$0xf]
      %491 = vset.pattern.permute.xlu0 0
      %492 = vperm.xlu0 %491, %v489
      %v493 = vpop.permute.xlu0 %492
      %v495 = vmul.f32 %v431, %v493
      %v496 = vmul.f32 %v432, %v493
      %v497 = vmul.f32 %v433, %v493
      %v498 = vmul.f32 %v434, %v493
      %v499 = vmul.f32 %v435, %v493
      %v500 = vmul.f32 %v436, %v493
      %v501 = vmul.f32 %v437, %v493
      %v502 = vmul.f32 %v438, %v493
      %v503 = vmul.f32 %v439, %v493
      %v504 = vmul.f32 %v440, %v493
      %v505 = vmul.f32 %v441, %v493
      %v506 = vmul.f32 %v442, %v493
      %v507 = vmul.f32 %v443, %v493
      %v508 = vmul.f32 %v444, %v493
      %v509 = vmul.f32 %v445, %v493
      %v510 = vmul.f32 %v446, %v493
      %527 = vrot.lane.b32.xlu0 %v495, 127
      %v528 = vpop.permute.xlu0 %527
      %529 = vrot.lane.b32.xlu0 %v496, 127
      %v530 = vpop.permute.xlu0 %529
      %531 = vrot.lane.b32.xlu0 %v497, 127
      %v532 = vpop.permute.xlu0 %531
      %533 = vrot.lane.b32.xlu0 %v498, 127
      %v534 = vpop.permute.xlu0 %533
      %535 = vrot.lane.b32.xlu0 %v499, 127
      %v536 = vpop.permute.xlu0 %535
      %537 = vrot.lane.b32.xlu0 %v500, 127
      %v538 = vpop.permute.xlu0 %537
      %539 = vrot.lane.b32.xlu0 %v501, 127
      %v540 = vpop.permute.xlu0 %539
      %541 = vrot.lane.b32.xlu0 %v502, 127
      %v542 = vpop.permute.xlu0 %541
      %543 = vrot.lane.b32.xlu0 %v503, 127
      %v544 = vpop.permute.xlu0 %543
      %545 = vrot.lane.b32.xlu0 %v504, 127
      %v546 = vpop.permute.xlu0 %545
      %547 = vrot.lane.b32.xlu0 %v505, 127
      %v548 = vpop.permute.xlu0 %547
      %549 = vrot.lane.b32.xlu0 %v506, 127
      %v550 = vpop.permute.xlu0 %549
      %551 = vrot.lane.b32.xlu0 %v507, 127
      %v552 = vpop.permute.xlu0 %551
      %553 = vrot.lane.b32.xlu0 %v508, 127
      %v554 = vpop.permute.xlu0 %553
      %555 = vrot.lane.b32.xlu0 %v509, 127
      %v556 = vpop.permute.xlu0 %555
      %557 = vrot.lane.b32.xlu0 %v510, 127
      %v558 = vpop.permute.xlu0 %557
      %v575 = vadd.f32 %v471, %v528
      %v576 = vadd.f32 %v472, %v530
      %v577 = vadd.f32 %v473, %v532
      %v578 = vadd.f32 %v474, %v534
      %v579 = vadd.f32 %v475, %v536
      %v580 = vadd.f32 %v476, %v538
      %v581 = vadd.f32 %v477, %v540
      %v582 = vadd.f32 %v478, %v542
      %v583 = vadd.f32 %v479, %v544
      %v584 = vadd.f32 %v480, %v546
      %v585 = vadd.f32 %v481, %v548
      %v586 = vadd.f32 %v482, %v550
      %v587 = vadd.f32 %v483, %v552
      %v588 = vadd.f32 %v484, %v554
      %v589 = vadd.f32 %v485, %v556
      %v590 = vadd.f32 %v486, %v558
      %s591 = sadd.s32 20, %s182
      %s592 = scalar_lea.vmem %s1, %s591
      %v593 = vld [vmem:[%s592] sm:$0xf]
      %595 = vset.pattern.permute.xlu0 0
      %596 = vperm.xlu0 %595, %v593
      %v597 = vpop.permute.xlu0 %596
      %v599 = vmul.f32 %v431, %v597
      %v600 = vmul.f32 %v432, %v597
      %v601 = vmul.f32 %v433, %v597
      %v602 = vmul.f32 %v434, %v597
      %v603 = vmul.f32 %v435, %v597
      %v604 = vmul.f32 %v436, %v597
      %v605 = vmul.f32 %v437, %v597
      %v606 = vmul.f32 %v438, %v597
      %v607 = vmul.f32 %v439, %v597
      %v608 = vmul.f32 %v440, %v597
      %v609 = vmul.f32 %v441, %v597
      %v610 = vmul.f32 %v442, %v597
      %v611 = vmul.f32 %v443, %v597
      %v612 = vmul.f32 %v444, %v597
      %v613 = vmul.f32 %v445, %v597
      %v614 = vmul.f32 %v446, %v597
      %631 = vrot.lane.b32.xlu0 %v599, 126
      %v632 = vpop.permute.xlu0 %631
      %633 = vrot.lane.b32.xlu0 %v600, 126
      %v634 = vpop.permute.xlu0 %633
      %635 = vrot.lane.b32.xlu0 %v601, 126
      %v636 = vpop.permute.xlu0 %635
      %637 = vrot.lane.b32.xlu0 %v602, 126
      %v638 = vpop.permute.xlu0 %637
      %639 = vrot.lane.b32.xlu0 %v603, 126
      %v640 = vpop.permute.xlu0 %639
      %641 = vrot.lane.b32.xlu0 %v604, 126
      %v642 = vpop.permute.xlu0 %641
      %643 = vrot.lane.b32.xlu0 %v605, 126
      %v644 = vpop.permute.xlu0 %643
      %645 = vrot.lane.b32.xlu0 %v606, 126
      %v646 = vpop.permute.xlu0 %645
      %647 = vrot.lane.b32.xlu0 %v607, 126
      %v648 = vpop.permute.xlu0 %647
      %649 = vrot.lane.b32.xlu0 %v608, 126
      %v650 = vpop.permute.xlu0 %649
      %651 = vrot.lane.b32.xlu0 %v609, 126
      %v652 = vpop.permute.xlu0 %651
      %653 = vrot.lane.b32.xlu0 %v610, 126
      %v654 = vpop.permute.xlu0 %653
      %655 = vrot.lane.b32.xlu0 %v611, 126
      %v656 = vpop.permute.xlu0 %655
      %657 = vrot.lane.b32.xlu0 %v612, 126
      %v658 = vpop.permute.xlu0 %657
      %659 = vrot.lane.b32.xlu0 %v613, 126
      %v660 = vpop.permute.xlu0 %659
      %661 = vrot.lane.b32.xlu0 %v614, 126
      %v662 = vpop.permute.xlu0 %661
      %v679 = vadd.f32 %v575, %v632
      %v680 = vadd.f32 %v576, %v634
      %v681 = vadd.f32 %v577, %v636
      %v682 = vadd.f32 %v578, %v638
      %v683 = vadd.f32 %v579, %v640
      %v684 = vadd.f32 %v580, %v642
      %v685 = vadd.f32 %v581, %v644
      %v686 = vadd.f32 %v582, %v646
      %v687 = vadd.f32 %v583, %v648
      %v688 = vadd.f32 %v584, %v650
      %v689 = vadd.f32 %v585, %v652
      %v690 = vadd.f32 %v586, %v654
      %v691 = vadd.f32 %v587, %v656
      %v692 = vadd.f32 %v588, %v658
      %v693 = vadd.f32 %v589, %v660
      %v694 = vadd.f32 %v590, %v662
      %s695 = scalar_lea.vmem %s156, 8
      %v696 = vld [vmem:[%s695] sm:$0xf]
      %v697 = vld [vmem:[%s695 + $0x4] sm:$0xf]
      %v698 = vld [vmem:[%s695 + $0x8] sm:$0xf]
      %v699 = vld [vmem:[%s695 + $0xc] sm:$0xf]
      %v700 = vld [vmem:[%s695 + $0x10] sm:$0xf]
      %v701 = vld [vmem:[%s695 + $0x14] sm:$0xf]
      %v702 = vld [vmem:[%s695 + $0x18] sm:$0xf]
      %v703 = vld [vmem:[%s695 + $0x1c] sm:$0xf]
      %v704 = vld [vmem:[%s695 + $0x20] sm:$0xf]
      %v705 = vld [vmem:[%s695 + $0x24] sm:$0xf]
      %v706 = vld [vmem:[%s695 + $0x28] sm:$0xf]
      %v707 = vld [vmem:[%s695 + $0x2c] sm:$0xf]
      %v708 = vld [vmem:[%s695 + $0x30] sm:$0xf]
      %v709 = vld [vmem:[%s695 + $0x34] sm:$0xf]
      %v710 = vld [vmem:[%s695 + $0x38] sm:$0xf]
      %v711 = vld [vmem:[%s695 + $0x3c] sm:$0xf]
      %s712 = sadd.s32 24, %s182
      %s713 = scalar_lea.vmem %s1, %s712
      %v714 = vld [vmem:[%s713] sm:$0xf]
      %716 = vset.pattern.permute.xlu0 0
      %717 = vperm.xlu0 %716, %v714
      %v718 = vpop.permute.xlu0 %717
      %v720 = vmul.f32 %v696, %v718
      %v721 = vmul.f32 %v697, %v718
      %v722 = vmul.f32 %v698, %v718
      %v723 = vmul.f32 %v699, %v718
      %v724 = vmul.f32 %v700, %v718
      %v725 = vmul.f32 %v701, %v718
      %v726 = vmul.f32 %v702, %v718
      %v727 = vmul.f32 %v703, %v718
      %v728 = vmul.f32 %v704, %v718
      %v729 = vmul.f32 %v705, %v718
      %v730 = vmul.f32 %v706, %v718
      %v731 = vmul.f32 %v707, %v718
      %v732 = vmul.f32 %v708, %v718
      %v733 = vmul.f32 %v709, %v718
      %v734 = vmul.f32 %v710, %v718
      %v735 = vmul.f32 %v711, %v718
      %v736 = vadd.f32 %v679, %v720
      %v737 = vadd.f32 %v680, %v721
      %v738 = vadd.f32 %v681, %v722
      %v739 = vadd.f32 %v682, %v723
      %v740 = vadd.f32 %v683, %v724
      %v741 = vadd.f32 %v684, %v725
      %v742 = vadd.f32 %v685, %v726
      %v743 = vadd.f32 %v686, %v727
      %v744 = vadd.f32 %v687, %v728
      %v745 = vadd.f32 %v688, %v729
      %v746 = vadd.f32 %v689, %v730
      %v747 = vadd.f32 %v690, %v731
      %v748 = vadd.f32 %v691, %v732
      %v749 = vadd.f32 %v692, %v733
      %v750 = vadd.f32 %v693, %v734
      %v751 = vadd.f32 %v694, %v735
      %s752 = sadd.s32 28, %s182
      %s753 = scalar_lea.vmem %s1, %s752
      %v754 = vld [vmem:[%s753] sm:$0xf]
      %756 = vset.pattern.permute.xlu0 0
      %757 = vperm.xlu0 %756, %v754
      %v758 = vpop.permute.xlu0 %757
      %v760 = vmul.f32 %v696, %v758
      %v761 = vmul.f32 %v697, %v758
      %v762 = vmul.f32 %v698, %v758
      %v763 = vmul.f32 %v699, %v758
      %v764 = vmul.f32 %v700, %v758
      %v765 = vmul.f32 %v701, %v758
      %v766 = vmul.f32 %v702, %v758
      %v767 = vmul.f32 %v703, %v758
      %v768 = vmul.f32 %v704, %v758
      %v769 = vmul.f32 %v705, %v758
      %v770 = vmul.f32 %v706, %v758
      %v771 = vmul.f32 %v707, %v758
      %v772 = vmul.f32 %v708, %v758
      %v773 = vmul.f32 %v709, %v758
      %v774 = vmul.f32 %v710, %v758
      %v775 = vmul.f32 %v711, %v758
      %792 = vrot.lane.b32.xlu0 %v760, 127
      %v793 = vpop.permute.xlu0 %792
      %794 = vrot.lane.b32.xlu0 %v761, 127
      %v795 = vpop.permute.xlu0 %794
      %796 = vrot.lane.b32.xlu0 %v762, 127
      %v797 = vpop.permute.xlu0 %796
      %798 = vrot.lane.b32.xlu0 %v763, 127
      %v799 = vpop.permute.xlu0 %798
      %800 = vrot.lane.b32.xlu0 %v764, 127
      %v801 = vpop.permute.xlu0 %800
      %802 = vrot.lane.b32.xlu0 %v765, 127
      %v803 = vpop.permute.xlu0 %802
      %804 = vrot.lane.b32.xlu0 %v766, 127
      %v805 = vpop.permute.xlu0 %804
      %806 = vrot.lane.b32.xlu0 %v767, 127
      %v807 = vpop.permute.xlu0 %806
      %808 = vrot.lane.b32.xlu0 %v768, 127
      %v809 = vpop.permute.xlu0 %808
      %810 = vrot.lane.b32.xlu0 %v769, 127
      %v811 = vpop.permute.xlu0 %810
      %812 = vrot.lane.b32.xlu0 %v770, 127
      %v813 = vpop.permute.xlu0 %812
      %814 = vrot.lane.b32.xlu0 %v771, 127
      %v815 = vpop.permute.xlu0 %814
      %816 = vrot.lane.b32.xlu0 %v772, 127
      %v817 = vpop.permute.xlu0 %816
      %818 = vrot.lane.b32.xlu0 %v773, 127
      %v819 = vpop.permute.xlu0 %818
      %820 = vrot.lane.b32.xlu0 %v774, 127
      %v821 = vpop.permute.xlu0 %820
      %822 = vrot.lane.b32.xlu0 %v775, 127
      %v823 = vpop.permute.xlu0 %822
      %v840 = vadd.f32 %v736, %v793
      %v841 = vadd.f32 %v737, %v795
      %v842 = vadd.f32 %v738, %v797
      %v843 = vadd.f32 %v739, %v799
      %v844 = vadd.f32 %v740, %v801
      %v845 = vadd.f32 %v741, %v803
      %v846 = vadd.f32 %v742, %v805
      %v847 = vadd.f32 %v743, %v807
      %v848 = vadd.f32 %v744, %v809
      %v849 = vadd.f32 %v745, %v811
      %v850 = vadd.f32 %v746, %v813
      %v851 = vadd.f32 %v747, %v815
      %v852 = vadd.f32 %v748, %v817
      %v853 = vadd.f32 %v749, %v819
      %v854 = vadd.f32 %v750, %v821
      %v855 = vadd.f32 %v751, %v823
      %s856 = sadd.s32 32, %s182
      %s857 = scalar_lea.vmem %s1, %s856
      %v858 = vld [vmem:[%s857] sm:$0xf]
      %860 = vset.pattern.permute.xlu0 0
      %861 = vperm.xlu0 %860, %v858
      %v862 = vpop.permute.xlu0 %861
      %v864 = vmul.f32 %v696, %v862
      %v865 = vmul.f32 %v697, %v862
      %v866 = vmul.f32 %v698, %v862
      %v867 = vmul.f32 %v699, %v862
      %v868 = vmul.f32 %v700, %v862
      %v869 = vmul.f32 %v701, %v862
      %v870 = vmul.f32 %v702, %v862
      %v871 = vmul.f32 %v703, %v862
      %v872 = vmul.f32 %v704, %v862
      %v873 = vmul.f32 %v705, %v862
      %v874 = vmul.f32 %v706, %v862
      %v875 = vmul.f32 %v707, %v862
      %v876 = vmul.f32 %v708, %v862
      %v877 = vmul.f32 %v709, %v862
      %v878 = vmul.f32 %v710, %v862
      %v879 = vmul.f32 %v711, %v862
      %896 = vrot.lane.b32.xlu0 %v864, 126
      %v897 = vpop.permute.xlu0 %896
      %898 = vrot.lane.b32.xlu0 %v865, 126
      %v899 = vpop.permute.xlu0 %898
      %900 = vrot.lane.b32.xlu0 %v866, 126
      %v901 = vpop.permute.xlu0 %900
      %902 = vrot.lane.b32.xlu0 %v867, 126
      %v903 = vpop.permute.xlu0 %902
      %904 = vrot.lane.b32.xlu0 %v868, 126
      %v905 = vpop.permute.xlu0 %904
      %906 = vrot.lane.b32.xlu0 %v869, 126
      %v907 = vpop.permute.xlu0 %906
      %908 = vrot.lane.b32.xlu0 %v870, 126
      %v909 = vpop.permute.xlu0 %908
      %910 = vrot.lane.b32.xlu0 %v871, 126
      %v911 = vpop.permute.xlu0 %910
      %912 = vrot.lane.b32.xlu0 %v872, 126
      %v913 = vpop.permute.xlu0 %912
      %914 = vrot.lane.b32.xlu0 %v873, 126
      %v915 = vpop.permute.xlu0 %914
      %916 = vrot.lane.b32.xlu0 %v874, 126
      %v917 = vpop.permute.xlu0 %916
      %918 = vrot.lane.b32.xlu0 %v875, 126
      %v919 = vpop.permute.xlu0 %918
      %920 = vrot.lane.b32.xlu0 %v876, 126
      %v921 = vpop.permute.xlu0 %920
      %922 = vrot.lane.b32.xlu0 %v877, 126
      %v923 = vpop.permute.xlu0 %922
      %924 = vrot.lane.b32.xlu0 %v878, 126
      %v925 = vpop.permute.xlu0 %924
      %926 = vrot.lane.b32.xlu0 %v879, 126
      %v927 = vpop.permute.xlu0 %926
      %v944 = vadd.f32 %v840, %v897
      %v945 = vadd.f32 %v841, %v899
      %v946 = vadd.f32 %v842, %v901
      %v947 = vadd.f32 %v843, %v903
      %v948 = vadd.f32 %v844, %v905
      %v949 = vadd.f32 %v845, %v907
      %v950 = vadd.f32 %v846, %v909
      %v951 = vadd.f32 %v847, %v911
      %v952 = vadd.f32 %v848, %v913
      %v953 = vadd.f32 %v849, %v915
      %v954 = vadd.f32 %v850, %v917
      %v955 = vadd.f32 %v851, %v919
      %v956 = vadd.f32 %v852, %v921
      %v957 = vadd.f32 %v853, %v923
      %v958 = vadd.f32 %v854, %v925
      %v959 = vadd.f32 %v855, %v927
      %vm960 = vcmask 125952
      %961 = vst.msk [vmem:[%s165] sm:$0xf] %vm960, %v944
      %962 = vst.msk [vmem:[%s165 + $0x4] sm:$0xf] %vm960, %v945
      %963 = vst.msk [vmem:[%s165 + $0x8] sm:$0xf] %vm960, %v946
      %964 = vst.msk [vmem:[%s165 + $0xc] sm:$0xf] %vm960, %v947
      %965 = vst.msk [vmem:[%s165 + $0x10] sm:$0xf] %vm960, %v948
      %966 = vst.msk [vmem:[%s165 + $0x14] sm:$0xf] %vm960, %v949
      %967 = vst.msk [vmem:[%s165 + $0x18] sm:$0xf] %vm960, %v950
      %968 = vst.msk [vmem:[%s165 + $0x1c] sm:$0xf] %vm960, %v951
      %969 = vst.msk [vmem:[%s165 + $0x20] sm:$0xf] %vm960, %v952
      %970 = vst.msk [vmem:[%s165 + $0x24] sm:$0xf] %vm960, %v953
      %971 = vst.msk [vmem:[%s165 + $0x28] sm:$0xf] %vm960, %v954
      %972 = vst.msk [vmem:[%s165 + $0x2c] sm:$0xf] %vm960, %v955
      %973 = vst.msk [vmem:[%s165 + $0x30] sm:$0xf] %vm960, %v956
      %974 = vst.msk [vmem:[%s165 + $0x34] sm:$0xf] %vm960, %v957
      %975 = vst.msk [vmem:[%s165 + $0x38] sm:$0xf] %vm960, %v958
      %976 = vst.msk [vmem:[%s165 + $0x3c] sm:$0xf] %vm960, %v959
      %p977 = scmp.lt.s32.totalorder %s18, 2
      %s978 = scalar_select %p977, %s18, 2
      %p979 = scmp.lt.s32.totalorder %s17, 1
      %s980 = scalar_select %p979, %s17, 1
      %s981 = smul.addr %s980, 16
      %s982 = smul.addr %s978, 32
      %s983 = sadd.s32 %s981, %s982
      %s984 = smul.addr %s983, 4
      %s985 = scalar_lea.vmem %s2, %s984
      // Predicated region
      $region29: #{mwsa_forward.5} parent=27 // pred_check
        %p986 = pneg %p92
      $region30: #{mwsa_forward.5} parent=27 // pred_check_branch
        %988 = sbr.rel (%p986) target = $region32
      $region31: #{mwsa_forward.5} parent=27 // pred_region
        _
      $region32: #{mwsa_forward.5} parent=27 // pred_fallthru
        _
    $region28: #{mwsa_forward.5} parent=5 // pred_fallthru
      _
    %p989 = scmp.le.s32.totalorder 2, %s8
    // Predicated region
    $region33: #{mwsa_forward.5} parent=5 // pred_check
      %p990 = pneg %p989
    $region34: #{mwsa_forward.5} parent=5 // pred_check_branch
      %992 = sbr.rel (%p990) target = $region36
    $region35: #{mwsa_forward.5} parent=5 // pred_region
      %s993 = ssub.s32 %s8, 2
      // Predicated region
      $region37: #{mwsa_forward.5} parent=35 // pred_check
        %p994 = pneg %p98
      $region38: #{mwsa_forward.5} parent=35 // pred_check_branch
        %996 = sbr.rel (%p994) target = $region40
      $region39: #{mwsa_forward.5} parent=35 // pred_region
        %p997 = scmp.lt.s32.totalorder %s20, 2
        %s998 = scalar_select %p997, %s20, 2
        %p999 = scmp.lt.s32.totalorder %s19, 1
        %s1000 = scalar_select %p999, %s19, 1
        %s1001 = smul.addr %s1000, 16
        %s1002 = smul.addr %s998, 32
        %s1003 = sadd.s32 %s1001, %s1002
        %s1004 = smul.addr %s1003, 4
        %s1005 = scalar_lea.vmem %s2, %s1004
      $region40: #{mwsa_forward.5} parent=35 // pred_fallthru
        _
    $region36: #{mwsa_forward.5} parent=5 // pred_fallthru
      _
  $region6: #{mwsa_forward.5} parent=0 // loop_footer
    %s12 = sadd.s32 1, %s8
  $region7: #{mwsa_forward.5} parent=0 // loop_footer_branch
    %7 = sbr.rel target = $region3
  $region8: #{mwsa_forward.5} parent=0 // loop_exit
    _

// kernel: mwsa_forward.8
$region0: #{mwsa_forward.8}
  #allocation0 [shape = 'u32[]', space=smem, size = 0x4, offset = 0x4, fixed_abs, tag = 'smem constant byte address 0x4 - core index']
  #allocation1 [shape = 'u32[144,128]{1,0:T(1,128)}', space=vmem, size = 0x12000, scoped, tag = 'internal scratch']
  %s0 = inlined_call_operand.vmem [shape: f32[2,256,2], index: 0, kind: input, shape index: {}]
  %s1 = inlined_call_operand.vmem [shape: f32[2,2,256], index: 1, kind: input, shape index: {}]
  %s2 = inlined_call_operand.vmem [shape: f32[2,2,256], index: 2, kind: output, shape index: {}]
  %s3 = sld [smem:[#allocation0]]
  $region41: #{mwsa_forward.8} parent=0
    _
  %s5 = ssub.s32 1, %s3
  %s6 = scalar_select 0, %s5, %s3
  loop: start=0, step=1, limit=4
  $region2: #{mwsa_forward.8} parent=0 // loop_pre_header
    _
  $region3: #{mwsa_forward.8} parent=0 // loop_header
    %s8 = sphi 0, %s12
    %p9 = scmp.ge.s32.totalorder %s8, 4
    %s18 = sphi 0, %s20
    %s21 = sphi 0, %s18
    %s22 = sphi 0, %s21
    %s38 = sphi 0, %s22
    %s44 = sphi 0, %s46
    %s47 = sphi 0, %s44
    %s48 = sphi 0, %s47
    %s64 = sphi 0, %s48
    %s70 = sphi 0, %s72
    %s73 = sphi 0, %s70
    %s74 = sphi 0, %s73
    %s90 = sphi 0, %s74
  $region4: #{mwsa_forward.8} parent=0 // loop_header_branch
    %11 = sbr.rel (%p9) target = $region8
  $region5: #{mwsa_forward.8} parent=0 // loop_body
    %s13 = ssub.s32 %s8, 1
    %s14 = ssub.s32 %s8, 2
    %s15 = sadd.s32 %s8, 1
    %s16 = ssub.s32 %s8, %s15
    %p17 = scmp.eq.s32.totalorder %s16, 0
    %s19 = sadd.s32 %s18, 1
    %s20 = scalar_select %p17, %s18, %s19
    %p23 = pneg %p17
    %p24 = scmp.eq.s32.totalorder %s8, 1
    %p25 = por %p23, %p24
    %p26 = scmp.ne.s32.totalorder %s18, %s21
    %p27 = scmp.eq.s32.totalorder %s8, 0
    %p28 = por %p26, %p27
    %p29 = scmp.ne.s32.totalorder %s18, %s21
    %p30 = scmp.eq.s32.totalorder %s13, 1
    %p31 = por %p29, %p30
    %p32 = scmp.ne.s32.totalorder %s21, %s22
    %p33 = scmp.eq.s32.totalorder %s13, 0
    %p34 = por %p32, %p33
    %p35 = scmp.ne.s32.totalorder %s21, %s22
    %p36 = scmp.eq.s32.totalorder %s14, 1
    %p37 = por %p35, %p36
    %p39 = scmp.ne.s32.totalorder %s22, %s38
    %p40 = scmp.eq.s32.totalorder %s14, 0
    %p41 = por %p39, %p40
    %s42 = ssub.s32 %s8, %s15
    %p43 = scmp.eq.s32.totalorder %s42, 0
    %s45 = sadd.s32 %s44, 1
    %s46 = scalar_select %p43, %s44, %s45
    %p49 = pneg %p43
    %p50 = scmp.eq.s32.totalorder %s8, 1
    %p51 = por %p49, %p50
    %p52 = scmp.ne.s32.totalorder %s44, %s47
    %p53 = scmp.eq.s32.totalorder %s8, 0
    %p54 = por %p52, %p53
    %p55 = scmp.ne.s32.totalorder %s44, %s47
    %p56 = scmp.eq.s32.totalorder %s13, 1
    %p57 = por %p55, %p56
    %p58 = scmp.ne.s32.totalorder %s47, %s48
    %p59 = scmp.eq.s32.totalorder %s13, 0
    %p60 = por %p58, %p59
    %p61 = scmp.ne.s32.totalorder %s47, %s48
    %p62 = scmp.eq.s32.totalorder %s14, 1
    %p63 = por %p61, %p62
    %p65 = scmp.ne.s32.totalorder %s48, %s64
    %p66 = scmp.eq.s32.totalorder %s14, 0
    %p67 = por %p65, %p66
    %s68 = ssub.s32 %s8, %s15
    %p69 = scmp.eq.s32.totalorder %s68, 0
    %s71 = sadd.s32 %s70, 1
    %s72 = scalar_select %p69, %s70, %s71
    %p75 = pneg %p69
    %p76 = scmp.eq.s32.totalorder %s8, 1
    %p77 = por %p75, %p76
    %p78 = scmp.ne.s32.totalorder %s70, %s73
    %p79 = scmp.eq.s32.totalorder %s8, 0
    %p80 = por %p78, %p79
    %p81 = scmp.ne.s32.totalorder %s70, %s73
    %p82 = scmp.eq.s32.totalorder %s13, 1
    %p83 = por %p81, %p82
    %p84 = scmp.ne.s32.totalorder %s73, %s74
    %p85 = scmp.eq.s32.totalorder %s13, 0
    %p86 = por %p84, %p85
    %p87 = scmp.ne.s32.totalorder %s73, %s74
    %p88 = scmp.eq.s32.totalorder %s14, 1
    %p89 = por %p87, %p88
    %p91 = scmp.ne.s32.totalorder %s74, %s90
    %p92 = scmp.eq.s32.totalorder %s14, 0
    %p93 = por %p91, %p92
    %p94 = scmp.le.s32.totalorder 1, %s8
    %p95 = scmp.lt.s32.totalorder %s8, 3
    %p96 = pnand %p94, %p95
    %p97 = pneg %p96
    // Predicated region
    $region9: #{mwsa_forward.8} parent=5 // pred_check
      _
    $region10: #{mwsa_forward.8} parent=5 // pred_check_branch
      %99 = sbr.rel (%p96) target = $region12
    $region11: #{mwsa_forward.8} parent=5 // pred_region
      %s100 = ssub.s32 %s8, 1
    $region12: #{mwsa_forward.8} parent=5 // pred_fallthru
      _
    %p101 = scmp.lt.s32.totalorder %s8, 2
    // Predicated region
    $region13: #{mwsa_forward.8} parent=5 // pred_check
      %p102 = pneg %p101
    $region14: #{mwsa_forward.8} parent=5 // pred_check_branch
      %104 = sbr.rel (%p102) target = $region16
    $region15: #{mwsa_forward.8} parent=5 // pred_region
      // Predicated region
      $region17: #{mwsa_forward.8} parent=15 // pred_check
        %p105 = pneg %p28
      $region18: #{mwsa_forward.8} parent=15 // pred_check_branch
        %107 = sbr.rel (%p105) target = $region20
      $region19: #{mwsa_forward.8} parent=15 // pred_region
        %p108 = scmp.lt.s32.totalorder %s8, 1
        %s109 = scalar_select %p108, %s8, 1
        %s110 = smul.addr %s109, 32
        %s111 = smul.addr %s110, 8
        %s112 = scalar_lea.vmem %s0, %s111
      $region20: #{mwsa_forward.8} parent=15 // pred_fallthru
        _
      // Predicated region
      $region21: #{mwsa_forward.8} parent=15 // pred_check
        %p113 = pneg %p54
      $region22: #{mwsa_forward.8} parent=15 // pred_check_branch
        %115 = sbr.rel (%p113) target = $region24
      $region23: #{mwsa_forward.8} parent=15 // pred_region
        %p116 = scmp.lt.s32.totalorder %s8, 1
        %s117 = scalar_select %p116, %s8, 1
        %s118 = smul.addr %s117, 2
        %s119 = smul.addr %s118, 2
        %s120 = scalar_lea.vmem %s1, %s119
      $region24: #{mwsa_forward.8} parent=15 // pred_fallthru
        _
    $region16: #{mwsa_forward.8} parent=5 // pred_fallthru
      _
    %p121 = scmp.le.s32.totalorder 1, %s8
    %p122 = scmp.lt.s32.totalorder %s8, 3
    %p123 = pnand %p121, %p122
    %p124 = pneg %p123
    // Predicated region
    $region25: #{mwsa_forward.8} parent=5 // pred_check
      _
    $region26: #{mwsa_forward.8} parent=5 // pred_check_branch
      %126 = sbr.rel (%p123) target = $region28
    $region27: #{mwsa_forward.8} parent=5 // pred_region
      %s127 = ssub.s32 %s8, 1
      %p128 = scmp.lt.s32.totalorder %s13, 1
      %s129 = scalar_select %p128, %s13, 1
      %s130 = smul.addr %s129, 32
      %s131 = smul.addr %s130, 8
      %s132 = scalar_lea.vmem %s0, %s131
      %p133 = pneg %p34
      %p134 = pneg %p31
      %p135 = scmp.lt.s32.totalorder %s13, 1
      %s136 = scalar_select %p135, %s13, 1
      %s137 = smul.addr %s136, 2
      %s138 = smul.addr %s137, 2
      %s139 = scalar_lea.vmem %s1, %s138
      %p140 = pneg %p60
      %p141 = pneg %p57
      %p142 = pneg %p86
      %p143 = pneg %p83
      %p144 = scmp.lt.s32.totalorder %s13, 1
      %s145 = scalar_select %p144, %s13, 1
      %s146 = smul.addr %s145, 2
      %s147 = smul.addr %s146, 2
      %s148 = scalar_lea.vmem %s2, %s147
      %p149 = scmp.lt.s32.totalorder %s13, 1
      %s150 = scalar_select %p149, %s13, 1
      %s151 = smul.addr %s150, 32
      %s152 = smul.addr %s151, 8
      %s153 = scalar_lea.vmem %s0, %s152
      %p154 = scmp.lt.s32.totalorder %s13, 1
      %s155 = scalar_select %p154, %s13, 1
      %s156 = smul.addr %s155, 2
      %s157 = smul.addr %s156, 2
      %s158 = scalar_lea.vmem %s1, %s157
      %p159 = scmp.lt.s32.totalorder %s13, 1
      %s160 = scalar_select %p159, %s13, 1
      %s161 = smul.addr %s160, 2
      %s162 = smul.addr %s161, 2
      %s163 = scalar_lea.vmem %s2, %s162
      %v164 = vld [vmem:[%s153] sm:$0xff]
      %v165 = vld [vmem:[%s153 + $0x8] sm:$0xff]
      %v166 = vld [vmem:[%s153 + $0x10] sm:$0xff]
      %v167 = vld [vmem:[%s153 + $0x18] sm:$0xff]
      %v168 = vld [vmem:[%s153 + $0x20] sm:$0xff]
      %v169 = vld [vmem:[%s153 + $0x28] sm:$0xff]
      %v170 = vld [vmem:[%s153 + $0x30] sm:$0xff]
      %v171 = vld [vmem:[%s153 + $0x38] sm:$0xff]
      %v172 = vld [vmem:[%s153 + $0x40] sm:$0xff]
      %v173 = vld [vmem:[%s153 + $0x48] sm:$0xff]
      %v174 = vld [vmem:[%s153 + $0x50] sm:$0xff]
      %v175 = vld [vmem:[%s153 + $0x58] sm:$0xff]
      %v176 = vld [vmem:[%s153 + $0x60] sm:$0xff]
      %v177 = vld [vmem:[%s153 + $0x68] sm:$0xff]
      %v178 = vld [vmem:[%s153 + $0x70] sm:$0xff]
      %v179 = vld [vmem:[%s153 + $0x78] sm:$0xff]
      %v180 = vld [vmem:[%s153 + $0x80] sm:$0xff]
      %v181 = vld [vmem:[%s153 + $0x88] sm:$0xff]
      %v182 = vld [vmem:[%s153 + $0x90] sm:$0xff]
      %v183 = vld [vmem:[%s153 + $0x98] sm:$0xff]
      %v184 = vld [vmem:[%s153 + $0xa0] sm:$0xff]
      %v185 = vld [vmem:[%s153 + $0xa8] sm:$0xff]
      %v186 = vld [vmem:[%s153 + $0xb0] sm:$0xff]
      %v187 = vld [vmem:[%s153 + $0xb8] sm:$0xff]
      %v188 = vld [vmem:[%s153 + $0xc0] sm:$0xff]
      %v189 = vld [vmem:[%s153 + $0xc8] sm:$0xff]
      %v190 = vld [vmem:[%s153 + $0xd0] sm:$0xff]
      %v191 = vld [vmem:[%s153 + $0xd8] sm:$0xff]
      %v192 = vld [vmem:[%s153 + $0xe0] sm:$0xff]
      %v193 = vld [vmem:[%s153 + $0xe8] sm:$0xff]
      %v194 = vld [vmem:[%s153 + $0xf0] sm:$0xff]
      %v195 = vld [vmem:[%s153 + $0xf8] sm:$0xff]
      %v196 = vld [vmem:[%s158] sm:$0xf]
      %vm197 = vcmask 15360
      %v199 = vsel %vm197, %v164, 0
      %v202 = vsel %vm197, %v165, 0
      %v205 = vsel %vm197, %v166, 0
      %v208 = vsel %vm197, %v167, 0
      %v211 = vsel %vm197, %v168, 0
      %v214 = vsel %vm197, %v169, 0
      %v217 = vsel %vm197, %v170, 0
      %v220 = vsel %vm197, %v171, 0
      %v223 = vsel %vm197, %v172, 0
      %v226 = vsel %vm197, %v173, 0
      %v229 = vsel %vm197, %v174, 0
      %v232 = vsel %vm197, %v175, 0
      %v235 = vsel %vm197, %v176, 0
      %v238 = vsel %vm197, %v177, 0
      %v241 = vsel %vm197, %v178, 0
      %v244 = vsel %vm197, %v179, 0
      %v247 = vsel %vm197, %v180, 0
      %v250 = vsel %vm197, %v181, 0
      %v253 = vsel %vm197, %v182, 0
      %v256 = vsel %vm197, %v183, 0
      %v259 = vsel %vm197, %v184, 0
      %v262 = vsel %vm197, %v185, 0
      %v265 = vsel %vm197, %v186, 0
      %v268 = vsel %vm197, %v187, 0
      %v271 = vsel %vm197, %v188, 0
      %v274 = vsel %vm197, %v189, 0
      %v277 = vsel %vm197, %v190, 0
      %v280 = vsel %vm197, %v191, 0
      %v283 = vsel %vm197, %v192, 0
      %v286 = vsel %vm197, %v193, 0
      %v289 = vsel %vm197, %v194, 0
      %v292 = vsel %vm197, %v195, 0
      %294 = vmatprep.subr.mxu0 0.0
      %295 = vmatpush1.xpose.msra.mxu0 %v244
      %296 = vmatprep.subr.mxu0 0.0
      %297 = vmatpush1.xpose.msra.mxu0 %v241
      %298 = vmatprep.subr.mxu0 0.0
      %299 = vmatpush1.xpose.msra.mxu0 %v238
      %300 = vmatprep.subr.mxu0 0.0
      %301 = vmatpush1.xpose.msra.mxu0 %v235
      %302 = vmatprep.subr.mxu0 0.0
      %303 = vmatpush1.xpose.msra.mxu0 %v232
      %304 = vmatprep.subr.mxu0 0.0
      %305 = vmatpush1.xpose.msra.mxu0 %v229
      %306 = vmatprep.subr.mxu0 0.0
      %307 = vmatpush1.xpose.msra.mxu0 %v226
      %308 = vmatprep.subr.mxu0 0.0
      %309 = vmatpush1.xpose.msra.mxu0 %v223
      %310 = vmatprep.subr.mxu0 0.0
      %311 = vmatpush1.xpose.msra.mxu0 %v220
      %312 = vmatprep.subr.mxu0 0.0
      %313 = vmatpush1.xpose.msra.mxu0 %v217
      %314 = vmatprep.subr.mxu0 0.0
      %315 = vmatpush1.xpose.msra.mxu0 %v214
      %316 = vmatprep.subr.mxu0 0.0
      %317 = vmatpush1.xpose.msra.mxu0 %v211
      %318 = vmatprep.subr.mxu0 0.0
      %319 = vmatpush1.xpose.msra.mxu0 %v208
      %320 = vmatprep.subr.mxu0 0.0
      %321 = vmatpush1.xpose.msra.mxu0 %v205
      %322 = vmatprep.subr.mxu0 0.0
      %323 = vmatpush1.xpose.msra.mxu0 %v202
      %324 = vmatprep.subr.mxu0 0.0
      %325 = vmatpush1.xpose.msra.mxu0 %v199
      %326 = vmatprep.subr.mxu0 0.0
      %327 = vmatpush2.xpose.msra.mxu0 %v292
      %328 = vmatprep.subr.mxu0 0.0
      %329 = vmatpush2.xpose.msra.mxu0 %v289
      %330 = vmatprep.subr.mxu0 0.0
      %331 = vmatpush2.xpose.msra.mxu0 %v286
      %332 = vmatprep.subr.mxu0 0.0
      %333 = vmatpush2.xpose.msra.mxu0 %v283
      %334 = vmatprep.subr.mxu0 0.0
      %335 = vmatpush2.xpose.msra.mxu0 %v280
      %336 = vmatprep.subr.mxu0 0.0
      %337 = vmatpush2.xpose.msra.mxu0 %v277
      %338 = vmatprep.subr.mxu0 0.0
      %339 = vmatpush2.xpose.msra.mxu0 %v274
      %340 = vmatprep.subr.mxu0 0.0
      %341 = vmatpush2.xpose.msra.mxu0 %v271
      %342 = vmatprep.subr.mxu0 0.0
      %343 = vmatpush2.xpose.msra.mxu0 %v268
      %344 = vmatprep.subr.mxu0 0.0
      %345 = vmatpush2.xpose.msra.mxu0 %v265
      %346 = vmatprep.subr.mxu0 0.0
      %347 = vmatpush2.xpose.msra.mxu0 %v262
      %348 = vmatprep.subr.mxu0 0.0
      %349 = vmatpush2.xpose.msra.mxu0 %v259
      %350 = vmatprep.subr.mxu0 0.0
      %351 = vmatpush2.xpose.msra.mxu0 %v256
      %352 = vmatprep.subr.mxu0 0.0
      %353 = vmatpush2.xpose.msra.mxu0 %v253
      %354 = vmatprep.subr.mxu0 0.0
      %355 = vmatpush2.xpose.msra.mxu0 %v250
      %356 = vmatprep.subr.mxu0 0.0
      %357 = vmatpush2.xpose.msra.mxu0 %v247
      %358 = vmatprep.mubr.f32.mxu0 0.0
      %359 = vmatmul.mubr.f32.gmra.mxu0 %v199
      %v360 = vpop.f32.mrf.mxu0
      %v361 = vadd.f32 0.0, %v360
      %v362 = vpop.f32.mrf.mxu0
      %v363 = vadd.f32 0.0, %v362
      %364 = vmatprep.mubr.f32.mxu0 0.0
      %365 = vmatmul.mubr.f32.gmra.mxu0 %v202
      %v366 = vpop.f32.mrf.mxu0
      %v367 = vadd.f32 0.0, %v366
      %v368 = vpop.f32.mrf.mxu0
      %v369 = vadd.f32 0.0, %v368
      %370 = vmatprep.mubr.f32.mxu0 0.0
      %371 = vmatmul.mubr.f32.gmra.mxu0 %v205
      %v372 = vpop.f32.mrf.mxu0
      %v373 = vadd.f32 0.0, %v372
      %v374 = vpop.f32.mrf.mxu0
      %v375 = vadd.f32 0.0, %v374
      %376 = vmatprep.mubr.f32.mxu0 0.0
      %377 = vmatmul.mubr.f32.gmra.mxu0 %v208
      %v378 = vpop.f32.mrf.mxu0
      %v379 = vadd.f32 0.0, %v378
      %v380 = vpop.f32.mrf.mxu0
      %v381 = vadd.f32 0.0, %v380
      %382 = vmatprep.mubr.f32.mxu0 0.0
      %383 = vmatmul.mubr.f32.gmra.mxu0 %v211
      %v384 = vpop.f32.mrf.mxu0
      %v385 = vadd.f32 0.0, %v384
      %v386 = vpop.f32.mrf.mxu0
      %v387 = vadd.f32 0.0, %v386
      %388 = vmatprep.mubr.f32.mxu0 0.0
      %389 = vmatmul.mubr.f32.gmra.mxu0 %v214
      %v390 = vpop.f32.mrf.mxu0
      %v391 = vadd.f32 0.0, %v390
      %v392 = vpop.f32.mrf.mxu0
      %v393 = vadd.f32 0.0, %v392
      %394 = vmatprep.mubr.f32.mxu0 0.0
      %395 = vmatmul.mubr.f32.gmra.mxu0 %v217
      %v396 = vpop.f32.mrf.mxu0
      %v397 = vadd.f32 0.0, %v396
      %v398 = vpop.f32.mrf.mxu0
      %v399 = vadd.f32 0.0, %v398
      %400 = vmatprep.mubr.f32.mxu0 0.0
      %401 = vmatmul.mubr.f32.gmra.mxu0 %v220
      %v402 = vpop.f32.mrf.mxu0
      %v403 = vadd.f32 0.0, %v402
      %v404 = vpop.f32.mrf.mxu0
      %v405 = vadd.f32 0.0, %v404
      %406 = vmatprep.mubr.f32.mxu0 0.0
      %407 = vmatmul.mubr.f32.gmra.mxu0 %v223
      %v408 = vpop.f32.mrf.mxu0
      %v409 = vadd.f32 0.0, %v408
      %v410 = vpop.f32.mrf.mxu0
      %v411 = vadd.f32 0.0, %v410
      %412 = vmatprep.mubr.f32.mxu0 0.0
      %413 = vmatmul.mubr.f32.gmra.mxu0 %v226
      %v414 = vpop.f32.mrf.mxu0
      %v415 = vadd.f32 0.0, %v414
      %v416 = vpop.f32.mrf.mxu0
      %v417 = vadd.f32 0.0, %v416
      %418 = vmatprep.mubr.f32.mxu0 0.0
      %419 = vmatmul.mubr.f32.gmra.mxu0 %v229
      %v420 = vpop.f32.mrf.mxu0
      %v421 = vadd.f32 0.0, %v420
      %v422 = vpop.f32.mrf.mxu0
      %v423 = vadd.f32 0.0, %v422
      %424 = vmatprep.mubr.f32.mxu0 0.0
      %425 = vmatmul.mubr.f32.gmra.mxu0 %v232
      %v426 = vpop.f32.mrf.mxu0
      %v427 = vadd.f32 0.0, %v426
      %v428 = vpop.f32.mrf.mxu0
      %v429 = vadd.f32 0.0, %v428
      %430 = vmatprep.mubr.f32.mxu0 0.0
      %431 = vmatmul.mubr.f32.gmra.mxu0 %v235
      %v432 = vpop.f32.mrf.mxu0
      %v433 = vadd.f32 0.0, %v432
      %v434 = vpop.f32.mrf.mxu0
      %v435 = vadd.f32 0.0, %v434
      %436 = vmatprep.mubr.f32.mxu0 0.0
      %437 = vmatmul.mubr.f32.gmra.mxu0 %v238
      %v438 = vpop.f32.mrf.mxu0
      %v439 = vadd.f32 0.0, %v438
      %v440 = vpop.f32.mrf.mxu0
      %v441 = vadd.f32 0.0, %v440
      %442 = vmatprep.mubr.f32.mxu0 0.0
      %443 = vmatmul.mubr.f32.gmra.mxu0 %v241
      %v444 = vpop.f32.mrf.mxu0
      %v445 = vadd.f32 0.0, %v444
      %v446 = vpop.f32.mrf.mxu0
      %v447 = vadd.f32 0.0, %v446
      %448 = vmatprep.mubr.f32.mxu0 0.0
      %449 = vmatmul.mubr.f32.gmra.mxu0 %v244
      %v450 = vpop.f32.mrf.mxu0
      %v451 = vadd.f32 0.0, %v450
      %v452 = vpop.f32.mrf.mxu0
      %v453 = vadd.f32 0.0, %v452
      %454 = vmatprep.mubr.f32.mxu0 0.0
      %455 = vmatmul.mubr.f32.gmra.mxu0 %v247
      %v456 = vpop.f32.mrf.mxu0
      %v457 = vadd.f32 0.0, %v456
      %v458 = vpop.f32.mrf.mxu0
      %v459 = vadd.f32 0.0, %v458
      %460 = vmatprep.mubr.f32.mxu0 0.0
      %461 = vmatmul.mubr.f32.gmra.mxu0 %v250
      %v462 = vpop.f32.mrf.mxu0
      %v463 = vadd.f32 0.0, %v462
      %v464 = vpop.f32.mrf.mxu0
      %v465 = vadd.f32 0.0, %v464
      %466 = vmatprep.mubr.f32.mxu0 0.0
      %467 = vmatmul.mubr.f32.gmra.mxu0 %v253
      %v468 = vpop.f32.mrf.mxu0
      %v469 = vadd.f32 0.0, %v468
      %v470 = vpop.f32.mrf.mxu0
      %v471 = vadd.f32 0.0, %v470
      %472 = vmatprep.mubr.f32.mxu0 0.0
      %473 = vmatmul.mubr.f32.gmra.mxu0 %v256
      %v474 = vpop.f32.mrf.mxu0
      %v475 = vadd.f32 0.0, %v474
      %v476 = vpop.f32.mrf.mxu0
      %v477 = vadd.f32 0.0, %v476
      %478 = vmatprep.mubr.f32.mxu0 0.0
      %479 = vmatmul.mubr.f32.gmra.mxu0 %v259
      %v480 = vpop.f32.mrf.mxu0
      %v481 = vadd.f32 0.0, %v480
      %v482 = vpop.f32.mrf.mxu0
      %v483 = vadd.f32 0.0, %v482
      %484 = vmatprep.mubr.f32.mxu0 0.0
      %485 = vmatmul.mubr.f32.gmra.mxu0 %v262
      %v486 = vpop.f32.mrf.mxu0
      %v487 = vadd.f32 0.0, %v486
      %v488 = vpop.f32.mrf.mxu0
      %v489 = vadd.f32 0.0, %v488
      %490 = vmatprep.mubr.f32.mxu0 0.0
      %491 = vmatmul.mubr.f32.gmra.mxu0 %v265
      %v492 = vpop.f32.mrf.mxu0
      %v493 = vadd.f32 0.0, %v492
      %v494 = vpop.f32.mrf.mxu0
      %v495 = vadd.f32 0.0, %v494
      %496 = vmatprep.mubr.f32.mxu0 0.0
      %497 = vmatmul.mubr.f32.gmra.mxu0 %v268
      %v498 = vpop.f32.mrf.mxu0
      %v499 = vadd.f32 0.0, %v498
      %v500 = vpop.f32.mrf.mxu0
      %v501 = vadd.f32 0.0, %v500
      %502 = vmatprep.mubr.f32.mxu0 0.0
      %503 = vmatmul.mubr.f32.gmra.mxu0 %v271
      %v504 = vpop.f32.mrf.mxu0
      %v505 = vadd.f32 0.0, %v504
      %v506 = vpop.f32.mrf.mxu0
      %v507 = vadd.f32 0.0, %v506
      %508 = vmatprep.mubr.f32.mxu0 0.0
      %509 = vmatmul.mubr.f32.gmra.mxu0 %v274
      %v510 = vpop.f32.mrf.mxu0
      %v511 = vadd.f32 0.0, %v510
      %v512 = vpop.f32.mrf.mxu0
      %v513 = vadd.f32 0.0, %v512
      %514 = vmatprep.mubr.f32.mxu0 0.0
      %515 = vmatmul.mubr.f32.gmra.mxu0 %v277
      %v516 = vpop.f32.mrf.mxu0
      %v517 = vadd.f32 0.0, %v516
      %v518 = vpop.f32.mrf.mxu0
      %v519 = vadd.f32 0.0, %v518
      %520 = vmatprep.mubr.f32.mxu0 0.0
      %521 = vmatmul.mubr.f32.gmra.mxu0 %v280
      %v522 = vpop.f32.mrf.mxu0
      %v523 = vadd.f32 0.0, %v522
      %v524 = vpop.f32.mrf.mxu0
      %v525 = vadd.f32 0.0, %v524
      %526 = vmatprep.mubr.f32.mxu0 0.0
      %527 = vmatmul.mubr.f32.gmra.mxu0 %v283
      %v528 = vpop.f32.mrf.mxu0
      %v529 = vadd.f32 0.0, %v528
      %v530 = vpop.f32.mrf.mxu0
      %v531 = vadd.f32 0.0, %v530
      %532 = vmatprep.mubr.f32.mxu0 0.0
      %533 = vmatmul.mubr.f32.gmra.mxu0 %v286
      %v534 = vpop.f32.mrf.mxu0
      %v535 = vadd.f32 0.0, %v534
      %v536 = vpop.f32.mrf.mxu0
      %v537 = vadd.f32 0.0, %v536
      %538 = vmatprep.mubr.f32.mxu0 0.0
      %539 = vmatmul.mubr.f32.gmra.mxu0 %v289
      %v540 = vpop.f32.mrf.mxu0
      %v541 = vadd.f32 0.0, %v540
      %v542 = vpop.f32.mrf.mxu0
      %v543 = vadd.f32 0.0, %v542
      %544 = vmatprep.mubr.f32.mxu0 0.0
      %545 = vmatmul.mubr.f32.gmra.mxu0 %v292
      %v546 = vpop.f32.mrf.mxu0
      %v547 = vadd.f32 0.0, %v546
      %v548 = vpop.f32.mrf.mxu0
      %v549 = vadd.f32 0.0, %v548
      %550 = vdwg.mxu0
      %v551 = vmax.f32 %v361, %v363
      %552 = vmax.xlane.f32.xlu0 %v551
      %v553 = vpop.xlane.xlu0 %552
      %v554 = vmax.f32 %v367, %v369
      %555 = vmax.xlane.f32.xlu0 %v554
      %v556 = vpop.xlane.xlu0 %555
      %v557 = vmax.f32 %v373, %v375
      %558 = vmax.xlane.f32.xlu0 %v557
      %v559 = vpop.xlane.xlu0 %558
      %v560 = vmax.f32 %v379, %v381
      %561 = vmax.xlane.f32.xlu0 %v560
      %v562 = vpop.xlane.xlu0 %561
      %v563 = vmax.f32 %v385, %v387
      %564 = vmax.xlane.f32.xlu0 %v563
      %v565 = vpop.xlane.xlu0 %564
      %v566 = vmax.f32 %v391, %v393
      %567 = vmax.xlane.f32.xlu0 %v566
      %v568 = vpop.xlane.xlu0 %567
      %v569 = vmax.f32 %v397, %v399
      %570 = vmax.xlane.f32.xlu0 %v569
      %v571 = vpop.xlane.xlu0 %570
      %v572 = vmax.f32 %v403, %v405
      %573 = vmax.xlane.f32.xlu0 %v572
      %v574 = vpop.xlane.xlu0 %573
      %v575 = vmax.f32 %v409, %v411
      %576 = vmax.xlane.f32.xlu0 %v575
      %v577 = vpop.xlane.xlu0 %576
      %v578 = vmax.f32 %v415, %v417
      %579 = vmax.xlane.f32.xlu0 %v578
      %v580 = vpop.xlane.xlu0 %579
      %v581 = vmax.f32 %v421, %v423
      %582 = vmax.xlane.f32.xlu0 %v581
      %v583 = vpop.xlane.xlu0 %582
      %v584 = vmax.f32 %v427, %v429
      %585 = vmax.xlane.f32.xlu0 %v584
      %v586 = vpop.xlane.xlu0 %585
      %v587 = vmax.f32 %v433, %v435
      %588 = vmax.xlane.f32.xlu0 %v587
      %v589 = vpop.xlane.xlu0 %588
      %v590 = vmax.f32 %v439, %v441
      %591 = vmax.xlane.f32.xlu0 %v590
      %v592 = vpop.xlane.xlu0 %591
      %v593 = vmax.f32 %v445, %v447
      %594 = vmax.xlane.f32.xlu0 %v593
      %v595 = vpop.xlane.xlu0 %594
      %v596 = vmax.f32 %v451, %v453
      %597 = vmax.xlane.f32.xlu0 %v596
      %v598 = vpop.xlane.xlu0 %597
      %v599 = vmax.f32 %v457, %v459
      %600 = vmax.xlane.f32.xlu0 %v599
      %v601 = vpop.xlane.xlu0 %600
      %v602 = vmax.f32 %v463, %v465
      %603 = vmax.xlane.f32.xlu0 %v602
      %v604 = vpop.xlane.xlu0 %603
      %v605 = vmax.f32 %v469, %v471
      %606 = vmax.xlane.f32.xlu0 %v605
      %v607 = vpop.xlane.xlu0 %606
      %v608 = vmax.f32 %v475, %v477
      %609 = vmax.xlane.f32.xlu0 %v608
      %v610 = vpop.xlane.xlu0 %609
      %v611 = vmax.f32 %v481, %v483
      %612 = vmax.xlane.f32.xlu0 %v611
      %v613 = vpop.xlane.xlu0 %612
      %v614 = vmax.f32 %v487, %v489
      %615 = vmax.xlane.f32.xlu0 %v614
      %v616 = vpop.xlane.xlu0 %615
      %v617 = vmax.f32 %v493, %v495
      %618 = vmax.xlane.f32.xlu0 %v617
      %v619 = vpop.xlane.xlu0 %618
      %v620 = vmax.f32 %v499, %v501
      %621 = vmax.xlane.f32.xlu0 %v620
      %v622 = vpop.xlane.xlu0 %621
      %v623 = vmax.f32 %v505, %v507
      %624 = vmax.xlane.f32.xlu0 %v623
      %v625 = vpop.xlane.xlu0 %624
      %v626 = vmax.f32 %v511, %v513
      %627 = vmax.xlane.f32.xlu0 %v626
      %v628 = vpop.xlane.xlu0 %627
      %v629 = vmax.f32 %v517, %v519
      %630 = vmax.xlane.f32.xlu0 %v629
      %v631 = vpop.xlane.xlu0 %630
      %v632 = vmax.f32 %v523, %v525
      %633 = vmax.xlane.f32.xlu0 %v632
      %v634 = vpop.xlane.xlu0 %633
      %v635 = vmax.f32 %v529, %v531
      %636 = vmax.xlane.f32.xlu0 %v635
      %v637 = vpop.xlane.xlu0 %636
      %v638 = vmax.f32 %v535, %v537
      %639 = vmax.xlane.f32.xlu0 %v638
      %v640 = vpop.xlane.xlu0 %639
      %v641 = vmax.f32 %v541, %v543
      %642 = vmax.xlane.f32.xlu0 %v641
      %v643 = vpop.xlane.xlu0 %642
      %v644 = vmax.f32 %v547, %v549
      %645 = vmax.xlane.f32.xlu0 %v644
      %v646 = vpop.xlane.xlu0 %645
      %v647 = vsub.f32 %v361, %v553
      %v648 = vsub.f32 %v363, %v553
      %v649 = vsub.f32 %v367, %v556
      %v650 = vsub.f32 %v369, %v556
      %v651 = vsub.f32 %v373, %v559
      %v652 = vsub.f32 %v375, %v559
      %v653 = vsub.f32 %v379, %v562
      %v654 = vsub.f32 %v381, %v562
      %v655 = vsub.f32 %v385, %v565
      %v656 = vsub.f32 %v387, %v565
      %v657 = vsub.f32 %v391, %v568
      %v658 = vsub.f32 %v393, %v568
      %v659 = vsub.f32 %v397, %v571
      %v660 = vsub.f32 %v399, %v571
      %v661 = vsub.f32 %v403, %v574
      %v662 = vsub.f32 %v405, %v574
      %v663 = vsub.f32 %v409, %v577
      %v664 = vsub.f32 %v411, %v577
      %v665 = vsub.f32 %v415, %v580
      %v666 = vsub.f32 %v417, %v580
      %v667 = vsub.f32 %v421, %v583
      %v668 = vsub.f32 %v423, %v583
      %v669 = vsub.f32 %v427, %v586
      %v670 = vsub.f32 %v429, %v586
      %v671 = vsub.f32 %v433, %v589
      %v672 = vsub.f32 %v435, %v589
      %v673 = vsub.f32 %v439, %v592
      %v674 = vsub.f32 %v441, %v592
      %v675 = vsub.f32 %v445, %v595
      %v676 = vsub.f32 %v447, %v595
      %v677 = vsub.f32 %v451, %v598
      %v678 = vsub.f32 %v453, %v598
      %v679 = vsub.f32 %v457, %v601
      %v680 = vsub.f32 %v459, %v601
      %v681 = vsub.f32 %v463, %v604
      %v682 = vsub.f32 %v465, %v604
      %v683 = vsub.f32 %v469, %v607
      %v684 = vsub.f32 %v471, %v607
      %v685 = vsub.f32 %v475, %v610
      %v686 = vsub.f32 %v477, %v610
      %v687 = vsub.f32 %v481, %v613
      %v688 = vsub.f32 %v483, %v613
      %v689 = vsub.f32 %v487, %v616
      %v690 = vsub.f32 %v489, %v616
      %v691 = vsub.f32 %v493, %v619
      %v692 = vsub.f32 %v495, %v619
      %v693 = vsub.f32 %v499, %v622
      %v694 = vsub.f32 %v501, %v622
      %v695 = vsub.f32 %v505, %v625
      %v696 = vsub.f32 %v507, %v625
      %v697 = vsub.f32 %v511, %v628
      %v698 = vsub.f32 %v513, %v628
      %v699 = vsub.f32 %v517, %v631
      %v700 = vsub.f32 %v519, %v631
      %v701 = vsub.f32 %v523, %v634
      %v702 = vsub.f32 %v525, %v634
      %v703 = vsub.f32 %v529, %v637
      %v704 = vsub.f32 %v531, %v637
      %v705 = vsub.f32 %v535, %v640
      %v706 = vsub.f32 %v537, %v640
      %v707 = vsub.f32 %v541, %v643
      %v708 = vsub.f32 %v543, %v643
      %v709 = vsub.f32 %v547, %v646
      %v710 = vsub.f32 %v549, %v646
      %v711 = vmul.f32 %v647, 1.442695
      %v712 = vpow.pop %v711
      %v713 = vmul.f32 %v648, 1.442695
      %v714 = vpow.pop %v713
      %v715 = vmul.f32 %v649, 1.442695
      %v716 = vpow.pop %v715
      %v717 = vmul.f32 %v650, 1.442695
      %v718 = vpow.pop %v717
      %v719 = vmul.f32 %v651, 1.442695
      %v720 = vpow.pop %v719
      %v721 = vmul.f32 %v652, 1.442695
      %v722 = vpow.pop %v721
      %v723 = vmul.f32 %v653, 1.442695
      %v724 = vpow.pop %v723
      %v725 = vmul.f32 %v654, 1.442695
      %v726 = vpow.pop %v725
      %v727 = vmul.f32 %v655, 1.442695
      %v728 = vpow.pop %v727
      %v729 = vmul.f32 %v656, 1.442695
      %v730 = vpow.pop %v729
      %v731 = vmul.f32 %v657, 1.442695
      %v732 = vpow.pop %v731
      %v733 = vmul.f32 %v658, 1.442695
      %v734 = vpow.pop %v733
      %v735 = vmul.f32 %v659, 1.442695
      %v736 = vpow.pop %v735
      %v737 = vmul.f32 %v660, 1.442695
      %v738 = vpow.pop %v737
      %v739 = vmul.f32 %v661, 1.442695
      %v740 = vpow.pop %v739
      %v741 = vmul.f32 %v662, 1.442695
      %v742 = vpow.pop %v741
      %v743 = vmul.f32 %v663, 1.442695
      %v744 = vpow.pop %v743
      %v745 = vmul.f32 %v664, 1.442695
      %v746 = vpow.pop %v745
      %v747 = vmul.f32 %v665, 1.442695
      %v748 = vpow.pop %v747
      %v749 = vmul.f32 %v666, 1.442695
      %v750 = vpow.pop %v749
      %v751 = vmul.f32 %v667, 1.442695
      %v752 = vpow.pop %v751
      %v753 = vmul.f32 %v668, 1.442695
      %v754 = vpow.pop %v753
      %v755 = vmul.f32 %v669, 1.442695
      %v756 = vpow.pop %v755
      %v757 = vmul.f32 %v670, 1.442695
      %v758 = vpow.pop %v757
      %v759 = vmul.f32 %v671, 1.442695
      %v760 = vpow.pop %v759
      %v761 = vmul.f32 %v672, 1.442695
      %v762 = vpow.pop %v761
      %v763 = vmul.f32 %v673, 1.442695
      %v764 = vpow.pop %v763
      %v765 = vmul.f32 %v674, 1.442695
      %v766 = vpow.pop %v765
      %v767 = vmul.f32 %v675, 1.442695
      %v768 = vpow.pop %v767
      %v769 = vmul.f32 %v676, 1.442695
      %v770 = vpow.pop %v769
      %v771 = vmul.f32 %v677, 1.442695
      %v772 = vpow.pop %v771
      %v773 = vmul.f32 %v678, 1.442695
      %v774 = vpow.pop %v773
      %v775 = vmul.f32 %v679, 1.442695
      %v776 = vpow.pop %v775
      %v777 = vmul.f32 %v680, 1.442695
      %v778 = vpow.pop %v777
      %v779 = vmul.f32 %v681, 1.442695
      %v780 = vpow.pop %v779
      %v781 = vmul.f32 %v682, 1.442695
      %v782 = vpow.pop %v781
      %v783 = vmul.f32 %v683, 1.442695
      %v784 = vpow.pop %v783
      %v785 = vmul.f32 %v684, 1.442695
      %v786 = vpow.pop %v785
      %v787 = vmul.f32 %v685, 1.442695
      %v788 = vpow.pop %v787
      %v789 = vmul.f32 %v686, 1.442695
      %v790 = vpow.pop %v789
      %v791 = vmul.f32 %v687, 1.442695
      %v792 = vpow.pop %v791
      %v793 = vmul.f32 %v688, 1.442695
      %v794 = vpow.pop %v793
      %v795 = vmul.f32 %v689, 1.442695
      %v796 = vpow.pop %v795
      %v797 = vmul.f32 %v690, 1.442695
      %v798 = vpow.pop %v797
      %v799 = vmul.f32 %v691, 1.442695
      %v800 = vpow.pop %v799
      %v801 = vmul.f32 %v692, 1.442695
      %v802 = vpow.pop %v801
      %v803 = vmul.f32 %v693, 1.442695
      %v804 = vpow.pop %v803
      %v805 = vmul.f32 %v694, 1.442695
      %v806 = vpow.pop %v805
      %v807 = vmul.f32 %v695, 1.442695
      %v808 = vpow.pop %v807
      %v809 = vmul.f32 %v696, 1.442695
      %v810 = vpow.pop %v809
      %v811 = vmul.f32 %v697, 1.442695
      %v812 = vpow.pop %v811
      %v813 = vmul.f32 %v698, 1.442695
      %v814 = vpow.pop %v813
      %v815 = vmul.f32 %v699, 1.442695
      %v816 = vpow.pop %v815
      %v817 = vmul.f32 %v700, 1.442695
      %v818 = vpow.pop %v817
      %v819 = vmul.f32 %v701, 1.442695
      %v820 = vpow.pop %v819
      %v821 = vmul.f32 %v702, 1.442695
      %v822 = vpow.pop %v821
      %v823 = vmul.f32 %v703, 1.442695
      %v824 = vpow.pop %v823
      %v825 = vmul.f32 %v704, 1.442695
      %v826 = vpow.pop %v825
      %v827 = vmul.f32 %v705, 1.442695
      %v828 = vpow.pop %v827
      %v829 = vmul.f32 %v706, 1.442695
      %v830 = vpow.pop %v829
      %v831 = vmul.f32 %v707, 1.442695
      %v832 = vpow.pop %v831
      %v833 = vmul.f32 %v708, 1.442695
      %v834 = vpow.pop %v833
      %v835 = vmul.f32 %v709, 1.442695
      %v836 = vpow.pop %v835
      %v837 = vmul.f32 %v710, 1.442695
      %v838 = vpow.pop %v837
      %v839 = vadd.f32 %v712, %v714
      %840 = vadd.xlane.f32.xlu0 %v839
      %v841 = vpop.xlane.xlu0 %840
      %v842 = vadd.f32 %v716, %v718
      %843 = vadd.xlane.f32.xlu0 %v842
      %v844 = vpop.xlane.xlu0 %843
      %v845 = vadd.f32 %v720, %v722
      %846 = vadd.xlane.f32.xlu0 %v845
      %v847 = vpop.xlane.xlu0 %846
      %v848 = vadd.f32 %v724, %v726
      %849 = vadd.xlane.f32.xlu0 %v848
      %v850 = vpop.xlane.xlu0 %849
      %v851 = vadd.f32 %v728, %v730
      %852 = vadd.xlane.f32.xlu0 %v851
      %v853 = vpop.xlane.xlu0 %852
      %v854 = vadd.f32 %v732, %v734
      %855 = vadd.xlane.f32.xlu0 %v854
      %v856 = vpop.xlane.xlu0 %855
      %v857 = vadd.f32 %v736, %v738
      %858 = vadd.xlane.f32.xlu0 %v857
      %v859 = vpop.xlane.xlu0 %858
      %v860 = vadd.f32 %v740, %v742
      %861 = vadd.xlane.f32.xlu0 %v860
      %v862 = vpop.xlane.xlu0 %861
      %v863 = vadd.f32 %v744, %v746
      %864 = vadd.xlane.f32.xlu0 %v863
      %v865 = vpop.xlane.xlu0 %864
      %v866 = vadd.f32 %v748, %v750
      %867 = vadd.xlane.f32.xlu0 %v866
      %v868 = vpop.xlane.xlu0 %867
      %v869 = vadd.f32 %v752, %v754
      %870 = vadd.xlane.f32.xlu0 %v869
      %v871 = vpop.xlane.xlu0 %870
      %v872 = vadd.f32 %v756, %v758
      %873 = vadd.xlane.f32.xlu0 %v872
      %v874 = vpop.xlane.xlu0 %873
      %v875 = vadd.f32 %v760, %v762
      %876 = vadd.xlane.f32.xlu0 %v875
      %v877 = vpop.xlane.xlu0 %876
      %v878 = vadd.f32 %v764, %v766
      %879 = vadd.xlane.f32.xlu0 %v878
      %v880 = vpop.xlane.xlu0 %879
      %v881 = vadd.f32 %v768, %v770
      %882 = vadd.xlane.f32.xlu0 %v881
      %v883 = vpop.xlane.xlu0 %882
      %v884 = vadd.f32 %v772, %v774
      %885 = vadd.xlane.f32.xlu0 %v884
      %v886 = vpop.xlane.xlu0 %885
      %v887 = vadd.f32 %v776, %v778
      %888 = vadd.xlane.f32.xlu0 %v887
      %v889 = vpop.xlane.xlu0 %888
      %v890 = vadd.f32 %v780, %v782
      %891 = vadd.xlane.f32.xlu0 %v890
      %v892 = vpop.xlane.xlu0 %891
      %v893 = vadd.f32 %v784, %v786
      %894 = vadd.xlane.f32.xlu0 %v893
      %v895 = vpop.xlane.xlu0 %894
      %v896 = vadd.f32 %v788, %v790
      %897 = vadd.xlane.f32.xlu0 %v896
      %v898 = vpop.xlane.xlu0 %897
      %v899 = vadd.f32 %v792, %v794
      %900 = vadd.xlane.f32.xlu0 %v899
      %v901 = vpop.xlane.xlu0 %900
      %v902 = vadd.f32 %v796, %v798
      %903 = vadd.xlane.f32.xlu0 %v902
      %v904 = vpop.xlane.xlu0 %903
      %v905 = vadd.f32 %v800, %v802
      %906 = vadd.xlane.f32.xlu0 %v905
      %v907 = vpop.xlane.xlu0 %906
      %v908 = vadd.f32 %v804, %v806
      %909 = vadd.xlane.f32.xlu0 %v908
      %v910 = vpop.xlane.xlu0 %909
      %v911 = vadd.f32 %v808, %v810
      %912 = vadd.xlane.f32.xlu0 %v911
      %v913 = vpop.xlane.xlu0 %912
      %v914 = vadd.f32 %v812, %v814
      %915 = vadd.xlane.f32.xlu0 %v914
      %v916 = vpop.xlane.xlu0 %915
      %v917 = vadd.f32 %v816, %v818
      %918 = vadd.xlane.f32.xlu0 %v917
      %v919 = vpop.xlane.xlu0 %918
      %v920 = vadd.f32 %v820, %v822
      %921 = vadd.xlane.f32.xlu0 %v920
      %v922 = vpop.xlane.xlu0 %921
      %v923 = vadd.f32 %v824, %v826
      %924 = vadd.xlane.f32.xlu0 %v923
      %v925 = vpop.xlane.xlu0 %924
      %v926 = vadd.f32 %v828, %v830
      %927 = vadd.xlane.f32.xlu0 %v926
      %v928 = vpop.xlane.xlu0 %927
      %v929 = vadd.f32 %v832, %v834
      %930 = vadd.xlane.f32.xlu0 %v929
      %v931 = vpop.xlane.xlu0 %930
      %v932 = vadd.f32 %v836, %v838
      %933 = vadd.xlane.f32.xlu0 %v932
      %v934 = vpop.xlane.xlu0 %933
      %v935 = vrcp.pop %v841
      %v936 = vrcp.pop %v844
      %v937 = vrcp.pop %v847
      %v938 = vrcp.pop %v850
      %v939 = vrcp.pop %v853
      %v940 = vrcp.pop %v856
      %v941 = vrcp.pop %v859
      %v942 = vrcp.pop %v862
      %v943 = vrcp.pop %v865
      %v944 = vrcp.pop %v868
      %v945 = vrcp.pop %v871
      %v946 = vrcp.pop %v874
      %v947 = vrcp.pop %v877
      %v948 = vrcp.pop %v880
      %v949 = vrcp.pop %v883
      %v950 = vrcp.pop %v886
      %v951 = vrcp.pop %v889
      %v952 = vrcp.pop %v892
      %v953 = vrcp.pop %v895
      %v954 = vrcp.pop %v898
      %v955 = vrcp.pop %v901
      %v956 = vrcp.pop %v904
      %v957 = vrcp.pop %v907
      %v958 = vrcp.pop %v910
      %v959 = vrcp.pop %v913
      %v960 = vrcp.pop %v916
      %v961 = vrcp.pop %v919
      %v962 = vrcp.pop %v922
      %v963 = vrcp.pop %v925
      %v964 = vrcp.pop %v928
      %v965 = vrcp.pop %v931
      %v966 = vrcp.pop %v934
      %v967 = vmul.f32 %v712, %v935
      %v968 = vmul.f32 %v714, %v935
      %v969 = vmul.f32 %v716, %v936
      %v970 = vmul.f32 %v718, %v936
      %v971 = vmul.f32 %v720, %v937
      %v972 = vmul.f32 %v722, %v937
      %v973 = vmul.f32 %v724, %v938
      %v974 = vmul.f32 %v726, %v938
      %v975 = vmul.f32 %v728, %v939
      %v976 = vmul.f32 %v730, %v939
      %v977 = vmul.f32 %v732, %v940
      %v978 = vmul.f32 %v734, %v940
      %v979 = vmul.f32 %v736, %v941
      %v980 = vmul.f32 %v738, %v941
      %v981 = vmul.f32 %v740, %v942
      %v982 = vmul.f32 %v742, %v942
      %v983 = vmul.f32 %v744, %v943
      %v984 = vmul.f32 %v746, %v943
      %v985 = vmul.f32 %v748, %v944
      %v986 = vmul.f32 %v750, %v944
      %v987 = vmul.f32 %v752, %v945
      %v988 = vmul.f32 %v754, %v945
      %v989 = vmul.f32 %v756, %v946
      %v990 = vmul.f32 %v758, %v946
      %v991 = vmul.f32 %v760, %v947
      %v992 = vmul.f32 %v762, %v947
      %v993 = vmul.f32 %v764, %v948
      %v994 = vmul.f32 %v766, %v948
      %v995 = vmul.f32 %v768, %v949
      %v996 = vmul.f32 %v770, %v949
      %v997 = vmul.f32 %v772, %v950
      %v998 = vmul.f32 %v774, %v950
      %v999 = vmul.f32 %v776, %v951
      %v1000 = vmul.f32 %v778, %v951
      %v1001 = vmul.f32 %v780, %v952
      %v1002 = vmul.f32 %v782, %v952
      %v1003 = vmul.f32 %v784, %v953
      %v1004 = vmul.f32 %v786, %v953
      %v1005 = vmul.f32 %v788, %v954
      %v1006 = vmul.f32 %v790, %v954
      %v1007 = vmul.f32 %v792, %v955
      %v1008 = vmul.f32 %v794, %v955
      %v1009 = vmul.f32 %v796, %v956
      %v1010 = vmul.f32 %v798, %v956
      %v1011 = vmul.f32 %v800, %v957
      %v1012 = vmul.f32 %v802, %v957
      %v1013 = vmul.f32 %v804, %v958
      %v1014 = vmul.f32 %v806, %v958
      %v1015 = vmul.f32 %v808, %v959
      %v1016 = vmul.f32 %v810, %v959
      %v1017 = vmul.f32 %v812, %v960
      %v1018 = vmul.f32 %v814, %v960
      %v1019 = vmul.f32 %v816, %v961
      %v1020 = vmul.f32 %v818, %v961
      %v1021 = vmul.f32 %v820, %v962
      %v1022 = vmul.f32 %v822, %v962
      %v1023 = vmul.f32 %v824, %v963
      %v1024 = vmul.f32 %v826, %v963
      %v1025 = vmul.f32 %v828, %v964
      %v1026 = vmul.f32 %v830, %v964
      %v1027 = vmul.f32 %v832, %v965
      %v1028 = vmul.f32 %v834, %v965
      %v1029 = vmul.f32 %v836, %v966
      %v1030 = vmul.f32 %v838, %v966
      %v1033 = vunpack.c.l.s4 1983009808
      %v1034 = vunpack.c.0.s8 %v1033
      %v1035 = vlaneseq
      %v1036 = vshrl.u32 %v1035, 7
      %v1037 = vsub.s32 %v1034, %v1036
      %v1038 = vrot.slane %v196, %v1037
      %v1039 = vcombine.high %v1038, %v1038
      %1042 = vmatprep.subr.mxu0 %v998
      %1043 = vmatpush1.xpose.msra.mxu0 %v997
      %1044 = vmatprep.subr.mxu0 %v996
      %1045 = vmatpush1.xpose.msra.mxu0 %v995
      %1046 = vmatprep.subr.mxu0 %v994
      %1047 = vmatpush1.xpose.msra.mxu0 %v993
      %1048 = vmatprep.subr.mxu0 %v992
      %1049 = vmatpush1.xpose.msra.mxu0 %v991
      %1050 = vmatprep.subr.mxu0 %v990
      %1051 = vmatpush1.xpose.msra.mxu0 %v989
      %1052 = vmatprep.subr.mxu0 %v988
      %1053 = vmatpush1.xpose.msra.mxu0 %v987
      %1054 = vmatprep.subr.mxu0 %v986
      %1055 = vmatpush1.xpose.msra.mxu0 %v985
      %1056 = vmatprep.subr.mxu0 %v984
      %1057 = vmatpush1.xpose.msra.mxu0 %v983
      %1058 = vmatprep.subr.mxu0 %v982
      %1059 = vmatpush1.xpose.msra.mxu0 %v981
      %1060 = vmatprep.subr.mxu0 %v980
      %1061 = vmatpush1.xpose.msra.mxu0 %v979
      %1062 = vmatprep.subr.mxu0 %v978
      %1063 = vmatpush1.xpose.msra.mxu0 %v977
      %1064 = vmatprep.subr.mxu0 %v976
      %1065 = vmatpush1.xpose.msra.mxu0 %v975
      %1066 = vmatprep.subr.mxu0 %v974
      %1067 = vmatpush1.xpose.msra.mxu0 %v973
      %1068 = vmatprep.subr.mxu0 %v972
      %1069 = vmatpush1.xpose.msra.mxu0 %v971
      %1070 = vmatprep.subr.mxu0 %v970
      %1071 = vmatpush1.xpose.msra.mxu0 %v969
      %1072 = vmatprep.subr.mxu0 %v968
      %1073 = vmatpush1.xpose.msra.mxu0 %v967
      %1074 = vmatprep.subr.mxu0 %v1030
      %1075 = vmatpush2.xpose.msra.mxu0 %v1029
      %1076 = vmatprep.subr.mxu0 %v1028
      %1077 = vmatpush2.xpose.msra.mxu0 %v1027
      %1078 = vmatprep.subr.mxu0 %v1026
      %1079 = vmatpush2.xpose.msra.mxu0 %v1025
      %1080 = vmatprep.subr.mxu0 %v1024
      %1081 = vmatpush2.xpose.msra.mxu0 %v1023
      %1082 = vmatprep.subr.mxu0 %v1022
      %1083 = vmatpush2.xpose.msra.mxu0 %v1021
      %1084 = vmatprep.subr.mxu0 %v1020
      %1085 = vmatpush2.xpose.msra.mxu0 %v1019
      %1086 = vmatprep.subr.mxu0 %v1018
      %1087 = vmatpush2.xpose.msra.mxu0 %v1017
      %1088 = vmatprep.subr.mxu0 %v1016
      %1089 = vmatpush2.xpose.msra.mxu0 %v1015
      %1090 = vmatprep.subr.mxu0 %v1014
      %1091 = vmatpush2.xpose.msra.mxu0 %v1013
      %1092 = vmatprep.subr.mxu0 %v1012
      %1093 = vmatpush2.xpose.msra.mxu0 %v1011
      %1094 = vmatprep.subr.mxu0 %v1010
      %1095 = vmatpush2.xpose.msra.mxu0 %v1009
      %1096 = vmatprep.subr.mxu0 %v1008
      %1097 = vmatpush2.xpose.msra.mxu0 %v1007
      %1098 = vmatprep.subr.mxu0 %v1006
      %1099 = vmatpush2.xpose.msra.mxu0 %v1005
      %1100 = vmatprep.subr.mxu0 %v1004
      %1101 = vmatpush2.xpose.msra.mxu0 %v1003
      %1102 = vmatprep.subr.mxu0 %v1002
      %1103 = vmatpush2.xpose.msra.mxu0 %v1001
      %1104 = vmatprep.subr.mxu0 %v1000
      %1105 = vmatpush2.xpose.msra.mxu0 %v999
      %1106 = vmatprep.mubr.f32.mxu0 %v1039
      %1107 = vmatmul.mubr.f32.gmra.mxu0 %v1038
      %v1108 = vpop.f32.mrf.mxu0
      %v1109 = vadd.f32 0.0, %v1108
      %v1110 = vpop.f32.mrf.mxu0
      %v1111 = vadd.f32 0.0, %v1110
      %1112 = vdwg.mxu0
      %v1115 = vcombine.low %v1109, %v1111
      %v1117 = vunpack.c.l.s4 1983009808
      %v1118 = vunpack.c.0.s8 %v1117
      %v1119 = vlaneseq
      %v1120 = vshrl.u32 %v1119, 7
      %v1121 = vsub.s32 %v1118, %v1120
      %v1122 = vrot.slane %v1115, %v1121
      %1124 = vst [vmem:[%s163] sm:$0xf] %v1122
      %p1125 = scmp.lt.s32.totalorder %s13, 1
      %s1126 = scalar_select %p1125, %s13, 1
      %s1127 = smul.addr %s1126, 2
      %s1128 = smul.addr %s1127, 2
      %s1129 = scalar_lea.vmem %s2, %s1128
      // Predicated region
      $region29: #{mwsa_forward.8} parent=27 // pred_check
        %p1130 = pneg %p83
      $region30: #{mwsa_forward.8} parent=27 // pred_check_branch
        %1132 = sbr.rel (%p1130) target = $region32
      $region31: #{mwsa_forward.8} parent=27 // pred_region
        _
      $region32: #{mwsa_forward.8} parent=27 // pred_fallthru
        _
    $region28: #{mwsa_forward.8} parent=5 // pred_fallthru
      _
    %p1133 = scmp.le.s32.totalorder 2, %s8
    // Predicated region
    $region33: #{mwsa_forward.8} parent=5 // pred_check
      %p1134 = pneg %p1133
    $region34: #{mwsa_forward.8} parent=5 // pred_check_branch
      %1136 = sbr.rel (%p1134) target = $region36
    $region35: #{mwsa_forward.8} parent=5 // pred_region
      %s1137 = ssub.s32 %s8, 2
      // Predicated region
      $region37: #{mwsa_forward.8} parent=35 // pred_check
        %p1138 = pneg %p89
      $region38: #{mwsa_forward.8} parent=35 // pred_check_branch
        %1140 = sbr.rel (%p1138) target = $region40
      $region39: #{mwsa_forward.8} parent=35 // pred_region
        %p1141 = scmp.lt.s32.totalorder %s14, 1
        %s1142 = scalar_select %p1141, %s14, 1
        %s1143 = smul.addr %s1142, 2
        %s1144 = smul.addr %s1143, 2
        %s1145 = scalar_lea.vmem %s2, %s1144
      $region40: #{mwsa_forward.8} parent=35 // pred_fallthru
        _
    $region36: #{mwsa_forward.8} parent=5 // pred_fallthru
      _
  $region6: #{mwsa_forward.8} parent=0 // loop_footer
    %s12 = sadd.s32 1, %s8
  $region7: #{mwsa_forward.8} parent=0 // loop_footer_branch
    %7 = sbr.rel target = $region3
  $region8: #{mwsa_forward.8} parent=0 // loop_exit
    _

// kernel: mwsa_forward.7
$region0: #{mwsa_forward.7}
  #allocation0 [shape = 'u32[]', space=smem, size = 0x4, offset = 0x4, fixed_abs, tag = 'smem constant byte address 0x4 - core index']
  #allocation1 [shape = 'u32[144,128]{1,0:T(1,128)}', space=vmem, size = 0x12000, scoped, tag = 'internal scratch']
  %s0 = inlined_call_operand.vmem [shape: f32[8,64,2], index: 0, kind: input, shape index: {}]
  %s1 = inlined_call_operand.vmem [shape: f32[8,2,64], index: 1, kind: input, shape index: {}]
  %s2 = inlined_call_operand.vmem [shape: f32[8,2,64], index: 2, kind: output, shape index: {}]
  %s3 = sld [smem:[#allocation0]]
  $region41: #{mwsa_forward.7} parent=0
    _
  %s5 = ssub.s32 1, %s3
  %s6 = scalar_select 0, %s5, %s3
  loop: start=0, step=1, limit=4
  $region2: #{mwsa_forward.7} parent=0 // loop_pre_header
    _
  $region3: #{mwsa_forward.7} parent=0 // loop_header
    %s8 = sphi 0, %s12
    %p9 = scmp.ge.s32.totalorder %s8, 4
    %s18 = sphi 0, %s20
    %s21 = sphi 0, %s18
    %s22 = sphi 0, %s21
    %s38 = sphi 0, %s22
    %s44 = sphi 0, %s46
    %s47 = sphi 0, %s44
    %s48 = sphi 0, %s47
    %s64 = sphi 0, %s48
    %s70 = sphi 0, %s72
    %s73 = sphi 0, %s70
    %s74 = sphi 0, %s73
    %s90 = sphi 0, %s74
  $region4: #{mwsa_forward.7} parent=0 // loop_header_branch
    %11 = sbr.rel (%p9) target = $region8
  $region5: #{mwsa_forward.7} parent=0 // loop_body
    %s13 = ssub.s32 %s8, 1
    %s14 = ssub.s32 %s8, 2
    %s15 = sadd.s32 %s8, 1
    %s16 = ssub.s32 %s8, %s15
    %p17 = scmp.eq.s32.totalorder %s16, 0
    %s19 = sadd.s32 %s18, 1
    %s20 = scalar_select %p17, %s18, %s19
    %p23 = pneg %p17
    %p24 = scmp.eq.s32.totalorder %s8, 1
    %p25 = por %p23, %p24
    %p26 = scmp.ne.s32.totalorder %s18, %s21
    %p27 = scmp.eq.s32.totalorder %s8, 0
    %p28 = por %p26, %p27
    %p29 = scmp.ne.s32.totalorder %s18, %s21
    %p30 = scmp.eq.s32.totalorder %s13, 1
    %p31 = por %p29, %p30
    %p32 = scmp.ne.s32.totalorder %s21, %s22
    %p33 = scmp.eq.s32.totalorder %s13, 0
    %p34 = por %p32, %p33
    %p35 = scmp.ne.s32.totalorder %s21, %s22
    %p36 = scmp.eq.s32.totalorder %s14, 1
    %p37 = por %p35, %p36
    %p39 = scmp.ne.s32.totalorder %s22, %s38
    %p40 = scmp.eq.s32.totalorder %s14, 0
    %p41 = por %p39, %p40
    %s42 = ssub.s32 %s8, %s15
    %p43 = scmp.eq.s32.totalorder %s42, 0
    %s45 = sadd.s32 %s44, 1
    %s46 = scalar_select %p43, %s44, %s45
    %p49 = pneg %p43
    %p50 = scmp.eq.s32.totalorder %s8, 1
    %p51 = por %p49, %p50
    %p52 = scmp.ne.s32.totalorder %s44, %s47
    %p53 = scmp.eq.s32.totalorder %s8, 0
    %p54 = por %p52, %p53
    %p55 = scmp.ne.s32.totalorder %s44, %s47
    %p56 = scmp.eq.s32.totalorder %s13, 1
    %p57 = por %p55, %p56
    %p58 = scmp.ne.s32.totalorder %s47, %s48
    %p59 = scmp.eq.s32.totalorder %s13, 0
    %p60 = por %p58, %p59
    %p61 = scmp.ne.s32.totalorder %s47, %s48
    %p62 = scmp.eq.s32.totalorder %s14, 1
    %p63 = por %p61, %p62
    %p65 = scmp.ne.s32.totalorder %s48, %s64
    %p66 = scmp.eq.s32.totalorder %s14, 0
    %p67 = por %p65, %p66
    %s68 = ssub.s32 %s8, %s15
    %p69 = scmp.eq.s32.totalorder %s68, 0
    %s71 = sadd.s32 %s70, 1
    %s72 = scalar_select %p69, %s70, %s71
    %p75 = pneg %p69
    %p76 = scmp.eq.s32.totalorder %s8, 1
    %p77 = por %p75, %p76
    %p78 = scmp.ne.s32.totalorder %s70, %s73
    %p79 = scmp.eq.s32.totalorder %s8, 0
    %p80 = por %p78, %p79
    %p81 = scmp.ne.s32.totalorder %s70, %s73
    %p82 = scmp.eq.s32.totalorder %s13, 1
    %p83 = por %p81, %p82
    %p84 = scmp.ne.s32.totalorder %s73, %s74
    %p85 = scmp.eq.s32.totalorder %s13, 0
    %p86 = por %p84, %p85
    %p87 = scmp.ne.s32.totalorder %s73, %s74
    %p88 = scmp.eq.s32.totalorder %s14, 1
    %p89 = por %p87, %p88
    %p91 = scmp.ne.s32.totalorder %s74, %s90
    %p92 = scmp.eq.s32.totalorder %s14, 0
    %p93 = por %p91, %p92
    %p94 = scmp.le.s32.totalorder 1, %s8
    %p95 = scmp.lt.s32.totalorder %s8, 3
    %p96 = pnand %p94, %p95
    %p97 = pneg %p96
    // Predicated region
    $region9: #{mwsa_forward.7} parent=5 // pred_check
      _
    $region10: #{mwsa_forward.7} parent=5 // pred_check_branch
      %99 = sbr.rel (%p96) target = $region12
    $region11: #{mwsa_forward.7} parent=5 // pred_region
      %s100 = ssub.s32 %s8, 1
    $region12: #{mwsa_forward.7} parent=5 // pred_fallthru
      _
    %p101 = scmp.lt.s32.totalorder %s8, 2
    // Predicated region
    $region13: #{mwsa_forward.7} parent=5 // pred_check
      %p102 = pneg %p101
    $region14: #{mwsa_forward.7} parent=5 // pred_check_branch
      %104 = sbr.rel (%p102) target = $region16
    $region15: #{mwsa_forward.7} parent=5 // pred_region
      // Predicated region
      $region17: #{mwsa_forward.7} parent=15 // pred_check
        %p105 = pneg %p28
      $region18: #{mwsa_forward.7} parent=15 // pred_check_branch
        %107 = sbr.rel (%p105) target = $region20
      $region19: #{mwsa_forward.7} parent=15 // pred_region
        %s108 = smul.u32 4, %s8
        %p109 = scmp.lt.s32.totalorder %s108, 7
        %s110 = scalar_select %p109, %s108, 7
        %s111 = smul.addr %s110, 8
        %s112 = smul.addr %s111, 8
        %s113 = scalar_lea.vmem %s0, %s112
        %s114 = smul.u32 4, %s8
      $region20: #{mwsa_forward.7} parent=15 // pred_fallthru
        _
      // Predicated region
      $region21: #{mwsa_forward.7} parent=15 // pred_check
        %p115 = pneg %p54
      $region22: #{mwsa_forward.7} parent=15 // pred_check_branch
        %117 = sbr.rel (%p115) target = $region24
      $region23: #{mwsa_forward.7} parent=15 // pred_region
        %s118 = smul.u32 4, %s8
        %p119 = scmp.lt.s32.totalorder %s118, 7
        %s120 = scalar_select %p119, %s118, 7
        %s121 = smul.addr %s120, 2
        %s122 = scalar_lea.vmem %s1, %s121
        %s123 = smul.u32 4, %s8
      $region24: #{mwsa_forward.7} parent=15 // pred_fallthru
        _
    $region16: #{mwsa_forward.7} parent=5 // pred_fallthru
      _
    %p124 = scmp.le.s32.totalorder 1, %s8
    %p125 = scmp.lt.s32.totalorder %s8, 3
    %p126 = pnand %p124, %p125
    %p127 = pneg %p126
    // Predicated region
    $region25: #{mwsa_forward.7} parent=5 // pred_check
      _
    $region26: #{mwsa_forward.7} parent=5 // pred_check_branch
      %129 = sbr.rel (%p126) target = $region28
    $region27: #{mwsa_forward.7} parent=5 // pred_region
      %s130 = ssub.s32 %s8, 1
      %s131 = smul.u32 4, %s13
      %p132 = scmp.lt.s32.totalorder %s131, 7
      %s133 = scalar_select %p132, %s131, 7
      %s134 = smul.addr %s133, 8
      %s135 = smul.addr %s134, 8
      %s136 = scalar_lea.vmem %s0, %s135
      %p137 = pneg %p34
      %p138 = pneg %p31
      %s139 = smul.u32 4, %s13
      %p140 = scmp.lt.s32.totalorder %s139, 7
      %s141 = scalar_select %p140, %s139, 7
      %s142 = smul.addr %s141, 2
      %s143 = scalar_lea.vmem %s1, %s142
      %p144 = pneg %p60
      %p145 = pneg %p57
      %p146 = pneg %p86
      %p147 = pneg %p83
      %s148 = smul.u32 4, %s13
      %p149 = scmp.lt.s32.totalorder %s148, 7
      %s150 = scalar_select %p149, %s148, 7
      %s151 = smul.addr %s150, 2
      %s152 = scalar_lea.vmem %s2, %s151
      %s153 = smul.u32 4, %s13
      %p154 = scmp.lt.s32.totalorder %s153, 7
      %s155 = scalar_select %p154, %s153, 7
      %s156 = smul.addr %s155, 8
      %s157 = smul.addr %s156, 8
      %s158 = scalar_lea.vmem %s0, %s157
      %s159 = smul.u32 4, %s13
      %s160 = smul.u32 4, %s13
      %p161 = scmp.lt.s32.totalorder %s160, 7
      %s162 = scalar_select %p161, %s160, 7
      %s163 = smul.addr %s162, 2
      %s164 = scalar_lea.vmem %s1, %s163
      %s165 = smul.u32 4, %s13
      %s166 = smul.u32 4, %s13
      %p167 = scmp.lt.s32.totalorder %s166, 7
      %s168 = scalar_select %p167, %s166, 7
      %s169 = smul.addr %s168, 2
      %s170 = scalar_lea.vmem %s2, %s169
      %s171 = smul.u32 4, %s13
      %v172 = vld [vmem:[%s158] sm:$0xff]
      %v173 = vld [vmem:[%s158 + $0x8] sm:$0xff]
      %v174 = vld [vmem:[%s158 + $0x10] sm:$0xff]
      %v175 = vld [vmem:[%s158 + $0x18] sm:$0xff]
      %v176 = vld [vmem:[%s158 + $0x20] sm:$0xff]
      %v177 = vld [vmem:[%s158 + $0x28] sm:$0xff]
      %v178 = vld [vmem:[%s158 + $0x30] sm:$0xff]
      %v179 = vld [vmem:[%s158 + $0x38] sm:$0xff]
      %v180 = vld [vmem:[%s158 + $0x40] sm:$0xff]
      %v181 = vld [vmem:[%s158 + $0x48] sm:$0xff]
      %v182 = vld [vmem:[%s158 + $0x50] sm:$0xff]
      %v183 = vld [vmem:[%s158 + $0x58] sm:$0xff]
      %v184 = vld [vmem:[%s158 + $0x60] sm:$0xff]
      %v185 = vld [vmem:[%s158 + $0x68] sm:$0xff]
      %v186 = vld [vmem:[%s158 + $0x70] sm:$0xff]
      %v187 = vld [vmem:[%s158 + $0x78] sm:$0xff]
      %v188 = vld [vmem:[%s158 + $0x80] sm:$0xff]
      %v189 = vld [vmem:[%s158 + $0x88] sm:$0xff]
      %v190 = vld [vmem:[%s158 + $0x90] sm:$0xff]
      %v191 = vld [vmem:[%s158 + $0x98] sm:$0xff]
      %v192 = vld [vmem:[%s158 + $0xa0] sm:$0xff]
      %v193 = vld [vmem:[%s158 + $0xa8] sm:$0xff]
      %v194 = vld [vmem:[%s158 + $0xb0] sm:$0xff]
      %v195 = vld [vmem:[%s158 + $0xb8] sm:$0xff]
      %v196 = vld [vmem:[%s158 + $0xc0] sm:$0xff]
      %v197 = vld [vmem:[%s158 + $0xc8] sm:$0xff]
      %v198 = vld [vmem:[%s158 + $0xd0] sm:$0xff]
      %v199 = vld [vmem:[%s158 + $0xd8] sm:$0xff]
      %v200 = vld [vmem:[%s158 + $0xe0] sm:$0xff]
      %v201 = vld [vmem:[%s158 + $0xe8] sm:$0xff]
      %v202 = vld [vmem:[%s158 + $0xf0] sm:$0xff]
      %v203 = vld [vmem:[%s158 + $0xf8] sm:$0xff]
      %v204 = vld [vmem:[%s164] sm:$0x3]
      %v205 = vld [vmem:[%s164 + $0x2] sm:$0x3]
      %v206 = vld [vmem:[%s164 + $0x4] sm:$0x3]
      %v207 = vld [vmem:[%s164 + $0x6] sm:$0x3]
      %vm208 = vcmask 15360
      %v210 = vsel %vm208, %v172, 0
      %v213 = vsel %vm208, %v173, 0
      %v216 = vsel %vm208, %v174, 0
      %v219 = vsel %vm208, %v175, 0
      %v222 = vsel %vm208, %v176, 0
      %v225 = vsel %vm208, %v177, 0
      %v228 = vsel %vm208, %v178, 0
      %v231 = vsel %vm208, %v179, 0
      %233 = vmatprep.subr.mxu0 0.0
      %234 = vmatpush1.xpose.msra.mxu0 0.0
      %235 = vmatprep.subr.mxu0 0.0
      %236 = vmatpush1.xpose.msra.mxu0 0.0
      %237 = vmatprep.subr.mxu0 0.0
      %238 = vmatpush1.xpose.msra.mxu0 0.0
      %239 = vmatprep.subr.mxu0 0.0
      %240 = vmatpush1.xpose.msra.mxu0 0.0
      %241 = vmatprep.subr.mxu0 0.0
      %242 = vmatpush1.xpose.msra.mxu0 0.0
      %243 = vmatprep.subr.mxu0 0.0
      %244 = vmatpush1.xpose.msra.mxu0 0.0
      %245 = vmatprep.subr.mxu0 0.0
      %246 = vmatpush1.xpose.msra.mxu0 0.0
      %247 = vmatprep.subr.mxu0 0.0
      %248 = vmatpush1.xpose.msra.mxu0 0.0
      %249 = vmatprep.subr.mxu0 0.0
      %250 = vmatpush1.xpose.msra.mxu0 %v231
      %251 = vmatprep.subr.mxu0 0.0
      %252 = vmatpush1.xpose.msra.mxu0 %v228
      %253 = vmatprep.subr.mxu0 0.0
      %254 = vmatpush1.xpose.msra.mxu0 %v225
      %255 = vmatprep.subr.mxu0 0.0
      %256 = vmatpush1.xpose.msra.mxu0 %v222
      %257 = vmatprep.subr.mxu0 0.0
      %258 = vmatpush1.xpose.msra.mxu0 %v219
      %259 = vmatprep.subr.mxu0 0.0
      %260 = vmatpush1.xpose.msra.mxu0 %v216
      %261 = vmatprep.subr.mxu0 0.0
      %262 = vmatpush1.xpose.msra.mxu0 %v213
      %263 = vmatprep.subr.mxu0 0.0
      %264 = vmatpush1.xpose.msra.mxu0 %v210
      %265 = vmatprep.subr.mxu0 0.0
      %266 = vmatpush2.xpose.msra.mxu0 0.0
      %267 = vmatprep.subr.mxu0 0.0
      %268 = vmatpush2.xpose.msra.mxu0 0.0
      %269 = vmatprep.subr.mxu0 0.0
      %270 = vmatpush2.xpose.msra.mxu0 0.0
      %271 = vmatprep.subr.mxu0 0.0
      %272 = vmatpush2.xpose.msra.mxu0 0.0
      %273 = vmatprep.subr.mxu0 0.0
      %274 = vmatpush2.xpose.msra.mxu0 0.0
      %275 = vmatprep.subr.mxu0 0.0
      %276 = vmatpush2.xpose.msra.mxu0 0.0
      %277 = vmatprep.subr.mxu0 0.0
      %278 = vmatpush2.xpose.msra.mxu0 0.0
      %279 = vmatprep.subr.mxu0 0.0
      %280 = vmatpush2.xpose.msra.mxu0 0.0
      %281 = vmatprep.subr.mxu0 0.0
      %282 = vmatpush2.xpose.msra.mxu0 0.0
      %283 = vmatprep.subr.mxu0 0.0
      %284 = vmatpush2.xpose.msra.mxu0 0.0
      %285 = vmatprep.subr.mxu0 0.0
      %286 = vmatpush2.xpose.msra.mxu0 0.0
      %287 = vmatprep.subr.mxu0 0.0
      %288 = vmatpush2.xpose.msra.mxu0 0.0
      %289 = vmatprep.subr.mxu0 0.0
      %290 = vmatpush2.xpose.msra.mxu0 0.0
      %291 = vmatprep.subr.mxu0 0.0
      %292 = vmatpush2.xpose.msra.mxu0 0.0
      %293 = vmatprep.subr.mxu0 0.0
      %294 = vmatpush2.xpose.msra.mxu0 0.0
      %295 = vmatprep.subr.mxu0 0.0
      %296 = vmatpush2.xpose.msra.mxu0 0.0
      %297 = vmatprep.mubr.f32.mxu0 0.0
      %298 = vmatmul.mubr.f32.gmra.mxu0 %v210
      %v299 = vpop.f32.mrf.mxu0
      %v300 = vadd.f32 0.0, %v299
      %v301 = vpop.f32.mrf.mxu0
      %302 = vmatprep.mubr.f32.mxu0 0.0
      %303 = vmatmul.mubr.f32.gmra.mxu0 %v213
      %v304 = vpop.f32.mrf.mxu0
      %v305 = vadd.f32 0.0, %v304
      %v306 = vpop.f32.mrf.mxu0
      %307 = vmatprep.mubr.f32.mxu0 0.0
      %308 = vmatmul.mubr.f32.gmra.mxu0 %v216
      %v309 = vpop.f32.mrf.mxu0
      %v310 = vadd.f32 0.0, %v309
      %v311 = vpop.f32.mrf.mxu0
      %312 = vmatprep.mubr.f32.mxu0 0.0
      %313 = vmatmul.mubr.f32.gmra.mxu0 %v219
      %v314 = vpop.f32.mrf.mxu0
      %v315 = vadd.f32 0.0, %v314
      %v316 = vpop.f32.mrf.mxu0
      %317 = vmatprep.mubr.f32.mxu0 0.0
      %318 = vmatmul.mubr.f32.gmra.mxu0 %v222
      %v319 = vpop.f32.mrf.mxu0
      %v320 = vadd.f32 0.0, %v319
      %v321 = vpop.f32.mrf.mxu0
      %322 = vmatprep.mubr.f32.mxu0 0.0
      %323 = vmatmul.mubr.f32.gmra.mxu0 %v225
      %v324 = vpop.f32.mrf.mxu0
      %v325 = vadd.f32 0.0, %v324
      %v326 = vpop.f32.mrf.mxu0
      %327 = vmatprep.mubr.f32.mxu0 0.0
      %328 = vmatmul.mubr.f32.gmra.mxu0 %v228
      %v329 = vpop.f32.mrf.mxu0
      %v330 = vadd.f32 0.0, %v329
      %v331 = vpop.f32.mrf.mxu0
      %332 = vmatprep.mubr.f32.mxu0 0.0
      %333 = vmatmul.mubr.f32.gmra.mxu0 %v231
      %v334 = vpop.f32.mrf.mxu0
      %v335 = vadd.f32 0.0, %v334
      %v336 = vpop.f32.mrf.mxu0
      %337 = vdwg.mxu0
      %v339 = vsel %vm208, %v180, 0
      %v342 = vsel %vm208, %v181, 0
      %v345 = vsel %vm208, %v182, 0
      %v348 = vsel %vm208, %v183, 0
      %v351 = vsel %vm208, %v184, 0
      %v354 = vsel %vm208, %v185, 0
      %v357 = vsel %vm208, %v186, 0
      %v360 = vsel %vm208, %v187, 0
      %362 = vmatprep.subr.mxu0 0.0
      %363 = vmatpush1.xpose.msra.mxu0 0.0
      %364 = vmatprep.subr.mxu0 0.0
      %365 = vmatpush1.xpose.msra.mxu0 0.0
      %366 = vmatprep.subr.mxu0 0.0
      %367 = vmatpush1.xpose.msra.mxu0 0.0
      %368 = vmatprep.subr.mxu0 0.0
      %369 = vmatpush1.xpose.msra.mxu0 0.0
      %370 = vmatprep.subr.mxu0 0.0
      %371 = vmatpush1.xpose.msra.mxu0 0.0
      %372 = vmatprep.subr.mxu0 0.0
      %373 = vmatpush1.xpose.msra.mxu0 0.0
      %374 = vmatprep.subr.mxu0 0.0
      %375 = vmatpush1.xpose.msra.mxu0 0.0
      %376 = vmatprep.subr.mxu0 0.0
      %377 = vmatpush1.xpose.msra.mxu0 0.0
      %378 = vmatprep.subr.mxu0 0.0
      %379 = vmatpush1.xpose.msra.mxu0 %v360
      %380 = vmatprep.subr.mxu0 0.0
      %381 = vmatpush1.xpose.msra.mxu0 %v357
      %382 = vmatprep.subr.mxu0 0.0
      %383 = vmatpush1.xpose.msra.mxu0 %v354
      %384 = vmatprep.subr.mxu0 0.0
      %385 = vmatpush1.xpose.msra.mxu0 %v351
      %386 = vmatprep.subr.mxu0 0.0
      %387 = vmatpush1.xpose.msra.mxu0 %v348
      %388 = vmatprep.subr.mxu0 0.0
      %389 = vmatpush1.xpose.msra.mxu0 %v345
      %390 = vmatprep.subr.mxu0 0.0
      %391 = vmatpush1.xpose.msra.mxu0 %v342
      %392 = vmatprep.subr.mxu0 0.0
      %393 = vmatpush1.xpose.msra.mxu0 %v339
      %394 = vmatprep.subr.mxu0 0.0
      %395 = vmatpush2.xpose.msra.mxu0 0.0
      %396 = vmatprep.subr.mxu0 0.0
      %397 = vmatpush2.xpose.msra.mxu0 0.0
      %398 = vmatprep.subr.mxu0 0.0
      %399 = vmatpush2.xpose.msra.mxu0 0.0
      %400 = vmatprep.subr.mxu0 0.0
      %401 = vmatpush2.xpose.msra.mxu0 0.0
      %402 = vmatprep.subr.mxu0 0.0
      %403 = vmatpush2.xpose.msra.mxu0 0.0
      %404 = vmatprep.subr.mxu0 0.0
      %405 = vmatpush2.xpose.msra.mxu0 0.0
      %406 = vmatprep.subr.mxu0 0.0
      %407 = vmatpush2.xpose.msra.mxu0 0.0
      %408 = vmatprep.subr.mxu0 0.0
      %409 = vmatpush2.xpose.msra.mxu0 0.0
      %410 = vmatprep.subr.mxu0 0.0
      %411 = vmatpush2.xpose.msra.mxu0 0.0
      %412 = vmatprep.subr.mxu0 0.0
      %413 = vmatpush2.xpose.msra.mxu0 0.0
      %414 = vmatprep.subr.mxu0 0.0
      %415 = vmatpush2.xpose.msra.mxu0 0.0
      %416 = vmatprep.subr.mxu0 0.0
      %417 = vmatpush2.xpose.msra.mxu0 0.0
      %418 = vmatprep.subr.mxu0 0.0
      %419 = vmatpush2.xpose.msra.mxu0 0.0
      %420 = vmatprep.subr.mxu0 0.0
      %421 = vmatpush2.xpose.msra.mxu0 0.0
      %422 = vmatprep.subr.mxu0 0.0
      %423 = vmatpush2.xpose.msra.mxu0 0.0
      %424 = vmatprep.subr.mxu0 0.0
      %425 = vmatpush2.xpose.msra.mxu0 0.0
      %426 = vmatprep.mubr.f32.mxu0 0.0
      %427 = vmatmul.mubr.f32.gmra.mxu0 %v339
      %v428 = vpop.f32.mrf.mxu0
      %v429 = vadd.f32 0.0, %v428
      %v430 = vpop.f32.mrf.mxu0
      %431 = vmatprep.mubr.f32.mxu0 0.0
      %432 = vmatmul.mubr.f32.gmra.mxu0 %v342
      %v433 = vpop.f32.mrf.mxu0
      %v434 = vadd.f32 0.0, %v433
      %v435 = vpop.f32.mrf.mxu0
      %436 = vmatprep.mubr.f32.mxu0 0.0
      %437 = vmatmul.mubr.f32.gmra.mxu0 %v345
      %v438 = vpop.f32.mrf.mxu0
      %v439 = vadd.f32 0.0, %v438
      %v440 = vpop.f32.mrf.mxu0
      %441 = vmatprep.mubr.f32.mxu0 0.0
      %442 = vmatmul.mubr.f32.gmra.mxu0 %v348
      %v443 = vpop.f32.mrf.mxu0
      %v444 = vadd.f32 0.0, %v443
      %v445 = vpop.f32.mrf.mxu0
      %446 = vmatprep.mubr.f32.mxu0 0.0
      %447 = vmatmul.mubr.f32.gmra.mxu0 %v351
      %v448 = vpop.f32.mrf.mxu0
      %v449 = vadd.f32 0.0, %v448
      %v450 = vpop.f32.mrf.mxu0
      %451 = vmatprep.mubr.f32.mxu0 0.0
      %452 = vmatmul.mubr.f32.gmra.mxu0 %v354
      %v453 = vpop.f32.mrf.mxu0
      %v454 = vadd.f32 0.0, %v453
      %v455 = vpop.f32.mrf.mxu0
      %456 = vmatprep.mubr.f32.mxu0 0.0
      %457 = vmatmul.mubr.f32.gmra.mxu0 %v357
      %v458 = vpop.f32.mrf.mxu0
      %v459 = vadd.f32 0.0, %v458
      %v460 = vpop.f32.mrf.mxu0
      %461 = vmatprep.mubr.f32.mxu0 0.0
      %462 = vmatmul.mubr.f32.gmra.mxu0 %v360
      %v463 = vpop.f32.mrf.mxu0
      %v464 = vadd.f32 0.0, %v463
      %v465 = vpop.f32.mrf.mxu0
      %466 = vdwg.mxu0
      %v468 = vsel %vm208, %v188, 0
      %v471 = vsel %vm208, %v189, 0
      %v474 = vsel %vm208, %v190, 0
      %v477 = vsel %vm208, %v191, 0
      %v480 = vsel %vm208, %v192, 0
      %v483 = vsel %vm208, %v193, 0
      %v486 = vsel %vm208, %v194, 0
      %v489 = vsel %vm208, %v195, 0
      %491 = vmatprep.subr.mxu0 0.0
      %492 = vmatpush1.xpose.msra.mxu0 0.0
      %493 = vmatprep.subr.mxu0 0.0
      %494 = vmatpush1.xpose.msra.mxu0 0.0
      %495 = vmatprep.subr.mxu0 0.0
      %496 = vmatpush1.xpose.msra.mxu0 0.0
      %497 = vmatprep.subr.mxu0 0.0
      %498 = vmatpush1.xpose.msra.mxu0 0.0
      %499 = vmatprep.subr.mxu0 0.0
      %500 = vmatpush1.xpose.msra.mxu0 0.0
      %501 = vmatprep.subr.mxu0 0.0
      %502 = vmatpush1.xpose.msra.mxu0 0.0
      %503 = vmatprep.subr.mxu0 0.0
      %504 = vmatpush1.xpose.msra.mxu0 0.0
      %505 = vmatprep.subr.mxu0 0.0
      %506 = vmatpush1.xpose.msra.mxu0 0.0
      %507 = vmatprep.subr.mxu0 0.0
      %508 = vmatpush1.xpose.msra.mxu0 %v489
      %509 = vmatprep.subr.mxu0 0.0
      %510 = vmatpush1.xpose.msra.mxu0 %v486
      %511 = vmatprep.subr.mxu0 0.0
      %512 = vmatpush1.xpose.msra.mxu0 %v483
      %513 = vmatprep.subr.mxu0 0.0
      %514 = vmatpush1.xpose.msra.mxu0 %v480
      %515 = vmatprep.subr.mxu0 0.0
      %516 = vmatpush1.xpose.msra.mxu0 %v477
      %517 = vmatprep.subr.mxu0 0.0
      %518 = vmatpush1.xpose.msra.mxu0 %v474
      %519 = vmatprep.subr.mxu0 0.0
      %520 = vmatpush1.xpose.msra.mxu0 %v471
      %521 = vmatprep.subr.mxu0 0.0
      %522 = vmatpush1.xpose.msra.mxu0 %v468
      %523 = vmatprep.subr.mxu0 0.0
      %524 = vmatpush2.xpose.msra.mxu0 0.0
      %525 = vmatprep.subr.mxu0 0.0
      %526 = vmatpush2.xpose.msra.mxu0 0.0
      %527 = vmatprep.subr.mxu0 0.0
      %528 = vmatpush2.xpose.msra.mxu0 0.0
      %529 = vmatprep.subr.mxu0 0.0
      %530 = vmatpush2.xpose.msra.mxu0 0.0
      %531 = vmatprep.subr.mxu0 0.0
      %532 = vmatpush2.xpose.msra.mxu0 0.0
      %533 = vmatprep.subr.mxu0 0.0
      %534 = vmatpush2.xpose.msra.mxu0 0.0
      %535 = vmatprep.subr.mxu0 0.0
      %536 = vmatpush2.xpose.msra.mxu0 0.0
      %537 = vmatprep.subr.mxu0 0.0
      %538 = vmatpush2.xpose.msra.mxu0 0.0
      %539 = vmatprep.subr.mxu0 0.0
      %540 = vmatpush2.xpose.msra.mxu0 0.0
      %541 = vmatprep.subr.mxu0 0.0
      %542 = vmatpush2.xpose.msra.mxu0 0.0
      %543 = vmatprep.subr.mxu0 0.0
      %544 = vmatpush2.xpose.msra.mxu0 0.0
      %545 = vmatprep.subr.mxu0 0.0
      %546 = vmatpush2.xpose.msra.mxu0 0.0
      %547 = vmatprep.subr.mxu0 0.0
      %548 = vmatpush2.xpose.msra.mxu0 0.0
      %549 = vmatprep.subr.mxu0 0.0
      %550 = vmatpush2.xpose.msra.mxu0 0.0
      %551 = vmatprep.subr.mxu0 0.0
      %552 = vmatpush2.xpose.msra.mxu0 0.0
      %553 = vmatprep.subr.mxu0 0.0
      %554 = vmatpush2.xpose.msra.mxu0 0.0
      %555 = vmatprep.mubr.f32.mxu0 0.0
      %556 = vmatmul.mubr.f32.gmra.mxu0 %v468
      %v557 = vpop.f32.mrf.mxu0
      %v558 = vadd.f32 0.0, %v557
      %v559 = vpop.f32.mrf.mxu0
      %560 = vmatprep.mubr.f32.mxu0 0.0
      %561 = vmatmul.mubr.f32.gmra.mxu0 %v471
      %v562 = vpop.f32.mrf.mxu0
      %v563 = vadd.f32 0.0, %v562
      %v564 = vpop.f32.mrf.mxu0
      %565 = vmatprep.mubr.f32.mxu0 0.0
      %566 = vmatmul.mubr.f32.gmra.mxu0 %v474
      %v567 = vpop.f32.mrf.mxu0
      %v568 = vadd.f32 0.0, %v567
      %v569 = vpop.f32.mrf.mxu0
      %570 = vmatprep.mubr.f32.mxu0 0.0
      %571 = vmatmul.mubr.f32.gmra.mxu0 %v477
      %v572 = vpop.f32.mrf.mxu0
      %v573 = vadd.f32 0.0, %v572
      %v574 = vpop.f32.mrf.mxu0
      %575 = vmatprep.mubr.f32.mxu0 0.0
      %576 = vmatmul.mubr.f32.gmra.mxu0 %v480
      %v577 = vpop.f32.mrf.mxu0
      %v578 = vadd.f32 0.0, %v577
      %v579 = vpop.f32.mrf.mxu0
      %580 = vmatprep.mubr.f32.mxu0 0.0
      %581 = vmatmul.mubr.f32.gmra.mxu0 %v483
      %v582 = vpop.f32.mrf.mxu0
      %v583 = vadd.f32 0.0, %v582
      %v584 = vpop.f32.mrf.mxu0
      %585 = vmatprep.mubr.f32.mxu0 0.0
      %586 = vmatmul.mubr.f32.gmra.mxu0 %v486
      %v587 = vpop.f32.mrf.mxu0
      %v588 = vadd.f32 0.0, %v587
      %v589 = vpop.f32.mrf.mxu0
      %590 = vmatprep.mubr.f32.mxu0 0.0
      %591 = vmatmul.mubr.f32.gmra.mxu0 %v489
      %v592 = vpop.f32.mrf.mxu0
      %v593 = vadd.f32 0.0, %v592
      %v594 = vpop.f32.mrf.mxu0
      %595 = vdwg.mxu0
      %v597 = vsel %vm208, %v196, 0
      %v600 = vsel %vm208, %v197, 0
      %v603 = vsel %vm208, %v198, 0
      %v606 = vsel %vm208, %v199, 0
      %v609 = vsel %vm208, %v200, 0
      %v612 = vsel %vm208, %v201, 0
      %v615 = vsel %vm208, %v202, 0
      %v618 = vsel %vm208, %v203, 0
      %620 = vmatprep.subr.mxu0 0.0
      %621 = vmatpush1.xpose.msra.mxu0 0.0
      %622 = vmatprep.subr.mxu0 0.0
      %623 = vmatpush1.xpose.msra.mxu0 0.0
      %624 = vmatprep.subr.mxu0 0.0
      %625 = vmatpush1.xpose.msra.mxu0 0.0
      %626 = vmatprep.subr.mxu0 0.0
      %627 = vmatpush1.xpose.msra.mxu0 0.0
      %628 = vmatprep.subr.mxu0 0.0
      %629 = vmatpush1.xpose.msra.mxu0 0.0
      %630 = vmatprep.subr.mxu0 0.0
      %631 = vmatpush1.xpose.msra.mxu0 0.0
      %632 = vmatprep.subr.mxu0 0.0
      %633 = vmatpush1.xpose.msra.mxu0 0.0
      %634 = vmatprep.subr.mxu0 0.0
      %635 = vmatpush1.xpose.msra.mxu0 0.0
      %636 = vmatprep.subr.mxu0 0.0
      %637 = vmatpush1.xpose.msra.mxu0 %v618
      %638 = vmatprep.subr.mxu0 0.0
      %639 = vmatpush1.xpose.msra.mxu0 %v615
      %640 = vmatprep.subr.mxu0 0.0
      %641 = vmatpush1.xpose.msra.mxu0 %v612
      %642 = vmatprep.subr.mxu0 0.0
      %643 = vmatpush1.xpose.msra.mxu0 %v609
      %644 = vmatprep.subr.mxu0 0.0
      %645 = vmatpush1.xpose.msra.mxu0 %v606
      %646 = vmatprep.subr.mxu0 0.0
      %647 = vmatpush1.xpose.msra.mxu0 %v603
      %648 = vmatprep.subr.mxu0 0.0
      %649 = vmatpush1.xpose.msra.mxu0 %v600
      %650 = vmatprep.subr.mxu0 0.0
      %651 = vmatpush1.xpose.msra.mxu0 %v597
      %652 = vmatprep.subr.mxu0 0.0
      %653 = vmatpush2.xpose.msra.mxu0 0.0
      %654 = vmatprep.subr.mxu0 0.0
      %655 = vmatpush2.xpose.msra.mxu0 0.0
      %656 = vmatprep.subr.mxu0 0.0
      %657 = vmatpush2.xpose.msra.mxu0 0.0
      %658 = vmatprep.subr.mxu0 0.0
      %659 = vmatpush2.xpose.msra.mxu0 0.0
      %660 = vmatprep.subr.mxu0 0.0
      %661 = vmatpush2.xpose.msra.mxu0 0.0
      %662 = vmatprep.subr.mxu0 0.0
      %663 = vmatpush2.xpose.msra.mxu0 0.0
      %664 = vmatprep.subr.mxu0 0.0
      %665 = vmatpush2.xpose.msra.mxu0 0.0
      %666 = vmatprep.subr.mxu0 0.0
      %667 = vmatpush2.xpose.msra.mxu0 0.0
      %668 = vmatprep.subr.mxu0 0.0
      %669 = vmatpush2.xpose.msra.mxu0 0.0
      %670 = vmatprep.subr.mxu0 0.0
      %671 = vmatpush2.xpose.msra.mxu0 0.0
      %672 = vmatprep.subr.mxu0 0.0
      %673 = vmatpush2.xpose.msra.mxu0 0.0
      %674 = vmatprep.subr.mxu0 0.0
      %675 = vmatpush2.xpose.msra.mxu0 0.0
      %676 = vmatprep.subr.mxu0 0.0
      %677 = vmatpush2.xpose.msra.mxu0 0.0
      %678 = vmatprep.subr.mxu0 0.0
      %679 = vmatpush2.xpose.msra.mxu0 0.0
      %680 = vmatprep.subr.mxu0 0.0
      %681 = vmatpush2.xpose.msra.mxu0 0.0
      %682 = vmatprep.subr.mxu0 0.0
      %683 = vmatpush2.xpose.msra.mxu0 0.0
      %684 = vmatprep.mubr.f32.mxu0 0.0
      %685 = vmatmul.mubr.f32.gmra.mxu0 %v597
      %v686 = vpop.f32.mrf.mxu0
      %v687 = vadd.f32 0.0, %v686
      %v688 = vpop.f32.mrf.mxu0
      %689 = vmatprep.mubr.f32.mxu0 0.0
      %690 = vmatmul.mubr.f32.gmra.mxu0 %v600
      %v691 = vpop.f32.mrf.mxu0
      %v692 = vadd.f32 0.0, %v691
      %v693 = vpop.f32.mrf.mxu0
      %694 = vmatprep.mubr.f32.mxu0 0.0
      %695 = vmatmul.mubr.f32.gmra.mxu0 %v603
      %v696 = vpop.f32.mrf.mxu0
      %v697 = vadd.f32 0.0, %v696
      %v698 = vpop.f32.mrf.mxu0
      %699 = vmatprep.mubr.f32.mxu0 0.0
      %700 = vmatmul.mubr.f32.gmra.mxu0 %v606
      %v701 = vpop.f32.mrf.mxu0
      %v702 = vadd.f32 0.0, %v701
      %v703 = vpop.f32.mrf.mxu0
      %704 = vmatprep.mubr.f32.mxu0 0.0
      %705 = vmatmul.mubr.f32.gmra.mxu0 %v609
      %v706 = vpop.f32.mrf.mxu0
      %v707 = vadd.f32 0.0, %v706
      %v708 = vpop.f32.mrf.mxu0
      %709 = vmatprep.mubr.f32.mxu0 0.0
      %710 = vmatmul.mubr.f32.gmra.mxu0 %v612
      %v711 = vpop.f32.mrf.mxu0
      %v712 = vadd.f32 0.0, %v711
      %v713 = vpop.f32.mrf.mxu0
      %714 = vmatprep.mubr.f32.mxu0 0.0
      %715 = vmatmul.mubr.f32.gmra.mxu0 %v615
      %v716 = vpop.f32.mrf.mxu0
      %v717 = vadd.f32 0.0, %v716
      %v718 = vpop.f32.mrf.mxu0
      %719 = vmatprep.mubr.f32.mxu0 0.0
      %720 = vmatmul.mubr.f32.gmra.mxu0 %v618
      %v721 = vpop.f32.mrf.mxu0
      %v722 = vadd.f32 0.0, %v721
      %v723 = vpop.f32.mrf.mxu0
      %724 = vdwg.mxu0
      %vm725 = vcmask 523264
      %v726 = vsel %vm725, %v300, -inf
      %727 = vmax.xlane.f32.xlu0 %v726
      %v728 = vpop.xlane.xlu0 %727
      %v729 = vsel %vm725, %v305, -inf
      %730 = vmax.xlane.f32.xlu0 %v729
      %v731 = vpop.xlane.xlu0 %730
      %v732 = vsel %vm725, %v310, -inf
      %733 = vmax.xlane.f32.xlu0 %v732
      %v734 = vpop.xlane.xlu0 %733
      %v735 = vsel %vm725, %v315, -inf
      %736 = vmax.xlane.f32.xlu0 %v735
      %v737 = vpop.xlane.xlu0 %736
      %v738 = vsel %vm725, %v320, -inf
      %739 = vmax.xlane.f32.xlu0 %v738
      %v740 = vpop.xlane.xlu0 %739
      %v741 = vsel %vm725, %v325, -inf
      %742 = vmax.xlane.f32.xlu0 %v741
      %v743 = vpop.xlane.xlu0 %742
      %v744 = vsel %vm725, %v330, -inf
      %745 = vmax.xlane.f32.xlu0 %v744
      %v746 = vpop.xlane.xlu0 %745
      %v747 = vsel %vm725, %v335, -inf
      %748 = vmax.xlane.f32.xlu0 %v747
      %v749 = vpop.xlane.xlu0 %748
      %v750 = vsel %vm725, %v429, -inf
      %751 = vmax.xlane.f32.xlu0 %v750
      %v752 = vpop.xlane.xlu0 %751
      %v753 = vsel %vm725, %v434, -inf
      %754 = vmax.xlane.f32.xlu0 %v753
      %v755 = vpop.xlane.xlu0 %754
      %v756 = vsel %vm725, %v439, -inf
      %757 = vmax.xlane.f32.xlu0 %v756
      %v758 = vpop.xlane.xlu0 %757
      %v759 = vsel %vm725, %v444, -inf
      %760 = vmax.xlane.f32.xlu0 %v759
      %v761 = vpop.xlane.xlu0 %760
      %v762 = vsel %vm725, %v449, -inf
      %763 = vmax.xlane.f32.xlu0 %v762
      %v764 = vpop.xlane.xlu0 %763
      %v765 = vsel %vm725, %v454, -inf
      %766 = vmax.xlane.f32.xlu0 %v765
      %v767 = vpop.xlane.xlu0 %766
      %v768 = vsel %vm725, %v459, -inf
      %769 = vmax.xlane.f32.xlu0 %v768
      %v770 = vpop.xlane.xlu0 %769
      %v771 = vsel %vm725, %v464, -inf
      %772 = vmax.xlane.f32.xlu0 %v771
      %v773 = vpop.xlane.xlu0 %772
      %v774 = vsel %vm725, %v558, -inf
      %775 = vmax.xlane.f32.xlu0 %v774
      %v776 = vpop.xlane.xlu0 %775
      %v777 = vsel %vm725, %v563, -inf
      %778 = vmax.xlane.f32.xlu0 %v777
      %v779 = vpop.xlane.xlu0 %778
      %v780 = vsel %vm725, %v568, -inf
      %781 = vmax.xlane.f32.xlu0 %v780
      %v782 = vpop.xlane.xlu0 %781
      %v783 = vsel %vm725, %v573, -inf
      %784 = vmax.xlane.f32.xlu0 %v783
      %v785 = vpop.xlane.xlu0 %784
      %v786 = vsel %vm725, %v578, -inf
      %787 = vmax.xlane.f32.xlu0 %v786
      %v788 = vpop.xlane.xlu0 %787
      %v789 = vsel %vm725, %v583, -inf
      %790 = vmax.xlane.f32.xlu0 %v789
      %v791 = vpop.xlane.xlu0 %790
      %v792 = vsel %vm725, %v588, -inf
      %793 = vmax.xlane.f32.xlu0 %v792
      %v794 = vpop.xlane.xlu0 %793
      %v795 = vsel %vm725, %v593, -inf
      %796 = vmax.xlane.f32.xlu0 %v795
      %v797 = vpop.xlane.xlu0 %796
      %v798 = vsel %vm725, %v687, -inf
      %799 = vmax.xlane.f32.xlu0 %v798
      %v800 = vpop.xlane.xlu0 %799
      %v801 = vsel %vm725, %v692, -inf
      %802 = vmax.xlane.f32.xlu0 %v801
      %v803 = vpop.xlane.xlu0 %802
      %v804 = vsel %vm725, %v697, -inf
      %805 = vmax.xlane.f32.xlu0 %v804
      %v806 = vpop.xlane.xlu0 %805
      %v807 = vsel %vm725, %v702, -inf
      %808 = vmax.xlane.f32.xlu0 %v807
      %v809 = vpop.xlane.xlu0 %808
      %v810 = vsel %vm725, %v707, -inf
      %811 = vmax.xlane.f32.xlu0 %v810
      %v812 = vpop.xlane.xlu0 %811
      %v813 = vsel %vm725, %v712, -inf
      %814 = vmax.xlane.f32.xlu0 %v813
      %v815 = vpop.xlane.xlu0 %814
      %v816 = vsel %vm725, %v717, -inf
      %817 = vmax.xlane.f32.xlu0 %v816
      %v818 = vpop.xlane.xlu0 %817
      %v819 = vsel %vm725, %v722, -inf
      %820 = vmax.xlane.f32.xlu0 %v819
      %v821 = vpop.xlane.xlu0 %820
      %v822 = vsub.f32 %v300, %v728
      %v823 = vsub.f32 %v305, %v731
      %v824 = vsub.f32 %v310, %v734
      %v825 = vsub.f32 %v315, %v737
      %v826 = vsub.f32 %v320, %v740
      %v827 = vsub.f32 %v325, %v743
      %v828 = vsub.f32 %v330, %v746
      %v829 = vsub.f32 %v335, %v749
      %v830 = vsub.f32 %v429, %v752
      %v831 = vsub.f32 %v434, %v755
      %v832 = vsub.f32 %v439, %v758
      %v833 = vsub.f32 %v444, %v761
      %v834 = vsub.f32 %v449, %v764
      %v835 = vsub.f32 %v454, %v767
      %v836 = vsub.f32 %v459, %v770
      %v837 = vsub.f32 %v464, %v773
      %v838 = vsub.f32 %v558, %v776
      %v839 = vsub.f32 %v563, %v779
      %v840 = vsub.f32 %v568, %v782
      %v841 = vsub.f32 %v573, %v785
      %v842 = vsub.f32 %v578, %v788
      %v843 = vsub.f32 %v583, %v791
      %v844 = vsub.f32 %v588, %v794
      %v845 = vsub.f32 %v593, %v797
      %v846 = vsub.f32 %v687, %v800
      %v847 = vsub.f32 %v692, %v803
      %v848 = vsub.f32 %v697, %v806
      %v849 = vsub.f32 %v702, %v809
      %v850 = vsub.f32 %v707, %v812
      %v851 = vsub.f32 %v712, %v815
      %v852 = vsub.f32 %v717, %v818
      %v853 = vsub.f32 %v722, %v821
      %v854 = vmul.f32 %v822, 1.442695
      %v855 = vpow.pop %v854
      %v856 = vmul.f32 %v823, 1.442695
      %v857 = vpow.pop %v856
      %v858 = vmul.f32 %v824, 1.442695
      %v859 = vpow.pop %v858
      %v860 = vmul.f32 %v825, 1.442695
      %v861 = vpow.pop %v860
      %v862 = vmul.f32 %v826, 1.442695
      %v863 = vpow.pop %v862
      %v864 = vmul.f32 %v827, 1.442695
      %v865 = vpow.pop %v864
      %v866 = vmul.f32 %v828, 1.442695
      %v867 = vpow.pop %v866
      %v868 = vmul.f32 %v829, 1.442695
      %v869 = vpow.pop %v868
      %v870 = vmul.f32 %v830, 1.442695
      %v871 = vpow.pop %v870
      %v872 = vmul.f32 %v831, 1.442695
      %v873 = vpow.pop %v872
      %v874 = vmul.f32 %v832, 1.442695
      %v875 = vpow.pop %v874
      %v876 = vmul.f32 %v833, 1.442695
      %v877 = vpow.pop %v876
      %v878 = vmul.f32 %v834, 1.442695
      %v879 = vpow.pop %v878
      %v880 = vmul.f32 %v835, 1.442695
      %v881 = vpow.pop %v880
      %v882 = vmul.f32 %v836, 1.442695
      %v883 = vpow.pop %v882
      %v884 = vmul.f32 %v837, 1.442695
      %v885 = vpow.pop %v884
      %v886 = vmul.f32 %v838, 1.442695
      %v887 = vpow.pop %v886
      %v888 = vmul.f32 %v839, 1.442695
      %v889 = vpow.pop %v888
      %v890 = vmul.f32 %v840, 1.442695
      %v891 = vpow.pop %v890
      %v892 = vmul.f32 %v841, 1.442695
      %v893 = vpow.pop %v892
      %v894 = vmul.f32 %v842, 1.442695
      %v895 = vpow.pop %v894
      %v896 = vmul.f32 %v843, 1.442695
      %v897 = vpow.pop %v896
      %v898 = vmul.f32 %v844, 1.442695
      %v899 = vpow.pop %v898
      %v900 = vmul.f32 %v845, 1.442695
      %v901 = vpow.pop %v900
      %v902 = vmul.f32 %v846, 1.442695
      %v903 = vpow.pop %v902
      %v904 = vmul.f32 %v847, 1.442695
      %v905 = vpow.pop %v904
      %v906 = vmul.f32 %v848, 1.442695
      %v907 = vpow.pop %v906
      %v908 = vmul.f32 %v849, 1.442695
      %v909 = vpow.pop %v908
      %v910 = vmul.f32 %v850, 1.442695
      %v911 = vpow.pop %v910
      %v912 = vmul.f32 %v851, 1.442695
      %v913 = vpow.pop %v912
      %v914 = vmul.f32 %v852, 1.442695
      %v915 = vpow.pop %v914
      %v916 = vmul.f32 %v853, 1.442695
      %v917 = vpow.pop %v916
      %v918 = vsel %vm725, %v855, 0.0
      %919 = vadd.xlane.f32.xlu0 %v918
      %v920 = vpop.xlane.xlu0 %919
      %v921 = vsel %vm725, %v857, 0.0
      %922 = vadd.xlane.f32.xlu0 %v921
      %v923 = vpop.xlane.xlu0 %922
      %v924 = vsel %vm725, %v859, 0.0
      %925 = vadd.xlane.f32.xlu0 %v924
      %v926 = vpop.xlane.xlu0 %925
      %v927 = vsel %vm725, %v861, 0.0
      %928 = vadd.xlane.f32.xlu0 %v927
      %v929 = vpop.xlane.xlu0 %928
      %v930 = vsel %vm725, %v863, 0.0
      %931 = vadd.xlane.f32.xlu0 %v930
      %v932 = vpop.xlane.xlu0 %931
      %v933 = vsel %vm725, %v865, 0.0
      %934 = vadd.xlane.f32.xlu0 %v933
      %v935 = vpop.xlane.xlu0 %934
      %v936 = vsel %vm725, %v867, 0.0
      %937 = vadd.xlane.f32.xlu0 %v936
      %v938 = vpop.xlane.xlu0 %937
      %v939 = vsel %vm725, %v869, 0.0
      %940 = vadd.xlane.f32.xlu0 %v939
      %v941 = vpop.xlane.xlu0 %940
      %v942 = vsel %vm725, %v871, 0.0
      %943 = vadd.xlane.f32.xlu0 %v942
      %v944 = vpop.xlane.xlu0 %943
      %v945 = vsel %vm725, %v873, 0.0
      %946 = vadd.xlane.f32.xlu0 %v945
      %v947 = vpop.xlane.xlu0 %946
      %v948 = vsel %vm725, %v875, 0.0
      %949 = vadd.xlane.f32.xlu0 %v948
      %v950 = vpop.xlane.xlu0 %949
      %v951 = vsel %vm725, %v877, 0.0
      %952 = vadd.xlane.f32.xlu0 %v951
      %v953 = vpop.xlane.xlu0 %952
      %v954 = vsel %vm725, %v879, 0.0
      %955 = vadd.xlane.f32.xlu0 %v954
      %v956 = vpop.xlane.xlu0 %955
      %v957 = vsel %vm725, %v881, 0.0
      %958 = vadd.xlane.f32.xlu0 %v957
      %v959 = vpop.xlane.xlu0 %958
      %v960 = vsel %vm725, %v883, 0.0
      %961 = vadd.xlane.f32.xlu0 %v960
      %v962 = vpop.xlane.xlu0 %961
      %v963 = vsel %vm725, %v885, 0.0
      %964 = vadd.xlane.f32.xlu0 %v963
      %v965 = vpop.xlane.xlu0 %964
      %v966 = vsel %vm725, %v887, 0.0
      %967 = vadd.xlane.f32.xlu0 %v966
      %v968 = vpop.xlane.xlu0 %967
      %v969 = vsel %vm725, %v889, 0.0
      %970 = vadd.xlane.f32.xlu0 %v969
      %v971 = vpop.xlane.xlu0 %970
      %v972 = vsel %vm725, %v891, 0.0
      %973 = vadd.xlane.f32.xlu0 %v972
      %v974 = vpop.xlane.xlu0 %973
      %v975 = vsel %vm725, %v893, 0.0
      %976 = vadd.xlane.f32.xlu0 %v975
      %v977 = vpop.xlane.xlu0 %976
      %v978 = vsel %vm725, %v895, 0.0
      %979 = vadd.xlane.f32.xlu0 %v978
      %v980 = vpop.xlane.xlu0 %979
      %v981 = vsel %vm725, %v897, 0.0
      %982 = vadd.xlane.f32.xlu0 %v981
      %v983 = vpop.xlane.xlu0 %982
      %v984 = vsel %vm725, %v899, 0.0
      %985 = vadd.xlane.f32.xlu0 %v984
      %v986 = vpop.xlane.xlu0 %985
      %v987 = vsel %vm725, %v901, 0.0
      %988 = vadd.xlane.f32.xlu0 %v987
      %v989 = vpop.xlane.xlu0 %988
      %v990 = vsel %vm725, %v903, 0.0
      %991 = vadd.xlane.f32.xlu0 %v990
      %v992 = vpop.xlane.xlu0 %991
      %v993 = vsel %vm725, %v905, 0.0
      %994 = vadd.xlane.f32.xlu0 %v993
      %v995 = vpop.xlane.xlu0 %994
      %v996 = vsel %vm725, %v907, 0.0
      %997 = vadd.xlane.f32.xlu0 %v996
      %v998 = vpop.xlane.xlu0 %997
      %v999 = vsel %vm725, %v909, 0.0
      %1000 = vadd.xlane.f32.xlu0 %v999
      %v1001 = vpop.xlane.xlu0 %1000
      %v1002 = vsel %vm725, %v911, 0.0
      %1003 = vadd.xlane.f32.xlu0 %v1002
      %v1004 = vpop.xlane.xlu0 %1003
      %v1005 = vsel %vm725, %v913, 0.0
      %1006 = vadd.xlane.f32.xlu0 %v1005
      %v1007 = vpop.xlane.xlu0 %1006
      %v1008 = vsel %vm725, %v915, 0.0
      %1009 = vadd.xlane.f32.xlu0 %v1008
      %v1010 = vpop.xlane.xlu0 %1009
      %v1011 = vsel %vm725, %v917, 0.0
      %1012 = vadd.xlane.f32.xlu0 %v1011
      %v1013 = vpop.xlane.xlu0 %1012
      %v1014 = vrcp.pop %v920
      %v1015 = vrcp.pop %v923
      %v1016 = vrcp.pop %v926
      %v1017 = vrcp.pop %v929
      %v1018 = vrcp.pop %v932
      %v1019 = vrcp.pop %v935
      %v1020 = vrcp.pop %v938
      %v1021 = vrcp.pop %v941
      %v1022 = vrcp.pop %v944
      %v1023 = vrcp.pop %v947
      %v1024 = vrcp.pop %v950
      %v1025 = vrcp.pop %v953
      %v1026 = vrcp.pop %v956
      %v1027 = vrcp.pop %v959
      %v1028 = vrcp.pop %v962
      %v1029 = vrcp.pop %v965
      %v1030 = vrcp.pop %v968
      %v1031 = vrcp.pop %v971
      %v1032 = vrcp.pop %v974
      %v1033 = vrcp.pop %v977
      %v1034 = vrcp.pop %v980
      %v1035 = vrcp.pop %v983
      %v1036 = vrcp.pop %v986
      %v1037 = vrcp.pop %v989
      %v1038 = vrcp.pop %v992
      %v1039 = vrcp.pop %v995
      %v1040 = vrcp.pop %v998
      %v1041 = vrcp.pop %v1001
      %v1042 = vrcp.pop %v1004
      %v1043 = vrcp.pop %v1007
      %v1044 = vrcp.pop %v1010
      %v1045 = vrcp.pop %v1013
      %v1046 = vmul.f32 %v855, %v1014
      %v1047 = vmul.f32 %v857, %v1015
      %v1048 = vmul.f32 %v859, %v1016
      %v1049 = vmul.f32 %v861, %v1017
      %v1050 = vmul.f32 %v863, %v1018
      %v1051 = vmul.f32 %v865, %v1019
      %v1052 = vmul.f32 %v867, %v1020
      %v1053 = vmul.f32 %v869, %v1021
      %v1054 = vmul.f32 %v871, %v1022
      %v1055 = vmul.f32 %v873, %v1023
      %v1056 = vmul.f32 %v875, %v1024
      %v1057 = vmul.f32 %v877, %v1025
      %v1058 = vmul.f32 %v879, %v1026
      %v1059 = vmul.f32 %v881, %v1027
      %v1060 = vmul.f32 %v883, %v1028
      %v1061 = vmul.f32 %v885, %v1029
      %v1062 = vmul.f32 %v887, %v1030
      %v1063 = vmul.f32 %v889, %v1031
      %v1064 = vmul.f32 %v891, %v1032
      %v1065 = vmul.f32 %v893, %v1033
      %v1066 = vmul.f32 %v895, %v1034
      %v1067 = vmul.f32 %v897, %v1035
      %v1068 = vmul.f32 %v899, %v1036
      %v1069 = vmul.f32 %v901, %v1037
      %v1070 = vmul.f32 %v903, %v1038
      %v1071 = vmul.f32 %v905, %v1039
      %v1072 = vmul.f32 %v907, %v1040
      %v1073 = vmul.f32 %v909, %v1041
      %v1074 = vmul.f32 %v911, %v1042
      %v1075 = vmul.f32 %v913, %v1043
      %v1076 = vmul.f32 %v915, %v1044
      %v1077 = vmul.f32 %v917, %v1045
      %v1079 = vsel %vm725, %v204, 0
      %v1082 = vsel %vm725, %v1046, 0
      %v1085 = vsel %vm725, %v1047, 0
      %v1088 = vsel %vm725, %v1048, 0
      %v1091 = vsel %vm725, %v1049, 0
      %v1094 = vsel %vm725, %v1050, 0
      %v1097 = vsel %vm725, %v1051, 0
      %v1100 = vsel %vm725, %v1052, 0
      %v1103 = vsel %vm725, %v1053, 0
      %1105 = vmatprep.subr.mxu0 0.0
      %1106 = vmatpush1.xpose.msra.mxu0 0.0
      %1107 = vmatprep.subr.mxu0 0.0
      %1108 = vmatpush1.xpose.msra.mxu0 0.0
      %1109 = vmatprep.subr.mxu0 0.0
      %1110 = vmatpush1.xpose.msra.mxu0 0.0
      %1111 = vmatprep.subr.mxu0 0.0
      %1112 = vmatpush1.xpose.msra.mxu0 0.0
      %1113 = vmatprep.subr.mxu0 0.0
      %1114 = vmatpush1.xpose.msra.mxu0 0.0
      %1115 = vmatprep.subr.mxu0 0.0
      %1116 = vmatpush1.xpose.msra.mxu0 0.0
      %1117 = vmatprep.subr.mxu0 0.0
      %1118 = vmatpush1.xpose.msra.mxu0 0.0
      %1119 = vmatprep.subr.mxu0 0.0
      %1120 = vmatpush1.xpose.msra.mxu0 0.0
      %1121 = vmatprep.subr.mxu0 0.0
      %1122 = vmatpush1.xpose.msra.mxu0 %v1103
      %1123 = vmatprep.subr.mxu0 0.0
      %1124 = vmatpush1.xpose.msra.mxu0 %v1100
      %1125 = vmatprep.subr.mxu0 0.0
      %1126 = vmatpush1.xpose.msra.mxu0 %v1097
      %1127 = vmatprep.subr.mxu0 0.0
      %1128 = vmatpush1.xpose.msra.mxu0 %v1094
      %1129 = vmatprep.subr.mxu0 0.0
      %1130 = vmatpush1.xpose.msra.mxu0 %v1091
      %1131 = vmatprep.subr.mxu0 0.0
      %1132 = vmatpush1.xpose.msra.mxu0 %v1088
      %1133 = vmatprep.subr.mxu0 0.0
      %1134 = vmatpush1.xpose.msra.mxu0 %v1085
      %1135 = vmatprep.subr.mxu0 0.0
      %1136 = vmatpush1.xpose.msra.mxu0 %v1082
      %1137 = vmatprep.subr.mxu0 0.0
      %1138 = vmatpush2.xpose.msra.mxu0 0.0
      %1139 = vmatprep.subr.mxu0 0.0
      %1140 = vmatpush2.xpose.msra.mxu0 0.0
      %1141 = vmatprep.subr.mxu0 0.0
      %1142 = vmatpush2.xpose.msra.mxu0 0.0
      %1143 = vmatprep.subr.mxu0 0.0
      %1144 = vmatpush2.xpose.msra.mxu0 0.0
      %1145 = vmatprep.subr.mxu0 0.0
      %1146 = vmatpush2.xpose.msra.mxu0 0.0
      %1147 = vmatprep.subr.mxu0 0.0
      %1148 = vmatpush2.xpose.msra.mxu0 0.0
      %1149 = vmatprep.subr.mxu0 0.0
      %1150 = vmatpush2.xpose.msra.mxu0 0.0
      %1151 = vmatprep.subr.mxu0 0.0
      %1152 = vmatpush2.xpose.msra.mxu0 0.0
      %1153 = vmatprep.subr.mxu0 0.0
      %1154 = vmatpush2.xpose.msra.mxu0 0.0
      %1155 = vmatprep.subr.mxu0 0.0
      %1156 = vmatpush2.xpose.msra.mxu0 0.0
      %1157 = vmatprep.subr.mxu0 0.0
      %1158 = vmatpush2.xpose.msra.mxu0 0.0
      %1159 = vmatprep.subr.mxu0 0.0
      %1160 = vmatpush2.xpose.msra.mxu0 0.0
      %1161 = vmatprep.subr.mxu0 0.0
      %1162 = vmatpush2.xpose.msra.mxu0 0.0
      %1163 = vmatprep.subr.mxu0 0.0
      %1164 = vmatpush2.xpose.msra.mxu0 0.0
      %1165 = vmatprep.subr.mxu0 0.0
      %1166 = vmatpush2.xpose.msra.mxu0 0.0
      %1167 = vmatprep.subr.mxu0 0.0
      %1168 = vmatpush2.xpose.msra.mxu0 0.0
      %1169 = vmatprep.mubr.f32.mxu0 0.0
      %1170 = vmatmul.mubr.f32.gmra.mxu0 %v1079
      %v1171 = vpop.f32.mrf.mxu0
      %v1172 = vadd.f32 0.0, %v1171
      %v1173 = vpop.f32.mrf.mxu0
      %1174 = vdwg.mxu0
      %v1176 = vsel %vm725, %v205, 0
      %v1179 = vsel %vm725, %v1054, 0
      %v1182 = vsel %vm725, %v1055, 0
      %v1185 = vsel %vm725, %v1056, 0
      %v1188 = vsel %vm725, %v1057, 0
      %v1191 = vsel %vm725, %v1058, 0
      %v1194 = vsel %vm725, %v1059, 0
      %v1197 = vsel %vm725, %v1060, 0
      %v1200 = vsel %vm725, %v1061, 0
      %1202 = vmatprep.subr.mxu0 0.0
      %1203 = vmatpush1.xpose.msra.mxu0 0.0
      %1204 = vmatprep.subr.mxu0 0.0
      %1205 = vmatpush1.xpose.msra.mxu0 0.0
      %1206 = vmatprep.subr.mxu0 0.0
      %1207 = vmatpush1.xpose.msra.mxu0 0.0
      %1208 = vmatprep.subr.mxu0 0.0
      %1209 = vmatpush1.xpose.msra.mxu0 0.0
      %1210 = vmatprep.subr.mxu0 0.0
      %1211 = vmatpush1.xpose.msra.mxu0 0.0
      %1212 = vmatprep.subr.mxu0 0.0
      %1213 = vmatpush1.xpose.msra.mxu0 0.0
      %1214 = vmatprep.subr.mxu0 0.0
      %1215 = vmatpush1.xpose.msra.mxu0 0.0
      %1216 = vmatprep.subr.mxu0 0.0
      %1217 = vmatpush1.xpose.msra.mxu0 0.0
      %1218 = vmatprep.subr.mxu0 0.0
      %1219 = vmatpush1.xpose.msra.mxu0 %v1200
      %1220 = vmatprep.subr.mxu0 0.0
      %1221 = vmatpush1.xpose.msra.mxu0 %v1197
      %1222 = vmatprep.subr.mxu0 0.0
      %1223 = vmatpush1.xpose.msra.mxu0 %v1194
      %1224 = vmatprep.subr.mxu0 0.0
      %1225 = vmatpush1.xpose.msra.mxu0 %v1191
      %1226 = vmatprep.subr.mxu0 0.0
      %1227 = vmatpush1.xpose.msra.mxu0 %v1188
      %1228 = vmatprep.subr.mxu0 0.0
      %1229 = vmatpush1.xpose.msra.mxu0 %v1185
      %1230 = vmatprep.subr.mxu0 0.0
      %1231 = vmatpush1.xpose.msra.mxu0 %v1182
      %1232 = vmatprep.subr.mxu0 0.0
      %1233 = vmatpush1.xpose.msra.mxu0 %v1179
      %1234 = vmatprep.subr.mxu0 0.0
      %1235 = vmatpush2.xpose.msra.mxu0 0.0
      %1236 = vmatprep.subr.mxu0 0.0
      %1237 = vmatpush2.xpose.msra.mxu0 0.0
      %1238 = vmatprep.subr.mxu0 0.0
      %1239 = vmatpush2.xpose.msra.mxu0 0.0
      %1240 = vmatprep.subr.mxu0 0.0
      %1241 = vmatpush2.xpose.msra.mxu0 0.0
      %1242 = vmatprep.subr.mxu0 0.0
      %1243 = vmatpush2.xpose.msra.mxu0 0.0
      %1244 = vmatprep.subr.mxu0 0.0
      %1245 = vmatpush2.xpose.msra.mxu0 0.0
      %1246 = vmatprep.subr.mxu0 0.0
      %1247 = vmatpush2.xpose.msra.mxu0 0.0
      %1248 = vmatprep.subr.mxu0 0.0
      %1249 = vmatpush2.xpose.msra.mxu0 0.0
      %1250 = vmatprep.subr.mxu0 0.0
      %1251 = vmatpush2.xpose.msra.mxu0 0.0
      %1252 = vmatprep.subr.mxu0 0.0
      %1253 = vmatpush2.xpose.msra.mxu0 0.0
      %1254 = vmatprep.subr.mxu0 0.0
      %1255 = vmatpush2.xpose.msra.mxu0 0.0
      %1256 = vmatprep.subr.mxu0 0.0
      %1257 = vmatpush2.xpose.msra.mxu0 0.0
      %1258 = vmatprep.subr.mxu0 0.0
      %1259 = vmatpush2.xpose.msra.mxu0 0.0
      %1260 = vmatprep.subr.mxu0 0.0
      %1261 = vmatpush2.xpose.msra.mxu0 0.0
      %1262 = vmatprep.subr.mxu0 0.0
      %1263 = vmatpush2.xpose.msra.mxu0 0.0
      %1264 = vmatprep.subr.mxu0 0.0
      %1265 = vmatpush2.xpose.msra.mxu0 0.0
      %1266 = vmatprep.mubr.f32.mxu0 0.0
      %1267 = vmatmul.mubr.f32.gmra.mxu0 %v1176
      %v1268 = vpop.f32.mrf.mxu0
      %v1269 = vadd.f32 0.0, %v1268
      %v1270 = vpop.f32.mrf.mxu0
      %1271 = vdwg.mxu0
      %v1273 = vsel %vm725, %v206, 0
      %v1276 = vsel %vm725, %v1062, 0
      %v1279 = vsel %vm725, %v1063, 0
      %v1282 = vsel %vm725, %v1064, 0
      %v1285 = vsel %vm725, %v1065, 0
      %v1288 = vsel %vm725, %v1066, 0
      %v1291 = vsel %vm725, %v1067, 0
      %v1294 = vsel %vm725, %v1068, 0
      %v1297 = vsel %vm725, %v1069, 0
      %1299 = vmatprep.subr.mxu0 0.0
      %1300 = vmatpush1.xpose.msra.mxu0 0.0
      %1301 = vmatprep.subr.mxu0 0.0
      %1302 = vmatpush1.xpose.msra.mxu0 0.0
      %1303 = vmatprep.subr.mxu0 0.0
      %1304 = vmatpush1.xpose.msra.mxu0 0.0
      %1305 = vmatprep.subr.mxu0 0.0
      %1306 = vmatpush1.xpose.msra.mxu0 0.0
      %1307 = vmatprep.subr.mxu0 0.0
      %1308 = vmatpush1.xpose.msra.mxu0 0.0
      %1309 = vmatprep.subr.mxu0 0.0
      %1310 = vmatpush1.xpose.msra.mxu0 0.0
      %1311 = vmatprep.subr.mxu0 0.0
      %1312 = vmatpush1.xpose.msra.mxu0 0.0
      %1313 = vmatprep.subr.mxu0 0.0
      %1314 = vmatpush1.xpose.msra.mxu0 0.0
      %1315 = vmatprep.subr.mxu0 0.0
      %1316 = vmatpush1.xpose.msra.mxu0 %v1297
      %1317 = vmatprep.subr.mxu0 0.0
      %1318 = vmatpush1.xpose.msra.mxu0 %v1294
      %1319 = vmatprep.subr.mxu0 0.0
      %1320 = vmatpush1.xpose.msra.mxu0 %v1291
      %1321 = vmatprep.subr.mxu0 0.0
      %1322 = vmatpush1.xpose.msra.mxu0 %v1288
      %1323 = vmatprep.subr.mxu0 0.0
      %1324 = vmatpush1.xpose.msra.mxu0 %v1285
      %1325 = vmatprep.subr.mxu0 0.0
      %1326 = vmatpush1.xpose.msra.mxu0 %v1282
      %1327 = vmatprep.subr.mxu0 0.0
      %1328 = vmatpush1.xpose.msra.mxu0 %v1279
      %1329 = vmatprep.subr.mxu0 0.0
      %1330 = vmatpush1.xpose.msra.mxu0 %v1276
      %1331 = vmatprep.subr.mxu0 0.0
      %1332 = vmatpush2.xpose.msra.mxu0 0.0
      %1333 = vmatprep.subr.mxu0 0.0
      %1334 = vmatpush2.xpose.msra.mxu0 0.0
      %1335 = vmatprep.subr.mxu0 0.0
      %1336 = vmatpush2.xpose.msra.mxu0 0.0
      %1337 = vmatprep.subr.mxu0 0.0
      %1338 = vmatpush2.xpose.msra.mxu0 0.0
      %1339 = vmatprep.subr.mxu0 0.0
      %1340 = vmatpush2.xpose.msra.mxu0 0.0
      %1341 = vmatprep.subr.mxu0 0.0
      %1342 = vmatpush2.xpose.msra.mxu0 0.0
      %1343 = vmatprep.subr.mxu0 0.0
      %1344 = vmatpush2.xpose.msra.mxu0 0.0
      %1345 = vmatprep.subr.mxu0 0.0
      %1346 = vmatpush2.xpose.msra.mxu0 0.0
      %1347 = vmatprep.subr.mxu0 0.0
      %1348 = vmatpush2.xpose.msra.mxu0 0.0
      %1349 = vmatprep.subr.mxu0 0.0
      %1350 = vmatpush2.xpose.msra.mxu0 0.0
      %1351 = vmatprep.subr.mxu0 0.0
      %1352 = vmatpush2.xpose.msra.mxu0 0.0
      %1353 = vmatprep.subr.mxu0 0.0
      %1354 = vmatpush2.xpose.msra.mxu0 0.0
      %1355 = vmatprep.subr.mxu0 0.0
      %1356 = vmatpush2.xpose.msra.mxu0 0.0
      %1357 = vmatprep.subr.mxu0 0.0
      %1358 = vmatpush2.xpose.msra.mxu0 0.0
      %1359 = vmatprep.subr.mxu0 0.0
      %1360 = vmatpush2.xpose.msra.mxu0 0.0
      %1361 = vmatprep.subr.mxu0 0.0
      %1362 = vmatpush2.xpose.msra.mxu0 0.0
      %1363 = vmatprep.mubr.f32.mxu0 0.0
      %1364 = vmatmul.mubr.f32.gmra.mxu0 %v1273
      %v1365 = vpop.f32.mrf.mxu0
      %v1366 = vadd.f32 0.0, %v1365
      %v1367 = vpop.f32.mrf.mxu0
      %1368 = vdwg.mxu0
      %v1370 = vsel %vm725, %v207, 0
      %v1373 = vsel %vm725, %v1070, 0
      %v1376 = vsel %vm725, %v1071, 0
      %v1379 = vsel %vm725, %v1072, 0
      %v1382 = vsel %vm725, %v1073, 0
      %v1385 = vsel %vm725, %v1074, 0
      %v1388 = vsel %vm725, %v1075, 0
      %v1391 = vsel %vm725, %v1076, 0
      %v1394 = vsel %vm725, %v1077, 0
      %1396 = vmatprep.subr.mxu0 0.0
      %1397 = vmatpush1.xpose.msra.mxu0 0.0
      %1398 = vmatprep.subr.mxu0 0.0
      %1399 = vmatpush1.xpose.msra.mxu0 0.0
      %1400 = vmatprep.subr.mxu0 0.0
      %1401 = vmatpush1.xpose.msra.mxu0 0.0
      %1402 = vmatprep.subr.mxu0 0.0
      %1403 = vmatpush1.xpose.msra.mxu0 0.0
      %1404 = vmatprep.subr.mxu0 0.0
      %1405 = vmatpush1.xpose.msra.mxu0 0.0
      %1406 = vmatprep.subr.mxu0 0.0
      %1407 = vmatpush1.xpose.msra.mxu0 0.0
      %1408 = vmatprep.subr.mxu0 0.0
      %1409 = vmatpush1.xpose.msra.mxu0 0.0
      %1410 = vmatprep.subr.mxu0 0.0
      %1411 = vmatpush1.xpose.msra.mxu0 0.0
      %1412 = vmatprep.subr.mxu0 0.0
      %1413 = vmatpush1.xpose.msra.mxu0 %v1394
      %1414 = vmatprep.subr.mxu0 0.0
      %1415 = vmatpush1.xpose.msra.mxu0 %v1391
      %1416 = vmatprep.subr.mxu0 0.0
      %1417 = vmatpush1.xpose.msra.mxu0 %v1388
      %1418 = vmatprep.subr.mxu0 0.0
      %1419 = vmatpush1.xpose.msra.mxu0 %v1385
      %1420 = vmatprep.subr.mxu0 0.0
      %1421 = vmatpush1.xpose.msra.mxu0 %v1382
      %1422 = vmatprep.subr.mxu0 0.0
      %1423 = vmatpush1.xpose.msra.mxu0 %v1379
      %1424 = vmatprep.subr.mxu0 0.0
      %1425 = vmatpush1.xpose.msra.mxu0 %v1376
      %1426 = vmatprep.subr.mxu0 0.0
      %1427 = vmatpush1.xpose.msra.mxu0 %v1373
      %1428 = vmatprep.subr.mxu0 0.0
      %1429 = vmatpush2.xpose.msra.mxu0 0.0
      %1430 = vmatprep.subr.mxu0 0.0
      %1431 = vmatpush2.xpose.msra.mxu0 0.0
      %1432 = vmatprep.subr.mxu0 0.0
      %1433 = vmatpush2.xpose.msra.mxu0 0.0
      %1434 = vmatprep.subr.mxu0 0.0
      %1435 = vmatpush2.xpose.msra.mxu0 0.0
      %1436 = vmatprep.subr.mxu0 0.0
      %1437 = vmatpush2.xpose.msra.mxu0 0.0
      %1438 = vmatprep.subr.mxu0 0.0
      %1439 = vmatpush2.xpose.msra.mxu0 0.0
      %1440 = vmatprep.subr.mxu0 0.0
      %1441 = vmatpush2.xpose.msra.mxu0 0.0
      %1442 = vmatprep.subr.mxu0 0.0
      %1443 = vmatpush2.xpose.msra.mxu0 0.0
      %1444 = vmatprep.subr.mxu0 0.0
      %1445 = vmatpush2.xpose.msra.mxu0 0.0
      %1446 = vmatprep.subr.mxu0 0.0
      %1447 = vmatpush2.xpose.msra.mxu0 0.0
      %1448 = vmatprep.subr.mxu0 0.0
      %1449 = vmatpush2.xpose.msra.mxu0 0.0
      %1450 = vmatprep.subr.mxu0 0.0
      %1451 = vmatpush2.xpose.msra.mxu0 0.0
      %1452 = vmatprep.subr.mxu0 0.0
      %1453 = vmatpush2.xpose.msra.mxu0 0.0
      %1454 = vmatprep.subr.mxu0 0.0
      %1455 = vmatpush2.xpose.msra.mxu0 0.0
      %1456 = vmatprep.subr.mxu0 0.0
      %1457 = vmatpush2.xpose.msra.mxu0 0.0
      %1458 = vmatprep.subr.mxu0 0.0
      %1459 = vmatpush2.xpose.msra.mxu0 0.0
      %1460 = vmatprep.mubr.f32.mxu0 0.0
      %1461 = vmatmul.mubr.f32.gmra.mxu0 %v1370
      %v1462 = vpop.f32.mrf.mxu0
      %v1463 = vadd.f32 0.0, %v1462
      %v1464 = vpop.f32.mrf.mxu0
      %1465 = vdwg.mxu0
      %vm1466 = vcmask 517120
      %1467 = vst.msk [vmem:[%s170] sm:$0x3] %vm1466, %v1172
      %1468 = vst.msk [vmem:[%s170 + $0x2] sm:$0x3] %vm1466, %v1269
      %1469 = vst.msk [vmem:[%s170 + $0x4] sm:$0x3] %vm1466, %v1366
      %1470 = vst.msk [vmem:[%s170 + $0x6] sm:$0x3] %vm1466, %v1463
      %s1471 = smul.u32 4, %s13
      %p1472 = scmp.lt.s32.totalorder %s1471, 7
      %s1473 = scalar_select %p1472, %s1471, 7
      %s1474 = smul.addr %s1473, 2
      %s1475 = scalar_lea.vmem %s2, %s1474
      // Predicated region
      $region29: #{mwsa_forward.7} parent=27 // pred_check
        %p1476 = pneg %p83
      $region30: #{mwsa_forward.7} parent=27 // pred_check_branch
        %1478 = sbr.rel (%p1476) target = $region32
      $region31: #{mwsa_forward.7} parent=27 // pred_region
        %s1479 = smul.u32 4, %s13
      $region32: #{mwsa_forward.7} parent=27 // pred_fallthru
        _
    $region28: #{mwsa_forward.7} parent=5 // pred_fallthru
      _
    %p1480 = scmp.le.s32.totalorder 2, %s8
    // Predicated region
    $region33: #{mwsa_forward.7} parent=5 // pred_check
      %p1481 = pneg %p1480
    $region34: #{mwsa_forward.7} parent=5 // pred_check_branch
      %1483 = sbr.rel (%p1481) target = $region36
    $region35: #{mwsa_forward.7} parent=5 // pred_region
      %s1484 = ssub.s32 %s8, 2
      // Predicated region
      $region37: #{mwsa_forward.7} parent=35 // pred_check
        %p1485 = pneg %p89
      $region38: #{mwsa_forward.7} parent=35 // pred_check_branch
        %1487 = sbr.rel (%p1485) target = $region40
      $region39: #{mwsa_forward.7} parent=35 // pred_region
        %s1488 = smul.u32 4, %s14
        %p1489 = scmp.lt.s32.totalorder %s1488, 7
        %s1490 = scalar_select %p1489, %s1488, 7
        %s1491 = smul.addr %s1490, 2
        %s1492 = scalar_lea.vmem %s2, %s1491
      $region40: #{mwsa_forward.7} parent=35 // pred_fallthru
        _
    $region36: #{mwsa_forward.7} parent=5 // pred_fallthru
      _
  $region6: #{mwsa_forward.7} parent=0 // loop_footer
    %s12 = sadd.s32 1, %s8
  $region7: #{mwsa_forward.7} parent=0 // loop_footer_branch
    %7 = sbr.rel target = $region3
  $region8: #{mwsa_forward.7} parent=0 // loop_exit
    _

// kernel: mwsa_forward.9
$region0: #{mwsa_forward.9}
  #allocation0 [shape = 'u32[]', space=smem, size = 0x4, offset = 0x4, fixed_abs, tag = 'smem constant byte address 0x4 - core index']
  #allocation1 [shape = 'u32[144,128]{1,0:T(1,128)}', space=vmem, size = 0x12000, scoped, tag = 'internal scratch']
  %s0 = inlined_call_operand.vmem [shape: f32[2,2,256], index: 0, kind: input, shape index: {}]
  %s1 = inlined_call_operand.vmem [shape: f32[2,2,256], index: 1, kind: input, shape index: {}]
  %s2 = inlined_call_operand.vmem [shape: f32[2,2,256], index: 2, kind: input, shape index: {}]
  %s3 = inlined_call_operand.vmem [shape: f32[3,4,2], index: 3, kind: input, shape index: {}]
  %s4 = inlined_call_operand.vmem [shape: f32[2,4,256], index: 4, kind: output, shape index: {}]
  %s5 = sld [smem:[#allocation0]]
  $region49: #{mwsa_forward.9} parent=0
    _
  %s7 = ssub.s32 1, %s5
  %s8 = scalar_select 0, %s7, %s5
  loop: start=0, step=1, limit=6
  $region2: #{mwsa_forward.9} parent=0 // loop_pre_header
    _
  $region3: #{mwsa_forward.9} parent=0 // loop_header
    %s10 = sphi 0, %s14
    %p11 = scmp.ge.s32.totalorder %s10, 6
    %s17 = sphi 0, %s29
    %s18 = sphi 0, %s25
    %s19 = sphi 0, %s17
    %s20 = sphi 0, %s18
    %s21 = sphi 0, %s19
    %s22 = sphi 0, %s20
    %s34 = sphi 0, %s36
    %s37 = sphi 0, %s34
    %s38 = sphi 0, %s37
    %s54 = sphi 0, %s38
    %s62 = sphi 0, %s64
    %s65 = sphi 0, %s62
    %s66 = sphi 0, %s65
    %s82 = sphi 0, %s66
    %s90 = sphi 0, %s92
    %s93 = sphi 0, %s90
    %s94 = sphi 0, %s93
    %s110 = sphi 0, %s94
    %s114 = sphi 0, %s114
    %s116 = sphi 0, %s114
    %s117 = sphi 0, %s116
    %s131 = sphi 0, %s117
    %s139 = sphi 0, %s141
    %s142 = sphi 0, %s139
    %s143 = sphi 0, %s142
    %s159 = sphi 0, %s143
  $region4: #{mwsa_forward.9} parent=0 // loop_header_branch
    %13 = sbr.rel (%p11) target = $region8
  $region5: #{mwsa_forward.9} parent=0 // loop_body
    %s15 = ssub.s32 %s10, 1
    %s16 = ssub.s32 %s10, 2
    %s23 = sadd.s32 1, %s18
    %p24 = scmp.ge.s32.totalorder %s23, 2
    %s25 = scalar_select %p24, 0, %s23
    %s26 = sadd.s32 1, %s17
    %s27 = scalar_select %p24, %s26, %s17
    %p28 = scmp.ge.s32.totalorder %s27, 2
    %s29 = scalar_select %p28, 0, %s27
    %s30 = ssub.s32 %s17, %s29
    %s31 = ssub.s32 %s18, %s25
    %s32 = sor.u32 %s30, %s31
    %p33 = scmp.eq.s32.totalorder %s32, 0
    %s35 = sadd.s32 %s34, 1
    %s36 = scalar_select %p33, %s34, %s35
    %p39 = pneg %p33
    %p40 = scmp.eq.s32.totalorder %s10, 3
    %p41 = por %p39, %p40
    %p42 = scmp.ne.s32.totalorder %s34, %s37
    %p43 = scmp.eq.s32.totalorder %s10, 0
    %p44 = por %p42, %p43
    %p45 = scmp.ne.s32.totalorder %s34, %s37
    %p46 = scmp.eq.s32.totalorder %s15, 3
    %p47 = por %p45, %p46
    %p48 = scmp.ne.s32.totalorder %s37, %s38
    %p49 = scmp.eq.s32.totalorder %s15, 0
    %p50 = por %p48, %p49
    %p51 = scmp.ne.s32.totalorder %s37, %s38
    %p52 = scmp.eq.s32.totalorder %s16, 3
    %p53 = por %p51, %p52
    %p55 = scmp.ne.s32.totalorder %s38, %s54
    %p56 = scmp.eq.s32.totalorder %s16, 0
    %p57 = por %p55, %p56
    %s58 = ssub.s32 %s17, %s29
    %s59 = ssub.s32 %s18, %s25
    %s60 = sor.u32 %s58, %s59
    %p61 = scmp.eq.s32.totalorder %s60, 0
    %s63 = sadd.s32 %s62, 1
    %s64 = scalar_select %p61, %s62, %s63
    %p67 = pneg %p61
    %p68 = scmp.eq.s32.totalorder %s10, 3
    %p69 = por %p67, %p68
    %p70 = scmp.ne.s32.totalorder %s62, %s65
    %p71 = scmp.eq.s32.totalorder %s10, 0
    %p72 = por %p70, %p71
    %p73 = scmp.ne.s32.totalorder %s62, %s65
    %p74 = scmp.eq.s32.totalorder %s15, 3
    %p75 = por %p73, %p74
    %p76 = scmp.ne.s32.totalorder %s65, %s66
    %p77 = scmp.eq.s32.totalorder %s15, 0
    %p78 = por %p76, %p77
    %p79 = scmp.ne.s32.totalorder %s65, %s66
    %p80 = scmp.eq.s32.totalorder %s16, 3
    %p81 = por %p79, %p80
    %p83 = scmp.ne.s32.totalorder %s66, %s82
    %p84 = scmp.eq.s32.totalorder %s16, 0
    %p85 = por %p83, %p84
    %s86 = ssub.s32 %s17, %s29
    %s87 = ssub.s32 %s18, %s25
    %s88 = sor.u32 %s86, %s87
    %p89 = scmp.eq.s32.totalorder %s88, 0
    %s91 = sadd.s32 %s90, 1
    %s92 = scalar_select %p89, %s90, %s91
    %p95 = pneg %p89
    %p96 = scmp.eq.s32.totalorder %s10, 3
    %p97 = por %p95, %p96
    %p98 = scmp.ne.s32.totalorder %s90, %s93
    %p99 = scmp.eq.s32.totalorder %s10, 0
    %p100 = por %p98, %p99
    %p101 = scmp.ne.s32.totalorder %s90, %s93
    %p102 = scmp.eq.s32.totalorder %s15, 3
    %p103 = por %p101, %p102
    %p104 = scmp.ne.s32.totalorder %s93, %s94
    %p105 = scmp.eq.s32.totalorder %s15, 0
    %p106 = por %p104, %p105
    %p107 = scmp.ne.s32.totalorder %s93, %s94
    %p108 = scmp.eq.s32.totalorder %s16, 3
    %p109 = por %p107, %p108
    %p111 = scmp.ne.s32.totalorder %s94, %s110
    %p112 = scmp.eq.s32.totalorder %s16, 0
    %p113 = por %p111, %p112
    %s115 = sadd.s32 %s114, 1
    %p118 = scmp.eq.s32.totalorder %s10, 3
    %p119 = scmp.ne.s32.totalorder %s114, %s116
    %p120 = scmp.eq.s32.totalorder %s10, 0
    %p121 = por %p119, %p120
    %p122 = scmp.ne.s32.totalorder %s114, %s116
    %p123 = scmp.eq.s32.totalorder %s15, 3
    %p124 = por %p122, %p123
    %p125 = scmp.ne.s32.totalorder %s116, %s117
    %p126 = scmp.eq.s32.totalorder %s15, 0
    %p127 = por %p125, %p126
    %p128 = scmp.ne.s32.totalorder %s116, %s117
    %p129 = scmp.eq.s32.totalorder %s16, 3
    %p130 = por %p128, %p129
    %p132 = scmp.ne.s32.totalorder %s117, %s131
    %p133 = scmp.eq.s32.totalorder %s16, 0
    %p134 = por %p132, %p133
    %s135 = ssub.s32 %s17, %s29
    %s136 = ssub.s32 %s18, %s25
    %s137 = sor.u32 %s135, %s136
    %p138 = scmp.eq.s32.totalorder %s137, 0
    %s140 = sadd.s32 %s139, 1
    %s141 = scalar_select %p138, %s139, %s140
    %p144 = pneg %p138
    %p145 = scmp.eq.s32.totalorder %s10, 3
    %p146 = por %p144, %p145
    %p147 = scmp.ne.s32.totalorder %s139, %s142
    %p148 = scmp.eq.s32.totalorder %s10, 0
    %p149 = por %p147, %p148
    %p150 = scmp.ne.s32.totalorder %s139, %s142
    %p151 = scmp.eq.s32.totalorder %s15, 3
    %p152 = por %p150, %p151
    %p153 = scmp.ne.s32.totalorder %s142, %s143
    %p154 = scmp.eq.s32.totalorder %s15, 0
    %p155 = por %p153, %p154
    %p156 = scmp.ne.s32.totalorder %s142, %s143
    %p157 = scmp.eq.s32.totalorder %s16, 3
    %p158 = por %p156, %p157
    %p160 = scmp.ne.s32.totalorder %s143, %s159
    %p161 = scmp.eq.s32.totalorder %s16, 0
    %p162 = por %p160, %p161
    %p163 = scmp.le.s32.totalorder 1, %s10
    %p164 = scmp.lt.s32.totalorder %s10, 5
    %p165 = pnand %p163, %p164
    %p166 = pneg %p165
    // Predicated region
    $region9: #{mwsa_forward.9} parent=5 // pred_check
      _
    $region10: #{mwsa_forward.9} parent=5 // pred_check_branch
      %168 = sbr.rel (%p165) target = $region12
    $region11: #{mwsa_forward.9} parent=5 // pred_region
      %s169 = ssub.s32 %s10, 1
      // Predicated region
      $region13: #{mwsa_forward.9} parent=11 // pred_check
        %p170 = pneg %p127
      $region14: #{mwsa_forward.9} parent=11 // pred_check_branch
        %172 = sbr.rel (%p170) target = $region16
      $region15: #{mwsa_forward.9} parent=11 // pred_region
        _
      $region16: #{mwsa_forward.9} parent=11 // pred_fallthru
        _
    $region12: #{mwsa_forward.9} parent=5 // pred_fallthru
      _
    %p173 = scmp.lt.s32.totalorder %s10, 4
    // Predicated region
    $region17: #{mwsa_forward.9} parent=5 // pred_check
      %p174 = pneg %p173
    $region18: #{mwsa_forward.9} parent=5 // pred_check_branch
      %176 = sbr.rel (%p174) target = $region20
    $region19: #{mwsa_forward.9} parent=5 // pred_region
      // Predicated region
      $region21: #{mwsa_forward.9} parent=19 // pred_check
        %p177 = pneg %p44
      $region22: #{mwsa_forward.9} parent=19 // pred_check_branch
        %179 = sbr.rel (%p177) target = $region24
      $region23: #{mwsa_forward.9} parent=19 // pred_region
        %p180 = scmp.lt.s32.totalorder %s17, 1
        %s181 = scalar_select %p180, %s17, 1
        %p182 = scmp.lt.s32.totalorder %s18, 1
        %s183 = scalar_select %p182, %s18, 1
        %s184 = smul.addr %s181, 2
        %s185 = sadd.s32 %s183, %s184
        %s186 = smul.addr %s185, 2
        %s187 = scalar_lea.vmem %s0, %s186
      $region24: #{mwsa_forward.9} parent=19 // pred_fallthru
        _
      // Predicated region
      $region25: #{mwsa_forward.9} parent=19 // pred_check
        %p188 = pneg %p72
      $region26: #{mwsa_forward.9} parent=19 // pred_check_branch
        %190 = sbr.rel (%p188) target = $region28
      $region27: #{mwsa_forward.9} parent=19 // pred_region
        %p191 = scmp.lt.s32.totalorder %s17, 1
        %s192 = scalar_select %p191, %s17, 1
        %p193 = scmp.lt.s32.totalorder %s18, 1
        %s194 = scalar_select %p193, %s18, 1
        %s195 = smul.addr %s192, 2
        %s196 = sadd.s32 %s194, %s195
        %s197 = smul.addr %s196, 2
        %s198 = scalar_lea.vmem %s1, %s197
      $region28: #{mwsa_forward.9} parent=19 // pred_fallthru
        _
      // Predicated region
      $region29: #{mwsa_forward.9} parent=19 // pred_check
        %p199 = pneg %p100
      $region30: #{mwsa_forward.9} parent=19 // pred_check_branch
        %201 = sbr.rel (%p199) target = $region32
      $region31: #{mwsa_forward.9} parent=19 // pred_region
        %p202 = scmp.lt.s32.totalorder %s17, 1
        %s203 = scalar_select %p202, %s17, 1
        %p204 = scmp.lt.s32.totalorder %s18, 1
        %s205 = scalar_select %p204, %s18, 1
        %s206 = smul.addr %s203, 2
        %s207 = sadd.s32 %s205, %s206
        %s208 = smul.addr %s207, 2
        %s209 = scalar_lea.vmem %s2, %s208
      $region32: #{mwsa_forward.9} parent=19 // pred_fallthru
        _
    $region20: #{mwsa_forward.9} parent=5 // pred_fallthru
      _
    %p210 = scmp.le.s32.totalorder 1, %s10
    %p211 = scmp.lt.s32.totalorder %s10, 5
    %p212 = pnand %p210, %p211
    %p213 = pneg %p212
    // Predicated region
    $region33: #{mwsa_forward.9} parent=5 // pred_check
      _
    $region34: #{mwsa_forward.9} parent=5 // pred_check_branch
      %215 = sbr.rel (%p212) target = $region36
    $region35: #{mwsa_forward.9} parent=5 // pred_region
      %s216 = ssub.s32 %s10, 1
      %p217 = scmp.lt.s32.totalorder %s19, 1
      %s218 = scalar_select %p217, %s19, 1
      %p219 = scmp.lt.s32.totalorder %s20, 1
      %s220 = scalar_select %p219, %s20, 1
      %s221 = smul.addr %s218, 2
      %s222 = sadd.s32 %s220, %s221
      %s223 = smul.addr %s222, 2
      %s224 = scalar_lea.vmem %s0, %s223
      %p225 = pneg %p50
      %p226 = pneg %p47
      %p227 = scmp.lt.s32.totalorder %s19, 1
      %s228 = scalar_select %p227, %s19, 1
      %p229 = scmp.lt.s32.totalorder %s20, 1
      %s230 = scalar_select %p229, %s20, 1
      %s231 = smul.addr %s228, 2
      %s232 = sadd.s32 %s230, %s231
      %s233 = smul.addr %s232, 2
      %s234 = scalar_lea.vmem %s1, %s233
      %p235 = pneg %p78
      %p236 = pneg %p75
      %p237 = scmp.lt.s32.totalorder %s19, 1
      %s238 = scalar_select %p237, %s19, 1
      %p239 = scmp.lt.s32.totalorder %s20, 1
      %s240 = scalar_select %p239, %s20, 1
      %s241 = smul.addr %s238, 2
      %s242 = sadd.s32 %s240, %s241
      %s243 = smul.addr %s242, 2
      %s244 = scalar_lea.vmem %s2, %s243
      %p245 = pneg %p106
      %p246 = pneg %p103
      %p247 = pneg %p127
      %p248 = pneg %p124
      %p249 = pneg %p155
      %p250 = pneg %p152
      %p251 = scmp.lt.s32.totalorder %s19, 1
      %s252 = scalar_select %p251, %s19, 1
      %p253 = scmp.lt.s32.totalorder %s20, 1
      %s254 = scalar_select %p253, %s20, 1
      %s255 = smul.addr %s252, 2
      %s256 = sadd.s32 %s254, %s255
      %s257 = smul.addr %s256, 4
      %s258 = scalar_lea.vmem %s4, %s257
      %p259 = scmp.lt.s32.totalorder %s19, 1
      %s260 = scalar_select %p259, %s19, 1
      %p261 = scmp.lt.s32.totalorder %s20, 1
      %s262 = scalar_select %p261, %s20, 1
      %s263 = smul.addr %s260, 2
      %s264 = sadd.s32 %s262, %s263
      %s265 = smul.addr %s264, 2
      %s266 = scalar_lea.vmem %s0, %s265
      %p267 = scmp.lt.s32.totalorder %s19, 1
      %s268 = scalar_select %p267, %s19, 1
      %p269 = scmp.lt.s32.totalorder %s20, 1
      %s270 = scalar_select %p269, %s20, 1
      %s271 = smul.addr %s268, 2
      %s272 = sadd.s32 %s270, %s271
      %s273 = smul.addr %s272, 2
      %s274 = scalar_lea.vmem %s1, %s273
      %p275 = scmp.lt.s32.totalorder %s19, 1
      %s276 = scalar_select %p275, %s19, 1
      %p277 = scmp.lt.s32.totalorder %s20, 1
      %s278 = scalar_select %p277, %s20, 1
      %s279 = smul.addr %s276, 2
      %s280 = sadd.s32 %s278, %s279
      %s281 = smul.addr %s280, 2
      %s282 = scalar_lea.vmem %s2, %s281
      %p283 = scmp.lt.s32.totalorder %s19, 1
      %s284 = scalar_select %p283, %s19, 1
      %p285 = scmp.lt.s32.totalorder %s20, 1
      %s286 = scalar_select %p285, %s20, 1
      %s287 = smul.addr %s284, 2
      %s288 = sadd.s32 %s286, %s287
      %s289 = smul.addr %s288, 4
      %s290 = scalar_lea.vmem %s4, %s289
      %v291 = vld [vmem:[%s3] sm:$0xf]
      %v292 = vld [vmem:[%s266] sm:$0x3]
      %s293 = scalar_lea.vmem %s3, 4
      %v294 = vld [vmem:[%s293] sm:$0xf]
      %v295 = vld [vmem:[%s274] sm:$0x3]
      %vm296 = vcmask 15360
      %v298 = vsel %vm296, %v294, 0
      %vm300 = vcmask 1041408
      %v302 = vsel %vm300, %v295, 0
      %304 = vmatprep.subr.mxu0 0.0
      %305 = vmatpush1.msra.mxu0 0.0
      %306 = vmatprep.subr.mxu0 0.0
      %307 = vmatpush1.msra.mxu0 0.0
      %308 = vmatprep.subr.mxu0 0.0
      %309 = vmatpush1.msra.mxu0 0.0
      %310 = vmatprep.subr.mxu0 0.0
      %311 = vmatpush1.msra.mxu0 0.0
      %312 = vmatprep.subr.mxu0 0.0
      %313 = vmatpush1.msra.mxu0 0.0
      %314 = vmatprep.subr.mxu0 0.0
      %315 = vmatpush1.msra.mxu0 0.0
      %316 = vmatprep.subr.mxu0 0.0
      %317 = vmatpush1.msra.mxu0 0.0
      %318 = vmatprep.subr.mxu0 0.0
      %319 = vmatpush1.msra.mxu0 0.0
      %320 = vmatprep.subr.mxu0 0.0
      %321 = vmatpush1.msra.mxu0 0.0
      %322 = vmatprep.subr.mxu0 0.0
      %323 = vmatpush1.msra.mxu0 0.0
      %324 = vmatprep.subr.mxu0 0.0
      %325 = vmatpush1.msra.mxu0 0.0
      %326 = vmatprep.subr.mxu0 0.0
      %327 = vmatpush1.msra.mxu0 0.0
      %328 = vmatprep.subr.mxu0 0.0
      %329 = vmatpush1.msra.mxu0 0.0
      %330 = vmatprep.subr.mxu0 0.0
      %331 = vmatpush1.msra.mxu0 0.0
      %332 = vmatprep.subr.mxu0 0.0
      %333 = vmatpush1.msra.mxu0 0.0
      %334 = vmatprep.subr.mxu0 0.0
      %335 = vmatpush1.msra.mxu0 %v302
      %336 = vmatprep.subr.mxu0 0.0
      %337 = vmatpush2.msra.mxu0 0.0
      %338 = vmatprep.subr.mxu0 0.0
      %339 = vmatpush2.msra.mxu0 0.0
      %340 = vmatprep.subr.mxu0 0.0
      %341 = vmatpush2.msra.mxu0 0.0
      %342 = vmatprep.subr.mxu0 0.0
      %343 = vmatpush2.msra.mxu0 0.0
      %344 = vmatprep.subr.mxu0 0.0
      %345 = vmatpush2.msra.mxu0 0.0
      %346 = vmatprep.subr.mxu0 0.0
      %347 = vmatpush2.msra.mxu0 0.0
      %348 = vmatprep.subr.mxu0 0.0
      %349 = vmatpush2.msra.mxu0 0.0
      %350 = vmatprep.subr.mxu0 0.0
      %351 = vmatpush2.msra.mxu0 0.0
      %352 = vmatprep.subr.mxu0 0.0
      %353 = vmatpush2.msra.mxu0 0.0
      %354 = vmatprep.subr.mxu0 0.0
      %355 = vmatpush2.msra.mxu0 0.0
      %356 = vmatprep.subr.mxu0 0.0
      %357 = vmatpush2.msra.mxu0 0.0
      %358 = vmatprep.subr.mxu0 0.0
      %359 = vmatpush2.msra.mxu0 0.0
      %360 = vmatprep.subr.mxu0 0.0
      %361 = vmatpush2.msra.mxu0 0.0
      %362 = vmatprep.subr.mxu0 0.0
      %363 = vmatpush2.msra.mxu0 0.0
      %364 = vmatprep.subr.mxu0 0.0
      %365 = vmatpush2.msra.mxu0 0.0
      %366 = vmatprep.subr.mxu0 0.0
      %367 = vmatpush2.msra.mxu0 0.0
      %368 = vmatprep.mubr.f32.mxu0 0.0
      %369 = vmatmul.mubr.f32.gmra.mxu0 %v298
      %v370 = vpop.f32.mrf.mxu0
      %v371 = vadd.f32 0.0, %v370
      %v372 = vpop.f32.mrf.mxu0
      %373 = vdwg.mxu0
      %v375 = vsel %vm296, %v291, 0
      %v378 = vsel %vm300, %v292, 0
      %380 = vmatprep.subr.mxu0 0.0
      %381 = vmatpush1.msra.mxu0 0.0
      %382 = vmatprep.subr.mxu0 0.0
      %383 = vmatpush1.msra.mxu0 0.0
      %384 = vmatprep.subr.mxu0 0.0
      %385 = vmatpush1.msra.mxu0 0.0
      %386 = vmatprep.subr.mxu0 0.0
      %387 = vmatpush1.msra.mxu0 0.0
      %388 = vmatprep.subr.mxu0 0.0
      %389 = vmatpush1.msra.mxu0 0.0
      %390 = vmatprep.subr.mxu0 0.0
      %391 = vmatpush1.msra.mxu0 0.0
      %392 = vmatprep.subr.mxu0 0.0
      %393 = vmatpush1.msra.mxu0 0.0
      %394 = vmatprep.subr.mxu0 0.0
      %395 = vmatpush1.msra.mxu0 0.0
      %396 = vmatprep.subr.mxu0 0.0
      %397 = vmatpush1.msra.mxu0 0.0
      %398 = vmatprep.subr.mxu0 0.0
      %399 = vmatpush1.msra.mxu0 0.0
      %400 = vmatprep.subr.mxu0 0.0
      %401 = vmatpush1.msra.mxu0 0.0
      %402 = vmatprep.subr.mxu0 0.0
      %403 = vmatpush1.msra.mxu0 0.0
      %404 = vmatprep.subr.mxu0 0.0
      %405 = vmatpush1.msra.mxu0 0.0
      %406 = vmatprep.subr.mxu0 0.0
      %407 = vmatpush1.msra.mxu0 0.0
      %408 = vmatprep.subr.mxu0 0.0
      %409 = vmatpush1.msra.mxu0 0.0
      %410 = vmatprep.subr.mxu0 0.0
      %411 = vmatpush1.msra.mxu0 %v378
      %412 = vmatprep.subr.mxu0 0.0
      %413 = vmatpush2.msra.mxu0 0.0
      %414 = vmatprep.subr.mxu0 0.0
      %415 = vmatpush2.msra.mxu0 0.0
      %416 = vmatprep.subr.mxu0 0.0
      %417 = vmatpush2.msra.mxu0 0.0
      %418 = vmatprep.subr.mxu0 0.0
      %419 = vmatpush2.msra.mxu0 0.0
      %420 = vmatprep.subr.mxu0 0.0
      %421 = vmatpush2.msra.mxu0 0.0
      %422 = vmatprep.subr.mxu0 0.0
      %423 = vmatpush2.msra.mxu0 0.0
      %424 = vmatprep.subr.mxu0 0.0
      %425 = vmatpush2.msra.mxu0 0.0
      %426 = vmatprep.subr.mxu0 0.0
      %427 = vmatpush2.msra.mxu0 0.0
      %428 = vmatprep.subr.mxu0 0.0
      %429 = vmatpush2.msra.mxu0 0.0
      %430 = vmatprep.subr.mxu0 0.0
      %431 = vmatpush2.msra.mxu0 0.0
      %432 = vmatprep.subr.mxu0 0.0
      %433 = vmatpush2.msra.mxu0 0.0
      %434 = vmatprep.subr.mxu0 0.0
      %435 = vmatpush2.msra.mxu0 0.0
      %436 = vmatprep.subr.mxu0 0.0
      %437 = vmatpush2.msra.mxu0 0.0
      %438 = vmatprep.subr.mxu0 0.0
      %439 = vmatpush2.msra.mxu0 0.0
      %440 = vmatprep.subr.mxu0 0.0
      %441 = vmatpush2.msra.mxu0 0.0
      %442 = vmatprep.subr.mxu0 0.0
      %443 = vmatpush2.msra.mxu0 0.0
      %444 = vmatprep.mubr.f32.mxu0 0.0
      %445 = vmatmul.mubr.f32.gmra.mxu0 %v375
      %v446 = vpop.f32.mrf.mxu0
      %v447 = vadd.f32 %v371, %v446
      %v448 = vpop.f32.mrf.mxu0
      %449 = vdwg.mxu0
      %s450 = scalar_lea.vmem %s3, 8
      %v451 = vld [vmem:[%s450] sm:$0xf]
      %v452 = vld [vmem:[%s282] sm:$0x3]
      %v454 = vsel %vm296, %v451, 0
      %v457 = vsel %vm300, %v452, 0
      %459 = vmatprep.subr.mxu0 0.0
      %460 = vmatpush1.msra.mxu0 0.0
      %461 = vmatprep.subr.mxu0 0.0
      %462 = vmatpush1.msra.mxu0 0.0
      %463 = vmatprep.subr.mxu0 0.0
      %464 = vmatpush1.msra.mxu0 0.0
      %465 = vmatprep.subr.mxu0 0.0
      %466 = vmatpush1.msra.mxu0 0.0
      %467 = vmatprep.subr.mxu0 0.0
      %468 = vmatpush1.msra.mxu0 0.0
      %469 = vmatprep.subr.mxu0 0.0
      %470 = vmatpush1.msra.mxu0 0.0
      %471 = vmatprep.subr.mxu0 0.0
      %472 = vmatpush1.msra.mxu0 0.0
      %473 = vmatprep.subr.mxu0 0.0
      %474 = vmatpush1.msra.mxu0 0.0
      %475 = vmatprep.subr.mxu0 0.0
      %476 = vmatpush1.msra.mxu0 0.0
      %477 = vmatprep.subr.mxu0 0.0
      %478 = vmatpush1.msra.mxu0 0.0
      %479 = vmatprep.subr.mxu0 0.0
      %480 = vmatpush1.msra.mxu0 0.0
      %481 = vmatprep.subr.mxu0 0.0
      %482 = vmatpush1.msra.mxu0 0.0
      %483 = vmatprep.subr.mxu0 0.0
      %484 = vmatpush1.msra.mxu0 0.0
      %485 = vmatprep.subr.mxu0 0.0
      %486 = vmatpush1.msra.mxu0 0.0
      %487 = vmatprep.subr.mxu0 0.0
      %488 = vmatpush1.msra.mxu0 0.0
      %489 = vmatprep.subr.mxu0 0.0
      %490 = vmatpush1.msra.mxu0 %v457
      %491 = vmatprep.subr.mxu0 0.0
      %492 = vmatpush2.msra.mxu0 0.0
      %493 = vmatprep.subr.mxu0 0.0
      %494 = vmatpush2.msra.mxu0 0.0
      %495 = vmatprep.subr.mxu0 0.0
      %496 = vmatpush2.msra.mxu0 0.0
      %497 = vmatprep.subr.mxu0 0.0
      %498 = vmatpush2.msra.mxu0 0.0
      %499 = vmatprep.subr.mxu0 0.0
      %500 = vmatpush2.msra.mxu0 0.0
      %501 = vmatprep.subr.mxu0 0.0
      %502 = vmatpush2.msra.mxu0 0.0
      %503 = vmatprep.subr.mxu0 0.0
      %504 = vmatpush2.msra.mxu0 0.0
      %505 = vmatprep.subr.mxu0 0.0
      %506 = vmatpush2.msra.mxu0 0.0
      %507 = vmatprep.subr.mxu0 0.0
      %508 = vmatpush2.msra.mxu0 0.0
      %509 = vmatprep.subr.mxu0 0.0
      %510 = vmatpush2.msra.mxu0 0.0
      %511 = vmatprep.subr.mxu0 0.0
      %512 = vmatpush2.msra.mxu0 0.0
      %513 = vmatprep.subr.mxu0 0.0
      %514 = vmatpush2.msra.mxu0 0.0
      %515 = vmatprep.subr.mxu0 0.0
      %516 = vmatpush2.msra.mxu0 0.0
      %517 = vmatprep.subr.mxu0 0.0
      %518 = vmatpush2.msra.mxu0 0.0
      %519 = vmatprep.subr.mxu0 0.0
      %520 = vmatpush2.msra.mxu0 0.0
      %521 = vmatprep.subr.mxu0 0.0
      %522 = vmatpush2.msra.mxu0 0.0
      %523 = vmatprep.mubr.f32.mxu0 0.0
      %524 = vmatmul.mubr.f32.gmra.mxu0 %v454
      %v525 = vpop.f32.mrf.mxu0
      %v526 = vadd.f32 0.0, %v525
      %v527 = vpop.f32.mrf.mxu0
      %528 = vdwg.mxu0
      %v529 = vadd.f32 %v447, %v526
      %530 = vst [vmem:[%s290] sm:$0xf] %v529
      %p531 = scmp.lt.s32.totalorder %s19, 1
      %s532 = scalar_select %p531, %s19, 1
      %p533 = scmp.lt.s32.totalorder %s20, 1
      %s534 = scalar_select %p533, %s20, 1
      %s535 = smul.addr %s532, 2
      %s536 = sadd.s32 %s534, %s535
      %s537 = smul.addr %s536, 4
      %s538 = scalar_lea.vmem %s4, %s537
      // Predicated region
      $region37: #{mwsa_forward.9} parent=35 // pred_check
        %p539 = pneg %p152
      $region38: #{mwsa_forward.9} parent=35 // pred_check_branch
        %541 = sbr.rel (%p539) target = $region40
      $region39: #{mwsa_forward.9} parent=35 // pred_region
        _
      $region40: #{mwsa_forward.9} parent=35 // pred_fallthru
        _
    $region36: #{mwsa_forward.9} parent=5 // pred_fallthru
      _
    %p542 = scmp.le.s32.totalorder 2, %s10
    // Predicated region
    $region41: #{mwsa_forward.9} parent=5 // pred_check
      %p543 = pneg %p542
    $region42: #{mwsa_forward.9} parent=5 // pred_check_branch
      %545 = sbr.rel (%p543) target = $region44
    $region43: #{mwsa_forward.9} parent=5 // pred_region
      %s546 = ssub.s32 %s10, 2
      // Predicated region
      $region45: #{mwsa_forward.9} parent=43 // pred_check
        %p547 = pneg %p158
      $region46: #{mwsa_forward.9} parent=43 // pred_check_branch
        %549 = sbr.rel (%p547) target = $region48
      $region47: #{mwsa_forward.9} parent=43 // pred_region
        %p550 = scmp.lt.s32.totalorder %s21, 1
        %s551 = scalar_select %p550, %s21, 1
        %p552 = scmp.lt.s32.totalorder %s22, 1
        %s553 = scalar_select %p552, %s22, 1
        %s554 = smul.addr %s551, 2
        %s555 = sadd.s32 %s553, %s554
        %s556 = smul.addr %s555, 4
        %s557 = scalar_lea.vmem %s4, %s556
      $region48: #{mwsa_forward.9} parent=43 // pred_fallthru
        _
    $region44: #{mwsa_forward.9} parent=5 // pred_fallthru
      _
  $region6: #{mwsa_forward.9} parent=0 // loop_footer
    %s14 = sadd.s32 1, %s10
  $region7: #{mwsa_forward.9} parent=0 // loop_footer_branch
    %9 = sbr.rel target = $region3
  $region8: #{mwsa_forward.9} parent=0 // loop_exit
    _

// kernel: mwsa_forward.6
$region0: #{mwsa_forward.6}
  #allocation0 [shape = 'u32[]', space=smem, size = 0x4, offset = 0x4, fixed_abs, tag = 'smem constant byte address 0x4 - core index']
  #allocation1 [shape = 'u32[144,128]{1,0:T(1,128)}', space=vmem, size = 0x12000, scoped, tag = 'internal scratch']
  %s0 = inlined_call_operand.vmem [shape: f32[32,16,2], index: 0, kind: input, shape index: {}]
  %s1 = inlined_call_operand.vmem [shape: f32[32,2,16], index: 1, kind: input, shape index: {}]
  %s2 = inlined_call_operand.vmem [shape: f32[32,2,16], index: 2, kind: output, shape index: {}]
  %s3 = sld [smem:[#allocation0]]
  $region41: #{mwsa_forward.6} parent=0
    _
  %s5 = ssub.s32 1, %s3
  %s6 = scalar_select 0, %s5, %s3
  loop: start=0, step=1, limit=4
  $region2: #{mwsa_forward.6} parent=0 // loop_pre_header
    _
  $region3: #{mwsa_forward.6} parent=0 // loop_header
    %s8 = sphi 0, %s12
    %p9 = scmp.ge.s32.totalorder %s8, 4
    %s18 = sphi 0, %s20
    %s21 = sphi 0, %s18
    %s22 = sphi 0, %s21
    %s38 = sphi 0, %s22
    %s44 = sphi 0, %s46
    %s47 = sphi 0, %s44
    %s48 = sphi 0, %s47
    %s64 = sphi 0, %s48
    %s70 = sphi 0, %s72
    %s73 = sphi 0, %s70
    %s74 = sphi 0, %s73
    %s90 = sphi 0, %s74
  $region4: #{mwsa_forward.6} parent=0 // loop_header_branch
    %11 = sbr.rel (%p9) target = $region8
  $region5: #{mwsa_forward.6} parent=0 // loop_body
    %s13 = ssub.s32 %s8, 1
    %s14 = ssub.s32 %s8, 2
    %s15 = sadd.s32 %s8, 1
    %s16 = ssub.s32 %s8, %s15
    %p17 = scmp.eq.s32.totalorder %s16, 0
    %s19 = sadd.s32 %s18, 1
    %s20 = scalar_select %p17, %s18, %s19
    %p23 = pneg %p17
    %p24 = scmp.eq.s32.totalorder %s8, 1
    %p25 = por %p23, %p24
    %p26 = scmp.ne.s32.totalorder %s18, %s21
    %p27 = scmp.eq.s32.totalorder %s8, 0
    %p28 = por %p26, %p27
    %p29 = scmp.ne.s32.totalorder %s18, %s21
    %p30 = scmp.eq.s32.totalorder %s13, 1
    %p31 = por %p29, %p30
    %p32 = scmp.ne.s32.totalorder %s21, %s22
    %p33 = scmp.eq.s32.totalorder %s13, 0
    %p34 = por %p32, %p33
    %p35 = scmp.ne.s32.totalorder %s21, %s22
    %p36 = scmp.eq.s32.totalorder %s14, 1
    %p37 = por %p35, %p36
    %p39 = scmp.ne.s32.totalorder %s22, %s38
    %p40 = scmp.eq.s32.totalorder %s14, 0
    %p41 = por %p39, %p40
    %s42 = ssub.s32 %s8, %s15
    %p43 = scmp.eq.s32.totalorder %s42, 0
    %s45 = sadd.s32 %s44, 1
    %s46 = scalar_select %p43, %s44, %s45
    %p49 = pneg %p43
    %p50 = scmp.eq.s32.totalorder %s8, 1
    %p51 = por %p49, %p50
    %p52 = scmp.ne.s32.totalorder %s44, %s47
    %p53 = scmp.eq.s32.totalorder %s8, 0
    %p54 = por %p52, %p53
    %p55 = scmp.ne.s32.totalorder %s44, %s47
    %p56 = scmp.eq.s32.totalorder %s13, 1
    %p57 = por %p55, %p56
    %p58 = scmp.ne.s32.totalorder %s47, %s48
    %p59 = scmp.eq.s32.totalorder %s13, 0
    %p60 = por %p58, %p59
    %p61 = scmp.ne.s32.totalorder %s47, %s48
    %p62 = scmp.eq.s32.totalorder %s14, 1
    %p63 = por %p61, %p62
    %p65 = scmp.ne.s32.totalorder %s48, %s64
    %p66 = scmp.eq.s32.totalorder %s14, 0
    %p67 = por %p65, %p66
    %s68 = ssub.s32 %s8, %s15
    %p69 = scmp.eq.s32.totalorder %s68, 0
    %s71 = sadd.s32 %s70, 1
    %s72 = scalar_select %p69, %s70, %s71
    %p75 = pneg %p69
    %p76 = scmp.eq.s32.totalorder %s8, 1
    %p77 = por %p75, %p76
    %p78 = scmp.ne.s32.totalorder %s70, %s73
    %p79 = scmp.eq.s32.totalorder %s8, 0
    %p80 = por %p78, %p79
    %p81 = scmp.ne.s32.totalorder %s70, %s73
    %p82 = scmp.eq.s32.totalorder %s13, 1
    %p83 = por %p81, %p82
    %p84 = scmp.ne.s32.totalorder %s73, %s74
    %p85 = scmp.eq.s32.totalorder %s13, 0
    %p86 = por %p84, %p85
    %p87 = scmp.ne.s32.totalorder %s73, %s74
    %p88 = scmp.eq.s32.totalorder %s14, 1
    %p89 = por %p87, %p88
    %p91 = scmp.ne.s32.totalorder %s74, %s90
    %p92 = scmp.eq.s32.totalorder %s14, 0
    %p93 = por %p91, %p92
    %p94 = scmp.le.s32.totalorder 1, %s8
    %p95 = scmp.lt.s32.totalorder %s8, 3
    %p96 = pnand %p94, %p95
    %p97 = pneg %p96
    // Predicated region
    $region9: #{mwsa_forward.6} parent=5 // pred_check
      _
    $region10: #{mwsa_forward.6} parent=5 // pred_check_branch
      %99 = sbr.rel (%p96) target = $region12
    $region11: #{mwsa_forward.6} parent=5 // pred_region
      %s100 = ssub.s32 %s8, 1
    $region12: #{mwsa_forward.6} parent=5 // pred_fallthru
      _
    %p101 = scmp.lt.s32.totalorder %s8, 2
    // Predicated region
    $region13: #{mwsa_forward.6} parent=5 // pred_check
      %p102 = pneg %p101
    $region14: #{mwsa_forward.6} parent=5 // pred_check_branch
      %104 = sbr.rel (%p102) target = $region16
    $region15: #{mwsa_forward.6} parent=5 // pred_region
      // Predicated region
      $region17: #{mwsa_forward.6} parent=15 // pred_check
        %p105 = pneg %p28
      $region18: #{mwsa_forward.6} parent=15 // pred_check_branch
        %107 = sbr.rel (%p105) target = $region20
      $region19: #{mwsa_forward.6} parent=15 // pred_region
        %s108 = smul.u32 16, %s8
        %p109 = scmp.lt.s32.totalorder %s108, 31
        %s110 = scalar_select %p109, %s108, 31
        %s111 = smul.addr %s110, 2
        %s112 = smul.addr %s111, 8
        %s113 = scalar_lea.vmem %s0, %s112
        %s114 = smul.u32 16, %s8
      $region20: #{mwsa_forward.6} parent=15 // pred_fallthru
        _
      // Predicated region
      $region21: #{mwsa_forward.6} parent=15 // pred_check
        %p115 = pneg %p54
      $region22: #{mwsa_forward.6} parent=15 // pred_check_branch
        %117 = sbr.rel (%p115) target = $region24
      $region23: #{mwsa_forward.6} parent=15 // pred_region
        %s118 = smul.u32 16, %s8
        %p119 = scmp.lt.s32.totalorder %s118, 31
        %s120 = scalar_select %p119, %s118, 31
        %s121 = smul.addr %s120, 2
        %s122 = scalar_lea.vmem %s1, %s121
        %s123 = smul.u32 16, %s8
      $region24: #{mwsa_forward.6} parent=15 // pred_fallthru
        _
    $region16: #{mwsa_forward.6} parent=5 // pred_fallthru
      _
    %p124 = scmp.le.s32.totalorder 1, %s8
    %p125 = scmp.lt.s32.totalorder %s8, 3
    %p126 = pnand %p124, %p125
    %p127 = pneg %p126
    // Predicated region
    $region25: #{mwsa_forward.6} parent=5 // pred_check
      _
    $region26: #{mwsa_forward.6} parent=5 // pred_check_branch
      %129 = sbr.rel (%p126) target = $region28
    $region27: #{mwsa_forward.6} parent=5 // pred_region
      %s130 = ssub.s32 %s8, 1
      %s131 = smul.u32 16, %s13
      %p132 = scmp.lt.s32.totalorder %s131, 31
      %s133 = scalar_select %p132, %s131, 31
      %s134 = smul.addr %s133, 2
      %s135 = smul.addr %s134, 8
      %s136 = scalar_lea.vmem %s0, %s135
      %p137 = pneg %p34
      %p138 = pneg %p31
      %s139 = smul.u32 16, %s13
      %p140 = scmp.lt.s32.totalorder %s139, 31
      %s141 = scalar_select %p140, %s139, 31
      %s142 = smul.addr %s141, 2
      %s143 = scalar_lea.vmem %s1, %s142
      %p144 = pneg %p60
      %p145 = pneg %p57
      %p146 = pneg %p86
      %p147 = pneg %p83
      %s148 = smul.u32 16, %s13
      %p149 = scmp.lt.s32.totalorder %s148, 31
      %s150 = scalar_select %p149, %s148, 31
      %s151 = smul.addr %s150, 2
      %s152 = scalar_lea.vmem %s2, %s151
      %s153 = smul.u32 16, %s13
      %p154 = scmp.lt.s32.totalorder %s153, 31
      %s155 = scalar_select %p154, %s153, 31
      %s156 = smul.addr %s155, 2
      %s157 = smul.addr %s156, 8
      %s158 = scalar_lea.vmem %s0, %s157
      %s159 = smul.u32 16, %s13
      %s160 = smul.u32 16, %s13
      %p161 = scmp.lt.s32.totalorder %s160, 31
      %s162 = scalar_select %p161, %s160, 31
      %s163 = smul.addr %s162, 2
      %s164 = scalar_lea.vmem %s1, %s163
      %s165 = smul.u32 16, %s13
      %s166 = smul.u32 16, %s13
      %p167 = scmp.lt.s32.totalorder %s166, 31
      %s168 = scalar_select %p167, %s166, 31
      %s169 = smul.addr %s168, 2
      %s170 = scalar_lea.vmem %s2, %s169
      %s171 = smul.u32 16, %s13
      %v172 = vld [vmem:[%s158] sm:$0xff]
      %v173 = vld [vmem:[%s158 + $0x8] sm:$0xff]
      %v174 = vld [vmem:[%s158 + $0x10] sm:$0xff]
      %v175 = vld [vmem:[%s158 + $0x18] sm:$0xff]
      %v176 = vld [vmem:[%s158 + $0x20] sm:$0xff]
      %v177 = vld [vmem:[%s158 + $0x28] sm:$0xff]
      %v178 = vld [vmem:[%s158 + $0x30] sm:$0xff]
      %v179 = vld [vmem:[%s158 + $0x38] sm:$0xff]
      %v180 = vld [vmem:[%s158 + $0x40] sm:$0xff]
      %v181 = vld [vmem:[%s158 + $0x48] sm:$0xff]
      %v182 = vld [vmem:[%s158 + $0x50] sm:$0xff]
      %v183 = vld [vmem:[%s158 + $0x58] sm:$0xff]
      %v184 = vld [vmem:[%s158 + $0x60] sm:$0xff]
      %v185 = vld [vmem:[%s158 + $0x68] sm:$0xff]
      %v186 = vld [vmem:[%s158 + $0x70] sm:$0xff]
      %v187 = vld [vmem:[%s158 + $0x78] sm:$0xff]
      %v188 = vld [vmem:[%s158 + $0x80] sm:$0xff]
      %v189 = vld [vmem:[%s158 + $0x88] sm:$0xff]
      %v190 = vld [vmem:[%s158 + $0x90] sm:$0xff]
      %v191 = vld [vmem:[%s158 + $0x98] sm:$0xff]
      %v192 = vld [vmem:[%s158 + $0xa0] sm:$0xff]
      %v193 = vld [vmem:[%s158 + $0xa8] sm:$0xff]
      %v194 = vld [vmem:[%s158 + $0xb0] sm:$0xff]
      %v195 = vld [vmem:[%s158 + $0xb8] sm:$0xff]
      %v196 = vld [vmem:[%s158 + $0xc0] sm:$0xff]
      %v197 = vld [vmem:[%s158 + $0xc8] sm:$0xff]
      %v198 = vld [vmem:[%s158 + $0xd0] sm:$0xff]
      %v199 = vld [vmem:[%s158 + $0xd8] sm:$0xff]
      %v200 = vld [vmem:[%s158 + $0xe0] sm:$0xff]
      %v201 = vld [vmem:[%s158 + $0xe8] sm:$0xff]
      %v202 = vld [vmem:[%s158 + $0xf0] sm:$0xff]
      %v203 = vld [vmem:[%s158 + $0xf8] sm:$0xff]
      %v204 = vld [vmem:[%s164] sm:$0x3]
      %v205 = vld [vmem:[%s164 + $0x2] sm:$0x3]
      %v206 = vld [vmem:[%s164 + $0x4] sm:$0x3]
      %v207 = vld [vmem:[%s164 + $0x6] sm:$0x3]
      %v208 = vld [vmem:[%s164 + $0x8] sm:$0x3]
      %v209 = vld [vmem:[%s164 + $0xa] sm:$0x3]
      %v210 = vld [vmem:[%s164 + $0xc] sm:$0x3]
      %v211 = vld [vmem:[%s164 + $0xe] sm:$0x3]
      %v212 = vld [vmem:[%s164 + $0x10] sm:$0x3]
      %v213 = vld [vmem:[%s164 + $0x12] sm:$0x3]
      %v214 = vld [vmem:[%s164 + $0x14] sm:$0x3]
      %v215 = vld [vmem:[%s164 + $0x16] sm:$0x3]
      %v216 = vld [vmem:[%s164 + $0x18] sm:$0x3]
      %v217 = vld [vmem:[%s164 + $0x1a] sm:$0x3]
      %v218 = vld [vmem:[%s164 + $0x1c] sm:$0x3]
      %v219 = vld [vmem:[%s164 + $0x1e] sm:$0x3]
      %vm220 = vcmask 15360
      %v222 = vsel %vm220, %v172, 0
      %v225 = vsel %vm220, %v173, 0
      %227 = vmatprep.subr.mxu0 0.0
      %228 = vmatpush1.xpose.msra.mxu0 0.0
      %229 = vmatprep.subr.mxu0 0.0
      %230 = vmatpush1.xpose.msra.mxu0 0.0
      %231 = vmatprep.subr.mxu0 0.0
      %232 = vmatpush1.xpose.msra.mxu0 0.0
      %233 = vmatprep.subr.mxu0 0.0
      %234 = vmatpush1.xpose.msra.mxu0 0.0
      %235 = vmatprep.subr.mxu0 0.0
      %236 = vmatpush1.xpose.msra.mxu0 0.0
      %237 = vmatprep.subr.mxu0 0.0
      %238 = vmatpush1.xpose.msra.mxu0 0.0
      %239 = vmatprep.subr.mxu0 0.0
      %240 = vmatpush1.xpose.msra.mxu0 0.0
      %241 = vmatprep.subr.mxu0 0.0
      %242 = vmatpush1.xpose.msra.mxu0 0.0
      %243 = vmatprep.subr.mxu0 0.0
      %244 = vmatpush1.xpose.msra.mxu0 0.0
      %245 = vmatprep.subr.mxu0 0.0
      %246 = vmatpush1.xpose.msra.mxu0 0.0
      %247 = vmatprep.subr.mxu0 0.0
      %248 = vmatpush1.xpose.msra.mxu0 0.0
      %249 = vmatprep.subr.mxu0 0.0
      %250 = vmatpush1.xpose.msra.mxu0 0.0
      %251 = vmatprep.subr.mxu0 0.0
      %252 = vmatpush1.xpose.msra.mxu0 0.0
      %253 = vmatprep.subr.mxu0 0.0
      %254 = vmatpush1.xpose.msra.mxu0 0.0
      %255 = vmatprep.subr.mxu0 0.0
      %256 = vmatpush1.xpose.msra.mxu0 %v225
      %257 = vmatprep.subr.mxu0 0.0
      %258 = vmatpush1.xpose.msra.mxu0 %v222
      %259 = vmatprep.subr.mxu0 0.0
      %260 = vmatpush2.xpose.msra.mxu0 0.0
      %261 = vmatprep.subr.mxu0 0.0
      %262 = vmatpush2.xpose.msra.mxu0 0.0
      %263 = vmatprep.subr.mxu0 0.0
      %264 = vmatpush2.xpose.msra.mxu0 0.0
      %265 = vmatprep.subr.mxu0 0.0
      %266 = vmatpush2.xpose.msra.mxu0 0.0
      %267 = vmatprep.subr.mxu0 0.0
      %268 = vmatpush2.xpose.msra.mxu0 0.0
      %269 = vmatprep.subr.mxu0 0.0
      %270 = vmatpush2.xpose.msra.mxu0 0.0
      %271 = vmatprep.subr.mxu0 0.0
      %272 = vmatpush2.xpose.msra.mxu0 0.0
      %273 = vmatprep.subr.mxu0 0.0
      %274 = vmatpush2.xpose.msra.mxu0 0.0
      %275 = vmatprep.subr.mxu0 0.0
      %276 = vmatpush2.xpose.msra.mxu0 0.0
      %277 = vmatprep.subr.mxu0 0.0
      %278 = vmatpush2.xpose.msra.mxu0 0.0
      %279 = vmatprep.subr.mxu0 0.0
      %280 = vmatpush2.xpose.msra.mxu0 0.0
      %281 = vmatprep.subr.mxu0 0.0
      %282 = vmatpush2.xpose.msra.mxu0 0.0
      %283 = vmatprep.subr.mxu0 0.0
      %284 = vmatpush2.xpose.msra.mxu0 0.0
      %285 = vmatprep.subr.mxu0 0.0
      %286 = vmatpush2.xpose.msra.mxu0 0.0
      %287 = vmatprep.subr.mxu0 0.0
      %288 = vmatpush2.xpose.msra.mxu0 0.0
      %289 = vmatprep.subr.mxu0 0.0
      %290 = vmatpush2.xpose.msra.mxu0 0.0
      %291 = vmatprep.mubr.f32.mxu0 0.0
      %292 = vmatmul.mubr.f32.gmra.mxu0 %v222
      %v293 = vpop.f32.mrf.mxu0
      %v294 = vadd.f32 0.0, %v293
      %v295 = vpop.f32.mrf.mxu0
      %296 = vmatprep.mubr.f32.mxu0 0.0
      %297 = vmatmul.mubr.f32.gmra.mxu0 %v225
      %v298 = vpop.f32.mrf.mxu0
      %v299 = vadd.f32 0.0, %v298
      %v300 = vpop.f32.mrf.mxu0
      %301 = vdwg.mxu0
      %v303 = vsel %vm220, %v174, 0
      %v306 = vsel %vm220, %v175, 0
      %308 = vmatprep.subr.mxu0 0.0
      %309 = vmatpush1.xpose.msra.mxu0 0.0
      %310 = vmatprep.subr.mxu0 0.0
      %311 = vmatpush1.xpose.msra.mxu0 0.0
      %312 = vmatprep.subr.mxu0 0.0
      %313 = vmatpush1.xpose.msra.mxu0 0.0
      %314 = vmatprep.subr.mxu0 0.0
      %315 = vmatpush1.xpose.msra.mxu0 0.0
      %316 = vmatprep.subr.mxu0 0.0
      %317 = vmatpush1.xpose.msra.mxu0 0.0
      %318 = vmatprep.subr.mxu0 0.0
      %319 = vmatpush1.xpose.msra.mxu0 0.0
      %320 = vmatprep.subr.mxu0 0.0
      %321 = vmatpush1.xpose.msra.mxu0 0.0
      %322 = vmatprep.subr.mxu0 0.0
      %323 = vmatpush1.xpose.msra.mxu0 0.0
      %324 = vmatprep.subr.mxu0 0.0
      %325 = vmatpush1.xpose.msra.mxu0 0.0
      %326 = vmatprep.subr.mxu0 0.0
      %327 = vmatpush1.xpose.msra.mxu0 0.0
      %328 = vmatprep.subr.mxu0 0.0
      %329 = vmatpush1.xpose.msra.mxu0 0.0
      %330 = vmatprep.subr.mxu0 0.0
      %331 = vmatpush1.xpose.msra.mxu0 0.0
      %332 = vmatprep.subr.mxu0 0.0
      %333 = vmatpush1.xpose.msra.mxu0 0.0
      %334 = vmatprep.subr.mxu0 0.0
      %335 = vmatpush1.xpose.msra.mxu0 0.0
      %336 = vmatprep.subr.mxu0 0.0
      %337 = vmatpush1.xpose.msra.mxu0 %v306
      %338 = vmatprep.subr.mxu0 0.0
      %339 = vmatpush1.xpose.msra.mxu0 %v303
      %340 = vmatprep.subr.mxu0 0.0
      %341 = vmatpush2.xpose.msra.mxu0 0.0
      %342 = vmatprep.subr.mxu0 0.0
      %343 = vmatpush2.xpose.msra.mxu0 0.0
      %344 = vmatprep.subr.mxu0 0.0
      %345 = vmatpush2.xpose.msra.mxu0 0.0
      %346 = vmatprep.subr.mxu0 0.0
      %347 = vmatpush2.xpose.msra.mxu0 0.0
      %348 = vmatprep.subr.mxu0 0.0
      %349 = vmatpush2.xpose.msra.mxu0 0.0
      %350 = vmatprep.subr.mxu0 0.0
      %351 = vmatpush2.xpose.msra.mxu0 0.0
      %352 = vmatprep.subr.mxu0 0.0
      %353 = vmatpush2.xpose.msra.mxu0 0.0
      %354 = vmatprep.subr.mxu0 0.0
      %355 = vmatpush2.xpose.msra.mxu0 0.0
      %356 = vmatprep.subr.mxu0 0.0
      %357 = vmatpush2.xpose.msra.mxu0 0.0
      %358 = vmatprep.subr.mxu0 0.0
      %359 = vmatpush2.xpose.msra.mxu0 0.0
      %360 = vmatprep.subr.mxu0 0.0
      %361 = vmatpush2.xpose.msra.mxu0 0.0
      %362 = vmatprep.subr.mxu0 0.0
      %363 = vmatpush2.xpose.msra.mxu0 0.0
      %364 = vmatprep.subr.mxu0 0.0
      %365 = vmatpush2.xpose.msra.mxu0 0.0
      %366 = vmatprep.subr.mxu0 0.0
      %367 = vmatpush2.xpose.msra.mxu0 0.0
      %368 = vmatprep.subr.mxu0 0.0
      %369 = vmatpush2.xpose.msra.mxu0 0.0
      %370 = vmatprep.subr.mxu0 0.0
      %371 = vmatpush2.xpose.msra.mxu0 0.0
      %372 = vmatprep.mubr.f32.mxu0 0.0
      %373 = vmatmul.mubr.f32.gmra.mxu0 %v303
      %v374 = vpop.f32.mrf.mxu0
      %v375 = vadd.f32 0.0, %v374
      %v376 = vpop.f32.mrf.mxu0
      %377 = vmatprep.mubr.f32.mxu0 0.0
      %378 = vmatmul.mubr.f32.gmra.mxu0 %v306
      %v379 = vpop.f32.mrf.mxu0
      %v380 = vadd.f32 0.0, %v379
      %v381 = vpop.f32.mrf.mxu0
      %382 = vdwg.mxu0
      %v384 = vsel %vm220, %v176, 0
      %v387 = vsel %vm220, %v177, 0
      %389 = vmatprep.subr.mxu0 0.0
      %390 = vmatpush1.xpose.msra.mxu0 0.0
      %391 = vmatprep.subr.mxu0 0.0
      %392 = vmatpush1.xpose.msra.mxu0 0.0
      %393 = vmatprep.subr.mxu0 0.0
      %394 = vmatpush1.xpose.msra.mxu0 0.0
      %395 = vmatprep.subr.mxu0 0.0
      %396 = vmatpush1.xpose.msra.mxu0 0.0
      %397 = vmatprep.subr.mxu0 0.0
      %398 = vmatpush1.xpose.msra.mxu0 0.0
      %399 = vmatprep.subr.mxu0 0.0
      %400 = vmatpush1.xpose.msra.mxu0 0.0
      %401 = vmatprep.subr.mxu0 0.0
      %402 = vmatpush1.xpose.msra.mxu0 0.0
      %403 = vmatprep.subr.mxu0 0.0
      %404 = vmatpush1.xpose.msra.mxu0 0.0
      %405 = vmatprep.subr.mxu0 0.0
      %406 = vmatpush1.xpose.msra.mxu0 0.0
      %407 = vmatprep.subr.mxu0 0.0
      %408 = vmatpush1.xpose.msra.mxu0 0.0
      %409 = vmatprep.subr.mxu0 0.0
      %410 = vmatpush1.xpose.msra.mxu0 0.0
      %411 = vmatprep.subr.mxu0 0.0
      %412 = vmatpush1.xpose.msra.mxu0 0.0
      %413 = vmatprep.subr.mxu0 0.0
      %414 = vmatpush1.xpose.msra.mxu0 0.0
      %415 = vmatprep.subr.mxu0 0.0
      %416 = vmatpush1.xpose.msra.mxu0 0.0
      %417 = vmatprep.subr.mxu0 0.0
      %418 = vmatpush1.xpose.msra.mxu0 %v387
      %419 = vmatprep.subr.mxu0 0.0
      %420 = vmatpush1.xpose.msra.mxu0 %v384
      %421 = vmatprep.subr.mxu0 0.0
      %422 = vmatpush2.xpose.msra.mxu0 0.0
      %423 = vmatprep.subr.mxu0 0.0
      %424 = vmatpush2.xpose.msra.mxu0 0.0
      %425 = vmatprep.subr.mxu0 0.0
      %426 = vmatpush2.xpose.msra.mxu0 0.0
      %427 = vmatprep.subr.mxu0 0.0
      %428 = vmatpush2.xpose.msra.mxu0 0.0
      %429 = vmatprep.subr.mxu0 0.0
      %430 = vmatpush2.xpose.msra.mxu0 0.0
      %431 = vmatprep.subr.mxu0 0.0
      %432 = vmatpush2.xpose.msra.mxu0 0.0
      %433 = vmatprep.subr.mxu0 0.0
      %434 = vmatpush2.xpose.msra.mxu0 0.0
      %435 = vmatprep.subr.mxu0 0.0
      %436 = vmatpush2.xpose.msra.mxu0 0.0
      %437 = vmatprep.subr.mxu0 0.0
      %438 = vmatpush2.xpose.msra.mxu0 0.0
      %439 = vmatprep.subr.mxu0 0.0
      %440 = vmatpush2.xpose.msra.mxu0 0.0
      %441 = vmatprep.subr.mxu0 0.0
      %442 = vmatpush2.xpose.msra.mxu0 0.0
      %443 = vmatprep.subr.mxu0 0.0
      %444 = vmatpush2.xpose.msra.mxu0 0.0
      %445 = vmatprep.subr.mxu0 0.0
      %446 = vmatpush2.xpose.msra.mxu0 0.0
      %447 = vmatprep.subr.mxu0 0.0
      %448 = vmatpush2.xpose.msra.mxu0 0.0
      %449 = vmatprep.subr.mxu0 0.0
      %450 = vmatpush2.xpose.msra.mxu0 0.0
      %451 = vmatprep.subr.mxu0 0.0
      %452 = vmatpush2.xpose.msra.mxu0 0.0
      %453 = vmatprep.mubr.f32.mxu0 0.0
      %454 = vmatmul.mubr.f32.gmra.mxu0 %v384
      %v455 = vpop.f32.mrf.mxu0
      %v456 = vadd.f32 0.0, %v455
      %v457 = vpop.f32.mrf.mxu0
      %458 = vmatprep.mubr.f32.mxu0 0.0
      %459 = vmatmul.mubr.f32.gmra.mxu0 %v387
      %v460 = vpop.f32.mrf.mxu0
      %v461 = vadd.f32 0.0, %v460
      %v462 = vpop.f32.mrf.mxu0
      %463 = vdwg.mxu0
      %v465 = vsel %vm220, %v178, 0
      %v468 = vsel %vm220, %v179, 0
      %470 = vmatprep.subr.mxu0 0.0
      %471 = vmatpush1.xpose.msra.mxu0 0.0
      %472 = vmatprep.subr.mxu0 0.0
      %473 = vmatpush1.xpose.msra.mxu0 0.0
      %474 = vmatprep.subr.mxu0 0.0
      %475 = vmatpush1.xpose.msra.mxu0 0.0
      %476 = vmatprep.subr.mxu0 0.0
      %477 = vmatpush1.xpose.msra.mxu0 0.0
      %478 = vmatprep.subr.mxu0 0.0
      %479 = vmatpush1.xpose.msra.mxu0 0.0
      %480 = vmatprep.subr.mxu0 0.0
      %481 = vmatpush1.xpose.msra.mxu0 0.0
      %482 = vmatprep.subr.mxu0 0.0
      %483 = vmatpush1.xpose.msra.mxu0 0.0
      %484 = vmatprep.subr.mxu0 0.0
      %485 = vmatpush1.xpose.msra.mxu0 0.0
      %486 = vmatprep.subr.mxu0 0.0
      %487 = vmatpush1.xpose.msra.mxu0 0.0
      %488 = vmatprep.subr.mxu0 0.0
      %489 = vmatpush1.xpose.msra.mxu0 0.0
      %490 = vmatprep.subr.mxu0 0.0
      %491 = vmatpush1.xpose.msra.mxu0 0.0
      %492 = vmatprep.subr.mxu0 0.0
      %493 = vmatpush1.xpose.msra.mxu0 0.0
      %494 = vmatprep.subr.mxu0 0.0
      %495 = vmatpush1.xpose.msra.mxu0 0.0
      %496 = vmatprep.subr.mxu0 0.0
      %497 = vmatpush1.xpose.msra.mxu0 0.0
      %498 = vmatprep.subr.mxu0 0.0
      %499 = vmatpush1.xpose.msra.mxu0 %v468
      %500 = vmatprep.subr.mxu0 0.0
      %501 = vmatpush1.xpose.msra.mxu0 %v465
      %502 = vmatprep.subr.mxu0 0.0
      %503 = vmatpush2.xpose.msra.mxu0 0.0
      %504 = vmatprep.subr.mxu0 0.0
      %505 = vmatpush2.xpose.msra.mxu0 0.0
      %506 = vmatprep.subr.mxu0 0.0
      %507 = vmatpush2.xpose.msra.mxu0 0.0
      %508 = vmatprep.subr.mxu0 0.0
      %509 = vmatpush2.xpose.msra.mxu0 0.0
      %510 = vmatprep.subr.mxu0 0.0
      %511 = vmatpush2.xpose.msra.mxu0 0.0
      %512 = vmatprep.subr.mxu0 0.0
      %513 = vmatpush2.xpose.msra.mxu0 0.0
      %514 = vmatprep.subr.mxu0 0.0
      %515 = vmatpush2.xpose.msra.mxu0 0.0
      %516 = vmatprep.subr.mxu0 0.0
      %517 = vmatpush2.xpose.msra.mxu0 0.0
      %518 = vmatprep.subr.mxu0 0.0
      %519 = vmatpush2.xpose.msra.mxu0 0.0
      %520 = vmatprep.subr.mxu0 0.0
      %521 = vmatpush2.xpose.msra.mxu0 0.0
      %522 = vmatprep.subr.mxu0 0.0
      %523 = vmatpush2.xpose.msra.mxu0 0.0
      %524 = vmatprep.subr.mxu0 0.0
      %525 = vmatpush2.xpose.msra.mxu0 0.0
      %526 = vmatprep.subr.mxu0 0.0
      %527 = vmatpush2.xpose.msra.mxu0 0.0
      %528 = vmatprep.subr.mxu0 0.0
      %529 = vmatpush2.xpose.msra.mxu0 0.0
      %530 = vmatprep.subr.mxu0 0.0
      %531 = vmatpush2.xpose.msra.mxu0 0.0
      %532 = vmatprep.subr.mxu0 0.0
      %533 = vmatpush2.xpose.msra.mxu0 0.0
      %534 = vmatprep.mubr.f32.mxu0 0.0
      %535 = vmatmul.mubr.f32.gmra.mxu0 %v465
      %v536 = vpop.f32.mrf.mxu0
      %v537 = vadd.f32 0.0, %v536
      %v538 = vpop.f32.mrf.mxu0
      %539 = vmatprep.mubr.f32.mxu0 0.0
      %540 = vmatmul.mubr.f32.gmra.mxu0 %v468
      %v541 = vpop.f32.mrf.mxu0
      %v542 = vadd.f32 0.0, %v541
      %v543 = vpop.f32.mrf.mxu0
      %544 = vdwg.mxu0
      %v546 = vsel %vm220, %v180, 0
      %v549 = vsel %vm220, %v181, 0
      %551 = vmatprep.subr.mxu0 0.0
      %552 = vmatpush1.xpose.msra.mxu0 0.0
      %553 = vmatprep.subr.mxu0 0.0
      %554 = vmatpush1.xpose.msra.mxu0 0.0
      %555 = vmatprep.subr.mxu0 0.0
      %556 = vmatpush1.xpose.msra.mxu0 0.0
      %557 = vmatprep.subr.mxu0 0.0
      %558 = vmatpush1.xpose.msra.mxu0 0.0
      %559 = vmatprep.subr.mxu0 0.0
      %560 = vmatpush1.xpose.msra.mxu0 0.0
      %561 = vmatprep.subr.mxu0 0.0
      %562 = vmatpush1.xpose.msra.mxu0 0.0
      %563 = vmatprep.subr.mxu0 0.0
      %564 = vmatpush1.xpose.msra.mxu0 0.0
      %565 = vmatprep.subr.mxu0 0.0
      %566 = vmatpush1.xpose.msra.mxu0 0.0
      %567 = vmatprep.subr.mxu0 0.0
      %568 = vmatpush1.xpose.msra.mxu0 0.0
      %569 = vmatprep.subr.mxu0 0.0
      %570 = vmatpush1.xpose.msra.mxu0 0.0
      %571 = vmatprep.subr.mxu0 0.0
      %572 = vmatpush1.xpose.msra.mxu0 0.0
      %573 = vmatprep.subr.mxu0 0.0
      %574 = vmatpush1.xpose.msra.mxu0 0.0
      %575 = vmatprep.subr.mxu0 0.0
      %576 = vmatpush1.xpose.msra.mxu0 0.0
      %577 = vmatprep.subr.mxu0 0.0
      %578 = vmatpush1.xpose.msra.mxu0 0.0
      %579 = vmatprep.subr.mxu0 0.0
      %580 = vmatpush1.xpose.msra.mxu0 %v549
      %581 = vmatprep.subr.mxu0 0.0
      %582 = vmatpush1.xpose.msra.mxu0 %v546
      %583 = vmatprep.subr.mxu0 0.0
      %584 = vmatpush2.xpose.msra.mxu0 0.0
      %585 = vmatprep.subr.mxu0 0.0
      %586 = vmatpush2.xpose.msra.mxu0 0.0
      %587 = vmatprep.subr.mxu0 0.0
      %588 = vmatpush2.xpose.msra.mxu0 0.0
      %589 = vmatprep.subr.mxu0 0.0
      %590 = vmatpush2.xpose.msra.mxu0 0.0
      %591 = vmatprep.subr.mxu0 0.0
      %592 = vmatpush2.xpose.msra.mxu0 0.0
      %593 = vmatprep.subr.mxu0 0.0
      %594 = vmatpush2.xpose.msra.mxu0 0.0
      %595 = vmatprep.subr.mxu0 0.0
      %596 = vmatpush2.xpose.msra.mxu0 0.0
      %597 = vmatprep.subr.mxu0 0.0
      %598 = vmatpush2.xpose.msra.mxu0 0.0
      %599 = vmatprep.subr.mxu0 0.0
      %600 = vmatpush2.xpose.msra.mxu0 0.0
      %601 = vmatprep.subr.mxu0 0.0
      %602 = vmatpush2.xpose.msra.mxu0 0.0
      %603 = vmatprep.subr.mxu0 0.0
      %604 = vmatpush2.xpose.msra.mxu0 0.0
      %605 = vmatprep.subr.mxu0 0.0
      %606 = vmatpush2.xpose.msra.mxu0 0.0
      %607 = vmatprep.subr.mxu0 0.0
      %608 = vmatpush2.xpose.msra.mxu0 0.0
      %609 = vmatprep.subr.mxu0 0.0
      %610 = vmatpush2.xpose.msra.mxu0 0.0
      %611 = vmatprep.subr.mxu0 0.0
      %612 = vmatpush2.xpose.msra.mxu0 0.0
      %613 = vmatprep.subr.mxu0 0.0
      %614 = vmatpush2.xpose.msra.mxu0 0.0
      %615 = vmatprep.mubr.f32.mxu0 0.0
      %616 = vmatmul.mubr.f32.gmra.mxu0 %v546
      %v617 = vpop.f32.mrf.mxu0
      %v618 = vadd.f32 0.0, %v617
      %v619 = vpop.f32.mrf.mxu0
      %620 = vmatprep.mubr.f32.mxu0 0.0
      %621 = vmatmul.mubr.f32.gmra.mxu0 %v549
      %v622 = vpop.f32.mrf.mxu0
      %v623 = vadd.f32 0.0, %v622
      %v624 = vpop.f32.mrf.mxu0
      %625 = vdwg.mxu0
      %v627 = vsel %vm220, %v182, 0
      %v630 = vsel %vm220, %v183, 0
      %632 = vmatprep.subr.mxu0 0.0
      %633 = vmatpush1.xpose.msra.mxu0 0.0
      %634 = vmatprep.subr.mxu0 0.0
      %635 = vmatpush1.xpose.msra.mxu0 0.0
      %636 = vmatprep.subr.mxu0 0.0
      %637 = vmatpush1.xpose.msra.mxu0 0.0
      %638 = vmatprep.subr.mxu0 0.0
      %639 = vmatpush1.xpose.msra.mxu0 0.0
      %640 = vmatprep.subr.mxu0 0.0
      %641 = vmatpush1.xpose.msra.mxu0 0.0
      %642 = vmatprep.subr.mxu0 0.0
      %643 = vmatpush1.xpose.msra.mxu0 0.0
      %644 = vmatprep.subr.mxu0 0.0
      %645 = vmatpush1.xpose.msra.mxu0 0.0
      %646 = vmatprep.subr.mxu0 0.0
      %647 = vmatpush1.xpose.msra.mxu0 0.0
      %648 = vmatprep.subr.mxu0 0.0
      %649 = vmatpush1.xpose.msra.mxu0 0.0
      %650 = vmatprep.subr.mxu0 0.0
      %651 = vmatpush1.xpose.msra.mxu0 0.0
      %652 = vmatprep.subr.mxu0 0.0
      %653 = vmatpush1.xpose.msra.mxu0 0.0
      %654 = vmatprep.subr.mxu0 0.0
      %655 = vmatpush1.xpose.msra.mxu0 0.0
      %656 = vmatprep.subr.mxu0 0.0
      %657 = vmatpush1.xpose.msra.mxu0 0.0
      %658 = vmatprep.subr.mxu0 0.0
      %659 = vmatpush1.xpose.msra.mxu0 0.0
      %660 = vmatprep.subr.mxu0 0.0
      %661 = vmatpush1.xpose.msra.mxu0 %v630
      %662 = vmatprep.subr.mxu0 0.0
      %663 = vmatpush1.xpose.msra.mxu0 %v627
      %664 = vmatprep.subr.mxu0 0.0
      %665 = vmatpush2.xpose.msra.mxu0 0.0
      %666 = vmatprep.subr.mxu0 0.0
      %667 = vmatpush2.xpose.msra.mxu0 0.0
      %668 = vmatprep.subr.mxu0 0.0
      %669 = vmatpush2.xpose.msra.mxu0 0.0
      %670 = vmatprep.subr.mxu0 0.0
      %671 = vmatpush2.xpose.msra.mxu0 0.0
      %672 = vmatprep.subr.mxu0 0.0
      %673 = vmatpush2.xpose.msra.mxu0 0.0
      %674 = vmatprep.subr.mxu0 0.0
      %675 = vmatpush2.xpose.msra.mxu0 0.0
      %676 = vmatprep.subr.mxu0 0.0
      %677 = vmatpush2.xpose.msra.mxu0 0.0
      %678 = vmatprep.subr.mxu0 0.0
      %679 = vmatpush2.xpose.msra.mxu0 0.0
      %680 = vmatprep.subr.mxu0 0.0
      %681 = vmatpush2.xpose.msra.mxu0 0.0
      %682 = vmatprep.subr.mxu0 0.0
      %683 = vmatpush2.xpose.msra.mxu0 0.0
      %684 = vmatprep.subr.mxu0 0.0
      %685 = vmatpush2.xpose.msra.mxu0 0.0
      %686 = vmatprep.subr.mxu0 0.0
      %687 = vmatpush2.xpose.msra.mxu0 0.0
      %688 = vmatprep.subr.mxu0 0.0
      %689 = vmatpush2.xpose.msra.mxu0 0.0
      %690 = vmatprep.subr.mxu0 0.0
      %691 = vmatpush2.xpose.msra.mxu0 0.0
      %692 = vmatprep.subr.mxu0 0.0
      %693 = vmatpush2.xpose.msra.mxu0 0.0
      %694 = vmatprep.subr.mxu0 0.0
      %695 = vmatpush2.xpose.msra.mxu0 0.0
      %696 = vmatprep.mubr.f32.mxu0 0.0
      %697 = vmatmul.mubr.f32.gmra.mxu0 %v627
      %v698 = vpop.f32.mrf.mxu0
      %v699 = vadd.f32 0.0, %v698
      %v700 = vpop.f32.mrf.mxu0
      %701 = vmatprep.mubr.f32.mxu0 0.0
      %702 = vmatmul.mubr.f32.gmra.mxu0 %v630
      %v703 = vpop.f32.mrf.mxu0
      %v704 = vadd.f32 0.0, %v703
      %v705 = vpop.f32.mrf.mxu0
      %706 = vdwg.mxu0
      %v708 = vsel %vm220, %v184, 0
      %v711 = vsel %vm220, %v185, 0
      %713 = vmatprep.subr.mxu0 0.0
      %714 = vmatpush1.xpose.msra.mxu0 0.0
      %715 = vmatprep.subr.mxu0 0.0
      %716 = vmatpush1.xpose.msra.mxu0 0.0
      %717 = vmatprep.subr.mxu0 0.0
      %718 = vmatpush1.xpose.msra.mxu0 0.0
      %719 = vmatprep.subr.mxu0 0.0
      %720 = vmatpush1.xpose.msra.mxu0 0.0
      %721 = vmatprep.subr.mxu0 0.0
      %722 = vmatpush1.xpose.msra.mxu0 0.0
      %723 = vmatprep.subr.mxu0 0.0
      %724 = vmatpush1.xpose.msra.mxu0 0.0
      %725 = vmatprep.subr.mxu0 0.0
      %726 = vmatpush1.xpose.msra.mxu0 0.0
      %727 = vmatprep.subr.mxu0 0.0
      %728 = vmatpush1.xpose.msra.mxu0 0.0
      %729 = vmatprep.subr.mxu0 0.0
      %730 = vmatpush1.xpose.msra.mxu0 0.0
      %731 = vmatprep.subr.mxu0 0.0
      %732 = vmatpush1.xpose.msra.mxu0 0.0
      %733 = vmatprep.subr.mxu0 0.0
      %734 = vmatpush1.xpose.msra.mxu0 0.0
      %735 = vmatprep.subr.mxu0 0.0
      %736 = vmatpush1.xpose.msra.mxu0 0.0
      %737 = vmatprep.subr.mxu0 0.0
      %738 = vmatpush1.xpose.msra.mxu0 0.0
      %739 = vmatprep.subr.mxu0 0.0
      %740 = vmatpush1.xpose.msra.mxu0 0.0
      %741 = vmatprep.subr.mxu0 0.0
      %742 = vmatpush1.xpose.msra.mxu0 %v711
      %743 = vmatprep.subr.mxu0 0.0
      %744 = vmatpush1.xpose.msra.mxu0 %v708
      %745 = vmatprep.subr.mxu0 0.0
      %746 = vmatpush2.xpose.msra.mxu0 0.0
      %747 = vmatprep.subr.mxu0 0.0
      %748 = vmatpush2.xpose.msra.mxu0 0.0
      %749 = vmatprep.subr.mxu0 0.0
      %750 = vmatpush2.xpose.msra.mxu0 0.0
      %751 = vmatprep.subr.mxu0 0.0
      %752 = vmatpush2.xpose.msra.mxu0 0.0
      %753 = vmatprep.subr.mxu0 0.0
      %754 = vmatpush2.xpose.msra.mxu0 0.0
      %755 = vmatprep.subr.mxu0 0.0
      %756 = vmatpush2.xpose.msra.mxu0 0.0
      %757 = vmatprep.subr.mxu0 0.0
      %758 = vmatpush2.xpose.msra.mxu0 0.0
      %759 = vmatprep.subr.mxu0 0.0
      %760 = vmatpush2.xpose.msra.mxu0 0.0
      %761 = vmatprep.subr.mxu0 0.0
      %762 = vmatpush2.xpose.msra.mxu0 0.0
      %763 = vmatprep.subr.mxu0 0.0
      %764 = vmatpush2.xpose.msra.mxu0 0.0
      %765 = vmatprep.subr.mxu0 0.0
      %766 = vmatpush2.xpose.msra.mxu0 0.0
      %767 = vmatprep.subr.mxu0 0.0
      %768 = vmatpush2.xpose.msra.mxu0 0.0
      %769 = vmatprep.subr.mxu0 0.0
      %770 = vmatpush2.xpose.msra.mxu0 0.0
      %771 = vmatprep.subr.mxu0 0.0
      %772 = vmatpush2.xpose.msra.mxu0 0.0
      %773 = vmatprep.subr.mxu0 0.0
      %774 = vmatpush2.xpose.msra.mxu0 0.0
      %775 = vmatprep.subr.mxu0 0.0
      %776 = vmatpush2.xpose.msra.mxu0 0.0
      %777 = vmatprep.mubr.f32.mxu0 0.0
      %778 = vmatmul.mubr.f32.gmra.mxu0 %v708
      %v779 = vpop.f32.mrf.mxu0
      %v780 = vadd.f32 0.0, %v779
      %v781 = vpop.f32.mrf.mxu0
      %782 = vmatprep.mubr.f32.mxu0 0.0
      %783 = vmatmul.mubr.f32.gmra.mxu0 %v711
      %v784 = vpop.f32.mrf.mxu0
      %v785 = vadd.f32 0.0, %v784
      %v786 = vpop.f32.mrf.mxu0
      %787 = vdwg.mxu0
      %v789 = vsel %vm220, %v186, 0
      %v792 = vsel %vm220, %v187, 0
      %794 = vmatprep.subr.mxu0 0.0
      %795 = vmatpush1.xpose.msra.mxu0 0.0
      %796 = vmatprep.subr.mxu0 0.0
      %797 = vmatpush1.xpose.msra.mxu0 0.0
      %798 = vmatprep.subr.mxu0 0.0
      %799 = vmatpush1.xpose.msra.mxu0 0.0
      %800 = vmatprep.subr.mxu0 0.0
      %801 = vmatpush1.xpose.msra.mxu0 0.0
      %802 = vmatprep.subr.mxu0 0.0
      %803 = vmatpush1.xpose.msra.mxu0 0.0
      %804 = vmatprep.subr.mxu0 0.0
      %805 = vmatpush1.xpose.msra.mxu0 0.0
      %806 = vmatprep.subr.mxu0 0.0
      %807 = vmatpush1.xpose.msra.mxu0 0.0
      %808 = vmatprep.subr.mxu0 0.0
      %809 = vmatpush1.xpose.msra.mxu0 0.0
      %810 = vmatprep.subr.mxu0 0.0
      %811 = vmatpush1.xpose.msra.mxu0 0.0
      %812 = vmatprep.subr.mxu0 0.0
      %813 = vmatpush1.xpose.msra.mxu0 0.0
      %814 = vmatprep.subr.mxu0 0.0
      %815 = vmatpush1.xpose.msra.mxu0 0.0
      %816 = vmatprep.subr.mxu0 0.0
      %817 = vmatpush1.xpose.msra.mxu0 0.0
      %818 = vmatprep.subr.mxu0 0.0
      %819 = vmatpush1.xpose.msra.mxu0 0.0
      %820 = vmatprep.subr.mxu0 0.0
      %821 = vmatpush1.xpose.msra.mxu0 0.0
      %822 = vmatprep.subr.mxu0 0.0
      %823 = vmatpush1.xpose.msra.mxu0 %v792
      %824 = vmatprep.subr.mxu0 0.0
      %825 = vmatpush1.xpose.msra.mxu0 %v789
      %826 = vmatprep.subr.mxu0 0.0
      %827 = vmatpush2.xpose.msra.mxu0 0.0
      %828 = vmatprep.subr.mxu0 0.0
      %829 = vmatpush2.xpose.msra.mxu0 0.0
      %830 = vmatprep.subr.mxu0 0.0
      %831 = vmatpush2.xpose.msra.mxu0 0.0
      %832 = vmatprep.subr.mxu0 0.0
      %833 = vmatpush2.xpose.msra.mxu0 0.0
      %834 = vmatprep.subr.mxu0 0.0
      %835 = vmatpush2.xpose.msra.mxu0 0.0
      %836 = vmatprep.subr.mxu0 0.0
      %837 = vmatpush2.xpose.msra.mxu0 0.0
      %838 = vmatprep.subr.mxu0 0.0
      %839 = vmatpush2.xpose.msra.mxu0 0.0
      %840 = vmatprep.subr.mxu0 0.0
      %841 = vmatpush2.xpose.msra.mxu0 0.0
      %842 = vmatprep.subr.mxu0 0.0
      %843 = vmatpush2.xpose.msra.mxu0 0.0
      %844 = vmatprep.subr.mxu0 0.0
      %845 = vmatpush2.xpose.msra.mxu0 0.0
      %846 = vmatprep.subr.mxu0 0.0
      %847 = vmatpush2.xpose.msra.mxu0 0.0
      %848 = vmatprep.subr.mxu0 0.0
      %849 = vmatpush2.xpose.msra.mxu0 0.0
      %850 = vmatprep.subr.mxu0 0.0
      %851 = vmatpush2.xpose.msra.mxu0 0.0
      %852 = vmatprep.subr.mxu0 0.0
      %853 = vmatpush2.xpose.msra.mxu0 0.0
      %854 = vmatprep.subr.mxu0 0.0
      %855 = vmatpush2.xpose.msra.mxu0 0.0
      %856 = vmatprep.subr.mxu0 0.0
      %857 = vmatpush2.xpose.msra.mxu0 0.0
      %858 = vmatprep.mubr.f32.mxu0 0.0
      %859 = vmatmul.mubr.f32.gmra.mxu0 %v789
      %v860 = vpop.f32.mrf.mxu0
      %v861 = vadd.f32 0.0, %v860
      %v862 = vpop.f32.mrf.mxu0
      %863 = vmatprep.mubr.f32.mxu0 0.0
      %864 = vmatmul.mubr.f32.gmra.mxu0 %v792
      %v865 = vpop.f32.mrf.mxu0
      %v866 = vadd.f32 0.0, %v865
      %v867 = vpop.f32.mrf.mxu0
      %868 = vdwg.mxu0
      %v870 = vsel %vm220, %v188, 0
      %v873 = vsel %vm220, %v189, 0
      %875 = vmatprep.subr.mxu0 0.0
      %876 = vmatpush1.xpose.msra.mxu0 0.0
      %877 = vmatprep.subr.mxu0 0.0
      %878 = vmatpush1.xpose.msra.mxu0 0.0
      %879 = vmatprep.subr.mxu0 0.0
      %880 = vmatpush1.xpose.msra.mxu0 0.0
      %881 = vmatprep.subr.mxu0 0.0
      %882 = vmatpush1.xpose.msra.mxu0 0.0
      %883 = vmatprep.subr.mxu0 0.0
      %884 = vmatpush1.xpose.msra.mxu0 0.0
      %885 = vmatprep.subr.mxu0 0.0
      %886 = vmatpush1.xpose.msra.mxu0 0.0
      %887 = vmatprep.subr.mxu0 0.0
      %888 = vmatpush1.xpose.msra.mxu0 0.0
      %889 = vmatprep.subr.mxu0 0.0
      %890 = vmatpush1.xpose.msra.mxu0 0.0
      %891 = vmatprep.subr.mxu0 0.0
      %892 = vmatpush1.xpose.msra.mxu0 0.0
      %893 = vmatprep.subr.mxu0 0.0
      %894 = vmatpush1.xpose.msra.mxu0 0.0
      %895 = vmatprep.subr.mxu0 0.0
      %896 = vmatpush1.xpose.msra.mxu0 0.0
      %897 = vmatprep.subr.mxu0 0.0
      %898 = vmatpush1.xpose.msra.mxu0 0.0
      %899 = vmatprep.subr.mxu0 0.0
      %900 = vmatpush1.xpose.msra.mxu0 0.0
      %901 = vmatprep.subr.mxu0 0.0
      %902 = vmatpush1.xpose.msra.mxu0 0.0
      %903 = vmatprep.subr.mxu0 0.0
      %904 = vmatpush1.xpose.msra.mxu0 %v873
      %905 = vmatprep.subr.mxu0 0.0
      %906 = vmatpush1.xpose.msra.mxu0 %v870
      %907 = vmatprep.subr.mxu0 0.0
      %908 = vmatpush2.xpose.msra.mxu0 0.0
      %909 = vmatprep.subr.mxu0 0.0
      %910 = vmatpush2.xpose.msra.mxu0 0.0
      %911 = vmatprep.subr.mxu0 0.0
      %912 = vmatpush2.xpose.msra.mxu0 0.0
      %913 = vmatprep.subr.mxu0 0.0
      %914 = vmatpush2.xpose.msra.mxu0 0.0
      %915 = vmatprep.subr.mxu0 0.0
      %916 = vmatpush2.xpose.msra.mxu0 0.0
      %917 = vmatprep.subr.mxu0 0.0
      %918 = vmatpush2.xpose.msra.mxu0 0.0
      %919 = vmatprep.subr.mxu0 0.0
      %920 = vmatpush2.xpose.msra.mxu0 0.0
      %921 = vmatprep.subr.mxu0 0.0
      %922 = vmatpush2.xpose.msra.mxu0 0.0
      %923 = vmatprep.subr.mxu0 0.0
      %924 = vmatpush2.xpose.msra.mxu0 0.0
      %925 = vmatprep.subr.mxu0 0.0
      %926 = vmatpush2.xpose.msra.mxu0 0.0
      %927 = vmatprep.subr.mxu0 0.0
      %928 = vmatpush2.xpose.msra.mxu0 0.0
      %929 = vmatprep.subr.mxu0 0.0
      %930 = vmatpush2.xpose.msra.mxu0 0.0
      %931 = vmatprep.subr.mxu0 0.0
      %932 = vmatpush2.xpose.msra.mxu0 0.0
      %933 = vmatprep.subr.mxu0 0.0
      %934 = vmatpush2.xpose.msra.mxu0 0.0
      %935 = vmatprep.subr.mxu0 0.0
      %936 = vmatpush2.xpose.msra.mxu0 0.0
      %937 = vmatprep.subr.mxu0 0.0
      %938 = vmatpush2.xpose.msra.mxu0 0.0
      %939 = vmatprep.mubr.f32.mxu0 0.0
      %940 = vmatmul.mubr.f32.gmra.mxu0 %v870
      %v941 = vpop.f32.mrf.mxu0
      %v942 = vadd.f32 0.0, %v941
      %v943 = vpop.f32.mrf.mxu0
      %944 = vmatprep.mubr.f32.mxu0 0.0
      %945 = vmatmul.mubr.f32.gmra.mxu0 %v873
      %v946 = vpop.f32.mrf.mxu0
      %v947 = vadd.f32 0.0, %v946
      %v948 = vpop.f32.mrf.mxu0
      %949 = vdwg.mxu0
      %v951 = vsel %vm220, %v190, 0
      %v954 = vsel %vm220, %v191, 0
      %956 = vmatprep.subr.mxu0 0.0
      %957 = vmatpush1.xpose.msra.mxu0 0.0
      %958 = vmatprep.subr.mxu0 0.0
      %959 = vmatpush1.xpose.msra.mxu0 0.0
      %960 = vmatprep.subr.mxu0 0.0
      %961 = vmatpush1.xpose.msra.mxu0 0.0
      %962 = vmatprep.subr.mxu0 0.0
      %963 = vmatpush1.xpose.msra.mxu0 0.0
      %964 = vmatprep.subr.mxu0 0.0
      %965 = vmatpush1.xpose.msra.mxu0 0.0
      %966 = vmatprep.subr.mxu0 0.0
      %967 = vmatpush1.xpose.msra.mxu0 0.0
      %968 = vmatprep.subr.mxu0 0.0
      %969 = vmatpush1.xpose.msra.mxu0 0.0
      %970 = vmatprep.subr.mxu0 0.0
      %971 = vmatpush1.xpose.msra.mxu0 0.0
      %972 = vmatprep.subr.mxu0 0.0
      %973 = vmatpush1.xpose.msra.mxu0 0.0
      %974 = vmatprep.subr.mxu0 0.0
      %975 = vmatpush1.xpose.msra.mxu0 0.0
      %976 = vmatprep.subr.mxu0 0.0
      %977 = vmatpush1.xpose.msra.mxu0 0.0
      %978 = vmatprep.subr.mxu0 0.0
      %979 = vmatpush1.xpose.msra.mxu0 0.0
      %980 = vmatprep.subr.mxu0 0.0
      %981 = vmatpush1.xpose.msra.mxu0 0.0
      %982 = vmatprep.subr.mxu0 0.0
      %983 = vmatpush1.xpose.msra.mxu0 0.0
      %984 = vmatprep.subr.mxu0 0.0
      %985 = vmatpush1.xpose.msra.mxu0 %v954
      %986 = vmatprep.subr.mxu0 0.0
      %987 = vmatpush1.xpose.msra.mxu0 %v951
      %988 = vmatprep.subr.mxu0 0.0
      %989 = vmatpush2.xpose.msra.mxu0 0.0
      %990 = vmatprep.subr.mxu0 0.0
      %991 = vmatpush2.xpose.msra.mxu0 0.0
      %992 = vmatprep.subr.mxu0 0.0
      %993 = vmatpush2.xpose.msra.mxu0 0.0
      %994 = vmatprep.subr.mxu0 0.0
      %995 = vmatpush2.xpose.msra.mxu0 0.0
      %996 = vmatprep.subr.mxu0 0.0
      %997 = vmatpush2.xpose.msra.mxu0 0.0
      %998 = vmatprep.subr.mxu0 0.0
      %999 = vmatpush2.xpose.msra.mxu0 0.0
      %1000 = vmatprep.subr.mxu0 0.0
      %1001 = vmatpush2.xpose.msra.mxu0 0.0
      %1002 = vmatprep.subr.mxu0 0.0
      %1003 = vmatpush2.xpose.msra.mxu0 0.0
      %1004 = vmatprep.subr.mxu0 0.0
      %1005 = vmatpush2.xpose.msra.mxu0 0.0
      %1006 = vmatprep.subr.mxu0 0.0
      %1007 = vmatpush2.xpose.msra.mxu0 0.0
      %1008 = vmatprep.subr.mxu0 0.0
      %1009 = vmatpush2.xpose.msra.mxu0 0.0
      %1010 = vmatprep.subr.mxu0 0.0
      %1011 = vmatpush2.xpose.msra.mxu0 0.0
      %1012 = vmatprep.subr.mxu0 0.0
      %1013 = vmatpush2.xpose.msra.mxu0 0.0
      %1014 = vmatprep.subr.mxu0 0.0
      %1015 = vmatpush2.xpose.msra.mxu0 0.0
      %1016 = vmatprep.subr.mxu0 0.0
      %1017 = vmatpush2.xpose.msra.mxu0 0.0
      %1018 = vmatprep.subr.mxu0 0.0
      %1019 = vmatpush2.xpose.msra.mxu0 0.0
      %1020 = vmatprep.mubr.f32.mxu0 0.0
      %1021 = vmatmul.mubr.f32.gmra.mxu0 %v951
      %v1022 = vpop.f32.mrf.mxu0
      %v1023 = vadd.f32 0.0, %v1022
      %v1024 = vpop.f32.mrf.mxu0
      %1025 = vmatprep.mubr.f32.mxu0 0.0
      %1026 = vmatmul.mubr.f32.gmra.mxu0 %v954
      %v1027 = vpop.f32.mrf.mxu0
      %v1028 = vadd.f32 0.0, %v1027
      %v1029 = vpop.f32.mrf.mxu0
      %1030 = vdwg.mxu0
      %v1032 = vsel %vm220, %v192, 0
      %v1035 = vsel %vm220, %v193, 0
      %1037 = vmatprep.subr.mxu0 0.0
      %1038 = vmatpush1.xpose.msra.mxu0 0.0
      %1039 = vmatprep.subr.mxu0 0.0
      %1040 = vmatpush1.xpose.msra.mxu0 0.0
      %1041 = vmatprep.subr.mxu0 0.0
      %1042 = vmatpush1.xpose.msra.mxu0 0.0
      %1043 = vmatprep.subr.mxu0 0.0
      %1044 = vmatpush1.xpose.msra.mxu0 0.0
      %1045 = vmatprep.subr.mxu0 0.0
      %1046 = vmatpush1.xpose.msra.mxu0 0.0
      %1047 = vmatprep.subr.mxu0 0.0
      %1048 = vmatpush1.xpose.msra.mxu0 0.0
      %1049 = vmatprep.subr.mxu0 0.0
      %1050 = vmatpush1.xpose.msra.mxu0 0.0
      %1051 = vmatprep.subr.mxu0 0.0
      %1052 = vmatpush1.xpose.msra.mxu0 0.0
      %1053 = vmatprep.subr.mxu0 0.0
      %1054 = vmatpush1.xpose.msra.mxu0 0.0
      %1055 = vmatprep.subr.mxu0 0.0
      %1056 = vmatpush1.xpose.msra.mxu0 0.0
      %1057 = vmatprep.subr.mxu0 0.0
      %1058 = vmatpush1.xpose.msra.mxu0 0.0
      %1059 = vmatprep.subr.mxu0 0.0
      %1060 = vmatpush1.xpose.msra.mxu0 0.0
      %1061 = vmatprep.subr.mxu0 0.0
      %1062 = vmatpush1.xpose.msra.mxu0 0.0
      %1063 = vmatprep.subr.mxu0 0.0
      %1064 = vmatpush1.xpose.msra.mxu0 0.0
      %1065 = vmatprep.subr.mxu0 0.0
      %1066 = vmatpush1.xpose.msra.mxu0 %v1035
      %1067 = vmatprep.subr.mxu0 0.0
      %1068 = vmatpush1.xpose.msra.mxu0 %v1032
      %1069 = vmatprep.subr.mxu0 0.0
      %1070 = vmatpush2.xpose.msra.mxu0 0.0
      %1071 = vmatprep.subr.mxu0 0.0
      %1072 = vmatpush2.xpose.msra.mxu0 0.0
      %1073 = vmatprep.subr.mxu0 0.0
      %1074 = vmatpush2.xpose.msra.mxu0 0.0
      %1075 = vmatprep.subr.mxu0 0.0
      %1076 = vmatpush2.xpose.msra.mxu0 0.0
      %1077 = vmatprep.subr.mxu0 0.0
      %1078 = vmatpush2.xpose.msra.mxu0 0.0
      %1079 = vmatprep.subr.mxu0 0.0
      %1080 = vmatpush2.xpose.msra.mxu0 0.0
      %1081 = vmatprep.subr.mxu0 0.0
      %1082 = vmatpush2.xpose.msra.mxu0 0.0
      %1083 = vmatprep.subr.mxu0 0.0
      %1084 = vmatpush2.xpose.msra.mxu0 0.0
      %1085 = vmatprep.subr.mxu0 0.0
      %1086 = vmatpush2.xpose.msra.mxu0 0.0
      %1087 = vmatprep.subr.mxu0 0.0
      %1088 = vmatpush2.xpose.msra.mxu0 0.0
      %1089 = vmatprep.subr.mxu0 0.0
      %1090 = vmatpush2.xpose.msra.mxu0 0.0
      %1091 = vmatprep.subr.mxu0 0.0
      %1092 = vmatpush2.xpose.msra.mxu0 0.0
      %1093 = vmatprep.subr.mxu0 0.0
      %1094 = vmatpush2.xpose.msra.mxu0 0.0
      %1095 = vmatprep.subr.mxu0 0.0
      %1096 = vmatpush2.xpose.msra.mxu0 0.0
      %1097 = vmatprep.subr.mxu0 0.0
      %1098 = vmatpush2.xpose.msra.mxu0 0.0
      %1099 = vmatprep.subr.mxu0 0.0
      %1100 = vmatpush2.xpose.msra.mxu0 0.0
      %1101 = vmatprep.mubr.f32.mxu0 0.0
      %1102 = vmatmul.mubr.f32.gmra.mxu0 %v1032
      %v1103 = vpop.f32.mrf.mxu0
      %v1104 = vadd.f32 0.0, %v1103
      %v1105 = vpop.f32.mrf.mxu0
      %1106 = vmatprep.mubr.f32.mxu0 0.0
      %1107 = vmatmul.mubr.f32.gmra.mxu0 %v1035
      %v1108 = vpop.f32.mrf.mxu0
      %v1109 = vadd.f32 0.0, %v1108
      %v1110 = vpop.f32.mrf.mxu0
      %1111 = vdwg.mxu0
      %v1113 = vsel %vm220, %v194, 0
      %v1116 = vsel %vm220, %v195, 0
      %1118 = vmatprep.subr.mxu0 0.0
      %1119 = vmatpush1.xpose.msra.mxu0 0.0
      %1120 = vmatprep.subr.mxu0 0.0
      %1121 = vmatpush1.xpose.msra.mxu0 0.0
      %1122 = vmatprep.subr.mxu0 0.0
      %1123 = vmatpush1.xpose.msra.mxu0 0.0
      %1124 = vmatprep.subr.mxu0 0.0
      %1125 = vmatpush1.xpose.msra.mxu0 0.0
      %1126 = vmatprep.subr.mxu0 0.0
      %1127 = vmatpush1.xpose.msra.mxu0 0.0
      %1128 = vmatprep.subr.mxu0 0.0
      %1129 = vmatpush1.xpose.msra.mxu0 0.0
      %1130 = vmatprep.subr.mxu0 0.0
      %1131 = vmatpush1.xpose.msra.mxu0 0.0
      %1132 = vmatprep.subr.mxu0 0.0
      %1133 = vmatpush1.xpose.msra.mxu0 0.0
      %1134 = vmatprep.subr.mxu0 0.0
      %1135 = vmatpush1.xpose.msra.mxu0 0.0
      %1136 = vmatprep.subr.mxu0 0.0
      %1137 = vmatpush1.xpose.msra.mxu0 0.0
      %1138 = vmatprep.subr.mxu0 0.0
      %1139 = vmatpush1.xpose.msra.mxu0 0.0
      %1140 = vmatprep.subr.mxu0 0.0
      %1141 = vmatpush1.xpose.msra.mxu0 0.0
      %1142 = vmatprep.subr.mxu0 0.0
      %1143 = vmatpush1.xpose.msra.mxu0 0.0
      %1144 = vmatprep.subr.mxu0 0.0
      %1145 = vmatpush1.xpose.msra.mxu0 0.0
      %1146 = vmatprep.subr.mxu0 0.0
      %1147 = vmatpush1.xpose.msra.mxu0 %v1116
      %1148 = vmatprep.subr.mxu0 0.0
      %1149 = vmatpush1.xpose.msra.mxu0 %v1113
      %1150 = vmatprep.subr.mxu0 0.0
      %1151 = vmatpush2.xpose.msra.mxu0 0.0
      %1152 = vmatprep.subr.mxu0 0.0
      %1153 = vmatpush2.xpose.msra.mxu0 0.0
      %1154 = vmatprep.subr.mxu0 0.0
      %1155 = vmatpush2.xpose.msra.mxu0 0.0
      %1156 = vmatprep.subr.mxu0 0.0
      %1157 = vmatpush2.xpose.msra.mxu0 0.0
      %1158 = vmatprep.subr.mxu0 0.0
      %1159 = vmatpush2.xpose.msra.mxu0 0.0
      %1160 = vmatprep.subr.mxu0 0.0
      %1161 = vmatpush2.xpose.msra.mxu0 0.0
      %1162 = vmatprep.subr.mxu0 0.0
      %1163 = vmatpush2.xpose.msra.mxu0 0.0
      %1164 = vmatprep.subr.mxu0 0.0
      %1165 = vmatpush2.xpose.msra.mxu0 0.0
      %1166 = vmatprep.subr.mxu0 0.0
      %1167 = vmatpush2.xpose.msra.mxu0 0.0
      %1168 = vmatprep.subr.mxu0 0.0
      %1169 = vmatpush2.xpose.msra.mxu0 0.0
      %1170 = vmatprep.subr.mxu0 0.0
      %1171 = vmatpush2.xpose.msra.mxu0 0.0
      %1172 = vmatprep.subr.mxu0 0.0
      %1173 = vmatpush2.xpose.msra.mxu0 0.0
      %1174 = vmatprep.subr.mxu0 0.0
      %1175 = vmatpush2.xpose.msra.mxu0 0.0
      %1176 = vmatprep.subr.mxu0 0.0
      %1177 = vmatpush2.xpose.msra.mxu0 0.0
      %1178 = vmatprep.subr.mxu0 0.0
      %1179 = vmatpush2.xpose.msra.mxu0 0.0
      %1180 = vmatprep.subr.mxu0 0.0
      %1181 = vmatpush2.xpose.msra.mxu0 0.0
      %1182 = vmatprep.mubr.f32.mxu0 0.0
      %1183 = vmatmul.mubr.f32.gmra.mxu0 %v1113
      %v1184 = vpop.f32.mrf.mxu0
      %v1185 = vadd.f32 0.0, %v1184
      %v1186 = vpop.f32.mrf.mxu0
      %1187 = vmatprep.mubr.f32.mxu0 0.0
      %1188 = vmatmul.mubr.f32.gmra.mxu0 %v1116
      %v1189 = vpop.f32.mrf.mxu0
      %v1190 = vadd.f32 0.0, %v1189
      %v1191 = vpop.f32.mrf.mxu0
      %1192 = vdwg.mxu0
      %v1194 = vsel %vm220, %v196, 0
      %v1197 = vsel %vm220, %v197, 0
      %1199 = vmatprep.subr.mxu0 0.0
      %1200 = vmatpush1.xpose.msra.mxu0 0.0
      %1201 = vmatprep.subr.mxu0 0.0
      %1202 = vmatpush1.xpose.msra.mxu0 0.0
      %1203 = vmatprep.subr.mxu0 0.0
      %1204 = vmatpush1.xpose.msra.mxu0 0.0
      %1205 = vmatprep.subr.mxu0 0.0
      %1206 = vmatpush1.xpose.msra.mxu0 0.0
      %1207 = vmatprep.subr.mxu0 0.0
      %1208 = vmatpush1.xpose.msra.mxu0 0.0
      %1209 = vmatprep.subr.mxu0 0.0
      %1210 = vmatpush1.xpose.msra.mxu0 0.0
      %1211 = vmatprep.subr.mxu0 0.0
      %1212 = vmatpush1.xpose.msra.mxu0 0.0
      %1213 = vmatprep.subr.mxu0 0.0
      %1214 = vmatpush1.xpose.msra.mxu0 0.0
      %1215 = vmatprep.subr.mxu0 0.0
      %1216 = vmatpush1.xpose.msra.mxu0 0.0
      %1217 = vmatprep.subr.mxu0 0.0
      %1218 = vmatpush1.xpose.msra.mxu0 0.0
      %1219 = vmatprep.subr.mxu0 0.0
      %1220 = vmatpush1.xpose.msra.mxu0 0.0
      %1221 = vmatprep.subr.mxu0 0.0
      %1222 = vmatpush1.xpose.msra.mxu0 0.0
      %1223 = vmatprep.subr.mxu0 0.0
      %1224 = vmatpush1.xpose.msra.mxu0 0.0
      %1225 = vmatprep.subr.mxu0 0.0
      %1226 = vmatpush1.xpose.msra.mxu0 0.0
      %1227 = vmatprep.subr.mxu0 0.0
      %1228 = vmatpush1.xpose.msra.mxu0 %v1197
      %1229 = vmatprep.subr.mxu0 0.0
      %1230 = vmatpush1.xpose.msra.mxu0 %v1194
      %1231 = vmatprep.subr.mxu0 0.0
      %1232 = vmatpush2.xpose.msra.mxu0 0.0
      %1233 = vmatprep.subr.mxu0 0.0
      %1234 = vmatpush2.xpose.msra.mxu0 0.0
      %1235 = vmatprep.subr.mxu0 0.0
      %1236 = vmatpush2.xpose.msra.mxu0 0.0
      %1237 = vmatprep.subr.mxu0 0.0
      %1238 = vmatpush2.xpose.msra.mxu0 0.0
      %1239 = vmatprep.subr.mxu0 0.0
      %1240 = vmatpush2.xpose.msra.mxu0 0.0
      %1241 = vmatprep.subr.mxu0 0.0
      %1242 = vmatpush2.xpose.msra.mxu0 0.0
      %1243 = vmatprep.subr.mxu0 0.0
      %1244 = vmatpush2.xpose.msra.mxu0 0.0
      %1245 = vmatprep.subr.mxu0 0.0
      %1246 = vmatpush2.xpose.msra.mxu0 0.0
      %1247 = vmatprep.subr.mxu0 0.0
      %1248 = vmatpush2.xpose.msra.mxu0 0.0
      %1249 = vmatprep.subr.mxu0 0.0
      %1250 = vmatpush2.xpose.msra.mxu0 0.0
      %1251 = vmatprep.subr.mxu0 0.0
      %1252 = vmatpush2.xpose.msra.mxu0 0.0
      %1253 = vmatprep.subr.mxu0 0.0
      %1254 = vmatpush2.xpose.msra.mxu0 0.0
      %1255 = vmatprep.subr.mxu0 0.0
      %1256 = vmatpush2.xpose.msra.mxu0 0.0
      %1257 = vmatprep.subr.mxu0 0.0
      %1258 = vmatpush2.xpose.msra.mxu0 0.0
      %1259 = vmatprep.subr.mxu0 0.0
      %1260 = vmatpush2.xpose.msra.mxu0 0.0
      %1261 = vmatprep.subr.mxu0 0.0
      %1262 = vmatpush2.xpose.msra.mxu0 0.0
      %1263 = vmatprep.mubr.f32.mxu0 0.0
      %1264 = vmatmul.mubr.f32.gmra.mxu0 %v1194
      %v1265 = vpop.f32.mrf.mxu0
      %v1266 = vadd.f32 0.0, %v1265
      %v1267 = vpop.f32.mrf.mxu0
      %1268 = vmatprep.mubr.f32.mxu0 0.0
      %1269 = vmatmul.mubr.f32.gmra.mxu0 %v1197
      %v1270 = vpop.f32.mrf.mxu0
      %v1271 = vadd.f32 0.0, %v1270
      %v1272 = vpop.f32.mrf.mxu0
      %1273 = vdwg.mxu0
      %v1275 = vsel %vm220, %v198, 0
      %v1278 = vsel %vm220, %v199, 0
      %1280 = vmatprep.subr.mxu0 0.0
      %1281 = vmatpush1.xpose.msra.mxu0 0.0
      %1282 = vmatprep.subr.mxu0 0.0
      %1283 = vmatpush1.xpose.msra.mxu0 0.0
      %1284 = vmatprep.subr.mxu0 0.0
      %1285 = vmatpush1.xpose.msra.mxu0 0.0
      %1286 = vmatprep.subr.mxu0 0.0
      %1287 = vmatpush1.xpose.msra.mxu0 0.0
      %1288 = vmatprep.subr.mxu0 0.0
      %1289 = vmatpush1.xpose.msra.mxu0 0.0
      %1290 = vmatprep.subr.mxu0 0.0
      %1291 = vmatpush1.xpose.msra.mxu0 0.0
      %1292 = vmatprep.subr.mxu0 0.0
      %1293 = vmatpush1.xpose.msra.mxu0 0.0
      %1294 = vmatprep.subr.mxu0 0.0
      %1295 = vmatpush1.xpose.msra.mxu0 0.0
      %1296 = vmatprep.subr.mxu0 0.0
      %1297 = vmatpush1.xpose.msra.mxu0 0.0
      %1298 = vmatprep.subr.mxu0 0.0
      %1299 = vmatpush1.xpose.msra.mxu0 0.0
      %1300 = vmatprep.subr.mxu0 0.0
      %1301 = vmatpush1.xpose.msra.mxu0 0.0
      %1302 = vmatprep.subr.mxu0 0.0
      %1303 = vmatpush1.xpose.msra.mxu0 0.0
      %1304 = vmatprep.subr.mxu0 0.0
      %1305 = vmatpush1.xpose.msra.mxu0 0.0
      %1306 = vmatprep.subr.mxu0 0.0
      %1307 = vmatpush1.xpose.msra.mxu0 0.0
      %1308 = vmatprep.subr.mxu0 0.0
      %1309 = vmatpush1.xpose.msra.mxu0 %v1278
      %1310 = vmatprep.subr.mxu0 0.0
      %1311 = vmatpush1.xpose.msra.mxu0 %v1275
      %1312 = vmatprep.subr.mxu0 0.0
      %1313 = vmatpush2.xpose.msra.mxu0 0.0
      %1314 = vmatprep.subr.mxu0 0.0
      %1315 = vmatpush2.xpose.msra.mxu0 0.0
      %1316 = vmatprep.subr.mxu0 0.0
      %1317 = vmatpush2.xpose.msra.mxu0 0.0
      %1318 = vmatprep.subr.mxu0 0.0
      %1319 = vmatpush2.xpose.msra.mxu0 0.0
      %1320 = vmatprep.subr.mxu0 0.0
      %1321 = vmatpush2.xpose.msra.mxu0 0.0
      %1322 = vmatprep.subr.mxu0 0.0
      %1323 = vmatpush2.xpose.msra.mxu0 0.0
      %1324 = vmatprep.subr.mxu0 0.0
      %1325 = vmatpush2.xpose.msra.mxu0 0.0
      %1326 = vmatprep.subr.mxu0 0.0
      %1327 = vmatpush2.xpose.msra.mxu0 0.0
      %1328 = vmatprep.subr.mxu0 0.0
      %1329 = vmatpush2.xpose.msra.mxu0 0.0
      %1330 = vmatprep.subr.mxu0 0.0
      %1331 = vmatpush2.xpose.msra.mxu0 0.0
      %1332 = vmatprep.subr.mxu0 0.0
      %1333 = vmatpush2.xpose.msra.mxu0 0.0
      %1334 = vmatprep.subr.mxu0 0.0
      %1335 = vmatpush2.xpose.msra.mxu0 0.0
      %1336 = vmatprep.subr.mxu0 0.0
      %1337 = vmatpush2.xpose.msra.mxu0 0.0
      %1338 = vmatprep.subr.mxu0 0.0
      %1339 = vmatpush2.xpose.msra.mxu0 0.0
      %1340 = vmatprep.subr.mxu0 0.0
      %1341 = vmatpush2.xpose.msra.mxu0 0.0
      %1342 = vmatprep.subr.mxu0 0.0
      %1343 = vmatpush2.xpose.msra.mxu0 0.0
      %1344 = vmatprep.mubr.f32.mxu0 0.0
      %1345 = vmatmul.mubr.f32.gmra.mxu0 %v1275
      %v1346 = vpop.f32.mrf.mxu0
      %v1347 = vadd.f32 0.0, %v1346
      %v1348 = vpop.f32.mrf.mxu0
      %1349 = vmatprep.mubr.f32.mxu0 0.0
      %1350 = vmatmul.mubr.f32.gmra.mxu0 %v1278
      %v1351 = vpop.f32.mrf.mxu0
      %v1352 = vadd.f32 0.0, %v1351
      %v1353 = vpop.f32.mrf.mxu0
      %1354 = vdwg.mxu0
      %v1356 = vsel %vm220, %v200, 0
      %v1359 = vsel %vm220, %v201, 0
      %1361 = vmatprep.subr.mxu0 0.0
      %1362 = vmatpush1.xpose.msra.mxu0 0.0
      %1363 = vmatprep.subr.mxu0 0.0
      %1364 = vmatpush1.xpose.msra.mxu0 0.0
      %1365 = vmatprep.subr.mxu0 0.0
      %1366 = vmatpush1.xpose.msra.mxu0 0.0
      %1367 = vmatprep.subr.mxu0 0.0
      %1368 = vmatpush1.xpose.msra.mxu0 0.0
      %1369 = vmatprep.subr.mxu0 0.0
      %1370 = vmatpush1.xpose.msra.mxu0 0.0
      %1371 = vmatprep.subr.mxu0 0.0
      %1372 = vmatpush1.xpose.msra.mxu0 0.0
      %1373 = vmatprep.subr.mxu0 0.0
      %1374 = vmatpush1.xpose.msra.mxu0 0.0
      %1375 = vmatprep.subr.mxu0 0.0
      %1376 = vmatpush1.xpose.msra.mxu0 0.0
      %1377 = vmatprep.subr.mxu0 0.0
      %1378 = vmatpush1.xpose.msra.mxu0 0.0
      %1379 = vmatprep.subr.mxu0 0.0
      %1380 = vmatpush1.xpose.msra.mxu0 0.0
      %1381 = vmatprep.subr.mxu0 0.0
      %1382 = vmatpush1.xpose.msra.mxu0 0.0
      %1383 = vmatprep.subr.mxu0 0.0
      %1384 = vmatpush1.xpose.msra.mxu0 0.0
      %1385 = vmatprep.subr.mxu0 0.0
      %1386 = vmatpush1.xpose.msra.mxu0 0.0
      %1387 = vmatprep.subr.mxu0 0.0
      %1388 = vmatpush1.xpose.msra.mxu0 0.0
      %1389 = vmatprep.subr.mxu0 0.0
      %1390 = vmatpush1.xpose.msra.mxu0 %v1359
      %1391 = vmatprep.subr.mxu0 0.0
      %1392 = vmatpush1.xpose.msra.mxu0 %v1356
      %1393 = vmatprep.subr.mxu0 0.0
      %1394 = vmatpush2.xpose.msra.mxu0 0.0
      %1395 = vmatprep.subr.mxu0 0.0
      %1396 = vmatpush2.xpose.msra.mxu0 0.0
      %1397 = vmatprep.subr.mxu0 0.0
      %1398 = vmatpush2.xpose.msra.mxu0 0.0
      %1399 = vmatprep.subr.mxu0 0.0
      %1400 = vmatpush2.xpose.msra.mxu0 0.0
      %1401 = vmatprep.subr.mxu0 0.0
      %1402 = vmatpush2.xpose.msra.mxu0 0.0
      %1403 = vmatprep.subr.mxu0 0.0
      %1404 = vmatpush2.xpose.msra.mxu0 0.0
      %1405 = vmatprep.subr.mxu0 0.0
      %1406 = vmatpush2.xpose.msra.mxu0 0.0
      %1407 = vmatprep.subr.mxu0 0.0
      %1408 = vmatpush2.xpose.msra.mxu0 0.0
      %1409 = vmatprep.subr.mxu0 0.0
      %1410 = vmatpush2.xpose.msra.mxu0 0.0
      %1411 = vmatprep.subr.mxu0 0.0
      %1412 = vmatpush2.xpose.msra.mxu0 0.0
      %1413 = vmatprep.subr.mxu0 0.0
      %1414 = vmatpush2.xpose.msra.mxu0 0.0
      %1415 = vmatprep.subr.mxu0 0.0
      %1416 = vmatpush2.xpose.msra.mxu0 0.0
      %1417 = vmatprep.subr.mxu0 0.0
      %1418 = vmatpush2.xpose.msra.mxu0 0.0
      %1419 = vmatprep.subr.mxu0 0.0
      %1420 = vmatpush2.xpose.msra.mxu0 0.0
      %1421 = vmatprep.subr.mxu0 0.0
      %1422 = vmatpush2.xpose.msra.mxu0 0.0
      %1423 = vmatprep.subr.mxu0 0.0
      %1424 = vmatpush2.xpose.msra.mxu0 0.0
      %1425 = vmatprep.mubr.f32.mxu0 0.0
      %1426 = vmatmul.mubr.f32.gmra.mxu0 %v1356
      %v1427 = vpop.f32.mrf.mxu0
      %v1428 = vadd.f32 0.0, %v1427
      %v1429 = vpop.f32.mrf.mxu0
      %1430 = vmatprep.mubr.f32.mxu0 0.0
      %1431 = vmatmul.mubr.f32.gmra.mxu0 %v1359
      %v1432 = vpop.f32.mrf.mxu0
      %v1433 = vadd.f32 0.0, %v1432
      %v1434 = vpop.f32.mrf.mxu0
      %1435 = vdwg.mxu0
      %v1437 = vsel %vm220, %v202, 0
      %v1440 = vsel %vm220, %v203, 0
      %1442 = vmatprep.subr.mxu0 0.0
      %1443 = vmatpush1.xpose.msra.mxu0 0.0
      %1444 = vmatprep.subr.mxu0 0.0
      %1445 = vmatpush1.xpose.msra.mxu0 0.0
      %1446 = vmatprep.subr.mxu0 0.0
      %1447 = vmatpush1.xpose.msra.mxu0 0.0
      %1448 = vmatprep.subr.mxu0 0.0
      %1449 = vmatpush1.xpose.msra.mxu0 0.0
      %1450 = vmatprep.subr.mxu0 0.0
      %1451 = vmatpush1.xpose.msra.mxu0 0.0
      %1452 = vmatprep.subr.mxu0 0.0
      %1453 = vmatpush1.xpose.msra.mxu0 0.0
      %1454 = vmatprep.subr.mxu0 0.0
      %1455 = vmatpush1.xpose.msra.mxu0 0.0
      %1456 = vmatprep.subr.mxu0 0.0
      %1457 = vmatpush1.xpose.msra.mxu0 0.0
      %1458 = vmatprep.subr.mxu0 0.0
      %1459 = vmatpush1.xpose.msra.mxu0 0.0
      %1460 = vmatprep.subr.mxu0 0.0
      %1461 = vmatpush1.xpose.msra.mxu0 0.0
      %1462 = vmatprep.subr.mxu0 0.0
      %1463 = vmatpush1.xpose.msra.mxu0 0.0
      %1464 = vmatprep.subr.mxu0 0.0
      %1465 = vmatpush1.xpose.msra.mxu0 0.0
      %1466 = vmatprep.subr.mxu0 0.0
      %1467 = vmatpush1.xpose.msra.mxu0 0.0
      %1468 = vmatprep.subr.mxu0 0.0
      %1469 = vmatpush1.xpose.msra.mxu0 0.0
      %1470 = vmatprep.subr.mxu0 0.0
      %1471 = vmatpush1.xpose.msra.mxu0 %v1440
      %1472 = vmatprep.subr.mxu0 0.0
      %1473 = vmatpush1.xpose.msra.mxu0 %v1437
      %1474 = vmatprep.subr.mxu0 0.0
      %1475 = vmatpush2.xpose.msra.mxu0 0.0
      %1476 = vmatprep.subr.mxu0 0.0
      %1477 = vmatpush2.xpose.msra.mxu0 0.0
      %1478 = vmatprep.subr.mxu0 0.0
      %1479 = vmatpush2.xpose.msra.mxu0 0.0
      %1480 = vmatprep.subr.mxu0 0.0
      %1481 = vmatpush2.xpose.msra.mxu0 0.0
      %1482 = vmatprep.subr.mxu0 0.0
      %1483 = vmatpush2.xpose.msra.mxu0 0.0
      %1484 = vmatprep.subr.mxu0 0.0
      %1485 = vmatpush2.xpose.msra.mxu0 0.0
      %1486 = vmatprep.subr.mxu0 0.0
      %1487 = vmatpush2.xpose.msra.mxu0 0.0
      %1488 = vmatprep.subr.mxu0 0.0
      %1489 = vmatpush2.xpose.msra.mxu0 0.0
      %1490 = vmatprep.subr.mxu0 0.0
      %1491 = vmatpush2.xpose.msra.mxu0 0.0
      %1492 = vmatprep.subr.mxu0 0.0
      %1493 = vmatpush2.xpose.msra.mxu0 0.0
      %1494 = vmatprep.subr.mxu0 0.0
      %1495 = vmatpush2.xpose.msra.mxu0 0.0
      %1496 = vmatprep.subr.mxu0 0.0
      %1497 = vmatpush2.xpose.msra.mxu0 0.0
      %1498 = vmatprep.subr.mxu0 0.0
      %1499 = vmatpush2.xpose.msra.mxu0 0.0
      %1500 = vmatprep.subr.mxu0 0.0
      %1501 = vmatpush2.xpose.msra.mxu0 0.0
      %1502 = vmatprep.subr.mxu0 0.0
      %1503 = vmatpush2.xpose.msra.mxu0 0.0
      %1504 = vmatprep.subr.mxu0 0.0
      %1505 = vmatpush2.xpose.msra.mxu0 0.0
      %1506 = vmatprep.mubr.f32.mxu0 0.0
      %1507 = vmatmul.mubr.f32.gmra.mxu0 %v1437
      %v1508 = vpop.f32.mrf.mxu0
      %v1509 = vadd.f32 0.0, %v1508
      %v1510 = vpop.f32.mrf.mxu0
      %1511 = vmatprep.mubr.f32.mxu0 0.0
      %1512 = vmatmul.mubr.f32.gmra.mxu0 %v1440
      %v1513 = vpop.f32.mrf.mxu0
      %v1514 = vadd.f32 0.0, %v1513
      %v1515 = vpop.f32.mrf.mxu0
      %1516 = vdwg.mxu0
      %vm1517 = vcmask 130048
      %v1518 = vsel %vm1517, %v294, -inf
      %1519 = vmax.xlane.f32.xlu0 %v1518
      %v1520 = vpop.xlane.xlu0 %1519
      %v1521 = vsel %vm1517, %v299, -inf
      %1522 = vmax.xlane.f32.xlu0 %v1521
      %v1523 = vpop.xlane.xlu0 %1522
      %v1524 = vsel %vm1517, %v375, -inf
      %1525 = vmax.xlane.f32.xlu0 %v1524
      %v1526 = vpop.xlane.xlu0 %1525
      %v1527 = vsel %vm1517, %v380, -inf
      %1528 = vmax.xlane.f32.xlu0 %v1527
      %v1529 = vpop.xlane.xlu0 %1528
      %v1530 = vsel %vm1517, %v456, -inf
      %1531 = vmax.xlane.f32.xlu0 %v1530
      %v1532 = vpop.xlane.xlu0 %1531
      %v1533 = vsel %vm1517, %v461, -inf
      %1534 = vmax.xlane.f32.xlu0 %v1533
      %v1535 = vpop.xlane.xlu0 %1534
      %v1536 = vsel %vm1517, %v537, -inf
      %1537 = vmax.xlane.f32.xlu0 %v1536
      %v1538 = vpop.xlane.xlu0 %1537
      %v1539 = vsel %vm1517, %v542, -inf
      %1540 = vmax.xlane.f32.xlu0 %v1539
      %v1541 = vpop.xlane.xlu0 %1540
      %v1542 = vsel %vm1517, %v618, -inf
      %1543 = vmax.xlane.f32.xlu0 %v1542
      %v1544 = vpop.xlane.xlu0 %1543
      %v1545 = vsel %vm1517, %v623, -inf
      %1546 = vmax.xlane.f32.xlu0 %v1545
      %v1547 = vpop.xlane.xlu0 %1546
      %v1548 = vsel %vm1517, %v699, -inf
      %1549 = vmax.xlane.f32.xlu0 %v1548
      %v1550 = vpop.xlane.xlu0 %1549
      %v1551 = vsel %vm1517, %v704, -inf
      %1552 = vmax.xlane.f32.xlu0 %v1551
      %v1553 = vpop.xlane.xlu0 %1552
      %v1554 = vsel %vm1517, %v780, -inf
      %1555 = vmax.xlane.f32.xlu0 %v1554
      %v1556 = vpop.xlane.xlu0 %1555
      %v1557 = vsel %vm1517, %v785, -inf
      %1558 = vmax.xlane.f32.xlu0 %v1557
      %v1559 = vpop.xlane.xlu0 %1558
      %v1560 = vsel %vm1517, %v861, -inf
      %1561 = vmax.xlane.f32.xlu0 %v1560
      %v1562 = vpop.xlane.xlu0 %1561
      %v1563 = vsel %vm1517, %v866, -inf
      %1564 = vmax.xlane.f32.xlu0 %v1563
      %v1565 = vpop.xlane.xlu0 %1564
      %v1566 = vsel %vm1517, %v942, -inf
      %1567 = vmax.xlane.f32.xlu0 %v1566
      %v1568 = vpop.xlane.xlu0 %1567
      %v1569 = vsel %vm1517, %v947, -inf
      %1570 = vmax.xlane.f32.xlu0 %v1569
      %v1571 = vpop.xlane.xlu0 %1570
      %v1572 = vsel %vm1517, %v1023, -inf
      %1573 = vmax.xlane.f32.xlu0 %v1572
      %v1574 = vpop.xlane.xlu0 %1573
      %v1575 = vsel %vm1517, %v1028, -inf
      %1576 = vmax.xlane.f32.xlu0 %v1575
      %v1577 = vpop.xlane.xlu0 %1576
      %v1578 = vsel %vm1517, %v1104, -inf
      %1579 = vmax.xlane.f32.xlu0 %v1578
      %v1580 = vpop.xlane.xlu0 %1579
      %v1581 = vsel %vm1517, %v1109, -inf
      %1582 = vmax.xlane.f32.xlu0 %v1581
      %v1583 = vpop.xlane.xlu0 %1582
      %v1584 = vsel %vm1517, %v1185, -inf
      %1585 = vmax.xlane.f32.xlu0 %v1584
      %v1586 = vpop.xlane.xlu0 %1585
      %v1587 = vsel %vm1517, %v1190, -inf
      %1588 = vmax.xlane.f32.xlu0 %v1587
      %v1589 = vpop.xlane.xlu0 %1588
      %v1590 = vsel %vm1517, %v1266, -inf
      %1591 = vmax.xlane.f32.xlu0 %v1590
      %v1592 = vpop.xlane.xlu0 %1591
      %v1593 = vsel %vm1517, %v1271, -inf
      %1594 = vmax.xlane.f32.xlu0 %v1593
      %v1595 = vpop.xlane.xlu0 %1594
      %v1596 = vsel %vm1517, %v1347, -inf
      %1597 = vmax.xlane.f32.xlu0 %v1596
      %v1598 = vpop.xlane.xlu0 %1597
      %v1599 = vsel %vm1517, %v1352, -inf
      %1600 = vmax.xlane.f32.xlu0 %v1599
      %v1601 = vpop.xlane.xlu0 %1600
      %v1602 = vsel %vm1517, %v1428, -inf
      %1603 = vmax.xlane.f32.xlu0 %v1602
      %v1604 = vpop.xlane.xlu0 %1603
      %v1605 = vsel %vm1517, %v1433, -inf
      %1606 = vmax.xlane.f32.xlu0 %v1605
      %v1607 = vpop.xlane.xlu0 %1606
      %v1608 = vsel %vm1517, %v1509, -inf
      %1609 = vmax.xlane.f32.xlu0 %v1608
      %v1610 = vpop.xlane.xlu0 %1609
      %v1611 = vsel %vm1517, %v1514, -inf
      %1612 = vmax.xlane.f32.xlu0 %v1611
      %v1613 = vpop.xlane.xlu0 %1612
      %v1614 = vsub.f32 %v294, %v1520
      %v1615 = vsub.f32 %v299, %v1523
      %v1616 = vsub.f32 %v375, %v1526
      %v1617 = vsub.f32 %v380, %v1529
      %v1618 = vsub.f32 %v456, %v1532
      %v1619 = vsub.f32 %v461, %v1535
      %v1620 = vsub.f32 %v537, %v1538
      %v1621 = vsub.f32 %v542, %v1541
      %v1622 = vsub.f32 %v618, %v1544
      %v1623 = vsub.f32 %v623, %v1547
      %v1624 = vsub.f32 %v699, %v1550
      %v1625 = vsub.f32 %v704, %v1553
      %v1626 = vsub.f32 %v780, %v1556
      %v1627 = vsub.f32 %v785, %v1559
      %v1628 = vsub.f32 %v861, %v1562
      %v1629 = vsub.f32 %v866, %v1565
      %v1630 = vsub.f32 %v942, %v1568
      %v1631 = vsub.f32 %v947, %v1571
      %v1632 = vsub.f32 %v1023, %v1574
      %v1633 = vsub.f32 %v1028, %v1577
      %v1634 = vsub.f32 %v1104, %v1580
      %v1635 = vsub.f32 %v1109, %v1583
      %v1636 = vsub.f32 %v1185, %v1586
      %v1637 = vsub.f32 %v1190, %v1589
      %v1638 = vsub.f32 %v1266, %v1592
      %v1639 = vsub.f32 %v1271, %v1595
      %v1640 = vsub.f32 %v1347, %v1598
      %v1641 = vsub.f32 %v1352, %v1601
      %v1642 = vsub.f32 %v1428, %v1604
      %v1643 = vsub.f32 %v1433, %v1607
      %v1644 = vsub.f32 %v1509, %v1610
      %v1645 = vsub.f32 %v1514, %v1613
      %v1646 = vmul.f32 %v1614, 1.442695
      %v1647 = vpow.pop %v1646
      %v1648 = vmul.f32 %v1615, 1.442695
      %v1649 = vpow.pop %v1648
      %v1650 = vmul.f32 %v1616, 1.442695
      %v1651 = vpow.pop %v1650
      %v1652 = vmul.f32 %v1617, 1.442695
      %v1653 = vpow.pop %v1652
      %v1654 = vmul.f32 %v1618, 1.442695
      %v1655 = vpow.pop %v1654
      %v1656 = vmul.f32 %v1619, 1.442695
      %v1657 = vpow.pop %v1656
      %v1658 = vmul.f32 %v1620, 1.442695
      %v1659 = vpow.pop %v1658
      %v1660 = vmul.f32 %v1621, 1.442695
      %v1661 = vpow.pop %v1660
      %v1662 = vmul.f32 %v1622, 1.442695
      %v1663 = vpow.pop %v1662
      %v1664 = vmul.f32 %v1623, 1.442695
      %v1665 = vpow.pop %v1664
      %v1666 = vmul.f32 %v1624, 1.442695
      %v1667 = vpow.pop %v1666
      %v1668 = vmul.f32 %v1625, 1.442695
      %v1669 = vpow.pop %v1668
      %v1670 = vmul.f32 %v1626, 1.442695
      %v1671 = vpow.pop %v1670
      %v1672 = vmul.f32 %v1627, 1.442695
      %v1673 = vpow.pop %v1672
      %v1674 = vmul.f32 %v1628, 1.442695
      %v1675 = vpow.pop %v1674
      %v1676 = vmul.f32 %v1629, 1.442695
      %v1677 = vpow.pop %v1676
      %v1678 = vmul.f32 %v1630, 1.442695
      %v1679 = vpow.pop %v1678
      %v1680 = vmul.f32 %v1631, 1.442695
      %v1681 = vpow.pop %v1680
      %v1682 = vmul.f32 %v1632, 1.442695
      %v1683 = vpow.pop %v1682
      %v1684 = vmul.f32 %v1633, 1.442695
      %v1685 = vpow.pop %v1684
      %v1686 = vmul.f32 %v1634, 1.442695
      %v1687 = vpow.pop %v1686
      %v1688 = vmul.f32 %v1635, 1.442695
      %v1689 = vpow.pop %v1688
      %v1690 = vmul.f32 %v1636, 1.442695
      %v1691 = vpow.pop %v1690
      %v1692 = vmul.f32 %v1637, 1.442695
      %v1693 = vpow.pop %v1692
      %v1694 = vmul.f32 %v1638, 1.442695
      %v1695 = vpow.pop %v1694
      %v1696 = vmul.f32 %v1639, 1.442695
      %v1697 = vpow.pop %v1696
      %v1698 = vmul.f32 %v1640, 1.442695
      %v1699 = vpow.pop %v1698
      %v1700 = vmul.f32 %v1641, 1.442695
      %v1701 = vpow.pop %v1700
      %v1702 = vmul.f32 %v1642, 1.442695
      %v1703 = vpow.pop %v1702
      %v1704 = vmul.f32 %v1643, 1.442695
      %v1705 = vpow.pop %v1704
      %v1706 = vmul.f32 %v1644, 1.442695
      %v1707 = vpow.pop %v1706
      %v1708 = vmul.f32 %v1645, 1.442695
      %v1709 = vpow.pop %v1708
      %v1710 = vsel %vm1517, %v1647, 0.0
      %1711 = vadd.xlane.f32.xlu0 %v1710
      %v1712 = vpop.xlane.xlu0 %1711
      %v1713 = vsel %vm1517, %v1649, 0.0
      %1714 = vadd.xlane.f32.xlu0 %v1713
      %v1715 = vpop.xlane.xlu0 %1714
      %v1716 = vsel %vm1517, %v1651, 0.0
      %1717 = vadd.xlane.f32.xlu0 %v1716
      %v1718 = vpop.xlane.xlu0 %1717
      %v1719 = vsel %vm1517, %v1653, 0.0
      %1720 = vadd.xlane.f32.xlu0 %v1719
      %v1721 = vpop.xlane.xlu0 %1720
      %v1722 = vsel %vm1517, %v1655, 0.0
      %1723 = vadd.xlane.f32.xlu0 %v1722
      %v1724 = vpop.xlane.xlu0 %1723
      %v1725 = vsel %vm1517, %v1657, 0.0
      %1726 = vadd.xlane.f32.xlu0 %v1725
      %v1727 = vpop.xlane.xlu0 %1726
      %v1728 = vsel %vm1517, %v1659, 0.0
      %1729 = vadd.xlane.f32.xlu0 %v1728
      %v1730 = vpop.xlane.xlu0 %1729
      %v1731 = vsel %vm1517, %v1661, 0.0
      %1732 = vadd.xlane.f32.xlu0 %v1731
      %v1733 = vpop.xlane.xlu0 %1732
      %v1734 = vsel %vm1517, %v1663, 0.0
      %1735 = vadd.xlane.f32.xlu0 %v1734
      %v1736 = vpop.xlane.xlu0 %1735
      %v1737 = vsel %vm1517, %v1665, 0.0
      %1738 = vadd.xlane.f32.xlu0 %v1737
      %v1739 = vpop.xlane.xlu0 %1738
      %v1740 = vsel %vm1517, %v1667, 0.0
      %1741 = vadd.xlane.f32.xlu0 %v1740
      %v1742 = vpop.xlane.xlu0 %1741
      %v1743 = vsel %vm1517, %v1669, 0.0
      %1744 = vadd.xlane.f32.xlu0 %v1743
      %v1745 = vpop.xlane.xlu0 %1744
      %v1746 = vsel %vm1517, %v1671, 0.0
      %1747 = vadd.xlane.f32.xlu0 %v1746
      %v1748 = vpop.xlane.xlu0 %1747
      %v1749 = vsel %vm1517, %v1673, 0.0
      %1750 = vadd.xlane.f32.xlu0 %v1749
      %v1751 = vpop.xlane.xlu0 %1750
      %v1752 = vsel %vm1517, %v1675, 0.0
      %1753 = vadd.xlane.f32.xlu0 %v1752
      %v1754 = vpop.xlane.xlu0 %1753
      %v1755 = vsel %vm1517, %v1677, 0.0
      %1756 = vadd.xlane.f32.xlu0 %v1755
      %v1757 = vpop.xlane.xlu0 %1756
      %v1758 = vsel %vm1517, %v1679, 0.0
      %1759 = vadd.xlane.f32.xlu0 %v1758
      %v1760 = vpop.xlane.xlu0 %1759
      %v1761 = vsel %vm1517, %v1681, 0.0
      %1762 = vadd.xlane.f32.xlu0 %v1761
      %v1763 = vpop.xlane.xlu0 %1762
      %v1764 = vsel %vm1517, %v1683, 0.0
      %1765 = vadd.xlane.f32.xlu0 %v1764
      %v1766 = vpop.xlane.xlu0 %1765
      %v1767 = vsel %vm1517, %v1685, 0.0
      %1768 = vadd.xlane.f32.xlu0 %v1767
      %v1769 = vpop.xlane.xlu0 %1768
      %v1770 = vsel %vm1517, %v1687, 0.0
      %1771 = vadd.xlane.f32.xlu0 %v1770
      %v1772 = vpop.xlane.xlu0 %1771
      %v1773 = vsel %vm1517, %v1689, 0.0
      %1774 = vadd.xlane.f32.xlu0 %v1773
      %v1775 = vpop.xlane.xlu0 %1774
      %v1776 = vsel %vm1517, %v1691, 0.0
      %1777 = vadd.xlane.f32.xlu0 %v1776
      %v1778 = vpop.xlane.xlu0 %1777
      %v1779 = vsel %vm1517, %v1693, 0.0
      %1780 = vadd.xlane.f32.xlu0 %v1779
      %v1781 = vpop.xlane.xlu0 %1780
      %v1782 = vsel %vm1517, %v1695, 0.0
      %1783 = vadd.xlane.f32.xlu0 %v1782
      %v1784 = vpop.xlane.xlu0 %1783
      %v1785 = vsel %vm1517, %v1697, 0.0
      %1786 = vadd.xlane.f32.xlu0 %v1785
      %v1787 = vpop.xlane.xlu0 %1786
      %v1788 = vsel %vm1517, %v1699, 0.0
      %1789 = vadd.xlane.f32.xlu0 %v1788
      %v1790 = vpop.xlane.xlu0 %1789
      %v1791 = vsel %vm1517, %v1701, 0.0
      %1792 = vadd.xlane.f32.xlu0 %v1791
      %v1793 = vpop.xlane.xlu0 %1792
      %v1794 = vsel %vm1517, %v1703, 0.0
      %1795 = vadd.xlane.f32.xlu0 %v1794
      %v1796 = vpop.xlane.xlu0 %1795
      %v1797 = vsel %vm1517, %v1705, 0.0
      %1798 = vadd.xlane.f32.xlu0 %v1797
      %v1799 = vpop.xlane.xlu0 %1798
      %v1800 = vsel %vm1517, %v1707, 0.0
      %1801 = vadd.xlane.f32.xlu0 %v1800
      %v1802 = vpop.xlane.xlu0 %1801
      %v1803 = vsel %vm1517, %v1709, 0.0
      %1804 = vadd.xlane.f32.xlu0 %v1803
      %v1805 = vpop.xlane.xlu0 %1804
      %v1806 = vrcp.pop %v1712
      %v1807 = vrcp.pop %v1715
      %v1808 = vrcp.pop %v1718
      %v1809 = vrcp.pop %v1721
      %v1810 = vrcp.pop %v1724
      %v1811 = vrcp.pop %v1727
      %v1812 = vrcp.pop %v1730
      %v1813 = vrcp.pop %v1733
      %v1814 = vrcp.pop %v1736
      %v1815 = vrcp.pop %v1739
      %v1816 = vrcp.pop %v1742
      %v1817 = vrcp.pop %v1745
      %v1818 = vrcp.pop %v1748
      %v1819 = vrcp.pop %v1751
      %v1820 = vrcp.pop %v1754
      %v1821 = vrcp.pop %v1757
      %v1822 = vrcp.pop %v1760
      %v1823 = vrcp.pop %v1763
      %v1824 = vrcp.pop %v1766
      %v1825 = vrcp.pop %v1769
      %v1826 = vrcp.pop %v1772
      %v1827 = vrcp.pop %v1775
      %v1828 = vrcp.pop %v1778
      %v1829 = vrcp.pop %v1781
      %v1830 = vrcp.pop %v1784
      %v1831 = vrcp.pop %v1787
      %v1832 = vrcp.pop %v1790
      %v1833 = vrcp.pop %v1793
      %v1834 = vrcp.pop %v1796
      %v1835 = vrcp.pop %v1799
      %v1836 = vrcp.pop %v1802
      %v1837 = vrcp.pop %v1805
      %v1838 = vmul.f32 %v1647, %v1806
      %v1839 = vmul.f32 %v1649, %v1807
      %v1840 = vmul.f32 %v1651, %v1808
      %v1841 = vmul.f32 %v1653, %v1809
      %v1842 = vmul.f32 %v1655, %v1810
      %v1843 = vmul.f32 %v1657, %v1811
      %v1844 = vmul.f32 %v1659, %v1812
      %v1845 = vmul.f32 %v1661, %v1813
      %v1846 = vmul.f32 %v1663, %v1814
      %v1847 = vmul.f32 %v1665, %v1815
      %v1848 = vmul.f32 %v1667, %v1816
      %v1849 = vmul.f32 %v1669, %v1817
      %v1850 = vmul.f32 %v1671, %v1818
      %v1851 = vmul.f32 %v1673, %v1819
      %v1852 = vmul.f32 %v1675, %v1820
      %v1853 = vmul.f32 %v1677, %v1821
      %v1854 = vmul.f32 %v1679, %v1822
      %v1855 = vmul.f32 %v1681, %v1823
      %v1856 = vmul.f32 %v1683, %v1824
      %v1857 = vmul.f32 %v1685, %v1825
      %v1858 = vmul.f32 %v1687, %v1826
      %v1859 = vmul.f32 %v1689, %v1827
      %v1860 = vmul.f32 %v1691, %v1828
      %v1861 = vmul.f32 %v1693, %v1829
      %v1862 = vmul.f32 %v1695, %v1830
      %v1863 = vmul.f32 %v1697, %v1831
      %v1864 = vmul.f32 %v1699, %v1832
      %v1865 = vmul.f32 %v1701, %v1833
      %v1866 = vmul.f32 %v1703, %v1834
      %v1867 = vmul.f32 %v1705, %v1835
      %v1868 = vmul.f32 %v1707, %v1836
      %v1869 = vmul.f32 %v1709, %v1837
      %v1871 = vsel %vm1517, %v204, 0
      %v1874 = vsel %vm1517, %v1838, 0
      %v1877 = vsel %vm1517, %v1839, 0
      %1879 = vmatprep.subr.mxu0 0.0
      %1880 = vmatpush1.xpose.msra.mxu0 0.0
      %1881 = vmatprep.subr.mxu0 0.0
      %1882 = vmatpush1.xpose.msra.mxu0 0.0
      %1883 = vmatprep.subr.mxu0 0.0
      %1884 = vmatpush1.xpose.msra.mxu0 0.0
      %1885 = vmatprep.subr.mxu0 0.0
      %1886 = vmatpush1.xpose.msra.mxu0 0.0
      %1887 = vmatprep.subr.mxu0 0.0
      %1888 = vmatpush1.xpose.msra.mxu0 0.0
      %1889 = vmatprep.subr.mxu0 0.0
      %1890 = vmatpush1.xpose.msra.mxu0 0.0
      %1891 = vmatprep.subr.mxu0 0.0
      %1892 = vmatpush1.xpose.msra.mxu0 0.0
      %1893 = vmatprep.subr.mxu0 0.0
      %1894 = vmatpush1.xpose.msra.mxu0 0.0
      %1895 = vmatprep.subr.mxu0 0.0
      %1896 = vmatpush1.xpose.msra.mxu0 0.0
      %1897 = vmatprep.subr.mxu0 0.0
      %1898 = vmatpush1.xpose.msra.mxu0 0.0
      %1899 = vmatprep.subr.mxu0 0.0
      %1900 = vmatpush1.xpose.msra.mxu0 0.0
      %1901 = vmatprep.subr.mxu0 0.0
      %1902 = vmatpush1.xpose.msra.mxu0 0.0
      %1903 = vmatprep.subr.mxu0 0.0
      %1904 = vmatpush1.xpose.msra.mxu0 0.0
      %1905 = vmatprep.subr.mxu0 0.0
      %1906 = vmatpush1.xpose.msra.mxu0 0.0
      %1907 = vmatprep.subr.mxu0 0.0
      %1908 = vmatpush1.xpose.msra.mxu0 %v1877
      %1909 = vmatprep.subr.mxu0 0.0
      %1910 = vmatpush1.xpose.msra.mxu0 %v1874
      %1911 = vmatprep.subr.mxu0 0.0
      %1912 = vmatpush2.xpose.msra.mxu0 0.0
      %1913 = vmatprep.subr.mxu0 0.0
      %1914 = vmatpush2.xpose.msra.mxu0 0.0
      %1915 = vmatprep.subr.mxu0 0.0
      %1916 = vmatpush2.xpose.msra.mxu0 0.0
      %1917 = vmatprep.subr.mxu0 0.0
      %1918 = vmatpush2.xpose.msra.mxu0 0.0
      %1919 = vmatprep.subr.mxu0 0.0
      %1920 = vmatpush2.xpose.msra.mxu0 0.0
      %1921 = vmatprep.subr.mxu0 0.0
      %1922 = vmatpush2.xpose.msra.mxu0 0.0
      %1923 = vmatprep.subr.mxu0 0.0
      %1924 = vmatpush2.xpose.msra.mxu0 0.0
      %1925 = vmatprep.subr.mxu0 0.0
      %1926 = vmatpush2.xpose.msra.mxu0 0.0
      %1927 = vmatprep.subr.mxu0 0.0
      %1928 = vmatpush2.xpose.msra.mxu0 0.0
      %1929 = vmatprep.subr.mxu0 0.0
      %1930 = vmatpush2.xpose.msra.mxu0 0.0
      %1931 = vmatprep.subr.mxu0 0.0
      %1932 = vmatpush2.xpose.msra.mxu0 0.0
      %1933 = vmatprep.subr.mxu0 0.0
      %1934 = vmatpush2.xpose.msra.mxu0 0.0
      %1935 = vmatprep.subr.mxu0 0.0
      %1936 = vmatpush2.xpose.msra.mxu0 0.0
      %1937 = vmatprep.subr.mxu0 0.0
      %1938 = vmatpush2.xpose.msra.mxu0 0.0
      %1939 = vmatprep.subr.mxu0 0.0
      %1940 = vmatpush2.xpose.msra.mxu0 0.0
      %1941 = vmatprep.subr.mxu0 0.0
      %1942 = vmatpush2.xpose.msra.mxu0 0.0
      %1943 = vmatprep.mubr.f32.mxu0 0.0
      %1944 = vmatmul.mubr.f32.gmra.mxu0 %v1871
      %v1945 = vpop.f32.mrf.mxu0
      %v1946 = vadd.f32 0.0, %v1945
      %v1947 = vpop.f32.mrf.mxu0
      %1948 = vdwg.mxu0
      %v1950 = vsel %vm1517, %v205, 0
      %v1953 = vsel %vm1517, %v1840, 0
      %v1956 = vsel %vm1517, %v1841, 0
      %1958 = vmatprep.subr.mxu0 0.0
      %1959 = vmatpush1.xpose.msra.mxu0 0.0
      %1960 = vmatprep.subr.mxu0 0.0
      %1961 = vmatpush1.xpose.msra.mxu0 0.0
      %1962 = vmatprep.subr.mxu0 0.0
      %1963 = vmatpush1.xpose.msra.mxu0 0.0
      %1964 = vmatprep.subr.mxu0 0.0
      %1965 = vmatpush1.xpose.msra.mxu0 0.0
      %1966 = vmatprep.subr.mxu0 0.0
      %1967 = vmatpush1.xpose.msra.mxu0 0.0
      %1968 = vmatprep.subr.mxu0 0.0
      %1969 = vmatpush1.xpose.msra.mxu0 0.0
      %1970 = vmatprep.subr.mxu0 0.0
      %1971 = vmatpush1.xpose.msra.mxu0 0.0
      %1972 = vmatprep.subr.mxu0 0.0
      %1973 = vmatpush1.xpose.msra.mxu0 0.0
      %1974 = vmatprep.subr.mxu0 0.0
      %1975 = vmatpush1.xpose.msra.mxu0 0.0
      %1976 = vmatprep.subr.mxu0 0.0
      %1977 = vmatpush1.xpose.msra.mxu0 0.0
      %1978 = vmatprep.subr.mxu0 0.0
      %1979 = vmatpush1.xpose.msra.mxu0 0.0
      %1980 = vmatprep.subr.mxu0 0.0
      %1981 = vmatpush1.xpose.msra.mxu0 0.0
      %1982 = vmatprep.subr.mxu0 0.0
      %1983 = vmatpush1.xpose.msra.mxu0 0.0
      %1984 = vmatprep.subr.mxu0 0.0
      %1985 = vmatpush1.xpose.msra.mxu0 0.0
      %1986 = vmatprep.subr.mxu0 0.0
      %1987 = vmatpush1.xpose.msra.mxu0 %v1956
      %1988 = vmatprep.subr.mxu0 0.0
      %1989 = vmatpush1.xpose.msra.mxu0 %v1953
      %1990 = vmatprep.subr.mxu0 0.0
      %1991 = vmatpush2.xpose.msra.mxu0 0.0
      %1992 = vmatprep.subr.mxu0 0.0
      %1993 = vmatpush2.xpose.msra.mxu0 0.0
      %1994 = vmatprep.subr.mxu0 0.0
      %1995 = vmatpush2.xpose.msra.mxu0 0.0
      %1996 = vmatprep.subr.mxu0 0.0
      %1997 = vmatpush2.xpose.msra.mxu0 0.0
      %1998 = vmatprep.subr.mxu0 0.0
      %1999 = vmatpush2.xpose.msra.mxu0 0.0
      %2000 = vmatprep.subr.mxu0 0.0
      %2001 = vmatpush2.xpose.msra.mxu0 0.0
      %2002 = vmatprep.subr.mxu0 0.0
      %2003 = vmatpush2.xpose.msra.mxu0 0.0
      %2004 = vmatprep.subr.mxu0 0.0
      %2005 = vmatpush2.xpose.msra.mxu0 0.0
      %2006 = vmatprep.subr.mxu0 0.0
      %2007 = vmatpush2.xpose.msra.mxu0 0.0
      %2008 = vmatprep.subr.mxu0 0.0
      %2009 = vmatpush2.xpose.msra.mxu0 0.0
      %2010 = vmatprep.subr.mxu0 0.0
      %2011 = vmatpush2.xpose.msra.mxu0 0.0
      %2012 = vmatprep.subr.mxu0 0.0
      %2013 = vmatpush2.xpose.msra.mxu0 0.0
      %2014 = vmatprep.subr.mxu0 0.0
      %2015 = vmatpush2.xpose.msra.mxu0 0.0
      %2016 = vmatprep.subr.mxu0 0.0
      %2017 = vmatpush2.xpose.msra.mxu0 0.0
      %2018 = vmatprep.subr.mxu0 0.0
      %2019 = vmatpush2.xpose.msra.mxu0 0.0
      %2020 = vmatprep.subr.mxu0 0.0
      %2021 = vmatpush2.xpose.msra.mxu0 0.0
      %2022 = vmatprep.mubr.f32.mxu0 0.0
      %2023 = vmatmul.mubr.f32.gmra.mxu0 %v1950
      %v2024 = vpop.f32.mrf.mxu0
      %v2025 = vadd.f32 0.0, %v2024
      %v2026 = vpop.f32.mrf.mxu0
      %2027 = vdwg.mxu0
      %v2029 = vsel %vm1517, %v206, 0
      %v2032 = vsel %vm1517, %v1842, 0
      %v2035 = vsel %vm1517, %v1843, 0
      %2037 = vmatprep.subr.mxu0 0.0
      %2038 = vmatpush1.xpose.msra.mxu0 0.0
      %2039 = vmatprep.subr.mxu0 0.0
      %2040 = vmatpush1.xpose.msra.mxu0 0.0
      %2041 = vmatprep.subr.mxu0 0.0
      %2042 = vmatpush1.xpose.msra.mxu0 0.0
      %2043 = vmatprep.subr.mxu0 0.0
      %2044 = vmatpush1.xpose.msra.mxu0 0.0
      %2045 = vmatprep.subr.mxu0 0.0
      %2046 = vmatpush1.xpose.msra.mxu0 0.0
      %2047 = vmatprep.subr.mxu0 0.0
      %2048 = vmatpush1.xpose.msra.mxu0 0.0
      %2049 = vmatprep.subr.mxu0 0.0
      %2050 = vmatpush1.xpose.msra.mxu0 0.0
      %2051 = vmatprep.subr.mxu0 0.0
      %2052 = vmatpush1.xpose.msra.mxu0 0.0
      %2053 = vmatprep.subr.mxu0 0.0
      %2054 = vmatpush1.xpose.msra.mxu0 0.0
      %2055 = vmatprep.subr.mxu0 0.0
      %2056 = vmatpush1.xpose.msra.mxu0 0.0
      %2057 = vmatprep.subr.mxu0 0.0
      %2058 = vmatpush1.xpose.msra.mxu0 0.0
      %2059 = vmatprep.subr.mxu0 0.0
      %2060 = vmatpush1.xpose.msra.mxu0 0.0
      %2061 = vmatprep.subr.mxu0 0.0
      %2062 = vmatpush1.xpose.msra.mxu0 0.0
      %2063 = vmatprep.subr.mxu0 0.0
      %2064 = vmatpush1.xpose.msra.mxu0 0.0
      %2065 = vmatprep.subr.mxu0 0.0
      %2066 = vmatpush1.xpose.msra.mxu0 %v2035
      %2067 = vmatprep.subr.mxu0 0.0
      %2068 = vmatpush1.xpose.msra.mxu0 %v2032
      %2069 = vmatprep.subr.mxu0 0.0
      %2070 = vmatpush2.xpose.msra.mxu0 0.0
      %2071 = vmatprep.subr.mxu0 0.0
      %2072 = vmatpush2.xpose.msra.mxu0 0.0
      %2073 = vmatprep.subr.mxu0 0.0
      %2074 = vmatpush2.xpose.msra.mxu0 0.0
      %2075 = vmatprep.subr.mxu0 0.0
      %2076 = vmatpush2.xpose.msra.mxu0 0.0
      %2077 = vmatprep.subr.mxu0 0.0
      %2078 = vmatpush2.xpose.msra.mxu0 0.0
      %2079 = vmatprep.subr.mxu0 0.0
      %2080 = vmatpush2.xpose.msra.mxu0 0.0
      %2081 = vmatprep.subr.mxu0 0.0
      %2082 = vmatpush2.xpose.msra.mxu0 0.0
      %2083 = vmatprep.subr.mxu0 0.0
      %2084 = vmatpush2.xpose.msra.mxu0 0.0
      %2085 = vmatprep.subr.mxu0 0.0
      %2086 = vmatpush2.xpose.msra.mxu0 0.0
      %2087 = vmatprep.subr.mxu0 0.0
      %2088 = vmatpush2.xpose.msra.mxu0 0.0
      %2089 = vmatprep.subr.mxu0 0.0
      %2090 = vmatpush2.xpose.msra.mxu0 0.0
      %2091 = vmatprep.subr.mxu0 0.0
      %2092 = vmatpush2.xpose.msra.mxu0 0.0
      %2093 = vmatprep.subr.mxu0 0.0
      %2094 = vmatpush2.xpose.msra.mxu0 0.0
      %2095 = vmatprep.subr.mxu0 0.0
      %2096 = vmatpush2.xpose.msra.mxu0 0.0
      %2097 = vmatprep.subr.mxu0 0.0
      %2098 = vmatpush2.xpose.msra.mxu0 0.0
      %2099 = vmatprep.subr.mxu0 0.0
      %2100 = vmatpush2.xpose.msra.mxu0 0.0
      %2101 = vmatprep.mubr.f32.mxu0 0.0
      %2102 = vmatmul.mubr.f32.gmra.mxu0 %v2029
      %v2103 = vpop.f32.mrf.mxu0
      %v2104 = vadd.f32 0.0, %v2103
      %v2105 = vpop.f32.mrf.mxu0
      %2106 = vdwg.mxu0
      %v2108 = vsel %vm1517, %v207, 0
      %v2111 = vsel %vm1517, %v1844, 0
      %v2114 = vsel %vm1517, %v1845, 0
      %2116 = vmatprep.subr.mxu0 0.0
      %2117 = vmatpush1.xpose.msra.mxu0 0.0
      %2118 = vmatprep.subr.mxu0 0.0
      %2119 = vmatpush1.xpose.msra.mxu0 0.0
      %2120 = vmatprep.subr.mxu0 0.0
      %2121 = vmatpush1.xpose.msra.mxu0 0.0
      %2122 = vmatprep.subr.mxu0 0.0
      %2123 = vmatpush1.xpose.msra.mxu0 0.0
      %2124 = vmatprep.subr.mxu0 0.0
      %2125 = vmatpush1.xpose.msra.mxu0 0.0
      %2126 = vmatprep.subr.mxu0 0.0
      %2127 = vmatpush1.xpose.msra.mxu0 0.0
      %2128 = vmatprep.subr.mxu0 0.0
      %2129 = vmatpush1.xpose.msra.mxu0 0.0
      %2130 = vmatprep.subr.mxu0 0.0
      %2131 = vmatpush1.xpose.msra.mxu0 0.0
      %2132 = vmatprep.subr.mxu0 0.0
      %2133 = vmatpush1.xpose.msra.mxu0 0.0
      %2134 = vmatprep.subr.mxu0 0.0
      %2135 = vmatpush1.xpose.msra.mxu0 0.0
      %2136 = vmatprep.subr.mxu0 0.0
      %2137 = vmatpush1.xpose.msra.mxu0 0.0
      %2138 = vmatprep.subr.mxu0 0.0
      %2139 = vmatpush1.xpose.msra.mxu0 0.0
      %2140 = vmatprep.subr.mxu0 0.0
      %2141 = vmatpush1.xpose.msra.mxu0 0.0
      %2142 = vmatprep.subr.mxu0 0.0
      %2143 = vmatpush1.xpose.msra.mxu0 0.0
      %2144 = vmatprep.subr.mxu0 0.0
      %2145 = vmatpush1.xpose.msra.mxu0 %v2114
      %2146 = vmatprep.subr.mxu0 0.0
      %2147 = vmatpush1.xpose.msra.mxu0 %v2111
      %2148 = vmatprep.subr.mxu0 0.0
      %2149 = vmatpush2.xpose.msra.mxu0 0.0
      %2150 = vmatprep.subr.mxu0 0.0
      %2151 = vmatpush2.xpose.msra.mxu0 0.0
      %2152 = vmatprep.subr.mxu0 0.0
      %2153 = vmatpush2.xpose.msra.mxu0 0.0
      %2154 = vmatprep.subr.mxu0 0.0
      %2155 = vmatpush2.xpose.msra.mxu0 0.0
      %2156 = vmatprep.subr.mxu0 0.0
      %2157 = vmatpush2.xpose.msra.mxu0 0.0
      %2158 = vmatprep.subr.mxu0 0.0
      %2159 = vmatpush2.xpose.msra.mxu0 0.0
      %2160 = vmatprep.subr.mxu0 0.0
      %2161 = vmatpush2.xpose.msra.mxu0 0.0
      %2162 = vmatprep.subr.mxu0 0.0
      %2163 = vmatpush2.xpose.msra.mxu0 0.0
      %2164 = vmatprep.subr.mxu0 0.0
      %2165 = vmatpush2.xpose.msra.mxu0 0.0
      %2166 = vmatprep.subr.mxu0 0.0
      %2167 = vmatpush2.xpose.msra.mxu0 0.0
      %2168 = vmatprep.subr.mxu0 0.0
      %2169 = vmatpush2.xpose.msra.mxu0 0.0
      %2170 = vmatprep.subr.mxu0 0.0
      %2171 = vmatpush2.xpose.msra.mxu0 0.0
      %2172 = vmatprep.subr.mxu0 0.0
      %2173 = vmatpush2.xpose.msra.mxu0 0.0
      %2174 = vmatprep.subr.mxu0 0.0
      %2175 = vmatpush2.xpose.msra.mxu0 0.0
      %2176 = vmatprep.subr.mxu0 0.0
      %2177 = vmatpush2.xpose.msra.mxu0 0.0
      %2178 = vmatprep.subr.mxu0 0.0
      %2179 = vmatpush2.xpose.msra.mxu0 0.0
      %2180 = vmatprep.mubr.f32.mxu0 0.0
      %2181 = vmatmul.mubr.f32.gmra.mxu0 %v2108
      %v2182 = vpop.f32.mrf.mxu0
      %v2183 = vadd.f32 0.0, %v2182
      %v2184 = vpop.f32.mrf.mxu0
      %2185 = vdwg.mxu0
      %v2187 = vsel %vm1517, %v208, 0
      %v2190 = vsel %vm1517, %v1846, 0
      %v2193 = vsel %vm1517, %v1847, 0
      %2195 = vmatprep.subr.mxu0 0.0
      %2196 = vmatpush1.xpose.msra.mxu0 0.0
      %2197 = vmatprep.subr.mxu0 0.0
      %2198 = vmatpush1.xpose.msra.mxu0 0.0
      %2199 = vmatprep.subr.mxu0 0.0
      %2200 = vmatpush1.xpose.msra.mxu0 0.0
      %2201 = vmatprep.subr.mxu0 0.0
      %2202 = vmatpush1.xpose.msra.mxu0 0.0
      %2203 = vmatprep.subr.mxu0 0.0
      %2204 = vmatpush1.xpose.msra.mxu0 0.0
      %2205 = vmatprep.subr.mxu0 0.0
      %2206 = vmatpush1.xpose.msra.mxu0 0.0
      %2207 = vmatprep.subr.mxu0 0.0
      %2208 = vmatpush1.xpose.msra.mxu0 0.0
      %2209 = vmatprep.subr.mxu0 0.0
      %2210 = vmatpush1.xpose.msra.mxu0 0.0
      %2211 = vmatprep.subr.mxu0 0.0
      %2212 = vmatpush1.xpose.msra.mxu0 0.0
      %2213 = vmatprep.subr.mxu0 0.0
      %2214 = vmatpush1.xpose.msra.mxu0 0.0
      %2215 = vmatprep.subr.mxu0 0.0
      %2216 = vmatpush1.xpose.msra.mxu0 0.0
      %2217 = vmatprep.subr.mxu0 0.0
      %2218 = vmatpush1.xpose.msra.mxu0 0.0
      %2219 = vmatprep.subr.mxu0 0.0
      %2220 = vmatpush1.xpose.msra.mxu0 0.0
      %2221 = vmatprep.subr.mxu0 0.0
      %2222 = vmatpush1.xpose.msra.mxu0 0.0
      %2223 = vmatprep.subr.mxu0 0.0
      %2224 = vmatpush1.xpose.msra.mxu0 %v2193
      %2225 = vmatprep.subr.mxu0 0.0
      %2226 = vmatpush1.xpose.msra.mxu0 %v2190
      %2227 = vmatprep.subr.mxu0 0.0
      %2228 = vmatpush2.xpose.msra.mxu0 0.0
      %2229 = vmatprep.subr.mxu0 0.0
      %2230 = vmatpush2.xpose.msra.mxu0 0.0
      %2231 = vmatprep.subr.mxu0 0.0
      %2232 = vmatpush2.xpose.msra.mxu0 0.0
      %2233 = vmatprep.subr.mxu0 0.0
      %2234 = vmatpush2.xpose.msra.mxu0 0.0
      %2235 = vmatprep.subr.mxu0 0.0
      %2236 = vmatpush2.xpose.msra.mxu0 0.0
      %2237 = vmatprep.subr.mxu0 0.0
      %2238 = vmatpush2.xpose.msra.mxu0 0.0
      %2239 = vmatprep.subr.mxu0 0.0
      %2240 = vmatpush2.xpose.msra.mxu0 0.0
      %2241 = vmatprep.subr.mxu0 0.0
      %2242 = vmatpush2.xpose.msra.mxu0 0.0
      %2243 = vmatprep.subr.mxu0 0.0
      %2244 = vmatpush2.xpose.msra.mxu0 0.0
      %2245 = vmatprep.subr.mxu0 0.0
      %2246 = vmatpush2.xpose.msra.mxu0 0.0
      %2247 = vmatprep.subr.mxu0 0.0
      %2248 = vmatpush2.xpose.msra.mxu0 0.0
      %2249 = vmatprep.subr.mxu0 0.0
      %2250 = vmatpush2.xpose.msra.mxu0 0.0
      %2251 = vmatprep.subr.mxu0 0.0
      %2252 = vmatpush2.xpose.msra.mxu0 0.0
      %2253 = vmatprep.subr.mxu0 0.0
      %2254 = vmatpush2.xpose.msra.mxu0 0.0
      %2255 = vmatprep.subr.mxu0 0.0
      %2256 = vmatpush2.xpose.msra.mxu0 0.0
      %2257 = vmatprep.subr.mxu0 0.0
      %2258 = vmatpush2.xpose.msra.mxu0 0.0
      %2259 = vmatprep.mubr.f32.mxu0 0.0
      %2260 = vmatmul.mubr.f32.gmra.mxu0 %v2187
      %v2261 = vpop.f32.mrf.mxu0
      %v2262 = vadd.f32 0.0, %v2261
      %v2263 = vpop.f32.mrf.mxu0
      %2264 = vdwg.mxu0
      %v2266 = vsel %vm1517, %v209, 0
      %v2269 = vsel %vm1517, %v1848, 0
      %v2272 = vsel %vm1517, %v1849, 0
      %2274 = vmatprep.subr.mxu0 0.0
      %2275 = vmatpush1.xpose.msra.mxu0 0.0
      %2276 = vmatprep.subr.mxu0 0.0
      %2277 = vmatpush1.xpose.msra.mxu0 0.0
      %2278 = vmatprep.subr.mxu0 0.0
      %2279 = vmatpush1.xpose.msra.mxu0 0.0
      %2280 = vmatprep.subr.mxu0 0.0
      %2281 = vmatpush1.xpose.msra.mxu0 0.0
      %2282 = vmatprep.subr.mxu0 0.0
      %2283 = vmatpush1.xpose.msra.mxu0 0.0
      %2284 = vmatprep.subr.mxu0 0.0
      %2285 = vmatpush1.xpose.msra.mxu0 0.0
      %2286 = vmatprep.subr.mxu0 0.0
      %2287 = vmatpush1.xpose.msra.mxu0 0.0
      %2288 = vmatprep.subr.mxu0 0.0
      %2289 = vmatpush1.xpose.msra.mxu0 0.0
      %2290 = vmatprep.subr.mxu0 0.0
      %2291 = vmatpush1.xpose.msra.mxu0 0.0
      %2292 = vmatprep.subr.mxu0 0.0
      %2293 = vmatpush1.xpose.msra.mxu0 0.0
      %2294 = vmatprep.subr.mxu0 0.0
      %2295 = vmatpush1.xpose.msra.mxu0 0.0
      %2296 = vmatprep.subr.mxu0 0.0
      %2297 = vmatpush1.xpose.msra.mxu0 0.0
      %2298 = vmatprep.subr.mxu0 0.0
      %2299 = vmatpush1.xpose.msra.mxu0 0.0
      %2300 = vmatprep.subr.mxu0 0.0
      %2301 = vmatpush1.xpose.msra.mxu0 0.0
      %2302 = vmatprep.subr.mxu0 0.0
      %2303 = vmatpush1.xpose.msra.mxu0 %v2272
      %2304 = vmatprep.subr.mxu0 0.0
      %2305 = vmatpush1.xpose.msra.mxu0 %v2269
      %2306 = vmatprep.subr.mxu0 0.0
      %2307 = vmatpush2.xpose.msra.mxu0 0.0
      %2308 = vmatprep.subr.mxu0 0.0
      %2309 = vmatpush2.xpose.msra.mxu0 0.0
      %2310 = vmatprep.subr.mxu0 0.0
      %2311 = vmatpush2.xpose.msra.mxu0 0.0
      %2312 = vmatprep.subr.mxu0 0.0
      %2313 = vmatpush2.xpose.msra.mxu0 0.0
      %2314 = vmatprep.subr.mxu0 0.0
      %2315 = vmatpush2.xpose.msra.mxu0 0.0
      %2316 = vmatprep.subr.mxu0 0.0
      %2317 = vmatpush2.xpose.msra.mxu0 0.0
      %2318 = vmatprep.subr.mxu0 0.0
      %2319 = vmatpush2.xpose.msra.mxu0 0.0
      %2320 = vmatprep.subr.mxu0 0.0
      %2321 = vmatpush2.xpose.msra.mxu0 0.0
      %2322 = vmatprep.subr.mxu0 0.0
      %2323 = vmatpush2.xpose.msra.mxu0 0.0
      %2324 = vmatprep.subr.mxu0 0.0
      %2325 = vmatpush2.xpose.msra.mxu0 0.0
      %2326 = vmatprep.subr.mxu0 0.0
      %2327 = vmatpush2.xpose.msra.mxu0 0.0
      %2328 = vmatprep.subr.mxu0 0.0
      %2329 = vmatpush2.xpose.msra.mxu0 0.0
      %2330 = vmatprep.subr.mxu0 0.0
      %2331 = vmatpush2.xpose.msra.mxu0 0.0
      %2332 = vmatprep.subr.mxu0 0.0
      %2333 = vmatpush2.xpose.msra.mxu0 0.0
      %2334 = vmatprep.subr.mxu0 0.0
      %2335 = vmatpush2.xpose.msra.mxu0 0.0
      %2336 = vmatprep.subr.mxu0 0.0
      %2337 = vmatpush2.xpose.msra.mxu0 0.0
      %2338 = vmatprep.mubr.f32.mxu0 0.0
      %2339 = vmatmul.mubr.f32.gmra.mxu0 %v2266
      %v2340 = vpop.f32.mrf.mxu0
      %v2341 = vadd.f32 0.0, %v2340
      %v2342 = vpop.f32.mrf.mxu0
      %2343 = vdwg.mxu0
      %v2345 = vsel %vm1517, %v210, 0
      %v2348 = vsel %vm1517, %v1850, 0
      %v2351 = vsel %vm1517, %v1851, 0
      %2353 = vmatprep.subr.mxu0 0.0
      %2354 = vmatpush1.xpose.msra.mxu0 0.0
      %2355 = vmatprep.subr.mxu0 0.0
      %2356 = vmatpush1.xpose.msra.mxu0 0.0
      %2357 = vmatprep.subr.mxu0 0.0
      %2358 = vmatpush1.xpose.msra.mxu0 0.0
      %2359 = vmatprep.subr.mxu0 0.0
      %2360 = vmatpush1.xpose.msra.mxu0 0.0
      %2361 = vmatprep.subr.mxu0 0.0
      %2362 = vmatpush1.xpose.msra.mxu0 0.0
      %2363 = vmatprep.subr.mxu0 0.0
      %2364 = vmatpush1.xpose.msra.mxu0 0.0
      %2365 = vmatprep.subr.mxu0 0.0
      %2366 = vmatpush1.xpose.msra.mxu0 0.0
      %2367 = vmatprep.subr.mxu0 0.0
      %2368 = vmatpush1.xpose.msra.mxu0 0.0
      %2369 = vmatprep.subr.mxu0 0.0
      %2370 = vmatpush1.xpose.msra.mxu0 0.0
      %2371 = vmatprep.subr.mxu0 0.0
      %2372 = vmatpush1.xpose.msra.mxu0 0.0
      %2373 = vmatprep.subr.mxu0 0.0
      %2374 = vmatpush1.xpose.msra.mxu0 0.0
      %2375 = vmatprep.subr.mxu0 0.0
      %2376 = vmatpush1.xpose.msra.mxu0 0.0
      %2377 = vmatprep.subr.mxu0 0.0
      %2378 = vmatpush1.xpose.msra.mxu0 0.0
      %2379 = vmatprep.subr.mxu0 0.0
      %2380 = vmatpush1.xpose.msra.mxu0 0.0
      %2381 = vmatprep.subr.mxu0 0.0
      %2382 = vmatpush1.xpose.msra.mxu0 %v2351
      %2383 = vmatprep.subr.mxu0 0.0
      %2384 = vmatpush1.xpose.msra.mxu0 %v2348
      %2385 = vmatprep.subr.mxu0 0.0
      %2386 = vmatpush2.xpose.msra.mxu0 0.0
      %2387 = vmatprep.subr.mxu0 0.0
      %2388 = vmatpush2.xpose.msra.mxu0 0.0
      %2389 = vmatprep.subr.mxu0 0.0
      %2390 = vmatpush2.xpose.msra.mxu0 0.0
      %2391 = vmatprep.subr.mxu0 0.0
      %2392 = vmatpush2.xpose.msra.mxu0 0.0
      %2393 = vmatprep.subr.mxu0 0.0
      %2394 = vmatpush2.xpose.msra.mxu0 0.0
      %2395 = vmatprep.subr.mxu0 0.0
      %2396 = vmatpush2.xpose.msra.mxu0 0.0
      %2397 = vmatprep.subr.mxu0 0.0
      %2398 = vmatpush2.xpose.msra.mxu0 0.0
      %2399 = vmatprep.subr.mxu0 0.0
      %2400 = vmatpush2.xpose.msra.mxu0 0.0
      %2401 = vmatprep.subr.mxu0 0.0
      %2402 = vmatpush2.xpose.msra.mxu0 0.0
      %2403 = vmatprep.subr.mxu0 0.0
      %2404 = vmatpush2.xpose.msra.mxu0 0.0
      %2405 = vmatprep.subr.mxu0 0.0
      %2406 = vmatpush2.xpose.msra.mxu0 0.0
      %2407 = vmatprep.subr.mxu0 0.0
      %2408 = vmatpush2.xpose.msra.mxu0 0.0
      %2409 = vmatprep.subr.mxu0 0.0
      %2410 = vmatpush2.xpose.msra.mxu0 0.0
      %2411 = vmatprep.subr.mxu0 0.0
      %2412 = vmatpush2.xpose.msra.mxu0 0.0
      %2413 = vmatprep.subr.mxu0 0.0
      %2414 = vmatpush2.xpose.msra.mxu0 0.0
      %2415 = vmatprep.subr.mxu0 0.0
      %2416 = vmatpush2.xpose.msra.mxu0 0.0
      %2417 = vmatprep.mubr.f32.mxu0 0.0
      %2418 = vmatmul.mubr.f32.gmra.mxu0 %v2345
      %v2419 = vpop.f32.mrf.mxu0
      %v2420 = vadd.f32 0.0, %v2419
      %v2421 = vpop.f32.mrf.mxu0
      %2422 = vdwg.mxu0
      %v2424 = vsel %vm1517, %v211, 0
      %v2427 = vsel %vm1517, %v1852, 0
      %v2430 = vsel %vm1517, %v1853, 0
      %2432 = vmatprep.subr.mxu0 0.0
      %2433 = vmatpush1.xpose.msra.mxu0 0.0
      %2434 = vmatprep.subr.mxu0 0.0
      %2435 = vmatpush1.xpose.msra.mxu0 0.0
      %2436 = vmatprep.subr.mxu0 0.0
      %2437 = vmatpush1.xpose.msra.mxu0 0.0
      %2438 = vmatprep.subr.mxu0 0.0
      %2439 = vmatpush1.xpose.msra.mxu0 0.0
      %2440 = vmatprep.subr.mxu0 0.0
      %2441 = vmatpush1.xpose.msra.mxu0 0.0
      %2442 = vmatprep.subr.mxu0 0.0
      %2443 = vmatpush1.xpose.msra.mxu0 0.0
      %2444 = vmatprep.subr.mxu0 0.0
      %2445 = vmatpush1.xpose.msra.mxu0 0.0
      %2446 = vmatprep.subr.mxu0 0.0
      %2447 = vmatpush1.xpose.msra.mxu0 0.0
      %2448 = vmatprep.subr.mxu0 0.0
      %2449 = vmatpush1.xpose.msra.mxu0 0.0
      %2450 = vmatprep.subr.mxu0 0.0
      %2451 = vmatpush1.xpose.msra.mxu0 0.0
      %2452 = vmatprep.subr.mxu0 0.0
      %2453 = vmatpush1.xpose.msra.mxu0 0.0
      %2454 = vmatprep.subr.mxu0 0.0
      %2455 = vmatpush1.xpose.msra.mxu0 0.0
      %2456 = vmatprep.subr.mxu0 0.0
      %2457 = vmatpush1.xpose.msra.mxu0 0.0
      %2458 = vmatprep.subr.mxu0 0.0
      %2459 = vmatpush1.xpose.msra.mxu0 0.0
      %2460 = vmatprep.subr.mxu0 0.0
      %2461 = vmatpush1.xpose.msra.mxu0 %v2430
      %2462 = vmatprep.subr.mxu0 0.0
      %2463 = vmatpush1.xpose.msra.mxu0 %v2427
      %2464 = vmatprep.subr.mxu0 0.0
      %2465 = vmatpush2.xpose.msra.mxu0 0.0
      %2466 = vmatprep.subr.mxu0 0.0
      %2467 = vmatpush2.xpose.msra.mxu0 0.0
      %2468 = vmatprep.subr.mxu0 0.0
      %2469 = vmatpush2.xpose.msra.mxu0 0.0
      %2470 = vmatprep.subr.mxu0 0.0
      %2471 = vmatpush2.xpose.msra.mxu0 0.0
      %2472 = vmatprep.subr.mxu0 0.0
      %2473 = vmatpush2.xpose.msra.mxu0 0.0
      %2474 = vmatprep.subr.mxu0 0.0
      %2475 = vmatpush2.xpose.msra.mxu0 0.0
      %2476 = vmatprep.subr.mxu0 0.0
      %2477 = vmatpush2.xpose.msra.mxu0 0.0
      %2478 = vmatprep.subr.mxu0 0.0
      %2479 = vmatpush2.xpose.msra.mxu0 0.0
      %2480 = vmatprep.subr.mxu0 0.0
      %2481 = vmatpush2.xpose.msra.mxu0 0.0
      %2482 = vmatprep.subr.mxu0 0.0
      %2483 = vmatpush2.xpose.msra.mxu0 0.0
      %2484 = vmatprep.subr.mxu0 0.0
      %2485 = vmatpush2.xpose.msra.mxu0 0.0
      %2486 = vmatprep.subr.mxu0 0.0
      %2487 = vmatpush2.xpose.msra.mxu0 0.0
      %2488 = vmatprep.subr.mxu0 0.0
      %2489 = vmatpush2.xpose.msra.mxu0 0.0
      %2490 = vmatprep.subr.mxu0 0.0
      %2491 = vmatpush2.xpose.msra.mxu0 0.0
      %2492 = vmatprep.subr.mxu0 0.0
      %2493 = vmatpush2.xpose.msra.mxu0 0.0
      %2494 = vmatprep.subr.mxu0 0.0
      %2495 = vmatpush2.xpose.msra.mxu0 0.0
      %2496 = vmatprep.mubr.f32.mxu0 0.0
      %2497 = vmatmul.mubr.f32.gmra.mxu0 %v2424
      %v2498 = vpop.f32.mrf.mxu0
      %v2499 = vadd.f32 0.0, %v2498
      %v2500 = vpop.f32.mrf.mxu0
      %2501 = vdwg.mxu0
      %v2503 = vsel %vm1517, %v212, 0
      %v2506 = vsel %vm1517, %v1854, 0
      %v2509 = vsel %vm1517, %v1855, 0
      %2511 = vmatprep.subr.mxu0 0.0
      %2512 = vmatpush1.xpose.msra.mxu0 0.0
      %2513 = vmatprep.subr.mxu0 0.0
      %2514 = vmatpush1.xpose.msra.mxu0 0.0
      %2515 = vmatprep.subr.mxu0 0.0
      %2516 = vmatpush1.xpose.msra.mxu0 0.0
      %2517 = vmatprep.subr.mxu0 0.0
      %2518 = vmatpush1.xpose.msra.mxu0 0.0
      %2519 = vmatprep.subr.mxu0 0.0
      %2520 = vmatpush1.xpose.msra.mxu0 0.0
      %2521 = vmatprep.subr.mxu0 0.0
      %2522 = vmatpush1.xpose.msra.mxu0 0.0
      %2523 = vmatprep.subr.mxu0 0.0
      %2524 = vmatpush1.xpose.msra.mxu0 0.0
      %2525 = vmatprep.subr.mxu0 0.0
      %2526 = vmatpush1.xpose.msra.mxu0 0.0
      %2527 = vmatprep.subr.mxu0 0.0
      %2528 = vmatpush1.xpose.msra.mxu0 0.0
      %2529 = vmatprep.subr.mxu0 0.0
      %2530 = vmatpush1.xpose.msra.mxu0 0.0
      %2531 = vmatprep.subr.mxu0 0.0
      %2532 = vmatpush1.xpose.msra.mxu0 0.0
      %2533 = vmatprep.subr.mxu0 0.0
      %2534 = vmatpush1.xpose.msra.mxu0 0.0
      %2535 = vmatprep.subr.mxu0 0.0
      %2536 = vmatpush1.xpose.msra.mxu0 0.0
      %2537 = vmatprep.subr.mxu0 0.0
      %2538 = vmatpush1.xpose.msra.mxu0 0.0
      %2539 = vmatprep.subr.mxu0 0.0
      %2540 = vmatpush1.xpose.msra.mxu0 %v2509
      %2541 = vmatprep.subr.mxu0 0.0
      %2542 = vmatpush1.xpose.msra.mxu0 %v2506
      %2543 = vmatprep.subr.mxu0 0.0
      %2544 = vmatpush2.xpose.msra.mxu0 0.0
      %2545 = vmatprep.subr.mxu0 0.0
      %2546 = vmatpush2.xpose.msra.mxu0 0.0
      %2547 = vmatprep.subr.mxu0 0.0
      %2548 = vmatpush2.xpose.msra.mxu0 0.0
      %2549 = vmatprep.subr.mxu0 0.0
      %2550 = vmatpush2.xpose.msra.mxu0 0.0
      %2551 = vmatprep.subr.mxu0 0.0
      %2552 = vmatpush2.xpose.msra.mxu0 0.0
      %2553 = vmatprep.subr.mxu0 0.0
      %2554 = vmatpush2.xpose.msra.mxu0 0.0
      %2555 = vmatprep.subr.mxu0 0.0
      %2556 = vmatpush2.xpose.msra.mxu0 0.0
      %2557 = vmatprep.subr.mxu0 0.0
      %2558 = vmatpush2.xpose.msra.mxu0 0.0
      %2559 = vmatprep.subr.mxu0 0.0
      %2560 = vmatpush2.xpose.msra.mxu0 0.0
      %2561 = vmatprep.subr.mxu0 0.0
      %2562 = vmatpush2.xpose.msra.mxu0 0.0
      %2563 = vmatprep.subr.mxu0 0.0
      %2564 = vmatpush2.xpose.msra.mxu0 0.0
      %2565 = vmatprep.subr.mxu0 0.0
      %2566 = vmatpush2.xpose.msra.mxu0 0.0
      %2567 = vmatprep.subr.mxu0 0.0
      %2568 = vmatpush2.xpose.msra.mxu0 0.0
      %2569 = vmatprep.subr.mxu0 0.0
      %2570 = vmatpush2.xpose.msra.mxu0 0.0
      %2571 = vmatprep.subr.mxu0 0.0
      %2572 = vmatpush2.xpose.msra.mxu0 0.0
      %2573 = vmatprep.subr.mxu0 0.0
      %2574 = vmatpush2.xpose.msra.mxu0 0.0
      %2575 = vmatprep.mubr.f32.mxu0 0.0
      %2576 = vmatmul.mubr.f32.gmra.mxu0 %v2503
      %v2577 = vpop.f32.mrf.mxu0
      %v2578 = vadd.f32 0.0, %v2577
      %v2579 = vpop.f32.mrf.mxu0
      %2580 = vdwg.mxu0
      %v2582 = vsel %vm1517, %v213, 0
      %v2585 = vsel %vm1517, %v1856, 0
      %v2588 = vsel %vm1517, %v1857, 0
      %2590 = vmatprep.subr.mxu0 0.0
      %2591 = vmatpush1.xpose.msra.mxu0 0.0
      %2592 = vmatprep.subr.mxu0 0.0
      %2593 = vmatpush1.xpose.msra.mxu0 0.0
      %2594 = vmatprep.subr.mxu0 0.0
      %2595 = vmatpush1.xpose.msra.mxu0 0.0
      %2596 = vmatprep.subr.mxu0 0.0
      %2597 = vmatpush1.xpose.msra.mxu0 0.0
      %2598 = vmatprep.subr.mxu0 0.0
      %2599 = vmatpush1.xpose.msra.mxu0 0.0
      %2600 = vmatprep.subr.mxu0 0.0
      %2601 = vmatpush1.xpose.msra.mxu0 0.0
      %2602 = vmatprep.subr.mxu0 0.0
      %2603 = vmatpush1.xpose.msra.mxu0 0.0
      %2604 = vmatprep.subr.mxu0 0.0
      %2605 = vmatpush1.xpose.msra.mxu0 0.0
      %2606 = vmatprep.subr.mxu0 0.0
      %2607 = vmatpush1.xpose.msra.mxu0 0.0
      %2608 = vmatprep.subr.mxu0 0.0
      %2609 = vmatpush1.xpose.msra.mxu0 0.0
      %2610 = vmatprep.subr.mxu0 0.0
      %2611 = vmatpush1.xpose.msra.mxu0 0.0
      %2612 = vmatprep.subr.mxu0 0.0
      %2613 = vmatpush1.xpose.msra.mxu0 0.0
      %2614 = vmatprep.subr.mxu0 0.0
      %2615 = vmatpush1.xpose.msra.mxu0 0.0
      %2616 = vmatprep.subr.mxu0 0.0
      %2617 = vmatpush1.xpose.msra.mxu0 0.0
      %2618 = vmatprep.subr.mxu0 0.0
      %2619 = vmatpush1.xpose.msra.mxu0 %v2588
      %2620 = vmatprep.subr.mxu0 0.0
      %2621 = vmatpush1.xpose.msra.mxu0 %v2585
      %2622 = vmatprep.subr.mxu0 0.0
      %2623 = vmatpush2.xpose.msra.mxu0 0.0
      %2624 = vmatprep.subr.mxu0 0.0
      %2625 = vmatpush2.xpose.msra.mxu0 0.0
      %2626 = vmatprep.subr.mxu0 0.0
      %2627 = vmatpush2.xpose.msra.mxu0 0.0
      %2628 = vmatprep.subr.mxu0 0.0
      %2629 = vmatpush2.xpose.msra.mxu0 0.0
      %2630 = vmatprep.subr.mxu0 0.0
      %2631 = vmatpush2.xpose.msra.mxu0 0.0
      %2632 = vmatprep.subr.mxu0 0.0
      %2633 = vmatpush2.xpose.msra.mxu0 0.0
      %2634 = vmatprep.subr.mxu0 0.0
      %2635 = vmatpush2.xpose.msra.mxu0 0.0
      %2636 = vmatprep.subr.mxu0 0.0
      %2637 = vmatpush2.xpose.msra.mxu0 0.0
      %2638 = vmatprep.subr.mxu0 0.0
      %2639 = vmatpush2.xpose.msra.mxu0 0.0
      %2640 = vmatprep.subr.mxu0 0.0
      %2641 = vmatpush2.xpose.msra.mxu0 0.0
      %2642 = vmatprep.subr.mxu0 0.0
      %2643 = vmatpush2.xpose.msra.mxu0 0.0
      %2644 = vmatprep.subr.mxu0 0.0
      %2645 = vmatpush2.xpose.msra.mxu0 0.0
      %2646 = vmatprep.subr.mxu0 0.0
      %2647 = vmatpush2.xpose.msra.mxu0 0.0
      %2648 = vmatprep.subr.mxu0 0.0
      %2649 = vmatpush2.xpose.msra.mxu0 0.0
      %2650 = vmatprep.subr.mxu0 0.0
      %2651 = vmatpush2.xpose.msra.mxu0 0.0
      %2652 = vmatprep.subr.mxu0 0.0
      %2653 = vmatpush2.xpose.msra.mxu0 0.0
      %2654 = vmatprep.mubr.f32.mxu0 0.0
      %2655 = vmatmul.mubr.f32.gmra.mxu0 %v2582
      %v2656 = vpop.f32.mrf.mxu0
      %v2657 = vadd.f32 0.0, %v2656
      %v2658 = vpop.f32.mrf.mxu0
      %2659 = vdwg.mxu0
      %v2661 = vsel %vm1517, %v214, 0
      %v2664 = vsel %vm1517, %v1858, 0
      %v2667 = vsel %vm1517, %v1859, 0
      %2669 = vmatprep.subr.mxu0 0.0
      %2670 = vmatpush1.xpose.msra.mxu0 0.0
      %2671 = vmatprep.subr.mxu0 0.0
      %2672 = vmatpush1.xpose.msra.mxu0 0.0
      %2673 = vmatprep.subr.mxu0 0.0
      %2674 = vmatpush1.xpose.msra.mxu0 0.0
      %2675 = vmatprep.subr.mxu0 0.0
      %2676 = vmatpush1.xpose.msra.mxu0 0.0
      %2677 = vmatprep.subr.mxu0 0.0
      %2678 = vmatpush1.xpose.msra.mxu0 0.0
      %2679 = vmatprep.subr.mxu0 0.0
      %2680 = vmatpush1.xpose.msra.mxu0 0.0
      %2681 = vmatprep.subr.mxu0 0.0
      %2682 = vmatpush1.xpose.msra.mxu0 0.0
      %2683 = vmatprep.subr.mxu0 0.0
      %2684 = vmatpush1.xpose.msra.mxu0 0.0
      %2685 = vmatprep.subr.mxu0 0.0
      %2686 = vmatpush1.xpose.msra.mxu0 0.0
      %2687 = vmatprep.subr.mxu0 0.0
      %2688 = vmatpush1.xpose.msra.mxu0 0.0
      %2689 = vmatprep.subr.mxu0 0.0
      %2690 = vmatpush1.xpose.msra.mxu0 0.0
      %2691 = vmatprep.subr.mxu0 0.0
      %2692 = vmatpush1.xpose.msra.mxu0 0.0
      %2693 = vmatprep.subr.mxu0 0.0
      %2694 = vmatpush1.xpose.msra.mxu0 0.0
      %2695 = vmatprep.subr.mxu0 0.0
      %2696 = vmatpush1.xpose.msra.mxu0 0.0
      %2697 = vmatprep.subr.mxu0 0.0
      %2698 = vmatpush1.xpose.msra.mxu0 %v2667
      %2699 = vmatprep.subr.mxu0 0.0
      %2700 = vmatpush1.xpose.msra.mxu0 %v2664
      %2701 = vmatprep.subr.mxu0 0.0
      %2702 = vmatpush2.xpose.msra.mxu0 0.0
      %2703 = vmatprep.subr.mxu0 0.0
      %2704 = vmatpush2.xpose.msra.mxu0 0.0
      %2705 = vmatprep.subr.mxu0 0.0
      %2706 = vmatpush2.xpose.msra.mxu0 0.0
      %2707 = vmatprep.subr.mxu0 0.0
      %2708 = vmatpush2.xpose.msra.mxu0 0.0
      %2709 = vmatprep.subr.mxu0 0.0
      %2710 = vmatpush2.xpose.msra.mxu0 0.0
      %2711 = vmatprep.subr.mxu0 0.0
      %2712 = vmatpush2.xpose.msra.mxu0 0.0
      %2713 = vmatprep.subr.mxu0 0.0
      %2714 = vmatpush2.xpose.msra.mxu0 0.0
      %2715 = vmatprep.subr.mxu0 0.0
      %2716 = vmatpush2.xpose.msra.mxu0 0.0
      %2717 = vmatprep.subr.mxu0 0.0
      %2718 = vmatpush2.xpose.msra.mxu0 0.0
      %2719 = vmatprep.subr.mxu0 0.0
      %2720 = vmatpush2.xpose.msra.mxu0 0.0
      %2721 = vmatprep.subr.mxu0 0.0
      %2722 = vmatpush2.xpose.msra.mxu0 0.0
      %2723 = vmatprep.subr.mxu0 0.0
      %2724 = vmatpush2.xpose.msra.mxu0 0.0
      %2725 = vmatprep.subr.mxu0 0.0
      %2726 = vmatpush2.xpose.msra.mxu0 0.0
      %2727 = vmatprep.subr.mxu0 0.0
      %2728 = vmatpush2.xpose.msra.mxu0 0.0
      %2729 = vmatprep.subr.mxu0 0.0
      %2730 = vmatpush2.xpose.msra.mxu0 0.0
      %2731 = vmatprep.subr.mxu0 0.0
      %2732 = vmatpush2.xpose.msra.mxu0 0.0
      %2733 = vmatprep.mubr.f32.mxu0 0.0
      %2734 = vmatmul.mubr.f32.gmra.mxu0 %v2661
      %v2735 = vpop.f32.mrf.mxu0
      %v2736 = vadd.f32 0.0, %v2735
      %v2737 = vpop.f32.mrf.mxu0
      %2738 = vdwg.mxu0
      %v2740 = vsel %vm1517, %v215, 0
      %v2743 = vsel %vm1517, %v1860, 0
      %v2746 = vsel %vm1517, %v1861, 0
      %2748 = vmatprep.subr.mxu0 0.0
      %2749 = vmatpush1.xpose.msra.mxu0 0.0
      %2750 = vmatprep.subr.mxu0 0.0
      %2751 = vmatpush1.xpose.msra.mxu0 0.0
      %2752 = vmatprep.subr.mxu0 0.0
      %2753 = vmatpush1.xpose.msra.mxu0 0.0
      %2754 = vmatprep.subr.mxu0 0.0
      %2755 = vmatpush1.xpose.msra.mxu0 0.0
      %2756 = vmatprep.subr.mxu0 0.0
      %2757 = vmatpush1.xpose.msra.mxu0 0.0
      %2758 = vmatprep.subr.mxu0 0.0
      %2759 = vmatpush1.xpose.msra.mxu0 0.0
      %2760 = vmatprep.subr.mxu0 0.0
      %2761 = vmatpush1.xpose.msra.mxu0 0.0
      %2762 = vmatprep.subr.mxu0 0.0
      %2763 = vmatpush1.xpose.msra.mxu0 0.0
      %2764 = vmatprep.subr.mxu0 0.0
      %2765 = vmatpush1.xpose.msra.mxu0 0.0
      %2766 = vmatprep.subr.mxu0 0.0
      %2767 = vmatpush1.xpose.msra.mxu0 0.0
      %2768 = vmatprep.subr.mxu0 0.0
      %2769 = vmatpush1.xpose.msra.mxu0 0.0
      %2770 = vmatprep.subr.mxu0 0.0
      %2771 = vmatpush1.xpose.msra.mxu0 0.0
      %2772 = vmatprep.subr.mxu0 0.0
      %2773 = vmatpush1.xpose.msra.mxu0 0.0
      %2774 = vmatprep.subr.mxu0 0.0
      %2775 = vmatpush1.xpose.msra.mxu0 0.0
      %2776 = vmatprep.subr.mxu0 0.0
      %2777 = vmatpush1.xpose.msra.mxu0 %v2746
      %2778 = vmatprep.subr.mxu0 0.0
      %2779 = vmatpush1.xpose.msra.mxu0 %v2743
      %2780 = vmatprep.subr.mxu0 0.0
      %2781 = vmatpush2.xpose.msra.mxu0 0.0
      %2782 = vmatprep.subr.mxu0 0.0
      %2783 = vmatpush2.xpose.msra.mxu0 0.0
      %2784 = vmatprep.subr.mxu0 0.0
      %2785 = vmatpush2.xpose.msra.mxu0 0.0
      %2786 = vmatprep.subr.mxu0 0.0
      %2787 = vmatpush2.xpose.msra.mxu0 0.0
      %2788 = vmatprep.subr.mxu0 0.0
      %2789 = vmatpush2.xpose.msra.mxu0 0.0
      %2790 = vmatprep.subr.mxu0 0.0
      %2791 = vmatpush2.xpose.msra.mxu0 0.0
      %2792 = vmatprep.subr.mxu0 0.0
      %2793 = vmatpush2.xpose.msra.mxu0 0.0
      %2794 = vmatprep.subr.mxu0 0.0
      %2795 = vmatpush2.xpose.msra.mxu0 0.0
      %2796 = vmatprep.subr.mxu0 0.0
      %2797 = vmatpush2.xpose.msra.mxu0 0.0
      %2798 = vmatprep.subr.mxu0 0.0
      %2799 = vmatpush2.xpose.msra.mxu0 0.0
      %2800 = vmatprep.subr.mxu0 0.0
      %2801 = vmatpush2.xpose.msra.mxu0 0.0
      %2802 = vmatprep.subr.mxu0 0.0
      %2803 = vmatpush2.xpose.msra.mxu0 0.0
      %2804 = vmatprep.subr.mxu0 0.0
      %2805 = vmatpush2.xpose.msra.mxu0 0.0
      %2806 = vmatprep.subr.mxu0 0.0
      %2807 = vmatpush2.xpose.msra.mxu0 0.0
      %2808 = vmatprep.subr.mxu0 0.0
      %2809 = vmatpush2.xpose.msra.mxu0 0.0
      %2810 = vmatprep.subr.mxu0 0.0
      %2811 = vmatpush2.xpose.msra.mxu0 0.0
      %2812 = vmatprep.mubr.f32.mxu0 0.0
      %2813 = vmatmul.mubr.f32.gmra.mxu0 %v2740
      %v2814 = vpop.f32.mrf.mxu0
      %v2815 = vadd.f32 0.0, %v2814
      %v2816 = vpop.f32.mrf.mxu0
      %2817 = vdwg.mxu0
      %v2819 = vsel %vm1517, %v216, 0
      %v2822 = vsel %vm1517, %v1862, 0
      %v2825 = vsel %vm1517, %v1863, 0
      %2827 = vmatprep.subr.mxu0 0.0
      %2828 = vmatpush1.xpose.msra.mxu0 0.0
      %2829 = vmatprep.subr.mxu0 0.0
      %2830 = vmatpush1.xpose.msra.mxu0 0.0
      %2831 = vmatprep.subr.mxu0 0.0
      %2832 = vmatpush1.xpose.msra.mxu0 0.0
      %2833 = vmatprep.subr.mxu0 0.0
      %2834 = vmatpush1.xpose.msra.mxu0 0.0
      %2835 = vmatprep.subr.mxu0 0.0
      %2836 = vmatpush1.xpose.msra.mxu0 0.0
      %2837 = vmatprep.subr.mxu0 0.0
      %2838 = vmatpush1.xpose.msra.mxu0 0.0
      %2839 = vmatprep.subr.mxu0 0.0
      %2840 = vmatpush1.xpose.msra.mxu0 0.0
      %2841 = vmatprep.subr.mxu0 0.0
      %2842 = vmatpush1.xpose.msra.mxu0 0.0
      %2843 = vmatprep.subr.mxu0 0.0
      %2844 = vmatpush1.xpose.msra.mxu0 0.0
      %2845 = vmatprep.subr.mxu0 0.0
      %2846 = vmatpush1.xpose.msra.mxu0 0.0
      %2847 = vmatprep.subr.mxu0 0.0
      %2848 = vmatpush1.xpose.msra.mxu0 0.0
      %2849 = vmatprep.subr.mxu0 0.0
      %2850 = vmatpush1.xpose.msra.mxu0 0.0
      %2851 = vmatprep.subr.mxu0 0.0
      %2852 = vmatpush1.xpose.msra.mxu0 0.0
      %2853 = vmatprep.subr.mxu0 0.0
      %2854 = vmatpush1.xpose.msra.mxu0 0.0
      %2855 = vmatprep.subr.mxu0 0.0
      %2856 = vmatpush1.xpose.msra.mxu0 %v2825
      %2857 = vmatprep.subr.mxu0 0.0
      %2858 = vmatpush1.xpose.msra.mxu0 %v2822
      %2859 = vmatprep.subr.mxu0 0.0
      %2860 = vmatpush2.xpose.msra.mxu0 0.0
      %2861 = vmatprep.subr.mxu0 0.0
      %2862 = vmatpush2.xpose.msra.mxu0 0.0
      %2863 = vmatprep.subr.mxu0 0.0
      %2864 = vmatpush2.xpose.msra.mxu0 0.0
      %2865 = vmatprep.subr.mxu0 0.0
      %2866 = vmatpush2.xpose.msra.mxu0 0.0
      %2867 = vmatprep.subr.mxu0 0.0
      %2868 = vmatpush2.xpose.msra.mxu0 0.0
      %2869 = vmatprep.subr.mxu0 0.0
      %2870 = vmatpush2.xpose.msra.mxu0 0.0
      %2871 = vmatprep.subr.mxu0 0.0
      %2872 = vmatpush2.xpose.msra.mxu0 0.0
      %2873 = vmatprep.subr.mxu0 0.0
      %2874 = vmatpush2.xpose.msra.mxu0 0.0
      %2875 = vmatprep.subr.mxu0 0.0
      %2876 = vmatpush2.xpose.msra.mxu0 0.0
      %2877 = vmatprep.subr.mxu0 0.0
      %2878 = vmatpush2.xpose.msra.mxu0 0.0
      %2879 = vmatprep.subr.mxu0 0.0
      %2880 = vmatpush2.xpose.msra.mxu0 0.0
      %2881 = vmatprep.subr.mxu0 0.0
      %2882 = vmatpush2.xpose.msra.mxu0 0.0
      %2883 = vmatprep.subr.mxu0 0.0
      %2884 = vmatpush2.xpose.msra.mxu0 0.0
      %2885 = vmatprep.subr.mxu0 0.0
      %2886 = vmatpush2.xpose.msra.mxu0 0.0
      %2887 = vmatprep.subr.mxu0 0.0
      %2888 = vmatpush2.xpose.msra.mxu0 0.0
      %2889 = vmatprep.subr.mxu0 0.0
      %2890 = vmatpush2.xpose.msra.mxu0 0.0
      %2891 = vmatprep.mubr.f32.mxu0 0.0
      %2892 = vmatmul.mubr.f32.gmra.mxu0 %v2819
      %v2893 = vpop.f32.mrf.mxu0
      %v2894 = vadd.f32 0.0, %v2893
      %v2895 = vpop.f32.mrf.mxu0
      %2896 = vdwg.mxu0
      %v2898 = vsel %vm1517, %v217, 0
      %v2901 = vsel %vm1517, %v1864, 0
      %v2904 = vsel %vm1517, %v1865, 0
      %2906 = vmatprep.subr.mxu0 0.0
      %2907 = vmatpush1.xpose.msra.mxu0 0.0
      %2908 = vmatprep.subr.mxu0 0.0
      %2909 = vmatpush1.xpose.msra.mxu0 0.0
      %2910 = vmatprep.subr.mxu0 0.0
      %2911 = vmatpush1.xpose.msra.mxu0 0.0
      %2912 = vmatprep.subr.mxu0 0.0
      %2913 = vmatpush1.xpose.msra.mxu0 0.0
      %2914 = vmatprep.subr.mxu0 0.0
      %2915 = vmatpush1.xpose.msra.mxu0 0.0
      %2916 = vmatprep.subr.mxu0 0.0
      %2917 = vmatpush1.xpose.msra.mxu0 0.0
      %2918 = vmatprep.subr.mxu0 0.0
      %2919 = vmatpush1.xpose.msra.mxu0 0.0
      %2920 = vmatprep.subr.mxu0 0.0
      %2921 = vmatpush1.xpose.msra.mxu0 0.0
      %2922 = vmatprep.subr.mxu0 0.0
      %2923 = vmatpush1.xpose.msra.mxu0 0.0
      %2924 = vmatprep.subr.mxu0 0.0
      %2925 = vmatpush1.xpose.msra.mxu0 0.0
      %2926 = vmatprep.subr.mxu0 0.0
      %2927 = vmatpush1.xpose.msra.mxu0 0.0
      %2928 = vmatprep.subr.mxu0 0.0
      %2929 = vmatpush1.xpose.msra.mxu0 0.0
      %2930 = vmatprep.subr.mxu0 0.0
      %2931 = vmatpush1.xpose.msra.mxu0 0.0
      %2932 = vmatprep.subr.mxu0 0.0
      %2933 = vmatpush1.xpose.msra.mxu0 0.0
      %2934 = vmatprep.subr.mxu0 0.0
      %2935 = vmatpush1.xpose.msra.mxu0 %v2904
      %2936 = vmatprep.subr.mxu0 0.0
      %2937 = vmatpush1.xpose.msra.mxu0 %v2901
      %2938 = vmatprep.subr.mxu0 0.0
      %2939 = vmatpush2.xpose.msra.mxu0 0.0
      %2940 = vmatprep.subr.mxu0 0.0
      %2941 = vmatpush2.xpose.msra.mxu0 0.0
      %2942 = vmatprep.subr.mxu0 0.0
      %2943 = vmatpush2.xpose.msra.mxu0 0.0
      %2944 = vmatprep.subr.mxu0 0.0
      %2945 = vmatpush2.xpose.msra.mxu0 0.0
      %2946 = vmatprep.subr.mxu0 0.0
      %2947 = vmatpush2.xpose.msra.mxu0 0.0
      %2948 = vmatprep.subr.mxu0 0.0
      %2949 = vmatpush2.xpose.msra.mxu0 0.0
      %2950 = vmatprep.subr.mxu0 0.0
      %2951 = vmatpush2.xpose.msra.mxu0 0.0
      %2952 = vmatprep.subr.mxu0 0.0
      %2953 = vmatpush2.xpose.msra.mxu0 0.0
      %2954 = vmatprep.subr.mxu0 0.0
      %2955 = vmatpush2.xpose.msra.mxu0 0.0
      %2956 = vmatprep.subr.mxu0 0.0
      %2957 = vmatpush2.xpose.msra.mxu0 0.0
      %2958 = vmatprep.subr.mxu0 0.0
      %2959 = vmatpush2.xpose.msra.mxu0 0.0
      %2960 = vmatprep.subr.mxu0 0.0
      %2961 = vmatpush2.xpose.msra.mxu0 0.0
      %2962 = vmatprep.subr.mxu0 0.0
      %2963 = vmatpush2.xpose.msra.mxu0 0.0
      %2964 = vmatprep.subr.mxu0 0.0
      %2965 = vmatpush2.xpose.msra.mxu0 0.0
      %2966 = vmatprep.subr.mxu0 0.0
      %2967 = vmatpush2.xpose.msra.mxu0 0.0
      %2968 = vmatprep.subr.mxu0 0.0
      %2969 = vmatpush2.xpose.msra.mxu0 0.0
      %2970 = vmatprep.mubr.f32.mxu0 0.0
      %2971 = vmatmul.mubr.f32.gmra.mxu0 %v2898
      %v2972 = vpop.f32.mrf.mxu0
      %v2973 = vadd.f32 0.0, %v2972
      %v2974 = vpop.f32.mrf.mxu0
      %2975 = vdwg.mxu0
      %v2977 = vsel %vm1517, %v218, 0
      %v2980 = vsel %vm1517, %v1866, 0
      %v2983 = vsel %vm1517, %v1867, 0
      %2985 = vmatprep.subr.mxu0 0.0
      %2986 = vmatpush1.xpose.msra.mxu0 0.0
      %2987 = vmatprep.subr.mxu0 0.0
      %2988 = vmatpush1.xpose.msra.mxu0 0.0
      %2989 = vmatprep.subr.mxu0 0.0
      %2990 = vmatpush1.xpose.msra.mxu0 0.0
      %2991 = vmatprep.subr.mxu0 0.0
      %2992 = vmatpush1.xpose.msra.mxu0 0.0
      %2993 = vmatprep.subr.mxu0 0.0
      %2994 = vmatpush1.xpose.msra.mxu0 0.0
      %2995 = vmatprep.subr.mxu0 0.0
      %2996 = vmatpush1.xpose.msra.mxu0 0.0
      %2997 = vmatprep.subr.mxu0 0.0
      %2998 = vmatpush1.xpose.msra.mxu0 0.0
      %2999 = vmatprep.subr.mxu0 0.0
      %3000 = vmatpush1.xpose.msra.mxu0 0.0
      %3001 = vmatprep.subr.mxu0 0.0
      %3002 = vmatpush1.xpose.msra.mxu0 0.0
      %3003 = vmatprep.subr.mxu0 0.0
      %3004 = vmatpush1.xpose.msra.mxu0 0.0
      %3005 = vmatprep.subr.mxu0 0.0
      %3006 = vmatpush1.xpose.msra.mxu0 0.0
      %3007 = vmatprep.subr.mxu0 0.0
      %3008 = vmatpush1.xpose.msra.mxu0 0.0
      %3009 = vmatprep.subr.mxu0 0.0
      %3010 = vmatpush1.xpose.msra.mxu0 0.0
      %3011 = vmatprep.subr.mxu0 0.0
      %3012 = vmatpush1.xpose.msra.mxu0 0.0
      %3013 = vmatprep.subr.mxu0 0.0
      %3014 = vmatpush1.xpose.msra.mxu0 %v2983
      %3015 = vmatprep.subr.mxu0 0.0
      %3016 = vmatpush1.xpose.msra.mxu0 %v2980
      %3017 = vmatprep.subr.mxu0 0.0
      %3018 = vmatpush2.xpose.msra.mxu0 0.0
      %3019 = vmatprep.subr.mxu0 0.0
      %3020 = vmatpush2.xpose.msra.mxu0 0.0
      %3021 = vmatprep.subr.mxu0 0.0
      %3022 = vmatpush2.xpose.msra.mxu0 0.0
      %3023 = vmatprep.subr.mxu0 0.0
      %3024 = vmatpush2.xpose.msra.mxu0 0.0
      %3025 = vmatprep.subr.mxu0 0.0
      %3026 = vmatpush2.xpose.msra.mxu0 0.0
      %3027 = vmatprep.subr.mxu0 0.0
      %3028 = vmatpush2.xpose.msra.mxu0 0.0
      %3029 = vmatprep.subr.mxu0 0.0
      %3030 = vmatpush2.xpose.msra.mxu0 0.0
      %3031 = vmatprep.subr.mxu0 0.0
      %3032 = vmatpush2.xpose.msra.mxu0 0.0
      %3033 = vmatprep.subr.mxu0 0.0
      %3034 = vmatpush2.xpose.msra.mxu0 0.0
      %3035 = vmatprep.subr.mxu0 0.0
      %3036 = vmatpush2.xpose.msra.mxu0 0.0
      %3037 = vmatprep.subr.mxu0 0.0
      %3038 = vmatpush2.xpose.msra.mxu0 0.0
      %3039 = vmatprep.subr.mxu0 0.0
      %3040 = vmatpush2.xpose.msra.mxu0 0.0
      %3041 = vmatprep.subr.mxu0 0.0
      %3042 = vmatpush2.xpose.msra.mxu0 0.0
      %3043 = vmatprep.subr.mxu0 0.0
      %3044 = vmatpush2.xpose.msra.mxu0 0.0
      %3045 = vmatprep.subr.mxu0 0.0
      %3046 = vmatpush2.xpose.msra.mxu0 0.0
      %3047 = vmatprep.subr.mxu0 0.0
      %3048 = vmatpush2.xpose.msra.mxu0 0.0
      %3049 = vmatprep.mubr.f32.mxu0 0.0
      %3050 = vmatmul.mubr.f32.gmra.mxu0 %v2977
      %v3051 = vpop.f32.mrf.mxu0
      %v3052 = vadd.f32 0.0, %v3051
      %v3053 = vpop.f32.mrf.mxu0
      %3054 = vdwg.mxu0
      %v3056 = vsel %vm1517, %v219, 0
      %v3059 = vsel %vm1517, %v1868, 0
      %v3062 = vsel %vm1517, %v1869, 0
      %3064 = vmatprep.subr.mxu0 0.0
      %3065 = vmatpush1.xpose.msra.mxu0 0.0
      %3066 = vmatprep.subr.mxu0 0.0
      %3067 = vmatpush1.xpose.msra.mxu0 0.0
      %3068 = vmatprep.subr.mxu0 0.0
      %3069 = vmatpush1.xpose.msra.mxu0 0.0
      %3070 = vmatprep.subr.mxu0 0.0
      %3071 = vmatpush1.xpose.msra.mxu0 0.0
      %3072 = vmatprep.subr.mxu0 0.0
      %3073 = vmatpush1.xpose.msra.mxu0 0.0
      %3074 = vmatprep.subr.mxu0 0.0
      %3075 = vmatpush1.xpose.msra.mxu0 0.0
      %3076 = vmatprep.subr.mxu0 0.0
      %3077 = vmatpush1.xpose.msra.mxu0 0.0
      %3078 = vmatprep.subr.mxu0 0.0
      %3079 = vmatpush1.xpose.msra.mxu0 0.0
      %3080 = vmatprep.subr.mxu0 0.0
      %3081 = vmatpush1.xpose.msra.mxu0 0.0
      %3082 = vmatprep.subr.mxu0 0.0
      %3083 = vmatpush1.xpose.msra.mxu0 0.0
      %3084 = vmatprep.subr.mxu0 0.0
      %3085 = vmatpush1.xpose.msra.mxu0 0.0
      %3086 = vmatprep.subr.mxu0 0.0
      %3087 = vmatpush1.xpose.msra.mxu0 0.0
      %3088 = vmatprep.subr.mxu0 0.0
      %3089 = vmatpush1.xpose.msra.mxu0 0.0
      %3090 = vmatprep.subr.mxu0 0.0
      %3091 = vmatpush1.xpose.msra.mxu0 0.0
      %3092 = vmatprep.subr.mxu0 0.0
      %3093 = vmatpush1.xpose.msra.mxu0 %v3062
      %3094 = vmatprep.subr.mxu0 0.0
      %3095 = vmatpush1.xpose.msra.mxu0 %v3059
      %3096 = vmatprep.subr.mxu0 0.0
      %3097 = vmatpush2.xpose.msra.mxu0 0.0
      %3098 = vmatprep.subr.mxu0 0.0
      %3099 = vmatpush2.xpose.msra.mxu0 0.0
      %3100 = vmatprep.subr.mxu0 0.0
      %3101 = vmatpush2.xpose.msra.mxu0 0.0
      %3102 = vmatprep.subr.mxu0 0.0
      %3103 = vmatpush2.xpose.msra.mxu0 0.0
      %3104 = vmatprep.subr.mxu0 0.0
      %3105 = vmatpush2.xpose.msra.mxu0 0.0
      %3106 = vmatprep.subr.mxu0 0.0
      %3107 = vmatpush2.xpose.msra.mxu0 0.0
      %3108 = vmatprep.subr.mxu0 0.0
      %3109 = vmatpush2.xpose.msra.mxu0 0.0
      %3110 = vmatprep.subr.mxu0 0.0
      %3111 = vmatpush2.xpose.msra.mxu0 0.0
      %3112 = vmatprep.subr.mxu0 0.0
      %3113 = vmatpush2.xpose.msra.mxu0 0.0
      %3114 = vmatprep.subr.mxu0 0.0
      %3115 = vmatpush2.xpose.msra.mxu0 0.0
      %3116 = vmatprep.subr.mxu0 0.0
      %3117 = vmatpush2.xpose.msra.mxu0 0.0
      %3118 = vmatprep.subr.mxu0 0.0
      %3119 = vmatpush2.xpose.msra.mxu0 0.0
      %3120 = vmatprep.subr.mxu0 0.0
      %3121 = vmatpush2.xpose.msra.mxu0 0.0
      %3122 = vmatprep.subr.mxu0 0.0
      %3123 = vmatpush2.xpose.msra.mxu0 0.0
      %3124 = vmatprep.subr.mxu0 0.0
      %3125 = vmatpush2.xpose.msra.mxu0 0.0
      %3126 = vmatprep.subr.mxu0 0.0
      %3127 = vmatpush2.xpose.msra.mxu0 0.0
      %3128 = vmatprep.mubr.f32.mxu0 0.0
      %3129 = vmatmul.mubr.f32.gmra.mxu0 %v3056
      %v3130 = vpop.f32.mrf.mxu0
      %v3131 = vadd.f32 0.0, %v3130
      %v3132 = vpop.f32.mrf.mxu0
      %3133 = vdwg.mxu0
      %vm3134 = vcmask 123904
      %3135 = vst.msk [vmem:[%s170] sm:$0x3] %vm3134, %v1946
      %3136 = vst.msk [vmem:[%s170 + $0x2] sm:$0x3] %vm3134, %v2025
      %3137 = vst.msk [vmem:[%s170 + $0x4] sm:$0x3] %vm3134, %v2104
      %3138 = vst.msk [vmem:[%s170 + $0x6] sm:$0x3] %vm3134, %v2183
      %3139 = vst.msk [vmem:[%s170 + $0x8] sm:$0x3] %vm3134, %v2262
      %3140 = vst.msk [vmem:[%s170 + $0xa] sm:$0x3] %vm3134, %v2341
      %3141 = vst.msk [vmem:[%s170 + $0xc] sm:$0x3] %vm3134, %v2420
      %3142 = vst.msk [vmem:[%s170 + $0xe] sm:$0x3] %vm3134, %v2499
      %3143 = vst.msk [vmem:[%s170 + $0x10] sm:$0x3] %vm3134, %v2578
      %3144 = vst.msk [vmem:[%s170 + $0x12] sm:$0x3] %vm3134, %v2657
      %3145 = vst.msk [vmem:[%s170 + $0x14] sm:$0x3] %vm3134, %v2736
      %3146 = vst.msk [vmem:[%s170 + $0x16] sm:$0x3] %vm3134, %v2815
      %3147 = vst.msk [vmem:[%s170 + $0x18] sm:$0x3] %vm3134, %v2894
      %3148 = vst.msk [vmem:[%s170 + $0x1a] sm:$0x3] %vm3134, %v2973
      %3149 = vst.msk [vmem:[%s170 + $0x1c] sm:$0x3] %vm3134, %v3052
      %3150 = vst.msk [vmem:[%s170 + $0x1e] sm:$0x3] %vm3134, %v3131
      %s3151 = smul.u32 16, %s13
      %p3152 = scmp.lt.s32.totalorder %s3151, 31
      %s3153 = scalar_select %p3152, %s3151, 31
      %s3154 = smul.addr %s3153, 2
      %s3155 = scalar_lea.vmem %s2, %s3154
      // Predicated region
      $region29: #{mwsa_forward.6} parent=27 // pred_check
        %p3156 = pneg %p83
      $region30: #{mwsa_forward.6} parent=27 // pred_check_branch
        %3158 = sbr.rel (%p3156) target = $region32
      $region31: #{mwsa_forward.6} parent=27 // pred_region
        %s3159 = smul.u32 16, %s13
      $region32: #{mwsa_forward.6} parent=27 // pred_fallthru
        _
    $region28: #{mwsa_forward.6} parent=5 // pred_fallthru
      _
    %p3160 = scmp.le.s32.totalorder 2, %s8
    // Predicated region
    $region33: #{mwsa_forward.6} parent=5 // pred_check
      %p3161 = pneg %p3160
    $region34: #{mwsa_forward.6} parent=5 // pred_check_branch
      %3163 = sbr.rel (%p3161) target = $region36
    $region35: #{mwsa_forward.6} parent=5 // pred_region
      %s3164 = ssub.s32 %s8, 2
      // Predicated region
      $region37: #{mwsa_forward.6} parent=35 // pred_check
        %p3165 = pneg %p89
      $region38: #{mwsa_forward.6} parent=35 // pred_check_branch
        %3167 = sbr.rel (%p3165) target = $region40
      $region39: #{mwsa_forward.6} parent=35 // pred_region
        %s3168 = smul.u32 16, %s14
        %p3169 = scmp.lt.s32.totalorder %s3168, 31
        %s3170 = scalar_select %p3169, %s3168, 31
        %s3171 = smul.addr %s3170, 2
        %s3172 = scalar_lea.vmem %s2, %s3171
      $region40: #{mwsa_forward.6} parent=35 // pred_fallthru
        _
    $region36: #{mwsa_forward.6} parent=5 // pred_fallthru
      _
  $region6: #{mwsa_forward.6} parent=0 // loop_footer
    %s12 = sadd.s32 1, %s8
  $region7: #{mwsa_forward.6} parent=0 // loop_footer_branch
    %7 = sbr.rel target = $region3
  $region8: #{mwsa_forward.6} parent=0 // loop_exit
    _

</llo_original>
